<compile_context>
chip_gen: v6e
topology: v6e:2x2x1
jax: 0.10.0
libtpu: 0.0.40
codegen_flags: <defaults>
</compile_context>

<pallas_src>
import jax
import jax.numpy as jnp
from jax import lax
from jax.experimental import pallas as pl
from jax.experimental.pallas import tpu as pltpu


def _gelu_tanh(x):
    # tanh-approx GELU: a few VPU FMAs + one EUP tanh.
    # TODO(synk): switch to exact erf GELU if bit-parity with torch.nn.GELU()
    # (which uses the exact erf form) is required; deviation is ~1e-3 max.
    c = 0.7978845608028654  # sqrt(2/pi)
    return 0.5 * x * (1.0 + jnp.tanh(c * (x + 0.044715 * x * x * x)))


def _make_kernel(*, b_blk, seq, feat, cpg, ksize, tdim, heads, hd, layers,
                 s_len, s_pad, start_token):
    """Kernel over grid (batch_blocks, layers)."""

    def kernel(x0_ref, xg_ref, posw_ref, posb_ref, lng_ref, lnb_ref,
               wc_ref, bc_ref,
               wq_ref, wk_ref, wv_ref, bq_ref, bk_ref, bv_ref,
               wo_ref, bo_ref, w1_ref, b1_ref, w2_ref, b2_ref,
               wout_ref, bout_ref,
               out_ref, z_ref):
        l = pl.program_id(1)

        # ---------- front end (only at the first layer step) -------------
        @pl.when(l == 0)
        def _():
            x0 = x0_ref[...]                       # (B, seq, feat) f32
            xg = xg_ref[...]                       # (B, cpg, seq+2*pad, feat)
            # grouped position conv as element-wise FMAs over taps (k) and
            # within-group offsets (j): channel gather was done on the host.
            acc = jnp.zeros((b_blk, seq, feat), jnp.float32)
            for k in range(ksize):
                for j in range(cpg):
                    acc = acc + xg[:, j, k:k + seq, :] * posw_ref[k, j]
            acc = acc + posb_ref[...]
            hres = x0 + _gelu_tanh(acc)            # residual: x + GELU(conv(x))

            # LayerNorm(feat) (dropout = id in eval)
            mu = jnp.mean(hres, axis=-1, keepdims=True)
            var = jnp.mean((hres - mu) * (hres - mu), axis=-1, keepdims=True)
            hn = (hres - mu) * lax.rsqrt(var + 1e-5) * lng_ref[...] + lnb_ref[...]

            # 1x1 conv feat -> tdim (batch folded into M)
            hn2 = hn.reshape(b_blk * seq, feat).astype(jnp.bfloat16)
            ztok = jnp.dot(hn2, wc_ref[...],
                           preferred_element_type=jnp.float32) + bc_ref[...]
            ztok = ztok.reshape(b_blk, seq, tdim)

            # prepend start token + zero-pad rows up to s_pad, one aligned store
            parts = [jnp.full((b_blk, 1, tdim), start_token, jnp.float32), ztok]
            tail = s_pad - 1 - seq
            if tail > 0:
                parts.append(jnp.zeros((b_blk, tail, tdim), jnp.float32))
            z_ref[...] = jnp.concatenate(parts, axis=1)

        # ---------- transformer encoder layer `l` -------------------------
        # (norm1/norm2 are identity (_Hax), dropouts are identity in eval)
        z = z_ref[...]                             # (B, s_pad, tdim) f32
        zflat = z.reshape(b_blk * s_pad, tdim)
        z_bf = zflat.astype(jnp.bfloat16)

        # valid-key mask (padded sequence rows must not act as keys)
        kmask = lax.broadcasted_iota(jnp.int32, (1, 1, s_pad), 2) < s_len

        attn = jnp.zeros((b_blk * s_pad, tdim), jnp.float32)
        for hh in range(heads):
            # per-head projections: aligned leading-axis weight slices,
            # batch-folded M = B_blk * s_pad.  1/sqrt(hd) is folded into wq/bq.
            q = (jnp.dot(z_bf, wq_ref[0, hh], preferred_element_type=jnp.float32)
                 + bq_ref[0, hh]).reshape(b_blk, s_pad, hd)
            kmat = (jnp.dot(z_bf, wk_ref[0, hh], preferred_element_type=jnp.float32)
                    + bk_ref[0, hh]).reshape(b_blk, s_pad, hd)
            v = (jnp.dot(z_bf, wv_ref[0, hh], preferred_element_type=jnp.float32)
                 + bv_ref[0, hh]).reshape(b_blk, s_pad, hd)

            s = jnp.einsum('bqd,bkd->bqk', q.astype(jnp.bfloat16),
                           kmat.astype(jnp.bfloat16),
                           preferred_element_type=jnp.float32)   # (B, S, S)
            s = jnp.where(kmask, s, -1e30)
            m = jnp.max(s, axis=-1, keepdims=True)
            e = jnp.exp(s - m)
            p = e * pl.reciprocal(jnp.sum(e, axis=-1, keepdims=True), approx=True)

            o = jnp.einsum('bqk,bkd->bqd', p.astype(jnp.bfloat16),
                           v.astype(jnp.bfloat16),
                           preferred_element_type=jnp.float32)   # (B, S, hd)
            # per-head out-proj slice (rows h*hd:(h+1)*hd of Wo) == concat @ Wo
            attn = attn + jnp.dot(o.reshape(b_blk * s_pad, hd).astype(jnp.bfloat16),
                                  wo_ref[0, hh], preferred_element_type=jnp.float32)
        attn = attn + bo_ref[0]
        z1 = zflat + attn                          # residual 1

        f = jnp.dot(z1.astype(jnp.bfloat16), w1_ref[0],
                    preferred_element_type=jnp.float32) + b1_ref[0]
        f = _gelu_tanh(f)
        f = jnp.dot(f.astype(jnp.bfloat16), w2_ref[0],
                    preferred_element_type=jnp.float32) + b2_ref[0]
        z2 = z1 + f                                # residual 2
        z_ref[...] = z2.reshape(b_blk, s_pad, tdim)

        # ---------- output 1x1 conv (tdim -> feat) at the last layer ------
        @pl.when(l == layers - 1)
        def _():
            o = jnp.dot(z2.astype(jnp.bfloat16), wout_ref[...],
                        preferred_element_type=jnp.float32) + bout_ref[...]
            out_ref[...] = o.reshape(b_blk, s_pad, feat)

    return kernel


def _prepare_params(params, *, feat, tdim, heads, hd, layers, ksize, cpg):
    """Host-side re-layout of module-style weights into kernel layout."""
    f32, bf16 = jnp.float32, jnp.bfloat16
    scale = float(hd) ** -0.5

    # grouped conv weight (out, in/groups, k) -> (k, in/groups, 1, out)
    pos_w = jnp.transpose(params["pos_w_raw"], (2, 1, 0)).reshape(
        ksize, cpg, 1, feat).astype(f32)
    pos_b = params["pos_b_raw"].reshape(1, feat).astype(f32)
    ln_g = params["ln_g_raw"].reshape(1, feat).astype(f32)
    ln_b = params["ln_b_raw"].reshape(1, feat).astype(f32)
    wc = params["wc_raw"].astype(bf16)
    bc = params["bc_raw"].reshape(1, tdim).astype(f32)

    wqkv = params["wqkv_raw"]                      # (L, tdim, 3*tdim), x@W form
    bqkv = params["bqkv_raw"]                      # (L, 3*tdim)

    def split_w(w):                                # (L, tdim, tdim) -> (L, H, tdim, hd)
        return jnp.transpose(w.reshape(layers, tdim, heads, hd), (0, 2, 1, 3))

    def split_b(b):                                # (L, tdim) -> (L, H, 1, hd)
        return b.reshape(layers, heads, 1, hd)

    wq = split_w(wqkv[:, :, 0 * tdim:1 * tdim]) * scale   # fold 1/sqrt(hd) into q
    wk = split_w(wqkv[:, :, 1 * tdim:2 * tdim])
    wv = split_w(wqkv[:, :, 2 * tdim:3 * tdim])
    bq = split_b(bqkv[:, 0 * tdim:1 * tdim]) * scale
    bk = split_b(bqkv[:, 1 * tdim:2 * tdim])
    bv = split_b(bqkv[:, 2 * tdim:3 * tdim])

    wo = params["wo_raw"].reshape(layers, heads, hd, tdim)
    bo = params["bo_raw"].reshape(layers, 1, tdim).astype(f32)
    w1 = params["w1_raw"]
    b1 = params["b1_raw"].reshape(layers, 1, -1).astype(f32)
    w2 = params["w2_raw"]
    b2 = params["b2_raw"].reshape(layers, 1, tdim).astype(f32)
    wout = params["wout_raw"].astype(bf16)
    bout = params["bout_raw"].reshape(1, feat).astype(f32)

    return dict(pos_w=pos_w, pos_b=pos_b, ln_g=ln_g, ln_b=ln_b, wc=wc, bc=bc,
                wq=wq.astype(bf16), wk=wk.astype(bf16), wv=wv.astype(bf16),
                bq=bq.astype(f32), bk=bk.astype(f32), bv=bv.astype(f32),
                wo=wo.astype(bf16), bo=bo,
                w1=w1.astype(bf16), b1=b1, w2=w2.astype(bf16), b2=b2,
                wout=wout, bout=bout)


def bendr_contextualizer_forward(x, params, *, mask_t=None, mask_c=None):
    """Eval-mode forward of BENDRContextualizer.

    x: (bs, in_features, seq) float32 (PyTorch NCL layout)
    returns (bs, in_features, seq + 1) float32
    """
    x = jnp.asarray(x, jnp.float32)
    bs, feat, seq = x.shape
    cfg = params["config"]
    tdim, heads, layers = cfg["tdim"], cfg["heads"], cfg["layers"]
    ksize, groups = cfg["ksize"], cfg["groups"]
    start_token = cfg["start_token"]
    assert feat % groups == 0 and tdim % heads == 0
    cpg = feat // groups
    hd = tdim // heads
    pad = ksize // 2
    s_len = seq + 1
    s_pad = ((s_len + 7) // 8) * 8          # sublane-aligned sequence length

    # optional mask substitution (mirrors the in-place indexing in torch)
    if mask_t is not None:   # (bs, seq) bool
        x = jnp.where(mask_t[:, None, :],
                      params["mask_replacement"][None, :, None], x)
    if mask_c is not None:   # (bs, feat) bool
        x = jnp.where(mask_c[:, :, None], 0.0, x)

    # token-major layout so channels sit on the 128-lane axis
    x_tm = jnp.transpose(x, (0, 2, 1))                       # (bs, seq, feat)
    xpad_tm = jnp.pad(x_tm, ((0, 0), (pad, pad), (0, 0)))    # (bs, seq+2*pad, feat)
    # grouped-conv channel gather: out channel o / tap offset j reads input
    # channel (o // cpg) * cpg + j  (keeps the block-diagonal structure exact)
    ch = jnp.arange(feat)
    idx = (ch // cpg) * cpg + jnp.arange(cpg)[:, None]       # (cpg, feat)
    xg = jnp.transpose(xpad_tm[:, :, idx], (0, 2, 1, 3))     # (bs, cpg, L, feat)

    pp = _prepare_params(params, feat=feat, tdim=tdim, heads=heads, hd=hd,
                         layers=layers, ksize=ksize, cpg=cpg)

    # batch blocking: fold several samples into the matmul M dimension
    b_blk = 1
    for d in range(bs, 0, -1):
        if bs % d == 0 and d * s_pad <= 1024:
            b_blk = d
            break
    nb = bs // b_blk

    kernel = _make_kernel(b_blk=b_blk, seq=seq, feat=feat, cpg=cpg, ksize=ksize,
                          tdim=tdim, heads=heads, hd=hd, layers=layers,
                          s_len=s_len, s_pad=s_pad, start_token=start_token)

    def const_spec(a):
        nd = a.ndim
        return pl.BlockSpec(a.shape, lambda b, l, _n=nd: (0,) * _n)

    def batch_spec(a):
        nd = a.ndim
        return pl.BlockSpec((b_blk,) + tuple(a.shape[1:]),
                            lambda b, l, _n=nd: (b,) + (0,) * (_n - 1))

    def layer_spec(a):
        nd = a.ndim
        return pl.BlockSpec((1,) + tuple(a.shape[1:]),
                            lambda b, l, _n=nd: (l,) + (0,) * (_n - 1))

    operands = (x_tm, xg,
                pp["pos_w"], pp["pos_b"], pp["ln_g"], pp["ln_b"], pp["wc"], pp["bc"],
                pp["wq"], pp["wk"], pp["wv"], pp["bq"], pp["bk"], pp["bv"],
                pp["wo"], pp["bo"], pp["w1"], pp["b1"], pp["w2"], pp["b2"],
                pp["wout"], pp["bout"])
    in_specs = [batch_spec(x_tm), batch_spec(xg)]
    in_specs += [const_spec(pp[k]) for k in ("pos_w", "pos_b", "ln_g", "ln_b",
                                             "wc", "bc")]
    in_specs += [layer_spec(pp[k]) for k in ("wq", "wk", "wv", "bq", "bk", "bv",
                                             "wo", "bo", "w1", "b1", "w2", "b2")]
    in_specs += [const_spec(pp["wout"]), const_spec(pp["bout"])]

    out = pl.pallas_call(
        kernel,
        out_shape=jax.ShapeDtypeStruct((bs, s_pad, feat), jnp.float32),
        grid=(nb, layers),
        in_specs=in_specs,
        out_specs=pl.BlockSpec((b_blk, s_pad, feat), lambda b, l: (b, 0, 0)),
        scratch_shapes=[pltpu.VMEM((b_blk, s_pad, tdim), jnp.float32)],
        compiler_params=pltpu.CompilerParams(
            dimension_semantics=("parallel", "arbitrary"),
            vmem_limit_bytes=64 * 1024 * 1024),
    )(*operands)

    out = out[:, :s_len, :]                  # drop sublane-padding rows
    return jnp.transpose(out, (0, 2, 1))     # (bs, feat, seq + 1)


def init_params(key, *, in_features=16, hidden_feedforward=64, heads=8,
                layers=2, position_encoder=25, start_token=-5.0, groups=16):
    """Deterministic synthetic parameters matching the module's shapes."""
    feat = in_features
    tdim = 3 * in_features
    ff = hidden_feedforward
    ksize = position_encoder
    assert feat % groups == 0, "groups=16 conv requires in_features % 16 == 0"
    assert tdim % heads == 0
    cpg = feat // groups

    keys = jax.random.split(key, 8)

    mask_replacement = (feat ** -0.5) * jax.random.normal(keys[0], (feat,), jnp.float32)

    # grouped position conv (torch layout (out, in/groups, k)); weight_norm(dim=2)
    # is an identity re-parameterization at init so the sample is the weight.
    pos_w_raw = (2.0 / tdim) * jax.random.normal(keys[1], (feat, cpg, ksize), jnp.float32)
    pos_b_raw = jnp.zeros((feat,), jnp.float32)

    ln_g_raw = jnp.ones((feat,), jnp.float32)
    ln_b_raw = jnp.zeros((feat,), jnp.float32)
    wc_raw = (feat ** -0.5) * jax.random.normal(keys[2], (feat, tdim), jnp.float32)
    bc_raw = 0.02 * jax.random.normal(keys[3], (tdim,), jnp.float32)

    lin_scale = 0.67 * layers ** (-0.25)          # init_bert_params scaling

    def nrm(k, shape, fan_in):
        return (lin_scale / fan_in ** 0.5) * jax.random.normal(k, shape, jnp.float32)

    kq, ko, k1, k2 = jax.random.split(keys[4], 4)
    wqkv_raw = jnp.stack([(tdim ** -0.5) * jax.random.normal(kk, (tdim, 3 * tdim), jnp.float32)
                          for kk in jax.random.split(kq, layers)])
    bqkv_raw = jnp.zeros((layers, 3 * tdim), jnp.float32)
    wo_raw = jnp.stack([nrm(kk, (tdim, tdim), tdim) for kk in jax.random.split(ko, layers)])
    bo_raw = jnp.zeros((layers, tdim), jnp.float32)
    w1_raw = jnp.stack([nrm(kk, (tdim, ff), tdim) for kk in jax.random.split(k1, layers)])
    b1_raw = jnp.zeros((layers, ff), jnp.float32)
    w2_raw = jnp.stack([nrm(kk, (ff, tdim), ff) for kk in jax.random.split(k2, layers)])
    b2_raw = jnp.zeros((layers, tdim), jnp.float32)

    wout_raw = (tdim ** -0.5) * jax.random.normal(keys[5], (tdim, feat), jnp.float32)
    bout_raw = 0.02 * jax.random.normal(keys[6], (feat,), jnp.float32)

    return {
        "config": dict(feat=feat, tdim=tdim, heads=heads, layers=layers,
                       ff=ff, ksize=ksize, groups=groups,
                       start_token=float(start_token)),
        "mask_replacement": mask_replacement,
        "pos_w_raw": pos_w_raw, "pos_b_raw": pos_b_raw,
        "ln_g_raw": ln_g_raw, "ln_b_raw": ln_b_raw,
        "wc_raw": wc_raw, "bc_raw": bc_raw,
        "wqkv_raw": wqkv_raw, "bqkv_raw": bqkv_raw,
        "wo_raw": wo_raw, "bo_raw": bo_raw,
        "w1_raw": w1_raw, "b1_raw": b1_raw,
        "w2_raw": w2_raw, "b2_raw": b2_raw,
        "wout_raw": wout_raw, "bout_raw": bout_raw,
    }


if __name__ == "__main__":
    key = jax.random.PRNGKey(0)
    kp, kx = jax.random.split(key)

    # small config consistent with the module: in_features must be a multiple
    # of 16 (groups=16 conv) and 3*in_features must be divisible by heads=8.
    bs, feat, seq = 2, 16, 8
    params = init_params(kp, in_features=feat, hidden_feedforward=64,
                         heads=8, layers=2, position_encoder=25,
                         start_token=-5.0)

    x = jax.random.normal(kx, (bs, feat, seq), jnp.float32)
    out = bendr_contextualizer_forward(x, params)
    out = jax.block_until_ready(out)

    assert out.shape == (bs, feat, seq + 1), out.shape
    assert bool(jnp.all(jnp.isfinite(out)))
    print("KERNEL_OK")
</pallas_src>

<mosaic_0001>
module attributes {stable_mosaic.version = 11 : i64} {
  func.func @kernel(%arg0: i32, %arg1: i32, %arg2: memref<2x8x16xf32, #tpu.memory_space<vmem>>, %arg3: memref<2x1x32x16xf32, #tpu.memory_space<vmem>>, %arg4: memref<25x1x1x16xf32, #tpu.memory_space<vmem>>, %arg5: memref<1x16xf32, #tpu.memory_space<vmem>>, %arg6: memref<1x16xf32, #tpu.memory_space<vmem>>, %arg7: memref<1x16xf32, #tpu.memory_space<vmem>>, %arg8: memref<16x48xbf16, #tpu.memory_space<vmem>>, %arg9: memref<1x48xf32, #tpu.memory_space<vmem>>, %arg10: memref<1x8x48x6xbf16, #tpu.memory_space<vmem>>, %arg11: memref<1x8x48x6xbf16, #tpu.memory_space<vmem>>, %arg12: memref<1x8x48x6xbf16, #tpu.memory_space<vmem>>, %arg13: memref<1x8x1x6xf32, #tpu.memory_space<vmem>>, %arg14: memref<1x8x1x6xf32, #tpu.memory_space<vmem>>, %arg15: memref<1x8x1x6xf32, #tpu.memory_space<vmem>>, %arg16: memref<1x8x6x48xbf16, #tpu.memory_space<vmem>>, %arg17: memref<1x1x48xf32, #tpu.memory_space<vmem>>, %arg18: memref<1x48x64xbf16, #tpu.memory_space<vmem>>, %arg19: memref<1x1x64xf32, #tpu.memory_space<vmem>>, %arg20: memref<1x64x48xbf16, #tpu.memory_space<vmem>>, %arg21: memref<1x1x48xf32, #tpu.memory_space<vmem>>, %arg22: memref<48x16xbf16, #tpu.memory_space<vmem>>, %arg23: memref<1x16xf32, #tpu.memory_space<vmem>>, %arg24: memref<2x16x16xf32, #tpu.memory_space<vmem>>, %arg25: memref<2x16x48xf32, #tpu.memory_space<vmem>>) attributes {dimension_semantics = [#tpu.dimension_semantics<parallel>, #tpu.dimension_semantics<arbitrary>], iteration_bounds = array<i64: 1, 2>, scalar_prefetch = 0 : i64, scratch_operands = 1 : i64, tpu.core_type = #tpu.core_type<tc>, window_params = [{transform_indices = @transform_0, window_bounds = array<i64: 2, 8, 16>}, {transform_indices = @transform_1, window_bounds = array<i64: 2, 1, 32, 16>}, {pipeline_mode = #tpu.pipeline_mode<synchronous>, transform_indices = @transform_2, window_bounds = array<i64: 25, 1, 1, 16>}, {pipeline_mode = #tpu.pipeline_mode<synchronous>, transform_indices = @transform_3, window_bounds = array<i64: 1, 16>}, {pipeline_mode = #tpu.pipeline_mode<synchronous>, transform_indices = @transform_4, window_bounds = array<i64: 1, 16>}, {pipeline_mode = #tpu.pipeline_mode<synchronous>, transform_indices = @transform_5, window_bounds = array<i64: 1, 16>}, {pipeline_mode = #tpu.pipeline_mode<synchronous>, transform_indices = @transform_6, window_bounds = array<i64: 16, 48>}, {pipeline_mode = #tpu.pipeline_mode<synchronous>, transform_indices = @transform_7, window_bounds = array<i64: 1, 48>}, {transform_indices = @transform_8, window_bounds = array<i64: 1, 8, 48, 6>}, {transform_indices = @transform_9, window_bounds = array<i64: 1, 8, 48, 6>}, {transform_indices = @transform_10, window_bounds = array<i64: 1, 8, 48, 6>}, {transform_indices = @transform_11, window_bounds = array<i64: 1, 8, 1, 6>}, {transform_indices = @transform_12, window_bounds = array<i64: 1, 8, 1, 6>}, {transform_indices = @transform_13, window_bounds = array<i64: 1, 8, 1, 6>}, {transform_indices = @transform_14, window_bounds = array<i64: 1, 8, 6, 48>}, {transform_indices = @transform_15, window_bounds = array<i64: 1, 1, 48>}, {transform_indices = @transform_16, window_bounds = array<i64: 1, 48, 64>}, {transform_indices = @transform_17, window_bounds = array<i64: 1, 1, 64>}, {transform_indices = @transform_18, window_bounds = array<i64: 1, 64, 48>}, {transform_indices = @transform_19, window_bounds = array<i64: 1, 1, 48>}, {pipeline_mode = #tpu.pipeline_mode<synchronous>, transform_indices = @transform_20, window_bounds = array<i64: 48, 16>}, {pipeline_mode = #tpu.pipeline_mode<synchronous>, transform_indices = @transform_21, window_bounds = array<i64: 1, 16>}, {transform_indices = @transform_22, window_bounds = array<i64: 2, 16, 16>}]} {
    %c0_i32 = arith.constant 0 : i32
    %0 = arith.cmpi eq, %arg1, %c0_i32 : i32
    %1 = arith.extui %0 : i1 to i32
    %c0_i32_0 = arith.constant 0 : i32
    %2 = arith.cmpi ne, %1, %c0_i32_0 : i32
    scf.if %2 {
      %c0_317 = arith.constant 0 : index
      %c0_318 = arith.constant 0 : index
      %c0_319 = arith.constant 0 : index
      %450 = vector.load %arg2[%c0_317, %c0_318, %c0_319] : memref<2x8x16xf32, #tpu.memory_space<vmem>>, vector<2x8x16xf32>
      %c0_320 = arith.constant 0 : index
      %c0_321 = arith.constant 0 : index
      %c0_322 = arith.constant 0 : index
      %c0_323 = arith.constant 0 : index
      %451 = vector.load %arg3[%c0_320, %c0_321, %c0_322, %c0_323] : memref<2x1x32x16xf32, #tpu.memory_space<vmem>>, vector<2x1x32x16xf32>
      %cst_324 = arith.constant 0.000000e+00 : f32
      %452 = vector.broadcast %cst_324 : f32 to vector<2x8x16xf32>
      %453 = vector.extract_strided_slice %451 {offsets = [0, 0, 0, 0], sizes = [2, 1, 8, 16], strides = [1, 1, 1, 1]} : vector<2x1x32x16xf32> to vector<2x1x8x16xf32>
      %454 = vector.shape_cast %453 : vector<2x1x8x16xf32> to vector<2x8x16xf32>
      %c0_325 = arith.constant 0 : index
      %c0_326 = arith.constant 0 : index
      %c0_327 = arith.constant 0 : index
      %c0_328 = arith.constant 0 : index
      %455 = vector.load %arg4[%c0_325, %c0_326, %c0_327, %c0_328] : memref<25x1x1x16xf32, #tpu.memory_space<vmem>>, vector<1x1x1x16xf32>
      %456 = vector.shape_cast %455 : vector<1x1x1x16xf32> to vector<1x16xf32>
      %457 = vector.shape_cast %456 : vector<1x16xf32> to vector<1x1x16xf32>
      %458 = vector.broadcast %457 : vector<1x1x16xf32> to vector<2x8x16xf32>
      %459 = arith.mulf %454, %458 : vector<2x8x16xf32>
      %460 = arith.addf %452, %459 : vector<2x8x16xf32>
      %461 = vector.extract_strided_slice %451 {offsets = [0, 0, 1, 0], sizes = [2, 1, 8, 16], strides = [1, 1, 1, 1]} : vector<2x1x32x16xf32> to vector<2x1x8x16xf32>
      %462 = vector.shape_cast %461 : vector<2x1x8x16xf32> to vector<2x8x16xf32>
      %c1_329 = arith.constant 1 : index
      %c0_330 = arith.constant 0 : index
      %c0_331 = arith.constant 0 : index
      %c0_332 = arith.constant 0 : index
      %463 = vector.load %arg4[%c1_329, %c0_330, %c0_331, %c0_332] : memref<25x1x1x16xf32, #tpu.memory_space<vmem>>, vector<1x1x1x16xf32>
      %464 = vector.shape_cast %463 : vector<1x1x1x16xf32> to vector<1x16xf32>
      %465 = vector.shape_cast %464 : vector<1x16xf32> to vector<1x1x16xf32>
      %466 = vector.broadcast %465 : vector<1x1x16xf32> to vector<2x8x16xf32>
      %467 = arith.mulf %462, %466 : vector<2x8x16xf32>
      %468 = arith.addf %460, %467 : vector<2x8x16xf32>
      %469 = vector.extract_strided_slice %451 {offsets = [0, 0, 2, 0], sizes = [2, 1, 8, 16], strides = [1, 1, 1, 1]} : vector<2x1x32x16xf32> to vector<2x1x8x16xf32>
      %470 = vector.shape_cast %469 : vector<2x1x8x16xf32> to vector<2x8x16xf32>
      %c2_333 = arith.constant 2 : index
      %c0_334 = arith.constant 0 : index
      %c0_335 = arith.constant 0 : index
      %c0_336 = arith.constant 0 : index
      %471 = vector.load %arg4[%c2_333, %c0_334, %c0_335, %c0_336] : memref<25x1x1x16xf32, #tpu.memory_space<vmem>>, vector<1x1x1x16xf32>
      %472 = vector.shape_cast %471 : vector<1x1x1x16xf32> to vector<1x16xf32>
      %473 = vector.shape_cast %472 : vector<1x16xf32> to vector<1x1x16xf32>
      %474 = vector.broadcast %473 : vector<1x1x16xf32> to vector<2x8x16xf32>
      %475 = arith.mulf %470, %474 : vector<2x8x16xf32>
      %476 = arith.addf %468, %475 : vector<2x8x16xf32>
      %477 = vector.extract_strided_slice %451 {offsets = [0, 0, 3, 0], sizes = [2, 1, 8, 16], strides = [1, 1, 1, 1]} : vector<2x1x32x16xf32> to vector<2x1x8x16xf32>
      %478 = vector.shape_cast %477 : vector<2x1x8x16xf32> to vector<2x8x16xf32>
      %c3_337 = arith.constant 3 : index
      %c0_338 = arith.constant 0 : index
      %c0_339 = arith.constant 0 : index
      %c0_340 = arith.constant 0 : index
      %479 = vector.load %arg4[%c3_337, %c0_338, %c0_339, %c0_340] : memref<25x1x1x16xf32, #tpu.memory_space<vmem>>, vector<1x1x1x16xf32>
      %480 = vector.shape_cast %479 : vector<1x1x1x16xf32> to vector<1x16xf32>
      %481 = vector.shape_cast %480 : vector<1x16xf32> to vector<1x1x16xf32>
      %482 = vector.broadcast %481 : vector<1x1x16xf32> to vector<2x8x16xf32>
      %483 = arith.mulf %478, %482 : vector<2x8x16xf32>
      %484 = arith.addf %476, %483 : vector<2x8x16xf32>
      %485 = vector.extract_strided_slice %451 {offsets = [0, 0, 4, 0], sizes = [2, 1, 8, 16], strides = [1, 1, 1, 1]} : vector<2x1x32x16xf32> to vector<2x1x8x16xf32>
      %486 = vector.shape_cast %485 : vector<2x1x8x16xf32> to vector<2x8x16xf32>
      %c4_341 = arith.constant 4 : index
      %c0_342 = arith.constant 0 : index
      %c0_343 = arith.constant 0 : index
      %c0_344 = arith.constant 0 : index
      %487 = vector.load %arg4[%c4_341, %c0_342, %c0_343, %c0_344] : memref<25x1x1x16xf32, #tpu.memory_space<vmem>>, vector<1x1x1x16xf32>
      %488 = vector.shape_cast %487 : vector<1x1x1x16xf32> to vector<1x16xf32>
      %489 = vector.shape_cast %488 : vector<1x16xf32> to vector<1x1x16xf32>
      %490 = vector.broadcast %489 : vector<1x1x16xf32> to vector<2x8x16xf32>
      %491 = arith.mulf %486, %490 : vector<2x8x16xf32>
      %492 = arith.addf %484, %491 : vector<2x8x16xf32>
      %493 = vector.extract_strided_slice %451 {offsets = [0, 0, 5, 0], sizes = [2, 1, 8, 16], strides = [1, 1, 1, 1]} : vector<2x1x32x16xf32> to vector<2x1x8x16xf32>
      %494 = vector.shape_cast %493 : vector<2x1x8x16xf32> to vector<2x8x16xf32>
      %c5_345 = arith.constant 5 : index
      %c0_346 = arith.constant 0 : index
      %c0_347 = arith.constant 0 : index
      %c0_348 = arith.constant 0 : index
      %495 = vector.load %arg4[%c5_345, %c0_346, %c0_347, %c0_348] : memref<25x1x1x16xf32, #tpu.memory_space<vmem>>, vector<1x1x1x16xf32>
      %496 = vector.shape_cast %495 : vector<1x1x1x16xf32> to vector<1x16xf32>
      %497 = vector.shape_cast %496 : vector<1x16xf32> to vector<1x1x16xf32>
      %498 = vector.broadcast %497 : vector<1x1x16xf32> to vector<2x8x16xf32>
      %499 = arith.mulf %494, %498 : vector<2x8x16xf32>
      %500 = arith.addf %492, %499 : vector<2x8x16xf32>
      %501 = vector.extract_strided_slice %451 {offsets = [0, 0, 6, 0], sizes = [2, 1, 8, 16], strides = [1, 1, 1, 1]} : vector<2x1x32x16xf32> to vector<2x1x8x16xf32>
      %502 = vector.shape_cast %501 : vector<2x1x8x16xf32> to vector<2x8x16xf32>
      %c6_349 = arith.constant 6 : index
      %c0_350 = arith.constant 0 : index
      %c0_351 = arith.constant 0 : index
      %c0_352 = arith.constant 0 : index
      %503 = vector.load %arg4[%c6_349, %c0_350, %c0_351, %c0_352] : memref<25x1x1x16xf32, #tpu.memory_space<vmem>>, vector<1x1x1x16xf32>
      %504 = vector.shape_cast %503 : vector<1x1x1x16xf32> to vector<1x16xf32>
      %505 = vector.shape_cast %504 : vector<1x16xf32> to vector<1x1x16xf32>
      %506 = vector.broadcast %505 : vector<1x1x16xf32> to vector<2x8x16xf32>
      %507 = arith.mulf %502, %506 : vector<2x8x16xf32>
      %508 = arith.addf %500, %507 : vector<2x8x16xf32>
      %509 = vector.extract_strided_slice %451 {offsets = [0, 0, 7, 0], sizes = [2, 1, 8, 16], strides = [1, 1, 1, 1]} : vector<2x1x32x16xf32> to vector<2x1x8x16xf32>
      %510 = vector.shape_cast %509 : vector<2x1x8x16xf32> to vector<2x8x16xf32>
      %c7_353 = arith.constant 7 : index
      %c0_354 = arith.constant 0 : index
      %c0_355 = arith.constant 0 : index
      %c0_356 = arith.constant 0 : index
      %511 = vector.load %arg4[%c7_353, %c0_354, %c0_355, %c0_356] : memref<25x1x1x16xf32, #tpu.memory_space<vmem>>, vector<1x1x1x16xf32>
      %512 = vector.shape_cast %511 : vector<1x1x1x16xf32> to vector<1x16xf32>
      %513 = vector.shape_cast %512 : vector<1x16xf32> to vector<1x1x16xf32>
      %514 = vector.broadcast %513 : vector<1x1x16xf32> to vector<2x8x16xf32>
      %515 = arith.mulf %510, %514 : vector<2x8x16xf32>
      %516 = arith.addf %508, %515 : vector<2x8x16xf32>
      %517 = vector.extract_strided_slice %451 {offsets = [0, 0, 8, 0], sizes = [2, 1, 8, 16], strides = [1, 1, 1, 1]} : vector<2x1x32x16xf32> to vector<2x1x8x16xf32>
      %518 = vector.shape_cast %517 : vector<2x1x8x16xf32> to vector<2x8x16xf32>
      %c8 = arith.constant 8 : index
      %c0_357 = arith.constant 0 : index
      %c0_358 = arith.constant 0 : index
      %c0_359 = arith.constant 0 : index
      %519 = vector.load %arg4[%c8, %c0_357, %c0_358, %c0_359] : memref<25x1x1x16xf32, #tpu.memory_space<vmem>>, vector<1x1x1x16xf32>
      %520 = vector.shape_cast %519 : vector<1x1x1x16xf32> to vector<1x16xf32>
      %521 = vector.shape_cast %520 : vector<1x16xf32> to vector<1x1x16xf32>
      %522 = vector.broadcast %521 : vector<1x1x16xf32> to vector<2x8x16xf32>
      %523 = arith.mulf %518, %522 : vector<2x8x16xf32>
      %524 = arith.addf %516, %523 : vector<2x8x16xf32>
      %525 = vector.extract_strided_slice %451 {offsets = [0, 0, 9, 0], sizes = [2, 1, 8, 16], strides = [1, 1, 1, 1]} : vector<2x1x32x16xf32> to vector<2x1x8x16xf32>
      %526 = vector.shape_cast %525 : vector<2x1x8x16xf32> to vector<2x8x16xf32>
      %c9 = arith.constant 9 : index
      %c0_360 = arith.constant 0 : index
      %c0_361 = arith.constant 0 : index
      %c0_362 = arith.constant 0 : index
      %527 = vector.load %arg4[%c9, %c0_360, %c0_361, %c0_362] : memref<25x1x1x16xf32, #tpu.memory_space<vmem>>, vector<1x1x1x16xf32>
      %528 = vector.shape_cast %527 : vector<1x1x1x16xf32> to vector<1x16xf32>
      %529 = vector.shape_cast %528 : vector<1x16xf32> to vector<1x1x16xf32>
      %530 = vector.broadcast %529 : vector<1x1x16xf32> to vector<2x8x16xf32>
      %531 = arith.mulf %526, %530 : vector<2x8x16xf32>
      %532 = arith.addf %524, %531 : vector<2x8x16xf32>
      %533 = vector.extract_strided_slice %451 {offsets = [0, 0, 10, 0], sizes = [2, 1, 8, 16], strides = [1, 1, 1, 1]} : vector<2x1x32x16xf32> to vector<2x1x8x16xf32>
      %534 = vector.shape_cast %533 : vector<2x1x8x16xf32> to vector<2x8x16xf32>
      %c10 = arith.constant 10 : index
      %c0_363 = arith.constant 0 : index
      %c0_364 = arith.constant 0 : index
      %c0_365 = arith.constant 0 : index
      %535 = vector.load %arg4[%c10, %c0_363, %c0_364, %c0_365] : memref<25x1x1x16xf32, #tpu.memory_space<vmem>>, vector<1x1x1x16xf32>
      %536 = vector.shape_cast %535 : vector<1x1x1x16xf32> to vector<1x16xf32>
      %537 = vector.shape_cast %536 : vector<1x16xf32> to vector<1x1x16xf32>
      %538 = vector.broadcast %537 : vector<1x1x16xf32> to vector<2x8x16xf32>
      %539 = arith.mulf %534, %538 : vector<2x8x16xf32>
      %540 = arith.addf %532, %539 : vector<2x8x16xf32>
      %541 = vector.extract_strided_slice %451 {offsets = [0, 0, 11, 0], sizes = [2, 1, 8, 16], strides = [1, 1, 1, 1]} : vector<2x1x32x16xf32> to vector<2x1x8x16xf32>
      %542 = vector.shape_cast %541 : vector<2x1x8x16xf32> to vector<2x8x16xf32>
      %c11 = arith.constant 11 : index
      %c0_366 = arith.constant 0 : index
      %c0_367 = arith.constant 0 : index
      %c0_368 = arith.constant 0 : index
      %543 = vector.load %arg4[%c11, %c0_366, %c0_367, %c0_368] : memref<25x1x1x16xf32, #tpu.memory_space<vmem>>, vector<1x1x1x16xf32>
      %544 = vector.shape_cast %543 : vector<1x1x1x16xf32> to vector<1x16xf32>
      %545 = vector.shape_cast %544 : vector<1x16xf32> to vector<1x1x16xf32>
      %546 = vector.broadcast %545 : vector<1x1x16xf32> to vector<2x8x16xf32>
      %547 = arith.mulf %542, %546 : vector<2x8x16xf32>
      %548 = arith.addf %540, %547 : vector<2x8x16xf32>
      %549 = vector.extract_strided_slice %451 {offsets = [0, 0, 12, 0], sizes = [2, 1, 8, 16], strides = [1, 1, 1, 1]} : vector<2x1x32x16xf32> to vector<2x1x8x16xf32>
      %550 = vector.shape_cast %549 : vector<2x1x8x16xf32> to vector<2x8x16xf32>
      %c12 = arith.constant 12 : index
      %c0_369 = arith.constant 0 : index
      %c0_370 = arith.constant 0 : index
      %c0_371 = arith.constant 0 : index
      %551 = vector.load %arg4[%c12, %c0_369, %c0_370, %c0_371] : memref<25x1x1x16xf32, #tpu.memory_space<vmem>>, vector<1x1x1x16xf32>
      %552 = vector.shape_cast %551 : vector<1x1x1x16xf32> to vector<1x16xf32>
      %553 = vector.shape_cast %552 : vector<1x16xf32> to vector<1x1x16xf32>
      %554 = vector.broadcast %553 : vector<1x1x16xf32> to vector<2x8x16xf32>
      %555 = arith.mulf %550, %554 : vector<2x8x16xf32>
      %556 = arith.addf %548, %555 : vector<2x8x16xf32>
      %557 = vector.extract_strided_slice %451 {offsets = [0, 0, 13, 0], sizes = [2, 1, 8, 16], strides = [1, 1, 1, 1]} : vector<2x1x32x16xf32> to vector<2x1x8x16xf32>
      %558 = vector.shape_cast %557 : vector<2x1x8x16xf32> to vector<2x8x16xf32>
      %c13 = arith.constant 13 : index
      %c0_372 = arith.constant 0 : index
      %c0_373 = arith.constant 0 : index
      %c0_374 = arith.constant 0 : index
      %559 = vector.load %arg4[%c13, %c0_372, %c0_373, %c0_374] : memref<25x1x1x16xf32, #tpu.memory_space<vmem>>, vector<1x1x1x16xf32>
      %560 = vector.shape_cast %559 : vector<1x1x1x16xf32> to vector<1x16xf32>
      %561 = vector.shape_cast %560 : vector<1x16xf32> to vector<1x1x16xf32>
      %562 = vector.broadcast %561 : vector<1x1x16xf32> to vector<2x8x16xf32>
      %563 = arith.mulf %558, %562 : vector<2x8x16xf32>
      %564 = arith.addf %556, %563 : vector<2x8x16xf32>
      %565 = vector.extract_strided_slice %451 {offsets = [0, 0, 14, 0], sizes = [2, 1, 8, 16], strides = [1, 1, 1, 1]} : vector<2x1x32x16xf32> to vector<2x1x8x16xf32>
      %566 = vector.shape_cast %565 : vector<2x1x8x16xf32> to vector<2x8x16xf32>
      %c14 = arith.constant 14 : index
      %c0_375 = arith.constant 0 : index
      %c0_376 = arith.constant 0 : index
      %c0_377 = arith.constant 0 : index
      %567 = vector.load %arg4[%c14, %c0_375, %c0_376, %c0_377] : memref<25x1x1x16xf32, #tpu.memory_space<vmem>>, vector<1x1x1x16xf32>
      %568 = vector.shape_cast %567 : vector<1x1x1x16xf32> to vector<1x16xf32>
      %569 = vector.shape_cast %568 : vector<1x16xf32> to vector<1x1x16xf32>
      %570 = vector.broadcast %569 : vector<1x1x16xf32> to vector<2x8x16xf32>
      %571 = arith.mulf %566, %570 : vector<2x8x16xf32>
      %572 = arith.addf %564, %571 : vector<2x8x16xf32>
      %573 = vector.extract_strided_slice %451 {offsets = [0, 0, 15, 0], sizes = [2, 1, 8, 16], strides = [1, 1, 1, 1]} : vector<2x1x32x16xf32> to vector<2x1x8x16xf32>
      %574 = vector.shape_cast %573 : vector<2x1x8x16xf32> to vector<2x8x16xf32>
      %c15 = arith.constant 15 : index
      %c0_378 = arith.constant 0 : index
      %c0_379 = arith.constant 0 : index
      %c0_380 = arith.constant 0 : index
      %575 = vector.load %arg4[%c15, %c0_378, %c0_379, %c0_380] : memref<25x1x1x16xf32, #tpu.memory_space<vmem>>, vector<1x1x1x16xf32>
      %576 = vector.shape_cast %575 : vector<1x1x1x16xf32> to vector<1x16xf32>
      %577 = vector.shape_cast %576 : vector<1x16xf32> to vector<1x1x16xf32>
      %578 = vector.broadcast %577 : vector<1x1x16xf32> to vector<2x8x16xf32>
      %579 = arith.mulf %574, %578 : vector<2x8x16xf32>
      %580 = arith.addf %572, %579 : vector<2x8x16xf32>
      %581 = vector.extract_strided_slice %451 {offsets = [0, 0, 16, 0], sizes = [2, 1, 8, 16], strides = [1, 1, 1, 1]} : vector<2x1x32x16xf32> to vector<2x1x8x16xf32>
      %582 = vector.shape_cast %581 : vector<2x1x8x16xf32> to vector<2x8x16xf32>
      %c16 = arith.constant 16 : index
      %c0_381 = arith.constant 0 : index
      %c0_382 = arith.constant 0 : index
      %c0_383 = arith.constant 0 : index
      %583 = vector.load %arg4[%c16, %c0_381, %c0_382, %c0_383] : memref<25x1x1x16xf32, #tpu.memory_space<vmem>>, vector<1x1x1x16xf32>
      %584 = vector.shape_cast %583 : vector<1x1x1x16xf32> to vector<1x16xf32>
      %585 = vector.shape_cast %584 : vector<1x16xf32> to vector<1x1x16xf32>
      %586 = vector.broadcast %585 : vector<1x1x16xf32> to vector<2x8x16xf32>
      %587 = arith.mulf %582, %586 : vector<2x8x16xf32>
      %588 = arith.addf %580, %587 : vector<2x8x16xf32>
      %589 = vector.extract_strided_slice %451 {offsets = [0, 0, 17, 0], sizes = [2, 1, 8, 16], strides = [1, 1, 1, 1]} : vector<2x1x32x16xf32> to vector<2x1x8x16xf32>
      %590 = vector.shape_cast %589 : vector<2x1x8x16xf32> to vector<2x8x16xf32>
      %c17 = arith.constant 17 : index
      %c0_384 = arith.constant 0 : index
      %c0_385 = arith.constant 0 : index
      %c0_386 = arith.constant 0 : index
      %591 = vector.load %arg4[%c17, %c0_384, %c0_385, %c0_386] : memref<25x1x1x16xf32, #tpu.memory_space<vmem>>, vector<1x1x1x16xf32>
      %592 = vector.shape_cast %591 : vector<1x1x1x16xf32> to vector<1x16xf32>
      %593 = vector.shape_cast %592 : vector<1x16xf32> to vector<1x1x16xf32>
      %594 = vector.broadcast %593 : vector<1x1x16xf32> to vector<2x8x16xf32>
      %595 = arith.mulf %590, %594 : vector<2x8x16xf32>
      %596 = arith.addf %588, %595 : vector<2x8x16xf32>
      %597 = vector.extract_strided_slice %451 {offsets = [0, 0, 18, 0], sizes = [2, 1, 8, 16], strides = [1, 1, 1, 1]} : vector<2x1x32x16xf32> to vector<2x1x8x16xf32>
      %598 = vector.shape_cast %597 : vector<2x1x8x16xf32> to vector<2x8x16xf32>
      %c18 = arith.constant 18 : index
      %c0_387 = arith.constant 0 : index
      %c0_388 = arith.constant 0 : index
      %c0_389 = arith.constant 0 : index
      %599 = vector.load %arg4[%c18, %c0_387, %c0_388, %c0_389] : memref<25x1x1x16xf32, #tpu.memory_space<vmem>>, vector<1x1x1x16xf32>
      %600 = vector.shape_cast %599 : vector<1x1x1x16xf32> to vector<1x16xf32>
      %601 = vector.shape_cast %600 : vector<1x16xf32> to vector<1x1x16xf32>
      %602 = vector.broadcast %601 : vector<1x1x16xf32> to vector<2x8x16xf32>
      %603 = arith.mulf %598, %602 : vector<2x8x16xf32>
      %604 = arith.addf %596, %603 : vector<2x8x16xf32>
      %605 = vector.extract_strided_slice %451 {offsets = [0, 0, 19, 0], sizes = [2, 1, 8, 16], strides = [1, 1, 1, 1]} : vector<2x1x32x16xf32> to vector<2x1x8x16xf32>
      %606 = vector.shape_cast %605 : vector<2x1x8x16xf32> to vector<2x8x16xf32>
      %c19 = arith.constant 19 : index
      %c0_390 = arith.constant 0 : index
      %c0_391 = arith.constant 0 : index
      %c0_392 = arith.constant 0 : index
      %607 = vector.load %arg4[%c19, %c0_390, %c0_391, %c0_392] : memref<25x1x1x16xf32, #tpu.memory_space<vmem>>, vector<1x1x1x16xf32>
      %608 = vector.shape_cast %607 : vector<1x1x1x16xf32> to vector<1x16xf32>
      %609 = vector.shape_cast %608 : vector<1x16xf32> to vector<1x1x16xf32>
      %610 = vector.broadcast %609 : vector<1x1x16xf32> to vector<2x8x16xf32>
      %611 = arith.mulf %606, %610 : vector<2x8x16xf32>
      %612 = arith.addf %604, %611 : vector<2x8x16xf32>
      %613 = vector.extract_strided_slice %451 {offsets = [0, 0, 20, 0], sizes = [2, 1, 8, 16], strides = [1, 1, 1, 1]} : vector<2x1x32x16xf32> to vector<2x1x8x16xf32>
      %614 = vector.shape_cast %613 : vector<2x1x8x16xf32> to vector<2x8x16xf32>
      %c20 = arith.constant 20 : index
      %c0_393 = arith.constant 0 : index
      %c0_394 = arith.constant 0 : index
      %c0_395 = arith.constant 0 : index
      %615 = vector.load %arg4[%c20, %c0_393, %c0_394, %c0_395] : memref<25x1x1x16xf32, #tpu.memory_space<vmem>>, vector<1x1x1x16xf32>
      %616 = vector.shape_cast %615 : vector<1x1x1x16xf32> to vector<1x16xf32>
      %617 = vector.shape_cast %616 : vector<1x16xf32> to vector<1x1x16xf32>
      %618 = vector.broadcast %617 : vector<1x1x16xf32> to vector<2x8x16xf32>
      %619 = arith.mulf %614, %618 : vector<2x8x16xf32>
      %620 = arith.addf %612, %619 : vector<2x8x16xf32>
      %621 = vector.extract_strided_slice %451 {offsets = [0, 0, 21, 0], sizes = [2, 1, 8, 16], strides = [1, 1, 1, 1]} : vector<2x1x32x16xf32> to vector<2x1x8x16xf32>
      %622 = vector.shape_cast %621 : vector<2x1x8x16xf32> to vector<2x8x16xf32>
      %c21 = arith.constant 21 : index
      %c0_396 = arith.constant 0 : index
      %c0_397 = arith.constant 0 : index
      %c0_398 = arith.constant 0 : index
      %623 = vector.load %arg4[%c21, %c0_396, %c0_397, %c0_398] : memref<25x1x1x16xf32, #tpu.memory_space<vmem>>, vector<1x1x1x16xf32>
      %624 = vector.shape_cast %623 : vector<1x1x1x16xf32> to vector<1x16xf32>
      %625 = vector.shape_cast %624 : vector<1x16xf32> to vector<1x1x16xf32>
      %626 = vector.broadcast %625 : vector<1x1x16xf32> to vector<2x8x16xf32>
      %627 = arith.mulf %622, %626 : vector<2x8x16xf32>
      %628 = arith.addf %620, %627 : vector<2x8x16xf32>
      %629 = vector.extract_strided_slice %451 {offsets = [0, 0, 22, 0], sizes = [2, 1, 8, 16], strides = [1, 1, 1, 1]} : vector<2x1x32x16xf32> to vector<2x1x8x16xf32>
      %630 = vector.shape_cast %629 : vector<2x1x8x16xf32> to vector<2x8x16xf32>
      %c22 = arith.constant 22 : index
      %c0_399 = arith.constant 0 : index
      %c0_400 = arith.constant 0 : index
      %c0_401 = arith.constant 0 : index
      %631 = vector.load %arg4[%c22, %c0_399, %c0_400, %c0_401] : memref<25x1x1x16xf32, #tpu.memory_space<vmem>>, vector<1x1x1x16xf32>
      %632 = vector.shape_cast %631 : vector<1x1x1x16xf32> to vector<1x16xf32>
      %633 = vector.shape_cast %632 : vector<1x16xf32> to vector<1x1x16xf32>
      %634 = vector.broadcast %633 : vector<1x1x16xf32> to vector<2x8x16xf32>
      %635 = arith.mulf %630, %634 : vector<2x8x16xf32>
      %636 = arith.addf %628, %635 : vector<2x8x16xf32>
      %637 = vector.extract_strided_slice %451 {offsets = [0, 0, 23, 0], sizes = [2, 1, 8, 16], strides = [1, 1, 1, 1]} : vector<2x1x32x16xf32> to vector<2x1x8x16xf32>
      %638 = vector.shape_cast %637 : vector<2x1x8x16xf32> to vector<2x8x16xf32>
      %c23 = arith.constant 23 : index
      %c0_402 = arith.constant 0 : index
      %c0_403 = arith.constant 0 : index
      %c0_404 = arith.constant 0 : index
      %639 = vector.load %arg4[%c23, %c0_402, %c0_403, %c0_404] : memref<25x1x1x16xf32, #tpu.memory_space<vmem>>, vector<1x1x1x16xf32>
      %640 = vector.shape_cast %639 : vector<1x1x1x16xf32> to vector<1x16xf32>
      %641 = vector.shape_cast %640 : vector<1x16xf32> to vector<1x1x16xf32>
      %642 = vector.broadcast %641 : vector<1x1x16xf32> to vector<2x8x16xf32>
      %643 = arith.mulf %638, %642 : vector<2x8x16xf32>
      %644 = arith.addf %636, %643 : vector<2x8x16xf32>
      %645 = vector.extract_strided_slice %451 {offsets = [0, 0, 24, 0], sizes = [2, 1, 8, 16], strides = [1, 1, 1, 1]} : vector<2x1x32x16xf32> to vector<2x1x8x16xf32>
      %646 = vector.shape_cast %645 : vector<2x1x8x16xf32> to vector<2x8x16xf32>
      %c24 = arith.constant 24 : index
      %c0_405 = arith.constant 0 : index
      %c0_406 = arith.constant 0 : index
      %c0_407 = arith.constant 0 : index
      %647 = vector.load %arg4[%c24, %c0_405, %c0_406, %c0_407] : memref<25x1x1x16xf32, #tpu.memory_space<vmem>>, vector<1x1x1x16xf32>
      %648 = vector.shape_cast %647 : vector<1x1x1x16xf32> to vector<1x16xf32>
      %649 = vector.shape_cast %648 : vector<1x16xf32> to vector<1x1x16xf32>
      %650 = vector.broadcast %649 : vector<1x1x16xf32> to vector<2x8x16xf32>
      %651 = arith.mulf %646, %650 : vector<2x8x16xf32>
      %652 = arith.addf %644, %651 : vector<2x8x16xf32>
      %c0_408 = arith.constant 0 : index
      %c0_409 = arith.constant 0 : index
      %653 = vector.load %arg5[%c0_408, %c0_409] : memref<1x16xf32, #tpu.memory_space<vmem>>, vector<1x16xf32>
      %654 = vector.shape_cast %653 : vector<1x16xf32> to vector<1x1x16xf32>
      %655 = vector.broadcast %654 : vector<1x1x16xf32> to vector<2x8x16xf32>
      %656 = arith.addf %652, %655 : vector<2x8x16xf32>
      %cst_410 = arith.constant 5.000000e-01 : f32
      %657 = vector.broadcast %cst_410 : f32 to vector<2x8x16xf32>
      %658 = arith.mulf %657, %656 : vector<2x8x16xf32>
      %cst_411 = arith.constant 4.471500e-02 : f32
      %659 = vector.broadcast %cst_411 : f32 to vector<2x8x16xf32>
      %660 = arith.mulf %659, %656 : vector<2x8x16xf32>
      %661 = arith.mulf %660, %656 : vector<2x8x16xf32>
      %662 = arith.mulf %661, %656 : vector<2x8x16xf32>
      %663 = arith.addf %656, %662 : vector<2x8x16xf32>
      %cst_412 = arith.constant 0.797884583 : f32
      %664 = vector.broadcast %cst_412 : f32 to vector<2x8x16xf32>
      %665 = arith.mulf %664, %663 : vector<2x8x16xf32>
      %666 = math.tanh %665 : vector<2x8x16xf32>
      %cst_413 = arith.constant 1.000000e+00 : f32
      %667 = vector.broadcast %cst_413 : f32 to vector<2x8x16xf32>
      %668 = arith.addf %667, %666 : vector<2x8x16xf32>
      %669 = arith.mulf %658, %668 : vector<2x8x16xf32>
      %670 = arith.addf %450, %669 : vector<2x8x16xf32>
      %cst_414 = arith.constant dense<0.000000e+00> : vector<2x8xf32>
      %671 = vector.multi_reduction <add>, %670, %cst_414 [2] : vector<2x8x16xf32> to vector<2x8xf32>
      %672 = vector.shape_cast %671 : vector<2x8xf32> to vector<2x8x1xf32>
      %cst_415 = arith.constant 1.600000e+01 : f32
      %673 = vector.broadcast %cst_415 : f32 to vector<2x8x1xf32>
      %674 = arith.divf %672, %673 : vector<2x8x1xf32>
      %675 = vector.broadcast %674 : vector<2x8x1xf32> to vector<2x8x16xf32>
      %676 = arith.subf %670, %675 : vector<2x8x16xf32>
      %677 = vector.broadcast %674 : vector<2x8x1xf32> to vector<2x8x16xf32>
      %678 = arith.subf %670, %677 : vector<2x8x16xf32>
      %679 = arith.mulf %676, %678 : vector<2x8x16xf32>
      %cst_416 = arith.constant dense<0.000000e+00> : vector<2x8xf32>
      %680 = vector.multi_reduction <add>, %679, %cst_416 [2] : vector<2x8x16xf32> to vector<2x8xf32>
      %681 = vector.shape_cast %680 : vector<2x8xf32> to vector<2x8x1xf32>
      %cst_417 = arith.constant 1.600000e+01 : f32
      %682 = vector.broadcast %cst_417 : f32 to vector<2x8x1xf32>
      %683 = arith.divf %681, %682 : vector<2x8x1xf32>
      %684 = vector.broadcast %674 : vector<2x8x1xf32> to vector<2x8x16xf32>
      %685 = arith.subf %670, %684 : vector<2x8x16xf32>
      %cst_418 = arith.constant 9.99999974E-6 : f32
      %686 = vector.broadcast %cst_418 : f32 to vector<2x8x1xf32>
      %687 = arith.addf %683, %686 : vector<2x8x1xf32>
      %688 = math.rsqrt %687 : vector<2x8x1xf32>
      %689 = vector.broadcast %688 : vector<2x8x1xf32> to vector<2x8x16xf32>
      %690 = arith.mulf %685, %689 : vector<2x8x16xf32>
      %c0_419 = arith.constant 0 : index
      %c0_420 = arith.constant 0 : index
      %691 = vector.load %arg6[%c0_419, %c0_420] : memref<1x16xf32, #tpu.memory_space<vmem>>, vector<1x16xf32>
      %692 = vector.shape_cast %691 : vector<1x16xf32> to vector<1x1x16xf32>
      %693 = vector.broadcast %692 : vector<1x1x16xf32> to vector<2x8x16xf32>
      %694 = arith.mulf %690, %693 : vector<2x8x16xf32>
      %c0_421 = arith.constant 0 : index
      %c0_422 = arith.constant 0 : index
      %695 = vector.load %arg7[%c0_421, %c0_422] : memref<1x16xf32, #tpu.memory_space<vmem>>, vector<1x16xf32>
      %696 = vector.shape_cast %695 : vector<1x16xf32> to vector<1x1x16xf32>
      %697 = vector.broadcast %696 : vector<1x1x16xf32> to vector<2x8x16xf32>
      %698 = arith.addf %694, %697 : vector<2x8x16xf32>
      %699 = vector.shape_cast %698 : vector<2x8x16xf32> to vector<16x16xf32>
      %700 = arith.truncf %699 : vector<16x16xf32> to vector<16x16xbf16>
      %c0_423 = arith.constant 0 : index
      %c0_424 = arith.constant 0 : index
      %701 = vector.load %arg8[%c0_423, %c0_424] : memref<16x48xbf16, #tpu.memory_space<vmem>>, vector<16x48xbf16>
      %cst_425 = arith.constant dense<0.000000e+00> : vector<16x48xf32>
      %702 = tpu.matmul %700, %701, %cst_425 {dimension_numbers = #tpu.dot_dimension_numbers<[1], [0], [0], [1], [0, 0, 1, 1], [], []>} : vector<16x16xbf16>, vector<16x48xbf16>, vector<16x48xf32> -> vector<16x48xf32>
      %c0_426 = arith.constant 0 : index
      %c0_427 = arith.constant 0 : index
      %703 = vector.load %arg9[%c0_426, %c0_427] : memref<1x48xf32, #tpu.memory_space<vmem>>, vector<1x48xf32>
      %704 = vector.broadcast %703 : vector<1x48xf32> to vector<16x48xf32>
      %705 = arith.addf %702, %704 : vector<16x48xf32>
      %706 = vector.shape_cast %705 : vector<16x48xf32> to vector<2x8x48xf32>
      %cst_428 = arith.constant -5.000000e+00 : f32
      %707 = vector.broadcast %cst_428 : f32 to vector<2x1x48xf32>
      %cst_429 = arith.constant 0.000000e+00 : f32
      %708 = vector.broadcast %cst_429 : f32 to vector<2x7x48xf32>
      %709 = tpu.concatenate %707, %706, %708 in 1 : vector<2x1x48xf32>, vector<2x8x48xf32>, vector<2x7x48xf32> -> vector<2x16x48xf32>
      %c0_430 = arith.constant 0 : index
      %c0_431 = arith.constant 0 : index
      %c0_432 = arith.constant 0 : index
      %710 = vector.load %arg25[%c0_430, %c0_431, %c0_432] : memref<2x16x48xf32, #tpu.memory_space<vmem>>, vector<2x16x48xf32>
      tpu.vector_store %arg25[%c0_430, %c0_431, %c0_432], %709 {strides = array<i32>} : memref<2x16x48xf32, #tpu.memory_space<vmem>>, vector<2x16x48xf32>,
    } else {
    }
    %c0 = arith.constant 0 : index
    %c0_1 = arith.constant 0 : index
    %c0_2 = arith.constant 0 : index
    %3 = vector.load %arg25[%c0, %c0_1, %c0_2] : memref<2x16x48xf32, #tpu.memory_space<vmem>>, vector<2x16x48xf32>
    %4 = vector.shape_cast %3 : vector<2x16x48xf32> to vector<32x48xf32>
    %5 = arith.truncf %4 : vector<32x48xf32> to vector<32x48xbf16>
    %6 = tpu.iota {dimensions = array<i32: 2>} : vector<1x1x16xi32>
    %c9_i32 = arith.constant 9 : i32
    %7 = vector.broadcast %c9_i32 : i32 to vector<1x1x16xi32>
    %8 = arith.cmpi slt, %6, %7 : vector<1x1x16xi32>
    %cst = arith.constant 0.000000e+00 : f32
    %9 = vector.broadcast %cst : f32 to vector<32x48xf32>
    %c0_3 = arith.constant 0 : index
    %c0_4 = arith.constant 0 : index
    %c0_5 = arith.constant 0 : index
    %c0_6 = arith.constant 0 : index
    %10 = vector.load %arg10[%c0_3, %c0_4, %c0_5, %c0_6] : memref<1x8x48x6xbf16, #tpu.memory_space<vmem>>, vector<1x1x48x6xbf16>
    %11 = vector.shape_cast %10 : vector<1x1x48x6xbf16> to vector<48x6xbf16>
    %cst_7 = arith.constant dense<0.000000e+00> : vector<32x6xf32>
    %12 = tpu.matmul %5, %11, %cst_7 {dimension_numbers = #tpu.dot_dimension_numbers<[1], [0], [0], [1], [0, 0, 1, 1], [], []>} : vector<32x48xbf16>, vector<48x6xbf16>, vector<32x6xf32> -> vector<32x6xf32>
    %c0_8 = arith.constant 0 : index
    %c0_9 = arith.constant 0 : index
    %c0_10 = arith.constant 0 : index
    %c0_11 = arith.constant 0 : index
    %13 = vector.load %arg13[%c0_8, %c0_9, %c0_10, %c0_11] : memref<1x8x1x6xf32, #tpu.memory_space<vmem>>, vector<1x1x1x6xf32>
    %14 = vector.shape_cast %13 : vector<1x1x1x6xf32> to vector<1x6xf32>
    %15 = vector.broadcast %14 : vector<1x6xf32> to vector<32x6xf32>
    %16 = arith.addf %12, %15 : vector<32x6xf32>
    %17 = vector.shape_cast %16 : vector<32x6xf32> to vector<2x16x6xf32>
    %c0_12 = arith.constant 0 : index
    %c0_13 = arith.constant 0 : index
    %c0_14 = arith.constant 0 : index
    %c0_15 = arith.constant 0 : index
    %18 = vector.load %arg11[%c0_12, %c0_13, %c0_14, %c0_15] : memref<1x8x48x6xbf16, #tpu.memory_space<vmem>>, vector<1x1x48x6xbf16>
    %19 = vector.shape_cast %18 : vector<1x1x48x6xbf16> to vector<48x6xbf16>
    %cst_16 = arith.constant dense<0.000000e+00> : vector<32x6xf32>
    %20 = tpu.matmul %5, %19, %cst_16 {dimension_numbers = #tpu.dot_dimension_numbers<[1], [0], [0], [1], [0, 0, 1, 1], [], []>} : vector<32x48xbf16>, vector<48x6xbf16>, vector<32x6xf32> -> vector<32x6xf32>
    %c0_17 = arith.constant 0 : index
    %c0_18 = arith.constant 0 : index
    %c0_19 = arith.constant 0 : index
    %c0_20 = arith.constant 0 : index
    %21 = vector.load %arg14[%c0_17, %c0_18, %c0_19, %c0_20] : memref<1x8x1x6xf32, #tpu.memory_space<vmem>>, vector<1x1x1x6xf32>
    %22 = vector.shape_cast %21 : vector<1x1x1x6xf32> to vector<1x6xf32>
    %23 = vector.broadcast %22 : vector<1x6xf32> to vector<32x6xf32>
    %24 = arith.addf %20, %23 : vector<32x6xf32>
    %25 = vector.shape_cast %24 : vector<32x6xf32> to vector<2x16x6xf32>
    %c0_21 = arith.constant 0 : index
    %c0_22 = arith.constant 0 : index
    %c0_23 = arith.constant 0 : index
    %c0_24 = arith.constant 0 : index
    %26 = vector.load %arg12[%c0_21, %c0_22, %c0_23, %c0_24] : memref<1x8x48x6xbf16, #tpu.memory_space<vmem>>, vector<1x1x48x6xbf16>
    %27 = vector.shape_cast %26 : vector<1x1x48x6xbf16> to vector<48x6xbf16>
    %cst_25 = arith.constant dense<0.000000e+00> : vector<32x6xf32>
    %28 = tpu.matmul %5, %27, %cst_25 {dimension_numbers = #tpu.dot_dimension_numbers<[1], [0], [0], [1], [0, 0, 1, 1], [], []>} : vector<32x48xbf16>, vector<48x6xbf16>, vector<32x6xf32> -> vector<32x6xf32>
    %c0_26 = arith.constant 0 : index
    %c0_27 = arith.constant 0 : index
    %c0_28 = arith.constant 0 : index
    %c0_29 = arith.constant 0 : index
    %29 = vector.load %arg15[%c0_26, %c0_27, %c0_28, %c0_29] : memref<1x8x1x6xf32, #tpu.memory_space<vmem>>, vector<1x1x1x6xf32>
    %30 = vector.shape_cast %29 : vector<1x1x1x6xf32> to vector<1x6xf32>
    %31 = vector.broadcast %30 : vector<1x6xf32> to vector<32x6xf32>
    %32 = arith.addf %28, %31 : vector<32x6xf32>
    %33 = vector.shape_cast %32 : vector<32x6xf32> to vector<2x16x6xf32>
    %34 = arith.truncf %17 : vector<2x16x6xf32> to vector<2x16x6xbf16>
    %35 = arith.truncf %25 : vector<2x16x6xf32> to vector<2x16x6xbf16>
    "tpu.trace_start"() <{level = 10 : i32, message = "bqd,bkd->bqk"}> : () -> ()
    %cst_30 = arith.constant dense<0.000000e+00> : vector<2x16x16xf32>
    %36 = tpu.matmul %34, %35, %cst_30 {dimension_numbers = #tpu.dot_dimension_numbers<[2], [2], [1], [1], [0, 0, 0, 1, 1, 1], [0], [0]>} : vector<2x16x6xbf16>, vector<2x16x6xbf16>, vector<2x16x16xf32> -> vector<2x16x16xf32>
    %cst_31 = arith.constant -1.000000e+30 : f32
    "tpu.trace_stop"() : () -> ()
    %37 = vector.shape_cast %8 : vector<1x1x16xi1> to vector<1x1x16xi1>
    %38 = vector.broadcast %37 : vector<1x1x16xi1> to vector<2x16x16xi1>
    %39 = vector.broadcast %cst_31 : f32 to vector<2x16x16xf32>
    %40 = arith.select %38, %36, %39 : vector<2x16x16xi1>, vector<2x16x16xf32>
    %cst_32 = arith.constant dense<0xFF800000> : vector<2x16xf32>
    %41 = vector.multi_reduction <maximumf>, %40, %cst_32 [2] : vector<2x16x16xf32> to vector<2x16xf32>
    %42 = vector.shape_cast %41 : vector<2x16xf32> to vector<2x16x1xf32>
    %43 = vector.broadcast %42 : vector<2x16x1xf32> to vector<2x16x16xf32>
    %44 = arith.subf %40, %43 : vector<2x16x16xf32>
    %45 = math.exp %44 : vector<2x16x16xf32>
    %cst_33 = arith.constant dense<0.000000e+00> : vector<2x16xf32>
    %46 = vector.multi_reduction <add>, %45, %cst_33 [2] : vector<2x16x16xf32> to vector<2x16xf32>
    %47 = vector.shape_cast %46 : vector<2x16xf32> to vector<2x16x1xf32>
    %48 = tpu.reciprocal %47 {approx = true} : vector<2x16x1xf32> -> vector<2x16x1xf32>
    %49 = vector.broadcast %48 : vector<2x16x1xf32> to vector<2x16x16xf32>
    %50 = arith.mulf %45, %49 : vector<2x16x16xf32>
    %51 = arith.truncf %50 : vector<2x16x16xf32> to vector<2x16x16xbf16>
    %52 = arith.truncf %33 : vector<2x16x6xf32> to vector<2x16x6xbf16>
    "tpu.trace_start"() <{level = 10 : i32, message = "bqk,bkd->bqd"}> : () -> ()
    %cst_34 = arith.constant dense<0.000000e+00> : vector<2x16x6xf32>
    %53 = tpu.matmul %51, %52, %cst_34 {dimension_numbers = #tpu.dot_dimension_numbers<[2], [1], [1], [2], [0, 0, 0, 1, 1, 2], [0], [0]>} : vector<2x16x16xbf16>, vector<2x16x6xbf16>, vector<2x16x6xf32> -> vector<2x16x6xf32>
    "tpu.trace_stop"() : () -> ()
    %54 = vector.shape_cast %53 : vector<2x16x6xf32> to vector<32x6xf32>
    %55 = arith.truncf %54 : vector<32x6xf32> to vector<32x6xbf16>
    %c0_35 = arith.constant 0 : index
    %c0_36 = arith.constant 0 : index
    %c0_37 = arith.constant 0 : index
    %c0_38 = arith.constant 0 : index
    %56 = vector.load %arg16[%c0_35, %c0_36, %c0_37, %c0_38] : memref<1x8x6x48xbf16, #tpu.memory_space<vmem>>, vector<1x1x6x48xbf16>
    %57 = vector.shape_cast %56 : vector<1x1x6x48xbf16> to vector<6x48xbf16>
    %cst_39 = arith.constant dense<0.000000e+00> : vector<32x48xf32>
    %58 = tpu.matmul %55, %57, %cst_39 {dimension_numbers = #tpu.dot_dimension_numbers<[1], [0], [0], [1], [0, 0, 1, 1], [], []>} : vector<32x6xbf16>, vector<6x48xbf16>, vector<32x48xf32> -> vector<32x48xf32>
    %59 = arith.addf %9, %58 : vector<32x48xf32>
    %c0_40 = arith.constant 0 : index
    %c1 = arith.constant 1 : index
    %c0_41 = arith.constant 0 : index
    %c0_42 = arith.constant 0 : index
    %60 = vector.load %arg10[%c0_40, %c1, %c0_41, %c0_42] : memref<1x8x48x6xbf16, #tpu.memory_space<vmem>>, vector<1x1x48x6xbf16>
    %61 = vector.shape_cast %60 : vector<1x1x48x6xbf16> to vector<48x6xbf16>
    %cst_43 = arith.constant dense<0.000000e+00> : vector<32x6xf32>
    %62 = tpu.matmul %5, %61, %cst_43 {dimension_numbers = #tpu.dot_dimension_numbers<[1], [0], [0], [1], [0, 0, 1, 1], [], []>} : vector<32x48xbf16>, vector<48x6xbf16>, vector<32x6xf32> -> vector<32x6xf32>
    %c0_44 = arith.constant 0 : index
    %c1_45 = arith.constant 1 : index
    %c0_46 = arith.constant 0 : index
    %c0_47 = arith.constant 0 : index
    %63 = vector.load %arg13[%c0_44, %c1_45, %c0_46, %c0_47] : memref<1x8x1x6xf32, #tpu.memory_space<vmem>>, vector<1x1x1x6xf32>
    %64 = vector.shape_cast %63 : vector<1x1x1x6xf32> to vector<1x6xf32>
    %65 = vector.broadcast %64 : vector<1x6xf32> to vector<32x6xf32>
    %66 = arith.addf %62, %65 : vector<32x6xf32>
    %67 = vector.shape_cast %66 : vector<32x6xf32> to vector<2x16x6xf32>
    %c0_48 = arith.constant 0 : index
    %c1_49 = arith.constant 1 : index
    %c0_50 = arith.constant 0 : index
    %c0_51 = arith.constant 0 : index
    %68 = vector.load %arg11[%c0_48, %c1_49, %c0_50, %c0_51] : memref<1x8x48x6xbf16, #tpu.memory_space<vmem>>, vector<1x1x48x6xbf16>
    %69 = vector.shape_cast %68 : vector<1x1x48x6xbf16> to vector<48x6xbf16>
    %cst_52 = arith.constant dense<0.000000e+00> : vector<32x6xf32>
    %70 = tpu.matmul %5, %69, %cst_52 {dimension_numbers = #tpu.dot_dimension_numbers<[1], [0], [0], [1], [0, 0, 1, 1], [], []>} : vector<32x48xbf16>, vector<48x6xbf16>, vector<32x6xf32> -> vector<32x6xf32>
    %c0_53 = arith.constant 0 : index
    %c1_54 = arith.constant 1 : index
    %c0_55 = arith.constant 0 : index
    %c0_56 = arith.constant 0 : index
    %71 = vector.load %arg14[%c0_53, %c1_54, %c0_55, %c0_56] : memref<1x8x1x6xf32, #tpu.memory_space<vmem>>, vector<1x1x1x6xf32>
    %72 = vector.shape_cast %71 : vector<1x1x1x6xf32> to vector<1x6xf32>
    %73 = vector.broadcast %72 : vector<1x6xf32> to vector<32x6xf32>
    %74 = arith.addf %70, %73 : vector<32x6xf32>
    %75 = vector.shape_cast %74 : vector<32x6xf32> to vector<2x16x6xf32>
    %c0_57 = arith.constant 0 : index
    %c1_58 = arith.constant 1 : index
    %c0_59 = arith.constant 0 : index
    %c0_60 = arith.constant 0 : index
    %76 = vector.load %arg12[%c0_57, %c1_58, %c0_59, %c0_60] : memref<1x8x48x6xbf16, #tpu.memory_space<vmem>>, vector<1x1x48x6xbf16>
    %77 = vector.shape_cast %76 : vector<1x1x48x6xbf16> to vector<48x6xbf16>
    %cst_61 = arith.constant dense<0.000000e+00> : vector<32x6xf32>
    %78 = tpu.matmul %5, %77, %cst_61 {dimension_numbers = #tpu.dot_dimension_numbers<[1], [0], [0], [1], [0, 0, 1, 1], [], []>} : vector<32x48xbf16>, vector<48x6xbf16>, vector<32x6xf32> -> vector<32x6xf32>
    %c0_62 = arith.constant 0 : index
    %c1_63 = arith.constant 1 : index
    %c0_64 = arith.constant 0 : index
    %c0_65 = arith.constant 0 : index
    %79 = vector.load %arg15[%c0_62, %c1_63, %c0_64, %c0_65] : memref<1x8x1x6xf32, #tpu.memory_space<vmem>>, vector<1x1x1x6xf32>
    %80 = vector.shape_cast %79 : vector<1x1x1x6xf32> to vector<1x6xf32>
    %81 = vector.broadcast %80 : vector<1x6xf32> to vector<32x6xf32>
    %82 = arith.addf %78, %81 : vector<32x6xf32>
    %83 = vector.shape_cast %82 : vector<32x6xf32> to vector<2x16x6xf32>
    %84 = arith.truncf %67 : vector<2x16x6xf32> to vector<2x16x6xbf16>
    %85 = arith.truncf %75 : vector<2x16x6xf32> to vector<2x16x6xbf16>
    "tpu.trace_start"() <{level = 10 : i32, message = "bqd,bkd->bqk"}> : () -> ()
    %cst_66 = arith.constant dense<0.000000e+00> : vector<2x16x16xf32>
    %86 = tpu.matmul %84, %85, %cst_66 {dimension_numbers = #tpu.dot_dimension_numbers<[2], [2], [1], [1], [0, 0, 0, 1, 1, 1], [0], [0]>} : vector<2x16x6xbf16>, vector<2x16x6xbf16>, vector<2x16x16xf32> -> vector<2x16x16xf32>
    %cst_67 = arith.constant -1.000000e+30 : f32
    "tpu.trace_stop"() : () -> ()
    %87 = vector.shape_cast %8 : vector<1x1x16xi1> to vector<1x1x16xi1>
    %88 = vector.broadcast %87 : vector<1x1x16xi1> to vector<2x16x16xi1>
    %89 = vector.broadcast %cst_67 : f32 to vector<2x16x16xf32>
    %90 = arith.select %88, %86, %89 : vector<2x16x16xi1>, vector<2x16x16xf32>
    %cst_68 = arith.constant dense<0xFF800000> : vector<2x16xf32>
    %91 = vector.multi_reduction <maximumf>, %90, %cst_68 [2] : vector<2x16x16xf32> to vector<2x16xf32>
    %92 = vector.shape_cast %91 : vector<2x16xf32> to vector<2x16x1xf32>
    %93 = vector.broadcast %92 : vector<2x16x1xf32> to vector<2x16x16xf32>
    %94 = arith.subf %90, %93 : vector<2x16x16xf32>
    %95 = math.exp %94 : vector<2x16x16xf32>
    %cst_69 = arith.constant dense<0.000000e+00> : vector<2x16xf32>
    %96 = vector.multi_reduction <add>, %95, %cst_69 [2] : vector<2x16x16xf32> to vector<2x16xf32>
    %97 = vector.shape_cast %96 : vector<2x16xf32> to vector<2x16x1xf32>
    %98 = tpu.reciprocal %97 {approx = true} : vector<2x16x1xf32> -> vector<2x16x1xf32>
    %99 = vector.broadcast %98 : vector<2x16x1xf32> to vector<2x16x16xf32>
    %100 = arith.mulf %95, %99 : vector<2x16x16xf32>
    %101 = arith.truncf %100 : vector<2x16x16xf32> to vector<2x16x16xbf16>
    %102 = arith.truncf %83 : vector<2x16x6xf32> to vector<2x16x6xbf16>
    "tpu.trace_start"() <{level = 10 : i32, message = "bqk,bkd->bqd"}> : () -> ()
    %cst_70 = arith.constant dense<0.000000e+00> : vector<2x16x6xf32>
    %103 = tpu.matmul %101, %102, %cst_70 {dimension_numbers = #tpu.dot_dimension_numbers<[2], [1], [1], [2], [0, 0, 0, 1, 1, 2], [0], [0]>} : vector<2x16x16xbf16>, vector<2x16x6xbf16>, vector<2x16x6xf32> -> vector<2x16x6xf32>
    "tpu.trace_stop"() : () -> ()
    %104 = vector.shape_cast %103 : vector<2x16x6xf32> to vector<32x6xf32>
    %105 = arith.truncf %104 : vector<32x6xf32> to vector<32x6xbf16>
    %c0_71 = arith.constant 0 : index
    %c1_72 = arith.constant 1 : index
    %c0_73 = arith.constant 0 : index
    %c0_74 = arith.constant 0 : index
    %106 = vector.load %arg16[%c0_71, %c1_72, %c0_73, %c0_74] : memref<1x8x6x48xbf16, #tpu.memory_space<vmem>>, vector<1x1x6x48xbf16>
    %107 = vector.shape_cast %106 : vector<1x1x6x48xbf16> to vector<6x48xbf16>
    %cst_75 = arith.constant dense<0.000000e+00> : vector<32x48xf32>
    %108 = tpu.matmul %105, %107, %cst_75 {dimension_numbers = #tpu.dot_dimension_numbers<[1], [0], [0], [1], [0, 0, 1, 1], [], []>} : vector<32x6xbf16>, vector<6x48xbf16>, vector<32x48xf32> -> vector<32x48xf32>
    %109 = arith.addf %59, %108 : vector<32x48xf32>
    %c0_76 = arith.constant 0 : index
    %c2 = arith.constant 2 : index
    %c0_77 = arith.constant 0 : index
    %c0_78 = arith.constant 0 : index
    %110 = vector.load %arg10[%c0_76, %c2, %c0_77, %c0_78] : memref<1x8x48x6xbf16, #tpu.memory_space<vmem>>, vector<1x1x48x6xbf16>
    %111 = vector.shape_cast %110 : vector<1x1x48x6xbf16> to vector<48x6xbf16>
    %cst_79 = arith.constant dense<0.000000e+00> : vector<32x6xf32>
    %112 = tpu.matmul %5, %111, %cst_79 {dimension_numbers = #tpu.dot_dimension_numbers<[1], [0], [0], [1], [0, 0, 1, 1], [], []>} : vector<32x48xbf16>, vector<48x6xbf16>, vector<32x6xf32> -> vector<32x6xf32>
    %c0_80 = arith.constant 0 : index
    %c2_81 = arith.constant 2 : index
    %c0_82 = arith.constant 0 : index
    %c0_83 = arith.constant 0 : index
    %113 = vector.load %arg13[%c0_80, %c2_81, %c0_82, %c0_83] : memref<1x8x1x6xf32, #tpu.memory_space<vmem>>, vector<1x1x1x6xf32>
    %114 = vector.shape_cast %113 : vector<1x1x1x6xf32> to vector<1x6xf32>
    %115 = vector.broadcast %114 : vector<1x6xf32> to vector<32x6xf32>
    %116 = arith.addf %112, %115 : vector<32x6xf32>
    %117 = vector.shape_cast %116 : vector<32x6xf32> to vector<2x16x6xf32>
    %c0_84 = arith.constant 0 : index
    %c2_85 = arith.constant 2 : index
    %c0_86 = arith.constant 0 : index
    %c0_87 = arith.constant 0 : index
    %118 = vector.load %arg11[%c0_84, %c2_85, %c0_86, %c0_87] : memref<1x8x48x6xbf16, #tpu.memory_space<vmem>>, vector<1x1x48x6xbf16>
    %119 = vector.shape_cast %118 : vector<1x1x48x6xbf16> to vector<48x6xbf16>
    %cst_88 = arith.constant dense<0.000000e+00> : vector<32x6xf32>
    %120 = tpu.matmul %5, %119, %cst_88 {dimension_numbers = #tpu.dot_dimension_numbers<[1], [0], [0], [1], [0, 0, 1, 1], [], []>} : vector<32x48xbf16>, vector<48x6xbf16>, vector<32x6xf32> -> vector<32x6xf32>
    %c0_89 = arith.constant 0 : index
    %c2_90 = arith.constant 2 : index
    %c0_91 = arith.constant 0 : index
    %c0_92 = arith.constant 0 : index
    %121 = vector.load %arg14[%c0_89, %c2_90, %c0_91, %c0_92] : memref<1x8x1x6xf32, #tpu.memory_space<vmem>>, vector<1x1x1x6xf32>
    %122 = vector.shape_cast %121 : vector<1x1x1x6xf32> to vector<1x6xf32>
    %123 = vector.broadcast %122 : vector<1x6xf32> to vector<32x6xf32>
    %124 = arith.addf %120, %123 : vector<32x6xf32>
    %125 = vector.shape_cast %124 : vector<32x6xf32> to vector<2x16x6xf32>
    %c0_93 = arith.constant 0 : index
    %c2_94 = arith.constant 2 : index
    %c0_95 = arith.constant 0 : index
    %c0_96 = arith.constant 0 : index
    %126 = vector.load %arg12[%c0_93, %c2_94, %c0_95, %c0_96] : memref<1x8x48x6xbf16, #tpu.memory_space<vmem>>, vector<1x1x48x6xbf16>
    %127 = vector.shape_cast %126 : vector<1x1x48x6xbf16> to vector<48x6xbf16>
    %cst_97 = arith.constant dense<0.000000e+00> : vector<32x6xf32>
    %128 = tpu.matmul %5, %127, %cst_97 {dimension_numbers = #tpu.dot_dimension_numbers<[1], [0], [0], [1], [0, 0, 1, 1], [], []>} : vector<32x48xbf16>, vector<48x6xbf16>, vector<32x6xf32> -> vector<32x6xf32>
    %c0_98 = arith.constant 0 : index
    %c2_99 = arith.constant 2 : index
    %c0_100 = arith.constant 0 : index
    %c0_101 = arith.constant 0 : index
    %129 = vector.load %arg15[%c0_98, %c2_99, %c0_100, %c0_101] : memref<1x8x1x6xf32, #tpu.memory_space<vmem>>, vector<1x1x1x6xf32>
    %130 = vector.shape_cast %129 : vector<1x1x1x6xf32> to vector<1x6xf32>
    %131 = vector.broadcast %130 : vector<1x6xf32> to vector<32x6xf32>
    %132 = arith.addf %128, %131 : vector<32x6xf32>
    %133 = vector.shape_cast %132 : vector<32x6xf32> to vector<2x16x6xf32>
    %134 = arith.truncf %117 : vector<2x16x6xf32> to vector<2x16x6xbf16>
    %135 = arith.truncf %125 : vector<2x16x6xf32> to vector<2x16x6xbf16>
    "tpu.trace_start"() <{level = 10 : i32, message = "bqd,bkd->bqk"}> : () -> ()
    %cst_102 = arith.constant dense<0.000000e+00> : vector<2x16x16xf32>
    %136 = tpu.matmul %134, %135, %cst_102 {dimension_numbers = #tpu.dot_dimension_numbers<[2], [2], [1], [1], [0, 0, 0, 1, 1, 1], [0], [0]>} : vector<2x16x6xbf16>, vector<2x16x6xbf16>, vector<2x16x16xf32> -> vector<2x16x16xf32>
    %cst_103 = arith.constant -1.000000e+30 : f32
    "tpu.trace_stop"() : () -> ()
    %137 = vector.shape_cast %8 : vector<1x1x16xi1> to vector<1x1x16xi1>
    %138 = vector.broadcast %137 : vector<1x1x16xi1> to vector<2x16x16xi1>
    %139 = vector.broadcast %cst_103 : f32 to vector<2x16x16xf32>
    %140 = arith.select %138, %136, %139 : vector<2x16x16xi1>, vector<2x16x16xf32>
    %cst_104 = arith.constant dense<0xFF800000> : vector<2x16xf32>
    %141 = vector.multi_reduction <maximumf>, %140, %cst_104 [2] : vector<2x16x16xf32> to vector<2x16xf32>
    %142 = vector.shape_cast %141 : vector<2x16xf32> to vector<2x16x1xf32>
    %143 = vector.broadcast %142 : vector<2x16x1xf32> to vector<2x16x16xf32>
    %144 = arith.subf %140, %143 : vector<2x16x16xf32>
    %145 = math.exp %144 : vector<2x16x16xf32>
    %cst_105 = arith.constant dense<0.000000e+00> : vector<2x16xf32>
    %146 = vector.multi_reduction <add>, %145, %cst_105 [2] : vector<2x16x16xf32> to vector<2x16xf32>
    %147 = vector.shape_cast %146 : vector<2x16xf32> to vector<2x16x1xf32>
    %148 = tpu.reciprocal %147 {approx = true} : vector<2x16x1xf32> -> vector<2x16x1xf32>
    %149 = vector.broadcast %148 : vector<2x16x1xf32> to vector<2x16x16xf32>
    %150 = arith.mulf %145, %149 : vector<2x16x16xf32>
    %151 = arith.truncf %150 : vector<2x16x16xf32> to vector<2x16x16xbf16>
    %152 = arith.truncf %133 : vector<2x16x6xf32> to vector<2x16x6xbf16>
    "tpu.trace_start"() <{level = 10 : i32, message = "bqk,bkd->bqd"}> : () -> ()
    %cst_106 = arith.constant dense<0.000000e+00> : vector<2x16x6xf32>
    %153 = tpu.matmul %151, %152, %cst_106 {dimension_numbers = #tpu.dot_dimension_numbers<[2], [1], [1], [2], [0, 0, 0, 1, 1, 2], [0], [0]>} : vector<2x16x16xbf16>, vector<2x16x6xbf16>, vector<2x16x6xf32> -> vector<2x16x6xf32>
    "tpu.trace_stop"() : () -> ()
    %154 = vector.shape_cast %153 : vector<2x16x6xf32> to vector<32x6xf32>
    %155 = arith.truncf %154 : vector<32x6xf32> to vector<32x6xbf16>
    %c0_107 = arith.constant 0 : index
    %c2_108 = arith.constant 2 : index
    %c0_109 = arith.constant 0 : index
    %c0_110 = arith.constant 0 : index
    %156 = vector.load %arg16[%c0_107, %c2_108, %c0_109, %c0_110] : memref<1x8x6x48xbf16, #tpu.memory_space<vmem>>, vector<1x1x6x48xbf16>
    %157 = vector.shape_cast %156 : vector<1x1x6x48xbf16> to vector<6x48xbf16>
    %cst_111 = arith.constant dense<0.000000e+00> : vector<32x48xf32>
    %158 = tpu.matmul %155, %157, %cst_111 {dimension_numbers = #tpu.dot_dimension_numbers<[1], [0], [0], [1], [0, 0, 1, 1], [], []>} : vector<32x6xbf16>, vector<6x48xbf16>, vector<32x48xf32> -> vector<32x48xf32>
    %159 = arith.addf %109, %158 : vector<32x48xf32>
    %c0_112 = arith.constant 0 : index
    %c3 = arith.constant 3 : index
    %c0_113 = arith.constant 0 : index
    %c0_114 = arith.constant 0 : index
    %160 = vector.load %arg10[%c0_112, %c3, %c0_113, %c0_114] : memref<1x8x48x6xbf16, #tpu.memory_space<vmem>>, vector<1x1x48x6xbf16>
    %161 = vector.shape_cast %160 : vector<1x1x48x6xbf16> to vector<48x6xbf16>
    %cst_115 = arith.constant dense<0.000000e+00> : vector<32x6xf32>
    %162 = tpu.matmul %5, %161, %cst_115 {dimension_numbers = #tpu.dot_dimension_numbers<[1], [0], [0], [1], [0, 0, 1, 1], [], []>} : vector<32x48xbf16>, vector<48x6xbf16>, vector<32x6xf32> -> vector<32x6xf32>
    %c0_116 = arith.constant 0 : index
    %c3_117 = arith.constant 3 : index
    %c0_118 = arith.constant 0 : index
    %c0_119 = arith.constant 0 : index
    %163 = vector.load %arg13[%c0_116, %c3_117, %c0_118, %c0_119] : memref<1x8x1x6xf32, #tpu.memory_space<vmem>>, vector<1x1x1x6xf32>
    %164 = vector.shape_cast %163 : vector<1x1x1x6xf32> to vector<1x6xf32>
    %165 = vector.broadcast %164 : vector<1x6xf32> to vector<32x6xf32>
    %166 = arith.addf %162, %165 : vector<32x6xf32>
    %167 = vector.shape_cast %166 : vector<32x6xf32> to vector<2x16x6xf32>
    %c0_120 = arith.constant 0 : index
    %c3_121 = arith.constant 3 : index
    %c0_122 = arith.constant 0 : index
    %c0_123 = arith.constant 0 : index
    %168 = vector.load %arg11[%c0_120, %c3_121, %c0_122, %c0_123] : memref<1x8x48x6xbf16, #tpu.memory_space<vmem>>, vector<1x1x48x6xbf16>
    %169 = vector.shape_cast %168 : vector<1x1x48x6xbf16> to vector<48x6xbf16>
    %cst_124 = arith.constant dense<0.000000e+00> : vector<32x6xf32>
    %170 = tpu.matmul %5, %169, %cst_124 {dimension_numbers = #tpu.dot_dimension_numbers<[1], [0], [0], [1], [0, 0, 1, 1], [], []>} : vector<32x48xbf16>, vector<48x6xbf16>, vector<32x6xf32> -> vector<32x6xf32>
    %c0_125 = arith.constant 0 : index
    %c3_126 = arith.constant 3 : index
    %c0_127 = arith.constant 0 : index
    %c0_128 = arith.constant 0 : index
    %171 = vector.load %arg14[%c0_125, %c3_126, %c0_127, %c0_128] : memref<1x8x1x6xf32, #tpu.memory_space<vmem>>, vector<1x1x1x6xf32>
    %172 = vector.shape_cast %171 : vector<1x1x1x6xf32> to vector<1x6xf32>
    %173 = vector.broadcast %172 : vector<1x6xf32> to vector<32x6xf32>
    %174 = arith.addf %170, %173 : vector<32x6xf32>
    %175 = vector.shape_cast %174 : vector<32x6xf32> to vector<2x16x6xf32>
    %c0_129 = arith.constant 0 : index
    %c3_130 = arith.constant 3 : index
    %c0_131 = arith.constant 0 : index
    %c0_132 = arith.constant 0 : index
    %176 = vector.load %arg12[%c0_129, %c3_130, %c0_131, %c0_132] : memref<1x8x48x6xbf16, #tpu.memory_space<vmem>>, vector<1x1x48x6xbf16>
    %177 = vector.shape_cast %176 : vector<1x1x48x6xbf16> to vector<48x6xbf16>
    %cst_133 = arith.constant dense<0.000000e+00> : vector<32x6xf32>
    %178 = tpu.matmul %5, %177, %cst_133 {dimension_numbers = #tpu.dot_dimension_numbers<[1], [0], [0], [1], [0, 0, 1, 1], [], []>} : vector<32x48xbf16>, vector<48x6xbf16>, vector<32x6xf32> -> vector<32x6xf32>
    %c0_134 = arith.constant 0 : index
    %c3_135 = arith.constant 3 : index
    %c0_136 = arith.constant 0 : index
    %c0_137 = arith.constant 0 : index
    %179 = vector.load %arg15[%c0_134, %c3_135, %c0_136, %c0_137] : memref<1x8x1x6xf32, #tpu.memory_space<vmem>>, vector<1x1x1x6xf32>
    %180 = vector.shape_cast %179 : vector<1x1x1x6xf32> to vector<1x6xf32>
    %181 = vector.broadcast %180 : vector<1x6xf32> to vector<32x6xf32>
    %182 = arith.addf %178, %181 : vector<32x6xf32>
    %183 = vector.shape_cast %182 : vector<32x6xf32> to vector<2x16x6xf32>
    %184 = arith.truncf %167 : vector<2x16x6xf32> to vector<2x16x6xbf16>
    %185 = arith.truncf %175 : vector<2x16x6xf32> to vector<2x16x6xbf16>
    "tpu.trace_start"() <{level = 10 : i32, message = "bqd,bkd->bqk"}> : () -> ()
    %cst_138 = arith.constant dense<0.000000e+00> : vector<2x16x16xf32>
    %186 = tpu.matmul %184, %185, %cst_138 {dimension_numbers = #tpu.dot_dimension_numbers<[2], [2], [1], [1], [0, 0, 0, 1, 1, 1], [0], [0]>} : vector<2x16x6xbf16>, vector<2x16x6xbf16>, vector<2x16x16xf32> -> vector<2x16x16xf32>
    %cst_139 = arith.constant -1.000000e+30 : f32
    "tpu.trace_stop"() : () -> ()
    %187 = vector.shape_cast %8 : vector<1x1x16xi1> to vector<1x1x16xi1>
    %188 = vector.broadcast %187 : vector<1x1x16xi1> to vector<2x16x16xi1>
    %189 = vector.broadcast %cst_139 : f32 to vector<2x16x16xf32>
    %190 = arith.select %188, %186, %189 : vector<2x16x16xi1>, vector<2x16x16xf32>
    %cst_140 = arith.constant dense<0xFF800000> : vector<2x16xf32>
    %191 = vector.multi_reduction <maximumf>, %190, %cst_140 [2] : vector<2x16x16xf32> to vector<2x16xf32>
    %192 = vector.shape_cast %191 : vector<2x16xf32> to vector<2x16x1xf32>
    %193 = vector.broadcast %192 : vector<2x16x1xf32> to vector<2x16x16xf32>
    %194 = arith.subf %190, %193 : vector<2x16x16xf32>
    %195 = math.exp %194 : vector<2x16x16xf32>
    %cst_141 = arith.constant dense<0.000000e+00> : vector<2x16xf32>
    %196 = vector.multi_reduction <add>, %195, %cst_141 [2] : vector<2x16x16xf32> to vector<2x16xf32>
    %197 = vector.shape_cast %196 : vector<2x16xf32> to vector<2x16x1xf32>
    %198 = tpu.reciprocal %197 {approx = true} : vector<2x16x1xf32> -> vector<2x16x1xf32>
    %199 = vector.broadcast %198 : vector<2x16x1xf32> to vector<2x16x16xf32>
    %200 = arith.mulf %195, %199 : vector<2x16x16xf32>
    %201 = arith.truncf %200 : vector<2x16x16xf32> to vector<2x16x16xbf16>
    %202 = arith.truncf %183 : vector<2x16x6xf32> to vector<2x16x6xbf16>
    "tpu.trace_start"() <{level = 10 : i32, message = "bqk,bkd->bqd"}> : () -> ()
    %cst_142 = arith.constant dense<0.000000e+00> : vector<2x16x6xf32>
    %203 = tpu.matmul %201, %202, %cst_142 {dimension_numbers = #tpu.dot_dimension_numbers<[2], [1], [1], [2], [0, 0, 0, 1, 1, 2], [0], [0]>} : vector<2x16x16xbf16>, vector<2x16x6xbf16>, vector<2x16x6xf32> -> vector<2x16x6xf32>
    "tpu.trace_stop"() : () -> ()
    %204 = vector.shape_cast %203 : vector<2x16x6xf32> to vector<32x6xf32>
    %205 = arith.truncf %204 : vector<32x6xf32> to vector<32x6xbf16>
    %c0_143 = arith.constant 0 : index
    %c3_144 = arith.constant 3 : index
    %c0_145 = arith.constant 0 : index
    %c0_146 = arith.constant 0 : index
    %206 = vector.load %arg16[%c0_143, %c3_144, %c0_145, %c0_146] : memref<1x8x6x48xbf16, #tpu.memory_space<vmem>>, vector<1x1x6x48xbf16>
    %207 = vector.shape_cast %206 : vector<1x1x6x48xbf16> to vector<6x48xbf16>
    %cst_147 = arith.constant dense<0.000000e+00> : vector<32x48xf32>
    %208 = tpu.matmul %205, %207, %cst_147 {dimension_numbers = #tpu.dot_dimension_numbers<[1], [0], [0], [1], [0, 0, 1, 1], [], []>} : vector<32x6xbf16>, vector<6x48xbf16>, vector<32x48xf32> -> vector<32x48xf32>
    %209 = arith.addf %159, %208 : vector<32x48xf32>
    %c0_148 = arith.constant 0 : index
    %c4 = arith.constant 4 : index
    %c0_149 = arith.constant 0 : index
    %c0_150 = arith.constant 0 : index
    %210 = vector.load %arg10[%c0_148, %c4, %c0_149, %c0_150] : memref<1x8x48x6xbf16, #tpu.memory_space<vmem>>, vector<1x1x48x6xbf16>
    %211 = vector.shape_cast %210 : vector<1x1x48x6xbf16> to vector<48x6xbf16>
    %cst_151 = arith.constant dense<0.000000e+00> : vector<32x6xf32>
    %212 = tpu.matmul %5, %211, %cst_151 {dimension_numbers = #tpu.dot_dimension_numbers<[1], [0], [0], [1], [0, 0, 1, 1], [], []>} : vector<32x48xbf16>, vector<48x6xbf16>, vector<32x6xf32> -> vector<32x6xf32>
    %c0_152 = arith.constant 0 : index
    %c4_153 = arith.constant 4 : index
    %c0_154 = arith.constant 0 : index
    %c0_155 = arith.constant 0 : index
    %213 = vector.load %arg13[%c0_152, %c4_153, %c0_154, %c0_155] : memref<1x8x1x6xf32, #tpu.memory_space<vmem>>, vector<1x1x1x6xf32>
    %214 = vector.shape_cast %213 : vector<1x1x1x6xf32> to vector<1x6xf32>
    %215 = vector.broadcast %214 : vector<1x6xf32> to vector<32x6xf32>
    %216 = arith.addf %212, %215 : vector<32x6xf32>
    %217 = vector.shape_cast %216 : vector<32x6xf32> to vector<2x16x6xf32>
    %c0_156 = arith.constant 0 : index
    %c4_157 = arith.constant 4 : index
    %c0_158 = arith.constant 0 : index
    %c0_159 = arith.constant 0 : index
    %218 = vector.load %arg11[%c0_156, %c4_157, %c0_158, %c0_159] : memref<1x8x48x6xbf16, #tpu.memory_space<vmem>>, vector<1x1x48x6xbf16>
    %219 = vector.shape_cast %218 : vector<1x1x48x6xbf16> to vector<48x6xbf16>
    %cst_160 = arith.constant dense<0.000000e+00> : vector<32x6xf32>
    %220 = tpu.matmul %5, %219, %cst_160 {dimension_numbers = #tpu.dot_dimension_numbers<[1], [0], [0], [1], [0, 0, 1, 1], [], []>} : vector<32x48xbf16>, vector<48x6xbf16>, vector<32x6xf32> -> vector<32x6xf32>
    %c0_161 = arith.constant 0 : index
    %c4_162 = arith.constant 4 : index
    %c0_163 = arith.constant 0 : index
    %c0_164 = arith.constant 0 : index
    %221 = vector.load %arg14[%c0_161, %c4_162, %c0_163, %c0_164] : memref<1x8x1x6xf32, #tpu.memory_space<vmem>>, vector<1x1x1x6xf32>
    %222 = vector.shape_cast %221 : vector<1x1x1x6xf32> to vector<1x6xf32>
    %223 = vector.broadcast %222 : vector<1x6xf32> to vector<32x6xf32>
    %224 = arith.addf %220, %223 : vector<32x6xf32>
    %225 = vector.shape_cast %224 : vector<32x6xf32> to vector<2x16x6xf32>
    %c0_165 = arith.constant 0 : index
    %c4_166 = arith.constant 4 : index
    %c0_167 = arith.constant 0 : index
    %c0_168 = arith.constant 0 : index
    %226 = vector.load %arg12[%c0_165, %c4_166, %c0_167, %c0_168] : memref<1x8x48x6xbf16, #tpu.memory_space<vmem>>, vector<1x1x48x6xbf16>
    %227 = vector.shape_cast %226 : vector<1x1x48x6xbf16> to vector<48x6xbf16>
    %cst_169 = arith.constant dense<0.000000e+00> : vector<32x6xf32>
    %228 = tpu.matmul %5, %227, %cst_169 {dimension_numbers = #tpu.dot_dimension_numbers<[1], [0], [0], [1], [0, 0, 1, 1], [], []>} : vector<32x48xbf16>, vector<48x6xbf16>, vector<32x6xf32> -> vector<32x6xf32>
    %c0_170 = arith.constant 0 : index
    %c4_171 = arith.constant 4 : index
    %c0_172 = arith.constant 0 : index
    %c0_173 = arith.constant 0 : index
    %229 = vector.load %arg15[%c0_170, %c4_171, %c0_172, %c0_173] : memref<1x8x1x6xf32, #tpu.memory_space<vmem>>, vector<1x1x1x6xf32>
    %230 = vector.shape_cast %229 : vector<1x1x1x6xf32> to vector<1x6xf32>
    %231 = vector.broadcast %230 : vector<1x6xf32> to vector<32x6xf32>
    %232 = arith.addf %228, %231 : vector<32x6xf32>
    %233 = vector.shape_cast %232 : vector<32x6xf32> to vector<2x16x6xf32>
    %234 = arith.truncf %217 : vector<2x16x6xf32> to vector<2x16x6xbf16>
    %235 = arith.truncf %225 : vector<2x16x6xf32> to vector<2x16x6xbf16>
    "tpu.trace_start"() <{level = 10 : i32, message = "bqd,bkd->bqk"}> : () -> ()
    %cst_174 = arith.constant dense<0.000000e+00> : vector<2x16x16xf32>
    %236 = tpu.matmul %234, %235, %cst_174 {dimension_numbers = #tpu.dot_dimension_numbers<[2], [2], [1], [1], [0, 0, 0, 1, 1, 1], [0], [0]>} : vector<2x16x6xbf16>, vector<2x16x6xbf16>, vector<2x16x16xf32> -> vector<2x16x16xf32>
    %cst_175 = arith.constant -1.000000e+30 : f32
    "tpu.trace_stop"() : () -> ()
    %237 = vector.shape_cast %8 : vector<1x1x16xi1> to vector<1x1x16xi1>
    %238 = vector.broadcast %237 : vector<1x1x16xi1> to vector<2x16x16xi1>
    %239 = vector.broadcast %cst_175 : f32 to vector<2x16x16xf32>
    %240 = arith.select %238, %236, %239 : vector<2x16x16xi1>, vector<2x16x16xf32>
    %cst_176 = arith.constant dense<0xFF800000> : vector<2x16xf32>
    %241 = vector.multi_reduction <maximumf>, %240, %cst_176 [2] : vector<2x16x16xf32> to vector<2x16xf32>
    %242 = vector.shape_cast %241 : vector<2x16xf32> to vector<2x16x1xf32>
    %243 = vector.broadcast %242 : vector<2x16x1xf32> to vector<2x16x16xf32>
    %244 = arith.subf %240, %243 : vector<2x16x16xf32>
    %245 = math.exp %244 : vector<2x16x16xf32>
    %cst_177 = arith.constant dense<0.000000e+00> : vector<2x16xf32>
    %246 = vector.multi_reduction <add>, %245, %cst_177 [2] : vector<2x16x16xf32> to vector<2x16xf32>
    %247 = vector.shape_cast %246 : vector<2x16xf32> to vector<2x16x1xf32>
    %248 = tpu.reciprocal %247 {approx = true} : vector<2x16x1xf32> -> vector<2x16x1xf32>
    %249 = vector.broadcast %248 : vector<2x16x1xf32> to vector<2x16x16xf32>
    %250 = arith.mulf %245, %249 : vector<2x16x16xf32>
    %251 = arith.truncf %250 : vector<2x16x16xf32> to vector<2x16x16xbf16>
    %252 = arith.truncf %233 : vector<2x16x6xf32> to vector<2x16x6xbf16>
    "tpu.trace_start"() <{level = 10 : i32, message = "bqk,bkd->bqd"}> : () -> ()
    %cst_178 = arith.constant dense<0.000000e+00> : vector<2x16x6xf32>
    %253 = tpu.matmul %251, %252, %cst_178 {dimension_numbers = #tpu.dot_dimension_numbers<[2], [1], [1], [2], [0, 0, 0, 1, 1, 2], [0], [0]>} : vector<2x16x16xbf16>, vector<2x16x6xbf16>, vector<2x16x6xf32> -> vector<2x16x6xf32>
    "tpu.trace_stop"() : () -> ()
    %254 = vector.shape_cast %253 : vector<2x16x6xf32> to vector<32x6xf32>
    %255 = arith.truncf %254 : vector<32x6xf32> to vector<32x6xbf16>
    %c0_179 = arith.constant 0 : index
    %c4_180 = arith.constant 4 : index
    %c0_181 = arith.constant 0 : index
    %c0_182 = arith.constant 0 : index
    %256 = vector.load %arg16[%c0_179, %c4_180, %c0_181, %c0_182] : memref<1x8x6x48xbf16, #tpu.memory_space<vmem>>, vector<1x1x6x48xbf16>
    %257 = vector.shape_cast %256 : vector<1x1x6x48xbf16> to vector<6x48xbf16>
    %cst_183 = arith.constant dense<0.000000e+00> : vector<32x48xf32>
    %258 = tpu.matmul %255, %257, %cst_183 {dimension_numbers = #tpu.dot_dimension_numbers<[1], [0], [0], [1], [0, 0, 1, 1], [], []>} : vector<32x6xbf16>, vector<6x48xbf16>, vector<32x48xf32> -> vector<32x48xf32>
    %259 = arith.addf %209, %258 : vector<32x48xf32>
    %c0_184 = arith.constant 0 : index
    %c5 = arith.constant 5 : index
    %c0_185 = arith.constant 0 : index
    %c0_186 = arith.constant 0 : index
    %260 = vector.load %arg10[%c0_184, %c5, %c0_185, %c0_186] : memref<1x8x48x6xbf16, #tpu.memory_space<vmem>>, vector<1x1x48x6xbf16>
    %261 = vector.shape_cast %260 : vector<1x1x48x6xbf16> to vector<48x6xbf16>
    %cst_187 = arith.constant dense<0.000000e+00> : vector<32x6xf32>
    %262 = tpu.matmul %5, %261, %cst_187 {dimension_numbers = #tpu.dot_dimension_numbers<[1], [0], [0], [1], [0, 0, 1, 1], [], []>} : vector<32x48xbf16>, vector<48x6xbf16>, vector<32x6xf32> -> vector<32x6xf32>
    %c0_188 = arith.constant 0 : index
    %c5_189 = arith.constant 5 : index
    %c0_190 = arith.constant 0 : index
    %c0_191 = arith.constant 0 : index
    %263 = vector.load %arg13[%c0_188, %c5_189, %c0_190, %c0_191] : memref<1x8x1x6xf32, #tpu.memory_space<vmem>>, vector<1x1x1x6xf32>
    %264 = vector.shape_cast %263 : vector<1x1x1x6xf32> to vector<1x6xf32>
    %265 = vector.broadcast %264 : vector<1x6xf32> to vector<32x6xf32>
    %266 = arith.addf %262, %265 : vector<32x6xf32>
    %267 = vector.shape_cast %266 : vector<32x6xf32> to vector<2x16x6xf32>
    %c0_192 = arith.constant 0 : index
    %c5_193 = arith.constant 5 : index
    %c0_194 = arith.constant 0 : index
    %c0_195 = arith.constant 0 : index
    %268 = vector.load %arg11[%c0_192, %c5_193, %c0_194, %c0_195] : memref<1x8x48x6xbf16, #tpu.memory_space<vmem>>, vector<1x1x48x6xbf16>
    %269 = vector.shape_cast %268 : vector<1x1x48x6xbf16> to vector<48x6xbf16>
    %cst_196 = arith.constant dense<0.000000e+00> : vector<32x6xf32>
    %270 = tpu.matmul %5, %269, %cst_196 {dimension_numbers = #tpu.dot_dimension_numbers<[1], [0], [0], [1], [0, 0, 1, 1], [], []>} : vector<32x48xbf16>, vector<48x6xbf16>, vector<32x6xf32> -> vector<32x6xf32>
    %c0_197 = arith.constant 0 : index
    %c5_198 = arith.constant 5 : index
    %c0_199 = arith.constant 0 : index
    %c0_200 = arith.constant 0 : index
    %271 = vector.load %arg14[%c0_197, %c5_198, %c0_199, %c0_200] : memref<1x8x1x6xf32, #tpu.memory_space<vmem>>, vector<1x1x1x6xf32>
    %272 = vector.shape_cast %271 : vector<1x1x1x6xf32> to vector<1x6xf32>
    %273 = vector.broadcast %272 : vector<1x6xf32> to vector<32x6xf32>
    %274 = arith.addf %270, %273 : vector<32x6xf32>
    %275 = vector.shape_cast %274 : vector<32x6xf32> to vector<2x16x6xf32>
    %c0_201 = arith.constant 0 : index
    %c5_202 = arith.constant 5 : index
    %c0_203 = arith.constant 0 : index
    %c0_204 = arith.constant 0 : index
    %276 = vector.load %arg12[%c0_201, %c5_202, %c0_203, %c0_204] : memref<1x8x48x6xbf16, #tpu.memory_space<vmem>>, vector<1x1x48x6xbf16>
    %277 = vector.shape_cast %276 : vector<1x1x48x6xbf16> to vector<48x6xbf16>
    %cst_205 = arith.constant dense<0.000000e+00> : vector<32x6xf32>
    %278 = tpu.matmul %5, %277, %cst_205 {dimension_numbers = #tpu.dot_dimension_numbers<[1], [0], [0], [1], [0, 0, 1, 1], [], []>} : vector<32x48xbf16>, vector<48x6xbf16>, vector<32x6xf32> -> vector<32x6xf32>
    %c0_206 = arith.constant 0 : index
    %c5_207 = arith.constant 5 : index
    %c0_208 = arith.constant 0 : index
    %c0_209 = arith.constant 0 : index
    %279 = vector.load %arg15[%c0_206, %c5_207, %c0_208, %c0_209] : memref<1x8x1x6xf32, #tpu.memory_space<vmem>>, vector<1x1x1x6xf32>
    %280 = vector.shape_cast %279 : vector<1x1x1x6xf32> to vector<1x6xf32>
    %281 = vector.broadcast %280 : vector<1x6xf32> to vector<32x6xf32>
    %282 = arith.addf %278, %281 : vector<32x6xf32>
    %283 = vector.shape_cast %282 : vector<32x6xf32> to vector<2x16x6xf32>
    %284 = arith.truncf %267 : vector<2x16x6xf32> to vector<2x16x6xbf16>
    %285 = arith.truncf %275 : vector<2x16x6xf32> to vector<2x16x6xbf16>
    "tpu.trace_start"() <{level = 10 : i32, message = "bqd,bkd->bqk"}> : () -> ()
    %cst_210 = arith.constant dense<0.000000e+00> : vector<2x16x16xf32>
    %286 = tpu.matmul %284, %285, %cst_210 {dimension_numbers = #tpu.dot_dimension_numbers<[2], [2], [1], [1], [0, 0, 0, 1, 1, 1], [0], [0]>} : vector<2x16x6xbf16>, vector<2x16x6xbf16>, vector<2x16x16xf32> -> vector<2x16x16xf32>
    %cst_211 = arith.constant -1.000000e+30 : f32
    "tpu.trace_stop"() : () -> ()
    %287 = vector.shape_cast %8 : vector<1x1x16xi1> to vector<1x1x16xi1>
    %288 = vector.broadcast %287 : vector<1x1x16xi1> to vector<2x16x16xi1>
    %289 = vector.broadcast %cst_211 : f32 to vector<2x16x16xf32>
    %290 = arith.select %288, %286, %289 : vector<2x16x16xi1>, vector<2x16x16xf32>
    %cst_212 = arith.constant dense<0xFF800000> : vector<2x16xf32>
    %291 = vector.multi_reduction <maximumf>, %290, %cst_212 [2] : vector<2x16x16xf32> to vector<2x16xf32>
    %292 = vector.shape_cast %291 : vector<2x16xf32> to vector<2x16x1xf32>
    %293 = vector.broadcast %292 : vector<2x16x1xf32> to vector<2x16x16xf32>
    %294 = arith.subf %290, %293 : vector<2x16x16xf32>
    %295 = math.exp %294 : vector<2x16x16xf32>
    %cst_213 = arith.constant dense<0.000000e+00> : vector<2x16xf32>
    %296 = vector.multi_reduction <add>, %295, %cst_213 [2] : vector<2x16x16xf32> to vector<2x16xf32>
    %297 = vector.shape_cast %296 : vector<2x16xf32> to vector<2x16x1xf32>
    %298 = tpu.reciprocal %297 {approx = true} : vector<2x16x1xf32> -> vector<2x16x1xf32>
    %299 = vector.broadcast %298 : vector<2x16x1xf32> to vector<2x16x16xf32>
    %300 = arith.mulf %295, %299 : vector<2x16x16xf32>
    %301 = arith.truncf %300 : vector<2x16x16xf32> to vector<2x16x16xbf16>
    %302 = arith.truncf %283 : vector<2x16x6xf32> to vector<2x16x6xbf16>
    "tpu.trace_start"() <{level = 10 : i32, message = "bqk,bkd->bqd"}> : () -> ()
    %cst_214 = arith.constant dense<0.000000e+00> : vector<2x16x6xf32>
    %303 = tpu.matmul %301, %302, %cst_214 {dimension_numbers = #tpu.dot_dimension_numbers<[2], [1], [1], [2], [0, 0, 0, 1, 1, 2], [0], [0]>} : vector<2x16x16xbf16>, vector<2x16x6xbf16>, vector<2x16x6xf32> -> vector<2x16x6xf32>
    "tpu.trace_stop"() : () -> ()
    %304 = vector.shape_cast %303 : vector<2x16x6xf32> to vector<32x6xf32>
    %305 = arith.truncf %304 : vector<32x6xf32> to vector<32x6xbf16>
    %c0_215 = arith.constant 0 : index
    %c5_216 = arith.constant 5 : index
    %c0_217 = arith.constant 0 : index
    %c0_218 = arith.constant 0 : index
    %306 = vector.load %arg16[%c0_215, %c5_216, %c0_217, %c0_218] : memref<1x8x6x48xbf16, #tpu.memory_space<vmem>>, vector<1x1x6x48xbf16>
    %307 = vector.shape_cast %306 : vector<1x1x6x48xbf16> to vector<6x48xbf16>
    %cst_219 = arith.constant dense<0.000000e+00> : vector<32x48xf32>
    %308 = tpu.matmul %305, %307, %cst_219 {dimension_numbers = #tpu.dot_dimension_numbers<[1], [0], [0], [1], [0, 0, 1, 1], [], []>} : vector<32x6xbf16>, vector<6x48xbf16>, vector<32x48xf32> -> vector<32x48xf32>
    %309 = arith.addf %259, %308 : vector<32x48xf32>
    %c0_220 = arith.constant 0 : index
    %c6 = arith.constant 6 : index
    %c0_221 = arith.constant 0 : index
    %c0_222 = arith.constant 0 : index
    %310 = vector.load %arg10[%c0_220, %c6, %c0_221, %c0_222] : memref<1x8x48x6xbf16, #tpu.memory_space<vmem>>, vector<1x1x48x6xbf16>
    %311 = vector.shape_cast %310 : vector<1x1x48x6xbf16> to vector<48x6xbf16>
    %cst_223 = arith.constant dense<0.000000e+00> : vector<32x6xf32>
    %312 = tpu.matmul %5, %311, %cst_223 {dimension_numbers = #tpu.dot_dimension_numbers<[1], [0], [0], [1], [0, 0, 1, 1], [], []>} : vector<32x48xbf16>, vector<48x6xbf16>, vector<32x6xf32> -> vector<32x6xf32>
    %c0_224 = arith.constant 0 : index
    %c6_225 = arith.constant 6 : index
    %c0_226 = arith.constant 0 : index
    %c0_227 = arith.constant 0 : index
    %313 = vector.load %arg13[%c0_224, %c6_225, %c0_226, %c0_227] : memref<1x8x1x6xf32, #tpu.memory_space<vmem>>, vector<1x1x1x6xf32>
    %314 = vector.shape_cast %313 : vector<1x1x1x6xf32> to vector<1x6xf32>
    %315 = vector.broadcast %314 : vector<1x6xf32> to vector<32x6xf32>
    %316 = arith.addf %312, %315 : vector<32x6xf32>
    %317 = vector.shape_cast %316 : vector<32x6xf32> to vector<2x16x6xf32>
    %c0_228 = arith.constant 0 : index
    %c6_229 = arith.constant 6 : index
    %c0_230 = arith.constant 0 : index
    %c0_231 = arith.constant 0 : index
    %318 = vector.load %arg11[%c0_228, %c6_229, %c0_230, %c0_231] : memref<1x8x48x6xbf16, #tpu.memory_space<vmem>>, vector<1x1x48x6xbf16>
    %319 = vector.shape_cast %318 : vector<1x1x48x6xbf16> to vector<48x6xbf16>
    %cst_232 = arith.constant dense<0.000000e+00> : vector<32x6xf32>
    %320 = tpu.matmul %5, %319, %cst_232 {dimension_numbers = #tpu.dot_dimension_numbers<[1], [0], [0], [1], [0, 0, 1, 1], [], []>} : vector<32x48xbf16>, vector<48x6xbf16>, vector<32x6xf32> -> vector<32x6xf32>
    %c0_233 = arith.constant 0 : index
    %c6_234 = arith.constant 6 : index
    %c0_235 = arith.constant 0 : index
    %c0_236 = arith.constant 0 : index
    %321 = vector.load %arg14[%c0_233, %c6_234, %c0_235, %c0_236] : memref<1x8x1x6xf32, #tpu.memory_space<vmem>>, vector<1x1x1x6xf32>
    %322 = vector.shape_cast %321 : vector<1x1x1x6xf32> to vector<1x6xf32>
    %323 = vector.broadcast %322 : vector<1x6xf32> to vector<32x6xf32>
    %324 = arith.addf %320, %323 : vector<32x6xf32>
    %325 = vector.shape_cast %324 : vector<32x6xf32> to vector<2x16x6xf32>
    %c0_237 = arith.constant 0 : index
    %c6_238 = arith.constant 6 : index
    %c0_239 = arith.constant 0 : index
    %c0_240 = arith.constant 0 : index
    %326 = vector.load %arg12[%c0_237, %c6_238, %c0_239, %c0_240] : memref<1x8x48x6xbf16, #tpu.memory_space<vmem>>, vector<1x1x48x6xbf16>
    %327 = vector.shape_cast %326 : vector<1x1x48x6xbf16> to vector<48x6xbf16>
    %cst_241 = arith.constant dense<0.000000e+00> : vector<32x6xf32>
    %328 = tpu.matmul %5, %327, %cst_241 {dimension_numbers = #tpu.dot_dimension_numbers<[1], [0], [0], [1], [0, 0, 1, 1], [], []>} : vector<32x48xbf16>, vector<48x6xbf16>, vector<32x6xf32> -> vector<32x6xf32>
    %c0_242 = arith.constant 0 : index
    %c6_243 = arith.constant 6 : index
    %c0_244 = arith.constant 0 : index
    %c0_245 = arith.constant 0 : index
    %329 = vector.load %arg15[%c0_242, %c6_243, %c0_244, %c0_245] : memref<1x8x1x6xf32, #tpu.memory_space<vmem>>, vector<1x1x1x6xf32>
    %330 = vector.shape_cast %329 : vector<1x1x1x6xf32> to vector<1x6xf32>
    %331 = vector.broadcast %330 : vector<1x6xf32> to vector<32x6xf32>
    %332 = arith.addf %328, %331 : vector<32x6xf32>
    %333 = vector.shape_cast %332 : vector<32x6xf32> to vector<2x16x6xf32>
    %334 = arith.truncf %317 : vector<2x16x6xf32> to vector<2x16x6xbf16>
    %335 = arith.truncf %325 : vector<2x16x6xf32> to vector<2x16x6xbf16>
    "tpu.trace_start"() <{level = 10 : i32, message = "bqd,bkd->bqk"}> : () -> ()
    %cst_246 = arith.constant dense<0.000000e+00> : vector<2x16x16xf32>
    %336 = tpu.matmul %334, %335, %cst_246 {dimension_numbers = #tpu.dot_dimension_numbers<[2], [2], [1], [1], [0, 0, 0, 1, 1, 1], [0], [0]>} : vector<2x16x6xbf16>, vector<2x16x6xbf16>, vector<2x16x16xf32> -> vector<2x16x16xf32>
    %cst_247 = arith.constant -1.000000e+30 : f32
    "tpu.trace_stop"() : () -> ()
    %337 = vector.shape_cast %8 : vector<1x1x16xi1> to vector<1x1x16xi1>
    %338 = vector.broadcast %337 : vector<1x1x16xi1> to vector<2x16x16xi1>
    %339 = vector.broadcast %cst_247 : f32 to vector<2x16x16xf32>
    %340 = arith.select %338, %336, %339 : vector<2x16x16xi1>, vector<2x16x16xf32>
    %cst_248 = arith.constant dense<0xFF800000> : vector<2x16xf32>
    %341 = vector.multi_reduction <maximumf>, %340, %cst_248 [2] : vector<2x16x16xf32> to vector<2x16xf32>
    %342 = vector.shape_cast %341 : vector<2x16xf32> to vector<2x16x1xf32>
    %343 = vector.broadcast %342 : vector<2x16x1xf32> to vector<2x16x16xf32>
    %344 = arith.subf %340, %343 : vector<2x16x16xf32>
    %345 = math.exp %344 : vector<2x16x16xf32>
    %cst_249 = arith.constant dense<0.000000e+00> : vector<2x16xf32>
    %346 = vector.multi_reduction <add>, %345, %cst_249 [2] : vector<2x16x16xf32> to vector<2x16xf32>
    %347 = vector.shape_cast %346 : vector<2x16xf32> to vector<2x16x1xf32>
    %348 = tpu.reciprocal %347 {approx = true} : vector<2x16x1xf32> -> vector<2x16x1xf32>
    %349 = vector.broadcast %348 : vector<2x16x1xf32> to vector<2x16x16xf32>
    %350 = arith.mulf %345, %349 : vector<2x16x16xf32>
    %351 = arith.truncf %350 : vector<2x16x16xf32> to vector<2x16x16xbf16>
    %352 = arith.truncf %333 : vector<2x16x6xf32> to vector<2x16x6xbf16>
    "tpu.trace_start"() <{level = 10 : i32, message = "bqk,bkd->bqd"}> : () -> ()
    %cst_250 = arith.constant dense<0.000000e+00> : vector<2x16x6xf32>
    %353 = tpu.matmul %351, %352, %cst_250 {dimension_numbers = #tpu.dot_dimension_numbers<[2], [1], [1], [2], [0, 0, 0, 1, 1, 2], [0], [0]>} : vector<2x16x16xbf16>, vector<2x16x6xbf16>, vector<2x16x6xf32> -> vector<2x16x6xf32>
    "tpu.trace_stop"() : () -> ()
    %354 = vector.shape_cast %353 : vector<2x16x6xf32> to vector<32x6xf32>
    %355 = arith.truncf %354 : vector<32x6xf32> to vector<32x6xbf16>
    %c0_251 = arith.constant 0 : index
    %c6_252 = arith.constant 6 : index
    %c0_253 = arith.constant 0 : index
    %c0_254 = arith.constant 0 : index
    %356 = vector.load %arg16[%c0_251, %c6_252, %c0_253, %c0_254] : memref<1x8x6x48xbf16, #tpu.memory_space<vmem>>, vector<1x1x6x48xbf16>
    %357 = vector.shape_cast %356 : vector<1x1x6x48xbf16> to vector<6x48xbf16>
    %cst_255 = arith.constant dense<0.000000e+00> : vector<32x48xf32>
    %358 = tpu.matmul %355, %357, %cst_255 {dimension_numbers = #tpu.dot_dimension_numbers<[1], [0], [0], [1], [0, 0, 1, 1], [], []>} : vector<32x6xbf16>, vector<6x48xbf16>, vector<32x48xf32> -> vector<32x48xf32>
    %359 = arith.addf %309, %358 : vector<32x48xf32>
    %c0_256 = arith.constant 0 : index
    %c7 = arith.constant 7 : index
    %c0_257 = arith.constant 0 : index
    %c0_258 = arith.constant 0 : index
    %360 = vector.load %arg10[%c0_256, %c7, %c0_257, %c0_258] : memref<1x8x48x6xbf16, #tpu.memory_space<vmem>>, vector<1x1x48x6xbf16>
    %361 = vector.shape_cast %360 : vector<1x1x48x6xbf16> to vector<48x6xbf16>
    %cst_259 = arith.constant dense<0.000000e+00> : vector<32x6xf32>
    %362 = tpu.matmul %5, %361, %cst_259 {dimension_numbers = #tpu.dot_dimension_numbers<[1], [0], [0], [1], [0, 0, 1, 1], [], []>} : vector<32x48xbf16>, vector<48x6xbf16>, vector<32x6xf32> -> vector<32x6xf32>
    %c0_260 = arith.constant 0 : index
    %c7_261 = arith.constant 7 : index
    %c0_262 = arith.constant 0 : index
    %c0_263 = arith.constant 0 : index
    %363 = vector.load %arg13[%c0_260, %c7_261, %c0_262, %c0_263] : memref<1x8x1x6xf32, #tpu.memory_space<vmem>>, vector<1x1x1x6xf32>
    %364 = vector.shape_cast %363 : vector<1x1x1x6xf32> to vector<1x6xf32>
    %365 = vector.broadcast %364 : vector<1x6xf32> to vector<32x6xf32>
    %366 = arith.addf %362, %365 : vector<32x6xf32>
    %367 = vector.shape_cast %366 : vector<32x6xf32> to vector<2x16x6xf32>
    %c0_264 = arith.constant 0 : index
    %c7_265 = arith.constant 7 : index
    %c0_266 = arith.constant 0 : index
    %c0_267 = arith.constant 0 : index
    %368 = vector.load %arg11[%c0_264, %c7_265, %c0_266, %c0_267] : memref<1x8x48x6xbf16, #tpu.memory_space<vmem>>, vector<1x1x48x6xbf16>
    %369 = vector.shape_cast %368 : vector<1x1x48x6xbf16> to vector<48x6xbf16>
    %cst_268 = arith.constant dense<0.000000e+00> : vector<32x6xf32>
    %370 = tpu.matmul %5, %369, %cst_268 {dimension_numbers = #tpu.dot_dimension_numbers<[1], [0], [0], [1], [0, 0, 1, 1], [], []>} : vector<32x48xbf16>, vector<48x6xbf16>, vector<32x6xf32> -> vector<32x6xf32>
    %c0_269 = arith.constant 0 : index
    %c7_270 = arith.constant 7 : index
    %c0_271 = arith.constant 0 : index
    %c0_272 = arith.constant 0 : index
    %371 = vector.load %arg14[%c0_269, %c7_270, %c0_271, %c0_272] : memref<1x8x1x6xf32, #tpu.memory_space<vmem>>, vector<1x1x1x6xf32>
    %372 = vector.shape_cast %371 : vector<1x1x1x6xf32> to vector<1x6xf32>
    %373 = vector.broadcast %372 : vector<1x6xf32> to vector<32x6xf32>
    %374 = arith.addf %370, %373 : vector<32x6xf32>
    %375 = vector.shape_cast %374 : vector<32x6xf32> to vector<2x16x6xf32>
    %c0_273 = arith.constant 0 : index
    %c7_274 = arith.constant 7 : index
    %c0_275 = arith.constant 0 : index
    %c0_276 = arith.constant 0 : index
    %376 = vector.load %arg12[%c0_273, %c7_274, %c0_275, %c0_276] : memref<1x8x48x6xbf16, #tpu.memory_space<vmem>>, vector<1x1x48x6xbf16>
    %377 = vector.shape_cast %376 : vector<1x1x48x6xbf16> to vector<48x6xbf16>
    %cst_277 = arith.constant dense<0.000000e+00> : vector<32x6xf32>
    %378 = tpu.matmul %5, %377, %cst_277 {dimension_numbers = #tpu.dot_dimension_numbers<[1], [0], [0], [1], [0, 0, 1, 1], [], []>} : vector<32x48xbf16>, vector<48x6xbf16>, vector<32x6xf32> -> vector<32x6xf32>
    %c0_278 = arith.constant 0 : index
    %c7_279 = arith.constant 7 : index
    %c0_280 = arith.constant 0 : index
    %c0_281 = arith.constant 0 : index
    %379 = vector.load %arg15[%c0_278, %c7_279, %c0_280, %c0_281] : memref<1x8x1x6xf32, #tpu.memory_space<vmem>>, vector<1x1x1x6xf32>
    %380 = vector.shape_cast %379 : vector<1x1x1x6xf32> to vector<1x6xf32>
    %381 = vector.broadcast %380 : vector<1x6xf32> to vector<32x6xf32>
    %382 = arith.addf %378, %381 : vector<32x6xf32>
    %383 = vector.shape_cast %382 : vector<32x6xf32> to vector<2x16x6xf32>
    %384 = arith.truncf %367 : vector<2x16x6xf32> to vector<2x16x6xbf16>
    %385 = arith.truncf %375 : vector<2x16x6xf32> to vector<2x16x6xbf16>
    "tpu.trace_start"() <{level = 10 : i32, message = "bqd,bkd->bqk"}> : () -> ()
    %cst_282 = arith.constant dense<0.000000e+00> : vector<2x16x16xf32>
    %386 = tpu.matmul %384, %385, %cst_282 {dimension_numbers = #tpu.dot_dimension_numbers<[2], [2], [1], [1], [0, 0, 0, 1, 1, 1], [0], [0]>} : vector<2x16x6xbf16>, vector<2x16x6xbf16>, vector<2x16x16xf32> -> vector<2x16x16xf32>
    %cst_283 = arith.constant -1.000000e+30 : f32
    "tpu.trace_stop"() : () -> ()
    %387 = vector.shape_cast %8 : vector<1x1x16xi1> to vector<1x1x16xi1>
    %388 = vector.broadcast %387 : vector<1x1x16xi1> to vector<2x16x16xi1>
    %389 = vector.broadcast %cst_283 : f32 to vector<2x16x16xf32>
    %390 = arith.select %388, %386, %389 : vector<2x16x16xi1>, vector<2x16x16xf32>
    %cst_284 = arith.constant dense<0xFF800000> : vector<2x16xf32>
    %391 = vector.multi_reduction <maximumf>, %390, %cst_284 [2] : vector<2x16x16xf32> to vector<2x16xf32>
    %392 = vector.shape_cast %391 : vector<2x16xf32> to vector<2x16x1xf32>
    %393 = vector.broadcast %392 : vector<2x16x1xf32> to vector<2x16x16xf32>
    %394 = arith.subf %390, %393 : vector<2x16x16xf32>
    %395 = math.exp %394 : vector<2x16x16xf32>
    %cst_285 = arith.constant dense<0.000000e+00> : vector<2x16xf32>
    %396 = vector.multi_reduction <add>, %395, %cst_285 [2] : vector<2x16x16xf32> to vector<2x16xf32>
    %397 = vector.shape_cast %396 : vector<2x16xf32> to vector<2x16x1xf32>
    %398 = tpu.reciprocal %397 {approx = true} : vector<2x16x1xf32> -> vector<2x16x1xf32>
    %399 = vector.broadcast %398 : vector<2x16x1xf32> to vector<2x16x16xf32>
    %400 = arith.mulf %395, %399 : vector<2x16x16xf32>
    %401 = arith.truncf %400 : vector<2x16x16xf32> to vector<2x16x16xbf16>
    %402 = arith.truncf %383 : vector<2x16x6xf32> to vector<2x16x6xbf16>
    "tpu.trace_start"() <{level = 10 : i32, message = "bqk,bkd->bqd"}> : () -> ()
    %cst_286 = arith.constant dense<0.000000e+00> : vector<2x16x6xf32>
    %403 = tpu.matmul %401, %402, %cst_286 {dimension_numbers = #tpu.dot_dimension_numbers<[2], [1], [1], [2], [0, 0, 0, 1, 1, 2], [0], [0]>} : vector<2x16x16xbf16>, vector<2x16x6xbf16>, vector<2x16x6xf32> -> vector<2x16x6xf32>
    "tpu.trace_stop"() : () -> ()
    %404 = vector.shape_cast %403 : vector<2x16x6xf32> to vector<32x6xf32>
    %405 = arith.truncf %404 : vector<32x6xf32> to vector<32x6xbf16>
    %c0_287 = arith.constant 0 : index
    %c7_288 = arith.constant 7 : index
    %c0_289 = arith.constant 0 : index
    %c0_290 = arith.constant 0 : index
    %406 = vector.load %arg16[%c0_287, %c7_288, %c0_289, %c0_290] : memref<1x8x6x48xbf16, #tpu.memory_space<vmem>>, vector<1x1x6x48xbf16>
    %407 = vector.shape_cast %406 : vector<1x1x6x48xbf16> to vector<6x48xbf16>
    %cst_291 = arith.constant dense<0.000000e+00> : vector<32x48xf32>
    %408 = tpu.matmul %405, %407, %cst_291 {dimension_numbers = #tpu.dot_dimension_numbers<[1], [0], [0], [1], [0, 0, 1, 1], [], []>} : vector<32x6xbf16>, vector<6x48xbf16>, vector<32x48xf32> -> vector<32x48xf32>
    %409 = arith.addf %359, %408 : vector<32x48xf32>
    %c0_292 = arith.constant 0 : index
    %c0_293 = arith.constant 0 : index
    %c0_294 = arith.constant 0 : index
    %410 = vector.load %arg17[%c0_292, %c0_293, %c0_294] : memref<1x1x48xf32, #tpu.memory_space<vmem>>, vector<1x1x48xf32>
    %411 = vector.shape_cast %410 : vector<1x1x48xf32> to vector<1x48xf32>
    %412 = vector.broadcast %411 : vector<1x48xf32> to vector<32x48xf32>
    %413 = arith.addf %409, %412 : vector<32x48xf32>
    %414 = arith.addf %4, %413 : vector<32x48xf32>
    %415 = arith.truncf %414 : vector<32x48xf32> to vector<32x48xbf16>
    %c0_295 = arith.constant 0 : index
    %c0_296 = arith.constant 0 : index
    %c0_297 = arith.constant 0 : index
    %416 = vector.load %arg18[%c0_295, %c0_296, %c0_297] : memref<1x48x64xbf16, #tpu.memory_space<vmem>>, vector<1x48x64xbf16>
    %417 = vector.shape_cast %416 : vector<1x48x64xbf16> to vector<48x64xbf16>
    %cst_298 = arith.constant dense<0.000000e+00> : vector<32x64xf32>
    %418 = tpu.matmul %415, %417, %cst_298 {dimension_numbers = #tpu.dot_dimension_numbers<[1], [0], [0], [1], [0, 0, 1, 1], [], []>} : vector<32x48xbf16>, vector<48x64xbf16>, vector<32x64xf32> -> vector<32x64xf32>
    %c0_299 = arith.constant 0 : index
    %c0_300 = arith.constant 0 : index
    %c0_301 = arith.constant 0 : index
    %419 = vector.load %arg19[%c0_299, %c0_300, %c0_301] : memref<1x1x64xf32, #tpu.memory_space<vmem>>, vector<1x1x64xf32>
    %420 = vector.shape_cast %419 : vector<1x1x64xf32> to vector<1x64xf32>
    %421 = vector.broadcast %420 : vector<1x64xf32> to vector<32x64xf32>
    %422 = arith.addf %418, %421 : vector<32x64xf32>
    %cst_302 = arith.constant 5.000000e-01 : f32
    %423 = vector.broadcast %cst_302 : f32 to vector<32x64xf32>
    %424 = arith.mulf %423, %422 : vector<32x64xf32>
    %cst_303 = arith.constant 4.471500e-02 : f32
    %425 = vector.broadcast %cst_303 : f32 to vector<32x64xf32>
    %426 = arith.mulf %425, %422 : vector<32x64xf32>
    %427 = arith.mulf %426, %422 : vector<32x64xf32>
    %428 = arith.mulf %427, %422 : vector<32x64xf32>
    %429 = arith.addf %422, %428 : vector<32x64xf32>
    %cst_304 = arith.constant 0.797884583 : f32
    %430 = vector.broadcast %cst_304 : f32 to vector<32x64xf32>
    %431 = arith.mulf %430, %429 : vector<32x64xf32>
    %432 = math.tanh %431 : vector<32x64xf32>
    %cst_305 = arith.constant 1.000000e+00 : f32
    %433 = vector.broadcast %cst_305 : f32 to vector<32x64xf32>
    %434 = arith.addf %433, %432 : vector<32x64xf32>
    %435 = arith.mulf %424, %434 : vector<32x64xf32>
    %436 = arith.truncf %435 : vector<32x64xf32> to vector<32x64xbf16>
    %c0_306 = arith.constant 0 : index
    %c0_307 = arith.constant 0 : index
    %c0_308 = arith.constant 0 : index
    %437 = vector.load %arg20[%c0_306, %c0_307, %c0_308] : memref<1x64x48xbf16, #tpu.memory_space<vmem>>, vector<1x64x48xbf16>
    %438 = vector.shape_cast %437 : vector<1x64x48xbf16> to vector<64x48xbf16>
    %cst_309 = arith.constant dense<0.000000e+00> : vector<32x48xf32>
    %439 = tpu.matmul %436, %438, %cst_309 {dimension_numbers = #tpu.dot_dimension_numbers<[1], [0], [0], [1], [0, 0, 1, 1], [], []>} : vector<32x64xbf16>, vector<64x48xbf16>, vector<32x48xf32> -> vector<32x48xf32>
    %c0_310 = arith.constant 0 : index
    %c0_311 = arith.constant 0 : index
    %c0_312 = arith.constant 0 : index
    %440 = vector.load %arg21[%c0_310, %c0_311, %c0_312] : memref<1x1x48xf32, #tpu.memory_space<vmem>>, vector<1x1x48xf32>
    %441 = vector.shape_cast %440 : vector<1x1x48xf32> to vector<1x48xf32>
    %442 = vector.broadcast %441 : vector<1x48xf32> to vector<32x48xf32>
    %443 = arith.addf %439, %442 : vector<32x48xf32>
    %444 = arith.addf %414, %443 : vector<32x48xf32>
    %445 = vector.shape_cast %444 : vector<32x48xf32> to vector<2x16x48xf32>
    %c0_313 = arith.constant 0 : index
    %c0_314 = arith.constant 0 : index
    %c0_315 = arith.constant 0 : index
    %446 = vector.load %arg25[%c0_313, %c0_314, %c0_315] : memref<2x16x48xf32, #tpu.memory_space<vmem>>, vector<2x16x48xf32>
    tpu.vector_store %arg25[%c0_313, %c0_314, %c0_315], %445 {strides = array<i32>} : memref<2x16x48xf32, #tpu.memory_space<vmem>>, vector<2x16x48xf32>,
    %c1_i32 = arith.constant 1 : i32
    %447 = arith.cmpi eq, %arg1, %c1_i32 : i32
    %448 = arith.extui %447 : i1 to i32
    %c0_i32_316 = arith.constant 0 : i32
    %449 = arith.cmpi ne, %448, %c0_i32_316 : i32
    scf.if %449 {
      %450 = arith.truncf %444 : vector<32x48xf32> to vector<32x48xbf16>
      %c0_317 = arith.constant 0 : index
      %c0_318 = arith.constant 0 : index
      %451 = vector.load %arg22[%c0_317, %c0_318] : memref<48x16xbf16, #tpu.memory_space<vmem>>, vector<48x16xbf16>
      %cst_319 = arith.constant dense<0.000000e+00> : vector<32x16xf32>
      %452 = tpu.matmul %450, %451, %cst_319 {dimension_numbers = #tpu.dot_dimension_numbers<[1], [0], [0], [1], [0, 0, 1, 1], [], []>} : vector<32x48xbf16>, vector<48x16xbf16>, vector<32x16xf32> -> vector<32x16xf32>
      %c0_320 = arith.constant 0 : index
      %c0_321 = arith.constant 0 : index
      %453 = vector.load %arg23[%c0_320, %c0_321] : memref<1x16xf32, #tpu.memory_space<vmem>>, vector<1x16xf32>
      %454 = vector.broadcast %453 : vector<1x16xf32> to vector<32x16xf32>
      %455 = arith.addf %452, %454 : vector<32x16xf32>
      %456 = vector.shape_cast %455 : vector<32x16xf32> to vector<2x16x16xf32>
      %c0_322 = arith.constant 0 : index
      %c0_323 = arith.constant 0 : index
      %c0_324 = arith.constant 0 : index
      %457 = vector.load %arg24[%c0_322, %c0_323, %c0_324] : memref<2x16x16xf32, #tpu.memory_space<vmem>>, vector<2x16x16xf32>
      tpu.vector_store %arg24[%c0_322, %c0_323, %c0_324], %456 {strides = array<i32>} : memref<2x16x16xf32, #tpu.memory_space<vmem>>, vector<2x16x16xf32>,
    } else {
    }
    return
  }
  func.func @transform_0(%arg0: i32, %arg1: i32) -> (i32, i32, i32) {
    %c0_i32 = arith.constant 0 : i32
    %c0_i32_0 = arith.constant 0 : i32
    %c0_i32_1 = arith.constant 0 : i32
    return %arg0, %c0_i32, %c0_i32_0 : i32, i32, i32
  }
  func.func @transform_1(%arg0: i32, %arg1: i32) -> (i32, i32, i32, i32) {
    %c0_i32 = arith.constant 0 : i32
    %c0_i32_0 = arith.constant 0 : i32
    %c0_i32_1 = arith.constant 0 : i32
    %c0_i32_2 = arith.constant 0 : i32
    return %arg0, %c0_i32, %c0_i32_0, %c0_i32_1 : i32, i32, i32, i32
  }
  func.func @transform_2(%arg0: i32, %arg1: i32) -> (i32, i32, i32, i32) {
    %c0_i32 = arith.constant 0 : i32
    %c0_i32_0 = arith.constant 0 : i32
    %c0_i32_1 = arith.constant 0 : i32
    %c0_i32_2 = arith.constant 0 : i32
    %c0_i32_3 = arith.constant 0 : i32
    return %c0_i32, %c0_i32_0, %c0_i32_1, %c0_i32_2 : i32, i32, i32, i32
  }
  func.func @transform_3(%arg0: i32, %arg1: i32) -> (i32, i32) {
    %c0_i32 = arith.constant 0 : i32
    %c0_i32_0 = arith.constant 0 : i32
    %c0_i32_1 = arith.constant 0 : i32
    return %c0_i32, %c0_i32_0 : i32, i32
  }
  func.func @transform_4(%arg0: i32, %arg1: i32) -> (i32, i32) {
    %c0_i32 = arith.constant 0 : i32
    %c0_i32_0 = arith.constant 0 : i32
    %c0_i32_1 = arith.constant 0 : i32
    return %c0_i32, %c0_i32_0 : i32, i32
  }
  func.func @transform_5(%arg0: i32, %arg1: i32) -> (i32, i32) {
    %c0_i32 = arith.constant 0 : i32
    %c0_i32_0 = arith.constant 0 : i32
    %c0_i32_1 = arith.constant 0 : i32
    return %c0_i32, %c0_i32_0 : i32, i32
  }
  func.func @transform_6(%arg0: i32, %arg1: i32) -> (i32, i32) {
    %c0_i32 = arith.constant 0 : i32
    %c0_i32_0 = arith.constant 0 : i32
    %c0_i32_1 = arith.constant 0 : i32
    return %c0_i32, %c0_i32_0 : i32, i32
  }
  func.func @transform_7(%arg0: i32, %arg1: i32) -> (i32, i32) {
    %c0_i32 = arith.constant 0 : i32
    %c0_i32_0 = arith.constant 0 : i32
    %c0_i32_1 = arith.constant 0 : i32
    return %c0_i32, %c0_i32_0 : i32, i32
  }
  func.func @transform_8(%arg0: i32, %arg1: i32) -> (i32, i32, i32, i32) {
    %c0_i32 = arith.constant 0 : i32
    %c0_i32_0 = arith.constant 0 : i32
    %c0_i32_1 = arith.constant 0 : i32
    %c0_i32_2 = arith.constant 0 : i32
    return %arg1, %c0_i32, %c0_i32_0, %c0_i32_1 : i32, i32, i32, i32
  }
  func.func @transform_9(%arg0: i32, %arg1: i32) -> (i32, i32, i32, i32) {
    %c0_i32 = arith.constant 0 : i32
    %c0_i32_0 = arith.constant 0 : i32
    %c0_i32_1 = arith.constant 0 : i32
    %c0_i32_2 = arith.constant 0 : i32
    return %arg1, %c0_i32, %c0_i32_0, %c0_i32_1 : i32, i32, i32, i32
  }
  func.func @transform_10(%arg0: i32, %arg1: i32) -> (i32, i32, i32, i32) {
    %c0_i32 = arith.constant 0 : i32
    %c0_i32_0 = arith.constant 0 : i32
    %c0_i32_1 = arith.constant 0 : i32
    %c0_i32_2 = arith.constant 0 : i32
    return %arg1, %c0_i32, %c0_i32_0, %c0_i32_1 : i32, i32, i32, i32
  }
  func.func @transform_11(%arg0: i32, %arg1: i32) -> (i32, i32, i32, i32) {
    %c0_i32 = arith.constant 0 : i32
    %c0_i32_0 = arith.constant 0 : i32
    %c0_i32_1 = arith.constant 0 : i32
    %c0_i32_2 = arith.constant 0 : i32
    return %arg1, %c0_i32, %c0_i32_0, %c0_i32_1 : i32, i32, i32, i32
  }
  func.func @transform_12(%arg0: i32, %arg1: i32) -> (i32, i32, i32, i32) {
    %c0_i32 = arith.constant 0 : i32
    %c0_i32_0 = arith.constant 0 : i32
    %c0_i32_1 = arith.constant 0 : i32
    %c0_i32_2 = arith.constant 0 : i32
    return %arg1, %c0_i32, %c0_i32_0, %c0_i32_1 : i32, i32, i32, i32
  }
  func.func @transform_13(%arg0: i32, %arg1: i32) -> (i32, i32, i32, i32) {
    %c0_i32 = arith.constant 0 : i32
    %c0_i32_0 = arith.constant 0 : i32
    %c0_i32_1 = arith.constant 0 : i32
    %c0_i32_2 = arith.constant 0 : i32
    return %arg1, %c0_i32, %c0_i32_0, %c0_i32_1 : i32, i32, i32, i32
  }
  func.func @transform_14(%arg0: i32, %arg1: i32) -> (i32, i32, i32, i32) {
    %c0_i32 = arith.constant 0 : i32
    %c0_i32_0 = arith.constant 0 : i32
    %c0_i32_1 = arith.constant 0 : i32
    %c0_i32_2 = arith.constant 0 : i32
    return %arg1, %c0_i32, %c0_i32_0, %c0_i32_1 : i32, i32, i32, i32
  }
  func.func @transform_15(%arg0: i32, %arg1: i32) -> (i32, i32, i32) {
    %c0_i32 = arith.constant 0 : i32
    %c0_i32_0 = arith.constant 0 : i32
    %c0_i32_1 = arith.constant 0 : i32
    return %arg1, %c0_i32, %c0_i32_0 : i32, i32, i32
  }
  func.func @transform_16(%arg0: i32, %arg1: i32) -> (i32, i32, i32) {
    %c0_i32 = arith.constant 0 : i32
    %c0_i32_0 = arith.constant 0 : i32
    %c0_i32_1 = arith.constant 0 : i32
    return %arg1, %c0_i32, %c0_i32_0 : i32, i32, i32
  }
  func.func @transform_17(%arg0: i32, %arg1: i32) -> (i32, i32, i32) {
    %c0_i32 = arith.constant 0 : i32
    %c0_i32_0 = arith.constant 0 : i32
    %c0_i32_1 = arith.constant 0 : i32
    return %arg1, %c0_i32, %c0_i32_0 : i32, i32, i32
  }
  func.func @transform_18(%arg0: i32, %arg1: i32) -> (i32, i32, i32) {
    %c0_i32 = arith.constant 0 : i32
    %c0_i32_0 = arith.constant 0 : i32
    %c0_i32_1 = arith.constant 0 : i32
    return %arg1, %c0_i32, %c0_i32_0 : i32, i32, i32
  }
  func.func @transform_19(%arg0: i32, %arg1: i32) -> (i32, i32, i32) {
    %c0_i32 = arith.constant 0 : i32
    %c0_i32_0 = arith.constant 0 : i32
    %c0_i32_1 = arith.constant 0 : i32
    return %arg1, %c0_i32, %c0_i32_0 : i32, i32, i32
  }
  func.func @transform_20(%arg0: i32, %arg1: i32) -> (i32, i32) {
    %c0_i32 = arith.constant 0 : i32
    %c0_i32_0 = arith.constant 0 : i32
    %c0_i32_1 = arith.constant 0 : i32
    return %c0_i32, %c0_i32_0 : i32, i32
  }
  func.func @transform_21(%arg0: i32, %arg1: i32) -> (i32, i32) {
    %c0_i32 = arith.constant 0 : i32
    %c0_i32_0 = arith.constant 0 : i32
    %c0_i32_1 = arith.constant 0 : i32
    return %c0_i32, %c0_i32_0 : i32, i32
  }
  func.func @transform_22(%arg0: i32, %arg1: i32) -> (i32, i32, i32) {
    %c0_i32 = arith.constant 0 : i32
    %c0_i32_0 = arith.constant 0 : i32
    %c0_i32_1 = arith.constant 0 : i32
    return %arg0, %c0_i32, %c0_i32_0 : i32, i32, i32
  }
}

</mosaic_0001>

<llo_original>
// kernel: tpu_custom_call.1
$region0: #{tpu_custom_call.1}
  #allocation0 [shape = 'u32[]', space=smem, size = 0x4, offset = 0x4, fixed_abs, tag = 'smem constant byte address 0x4 - core index']
  #allocation1 [shape = 'u32[144,128]{1,0:T(1,128)}', space=vmem, size = 0x12000, scoped, tag = 'internal scratch']
  #allocation2 [shape = 'f32[2,16,48]{2,1,0:T(8,128)}', space=vmem, size = 0x4000, scoped, tag = 'scratch operand']
  %s0 = inlined_call_operand.vmem [shape: f32[2,8,16], index: 0, kind: input, shape index: {}]
  %s1 = inlined_call_operand.vmem [shape: f32[2,1,32,16], index: 1, kind: input, shape index: {}]
  %s2 = inlined_call_operand.vmem [shape: f32[25,1,1,16], index: 2, kind: input, shape index: {}]
  %s3 = inlined_call_operand.vmem [shape: f32[1,16], index: 3, kind: input, shape index: {}]
  %s4 = inlined_call_operand.vmem [shape: f32[1,16], index: 4, kind: input, shape index: {}]
  %s5 = inlined_call_operand.vmem [shape: f32[1,16], index: 5, kind: input, shape index: {}]
  %s6 = inlined_call_operand.vmem [shape: bf16[16,48], index: 6, kind: input, shape index: {}]
  %s7 = inlined_call_operand.vmem [shape: f32[1,48], index: 7, kind: input, shape index: {}]
  %s8 = inlined_call_operand.vmem [shape: bf16[2,8,48,6], index: 8, kind: input, shape index: {}]
  %s9 = inlined_call_operand.vmem [shape: bf16[2,8,48,6], index: 9, kind: input, shape index: {}]
  %s10 = inlined_call_operand.vmem [shape: bf16[2,8,48,6], index: 10, kind: input, shape index: {}]
  %s11 = inlined_call_operand.vmem [shape: f32[2,8,1,6], index: 11, kind: input, shape index: {}]
  %s12 = inlined_call_operand.vmem [shape: f32[2,8,1,6], index: 12, kind: input, shape index: {}]
  %s13 = inlined_call_operand.vmem [shape: f32[2,8,1,6], index: 13, kind: input, shape index: {}]
  %s14 = inlined_call_operand.vmem [shape: bf16[2,8,6,48], index: 14, kind: input, shape index: {}]
  %s15 = inlined_call_operand.vmem [shape: f32[2,1,48], index: 15, kind: input, shape index: {}]
  %s16 = inlined_call_operand.vmem [shape: bf16[2,48,64], index: 16, kind: input, shape index: {}]
  %s17 = inlined_call_operand.vmem [shape: f32[2,1,64], index: 17, kind: input, shape index: {}]
  %s18 = inlined_call_operand.vmem [shape: bf16[2,64,48], index: 18, kind: input, shape index: {}]
  %s19 = inlined_call_operand.vmem [shape: f32[2,1,48], index: 19, kind: input, shape index: {}]
  %s20 = inlined_call_operand.vmem [shape: bf16[48,16], index: 20, kind: input, shape index: {}]
  %s21 = inlined_call_operand.vmem [shape: f32[1,16], index: 21, kind: input, shape index: {}]
  %s22 = inlined_call_operand.hbm [shape: f32[2,16,16], index: 22, kind: output, shape index: {}]
  %s23 = sld [smem:[#allocation0]]
  $region129: #{tpu_custom_call.1} parent=0
    _
  %s25 = ssub.s32 1, %s23
  %s26 = scalar_select 0, %s25, %s23
  $region1: #{tpu_custom_call.1} parent=0
    #allocation3 [shape = 'u8[16384]{0}', space=vmem, size = 0x4000, scoped, tag = 'output window, operand 0, single buffered']
    #allocation4 [shape = 's32[2]{0}', space=sflag, size = 0x8, scoped, tag = 'scoped memory for tpu_custom_call.1']
    %27 = vsyncpa [#allocation4], 0
    loop: start=0, step=1, limit=4
    $region2: #{tpu_custom_call.1} parent=1 // loop_pre_header
      _
    $region3: #{tpu_custom_call.1} parent=1 // loop_header
      %s29 = sphi 0, %s33
      %p30 = scmp.ge.s32.totalorder %s29, 4
      %s36 = sphi 0, %s48
      %s37 = sphi 0, %s44
      %s38 = sphi 0, %s36
      %s39 = sphi 0, %s37
      %s40 = sphi 0, %s38
      %s41 = sphi 0, %s39
      %s51 = sphi 0, %s53
      %s54 = sphi 0, %s51
      %s55 = sphi 0, %s54
      %s71 = sphi 0, %s55
      %s77 = sphi 0, %s79
      %s80 = sphi 0, %s77
      %s81 = sphi 0, %s80
      %s97 = sphi 0, %s81
      %s101 = sphi 0, %s101
      %s103 = sphi 0, %s101
      %s104 = sphi 0, %s103
      %s118 = sphi 0, %s104
      %s122 = sphi 0, %s122
      %s124 = sphi 0, %s122
      %s125 = sphi 0, %s124
      %s139 = sphi 0, %s125
      %s143 = sphi 0, %s143
      %s145 = sphi 0, %s143
      %s146 = sphi 0, %s145
      %s160 = sphi 0, %s146
      %s164 = sphi 0, %s164
      %s166 = sphi 0, %s164
      %s167 = sphi 0, %s166
      %s181 = sphi 0, %s167
      %s185 = sphi 0, %s185
      %s187 = sphi 0, %s185
      %s188 = sphi 0, %s187
      %s202 = sphi 0, %s188
      %s206 = sphi 0, %s206
      %s208 = sphi 0, %s206
      %s209 = sphi 0, %s208
      %s223 = sphi 0, %s209
      %s229 = sphi 0, %s231
      %s232 = sphi 0, %s229
      %s233 = sphi 0, %s232
      %s249 = sphi 0, %s233
      %s255 = sphi 0, %s257
      %s258 = sphi 0, %s255
      %s259 = sphi 0, %s258
      %s275 = sphi 0, %s259
      %s281 = sphi 0, %s283
      %s284 = sphi 0, %s281
      %s285 = sphi 0, %s284
      %s301 = sphi 0, %s285
      %s307 = sphi 0, %s309
      %s310 = sphi 0, %s307
      %s311 = sphi 0, %s310
      %s327 = sphi 0, %s311
      %s333 = sphi 0, %s335
      %s336 = sphi 0, %s333
      %s337 = sphi 0, %s336
      %s353 = sphi 0, %s337
      %s359 = sphi 0, %s361
      %s362 = sphi 0, %s359
      %s363 = sphi 0, %s362
      %s379 = sphi 0, %s363
      %s385 = sphi 0, %s387
      %s388 = sphi 0, %s385
      %s389 = sphi 0, %s388
      %s405 = sphi 0, %s389
      %s411 = sphi 0, %s413
      %s414 = sphi 0, %s411
      %s415 = sphi 0, %s414
      %s431 = sphi 0, %s415
      %s437 = sphi 0, %s439
      %s440 = sphi 0, %s437
      %s441 = sphi 0, %s440
      %s457 = sphi 0, %s441
      %s463 = sphi 0, %s465
      %s466 = sphi 0, %s463
      %s467 = sphi 0, %s466
      %s483 = sphi 0, %s467
      %s489 = sphi 0, %s491
      %s492 = sphi 0, %s489
      %s493 = sphi 0, %s492
      %s509 = sphi 0, %s493
      %s515 = sphi 0, %s517
      %s518 = sphi 0, %s515
      %s519 = sphi 0, %s518
      %s535 = sphi 0, %s519
      %s539 = sphi 0, %s539
      %s541 = sphi 0, %s539
      %s542 = sphi 0, %s541
      %s556 = sphi 0, %s542
      %s560 = sphi 0, %s560
      %s562 = sphi 0, %s560
      %s563 = sphi 0, %s562
      %s577 = sphi 0, %s563
      %s583 = sphi 0, %s585
      %s586 = sphi 0, %s583
      %s587 = sphi 0, %s586
      %s603 = sphi 0, %s587
    $region4: #{tpu_custom_call.1} parent=1 // loop_header_branch
      %32 = sbr.rel (%p30) target = $region8
    $region5: #{tpu_custom_call.1} parent=1 // loop_body
      %s34 = ssub.s32 %s29, 1
      %s35 = ssub.s32 %s29, 2
      %s42 = sadd.s32 1, %s37
      %p43 = scmp.ge.s32.totalorder %s42, 2
      %s44 = scalar_select %p43, 0, %s42
      %s45 = sadd.s32 1, %s36
      %s46 = scalar_select %p43, %s45, %s36
      %p47 = scmp.ge.s32.totalorder %s46, 1
      %s48 = scalar_select %p47, 0, %s46
      %s49 = ssub.s32 %s36, %s48
      %p50 = scmp.eq.s32.totalorder %s49, 0
      %s52 = sadd.s32 %s51, 1
      %s53 = scalar_select %p50, %s51, %s52
      %p56 = pneg %p50
      %p57 = scmp.eq.s32.totalorder %s29, 1
      %p58 = por %p56, %p57
      %p59 = scmp.ne.s32.totalorder %s51, %s54
      %p60 = scmp.eq.s32.totalorder %s29, 0
      %p61 = por %p59, %p60
      %p62 = scmp.ne.s32.totalorder %s51, %s54
      %p63 = scmp.eq.s32.totalorder %s34, 1
      %p64 = por %p62, %p63
      %p65 = scmp.ne.s32.totalorder %s54, %s55
      %p66 = scmp.eq.s32.totalorder %s34, 0
      %p67 = por %p65, %p66
      %p68 = scmp.ne.s32.totalorder %s54, %s55
      %p69 = scmp.eq.s32.totalorder %s35, 1
      %p70 = por %p68, %p69
      %p72 = scmp.ne.s32.totalorder %s55, %s71
      %p73 = scmp.eq.s32.totalorder %s35, 0
      %p74 = por %p72, %p73
      %s75 = ssub.s32 %s36, %s48
      %p76 = scmp.eq.s32.totalorder %s75, 0
      %s78 = sadd.s32 %s77, 1
      %s79 = scalar_select %p76, %s77, %s78
      %p82 = pneg %p76
      %p83 = scmp.eq.s32.totalorder %s29, 1
      %p84 = por %p82, %p83
      %p85 = scmp.ne.s32.totalorder %s77, %s80
      %p86 = scmp.eq.s32.totalorder %s29, 0
      %p87 = por %p85, %p86
      %p88 = scmp.ne.s32.totalorder %s77, %s80
      %p89 = scmp.eq.s32.totalorder %s34, 1
      %p90 = por %p88, %p89
      %p91 = scmp.ne.s32.totalorder %s80, %s81
      %p92 = scmp.eq.s32.totalorder %s34, 0
      %p93 = por %p91, %p92
      %p94 = scmp.ne.s32.totalorder %s80, %s81
      %p95 = scmp.eq.s32.totalorder %s35, 1
      %p96 = por %p94, %p95
      %p98 = scmp.ne.s32.totalorder %s81, %s97
      %p99 = scmp.eq.s32.totalorder %s35, 0
      %p100 = por %p98, %p99
      %s102 = sadd.s32 %s101, 1
      %p105 = scmp.eq.s32.totalorder %s29, 1
      %p106 = scmp.ne.s32.totalorder %s101, %s103
      %p107 = scmp.eq.s32.totalorder %s29, 0
      %p108 = por %p106, %p107
      %p109 = scmp.ne.s32.totalorder %s101, %s103
      %p110 = scmp.eq.s32.totalorder %s34, 1
      %p111 = por %p109, %p110
      %p112 = scmp.ne.s32.totalorder %s103, %s104
      %p113 = scmp.eq.s32.totalorder %s34, 0
      %p114 = por %p112, %p113
      %p115 = scmp.ne.s32.totalorder %s103, %s104
      %p116 = scmp.eq.s32.totalorder %s35, 1
      %p117 = por %p115, %p116
      %p119 = scmp.ne.s32.totalorder %s104, %s118
      %p120 = scmp.eq.s32.totalorder %s35, 0
      %p121 = por %p119, %p120
      %s123 = sadd.s32 %s122, 1
      %p126 = scmp.eq.s32.totalorder %s29, 1
      %p127 = scmp.ne.s32.totalorder %s122, %s124
      %p128 = scmp.eq.s32.totalorder %s29, 0
      %p129 = por %p127, %p128
      %p130 = scmp.ne.s32.totalorder %s122, %s124
      %p131 = scmp.eq.s32.totalorder %s34, 1
      %p132 = por %p130, %p131
      %p133 = scmp.ne.s32.totalorder %s124, %s125
      %p134 = scmp.eq.s32.totalorder %s34, 0
      %p135 = por %p133, %p134
      %p136 = scmp.ne.s32.totalorder %s124, %s125
      %p137 = scmp.eq.s32.totalorder %s35, 1
      %p138 = por %p136, %p137
      %p140 = scmp.ne.s32.totalorder %s125, %s139
      %p141 = scmp.eq.s32.totalorder %s35, 0
      %p142 = por %p140, %p141
      %s144 = sadd.s32 %s143, 1
      %p147 = scmp.eq.s32.totalorder %s29, 1
      %p148 = scmp.ne.s32.totalorder %s143, %s145
      %p149 = scmp.eq.s32.totalorder %s29, 0
      %p150 = por %p148, %p149
      %p151 = scmp.ne.s32.totalorder %s143, %s145
      %p152 = scmp.eq.s32.totalorder %s34, 1
      %p153 = por %p151, %p152
      %p154 = scmp.ne.s32.totalorder %s145, %s146
      %p155 = scmp.eq.s32.totalorder %s34, 0
      %p156 = por %p154, %p155
      %p157 = scmp.ne.s32.totalorder %s145, %s146
      %p158 = scmp.eq.s32.totalorder %s35, 1
      %p159 = por %p157, %p158
      %p161 = scmp.ne.s32.totalorder %s146, %s160
      %p162 = scmp.eq.s32.totalorder %s35, 0
      %p163 = por %p161, %p162
      %s165 = sadd.s32 %s164, 1
      %p168 = scmp.eq.s32.totalorder %s29, 1
      %p169 = scmp.ne.s32.totalorder %s164, %s166
      %p170 = scmp.eq.s32.totalorder %s29, 0
      %p171 = por %p169, %p170
      %p172 = scmp.ne.s32.totalorder %s164, %s166
      %p173 = scmp.eq.s32.totalorder %s34, 1
      %p174 = por %p172, %p173
      %p175 = scmp.ne.s32.totalorder %s166, %s167
      %p176 = scmp.eq.s32.totalorder %s34, 0
      %p177 = por %p175, %p176
      %p178 = scmp.ne.s32.totalorder %s166, %s167
      %p179 = scmp.eq.s32.totalorder %s35, 1
      %p180 = por %p178, %p179
      %p182 = scmp.ne.s32.totalorder %s167, %s181
      %p183 = scmp.eq.s32.totalorder %s35, 0
      %p184 = por %p182, %p183
      %s186 = sadd.s32 %s185, 1
      %p189 = scmp.eq.s32.totalorder %s29, 1
      %p190 = scmp.ne.s32.totalorder %s185, %s187
      %p191 = scmp.eq.s32.totalorder %s29, 0
      %p192 = por %p190, %p191
      %p193 = scmp.ne.s32.totalorder %s185, %s187
      %p194 = scmp.eq.s32.totalorder %s34, 1
      %p195 = por %p193, %p194
      %p196 = scmp.ne.s32.totalorder %s187, %s188
      %p197 = scmp.eq.s32.totalorder %s34, 0
      %p198 = por %p196, %p197
      %p199 = scmp.ne.s32.totalorder %s187, %s188
      %p200 = scmp.eq.s32.totalorder %s35, 1
      %p201 = por %p199, %p200
      %p203 = scmp.ne.s32.totalorder %s188, %s202
      %p204 = scmp.eq.s32.totalorder %s35, 0
      %p205 = por %p203, %p204
      %s207 = sadd.s32 %s206, 1
      %p210 = scmp.eq.s32.totalorder %s29, 1
      %p211 = scmp.ne.s32.totalorder %s206, %s208
      %p212 = scmp.eq.s32.totalorder %s29, 0
      %p213 = por %p211, %p212
      %p214 = scmp.ne.s32.totalorder %s206, %s208
      %p215 = scmp.eq.s32.totalorder %s34, 1
      %p216 = por %p214, %p215
      %p217 = scmp.ne.s32.totalorder %s208, %s209
      %p218 = scmp.eq.s32.totalorder %s34, 0
      %p219 = por %p217, %p218
      %p220 = scmp.ne.s32.totalorder %s208, %s209
      %p221 = scmp.eq.s32.totalorder %s35, 1
      %p222 = por %p220, %p221
      %p224 = scmp.ne.s32.totalorder %s209, %s223
      %p225 = scmp.eq.s32.totalorder %s35, 0
      %p226 = por %p224, %p225
      %s227 = ssub.s32 %s37, %s44
      %p228 = scmp.eq.s32.totalorder %s227, 0
      %s230 = sadd.s32 %s229, 1
      %s231 = scalar_select %p228, %s229, %s230
      %p234 = pneg %p228
      %p235 = scmp.eq.s32.totalorder %s29, 1
      %p236 = por %p234, %p235
      %p237 = scmp.ne.s32.totalorder %s229, %s232
      %p238 = scmp.eq.s32.totalorder %s29, 0
      %p239 = por %p237, %p238
      %p240 = scmp.ne.s32.totalorder %s229, %s232
      %p241 = scmp.eq.s32.totalorder %s34, 1
      %p242 = por %p240, %p241
      %p243 = scmp.ne.s32.totalorder %s232, %s233
      %p244 = scmp.eq.s32.totalorder %s34, 0
      %p245 = por %p243, %p244
      %p246 = scmp.ne.s32.totalorder %s232, %s233
      %p247 = scmp.eq.s32.totalorder %s35, 1
      %p248 = por %p246, %p247
      %p250 = scmp.ne.s32.totalorder %s233, %s249
      %p251 = scmp.eq.s32.totalorder %s35, 0
      %p252 = por %p250, %p251
      %s253 = ssub.s32 %s37, %s44
      %p254 = scmp.eq.s32.totalorder %s253, 0
      %s256 = sadd.s32 %s255, 1
      %s257 = scalar_select %p254, %s255, %s256
      %p260 = pneg %p254
      %p261 = scmp.eq.s32.totalorder %s29, 1
      %p262 = por %p260, %p261
      %p263 = scmp.ne.s32.totalorder %s255, %s258
      %p264 = scmp.eq.s32.totalorder %s29, 0
      %p265 = por %p263, %p264
      %p266 = scmp.ne.s32.totalorder %s255, %s258
      %p267 = scmp.eq.s32.totalorder %s34, 1
      %p268 = por %p266, %p267
      %p269 = scmp.ne.s32.totalorder %s258, %s259
      %p270 = scmp.eq.s32.totalorder %s34, 0
      %p271 = por %p269, %p270
      %p272 = scmp.ne.s32.totalorder %s258, %s259
      %p273 = scmp.eq.s32.totalorder %s35, 1
      %p274 = por %p272, %p273
      %p276 = scmp.ne.s32.totalorder %s259, %s275
      %p277 = scmp.eq.s32.totalorder %s35, 0
      %p278 = por %p276, %p277
      %s279 = ssub.s32 %s37, %s44
      %p280 = scmp.eq.s32.totalorder %s279, 0
      %s282 = sadd.s32 %s281, 1
      %s283 = scalar_select %p280, %s281, %s282
      %p286 = pneg %p280
      %p287 = scmp.eq.s32.totalorder %s29, 1
      %p288 = por %p286, %p287
      %p289 = scmp.ne.s32.totalorder %s281, %s284
      %p290 = scmp.eq.s32.totalorder %s29, 0
      %p291 = por %p289, %p290
      %p292 = scmp.ne.s32.totalorder %s281, %s284
      %p293 = scmp.eq.s32.totalorder %s34, 1
      %p294 = por %p292, %p293
      %p295 = scmp.ne.s32.totalorder %s284, %s285
      %p296 = scmp.eq.s32.totalorder %s34, 0
      %p297 = por %p295, %p296
      %p298 = scmp.ne.s32.totalorder %s284, %s285
      %p299 = scmp.eq.s32.totalorder %s35, 1
      %p300 = por %p298, %p299
      %p302 = scmp.ne.s32.totalorder %s285, %s301
      %p303 = scmp.eq.s32.totalorder %s35, 0
      %p304 = por %p302, %p303
      %s305 = ssub.s32 %s37, %s44
      %p306 = scmp.eq.s32.totalorder %s305, 0
      %s308 = sadd.s32 %s307, 1
      %s309 = scalar_select %p306, %s307, %s308
      %p312 = pneg %p306
      %p313 = scmp.eq.s32.totalorder %s29, 1
      %p314 = por %p312, %p313
      %p315 = scmp.ne.s32.totalorder %s307, %s310
      %p316 = scmp.eq.s32.totalorder %s29, 0
      %p317 = por %p315, %p316
      %p318 = scmp.ne.s32.totalorder %s307, %s310
      %p319 = scmp.eq.s32.totalorder %s34, 1
      %p320 = por %p318, %p319
      %p321 = scmp.ne.s32.totalorder %s310, %s311
      %p322 = scmp.eq.s32.totalorder %s34, 0
      %p323 = por %p321, %p322
      %p324 = scmp.ne.s32.totalorder %s310, %s311
      %p325 = scmp.eq.s32.totalorder %s35, 1
      %p326 = por %p324, %p325
      %p328 = scmp.ne.s32.totalorder %s311, %s327
      %p329 = scmp.eq.s32.totalorder %s35, 0
      %p330 = por %p328, %p329
      %s331 = ssub.s32 %s37, %s44
      %p332 = scmp.eq.s32.totalorder %s331, 0
      %s334 = sadd.s32 %s333, 1
      %s335 = scalar_select %p332, %s333, %s334
      %p338 = pneg %p332
      %p339 = scmp.eq.s32.totalorder %s29, 1
      %p340 = por %p338, %p339
      %p341 = scmp.ne.s32.totalorder %s333, %s336
      %p342 = scmp.eq.s32.totalorder %s29, 0
      %p343 = por %p341, %p342
      %p344 = scmp.ne.s32.totalorder %s333, %s336
      %p345 = scmp.eq.s32.totalorder %s34, 1
      %p346 = por %p344, %p345
      %p347 = scmp.ne.s32.totalorder %s336, %s337
      %p348 = scmp.eq.s32.totalorder %s34, 0
      %p349 = por %p347, %p348
      %p350 = scmp.ne.s32.totalorder %s336, %s337
      %p351 = scmp.eq.s32.totalorder %s35, 1
      %p352 = por %p350, %p351
      %p354 = scmp.ne.s32.totalorder %s337, %s353
      %p355 = scmp.eq.s32.totalorder %s35, 0
      %p356 = por %p354, %p355
      %s357 = ssub.s32 %s37, %s44
      %p358 = scmp.eq.s32.totalorder %s357, 0
      %s360 = sadd.s32 %s359, 1
      %s361 = scalar_select %p358, %s359, %s360
      %p364 = pneg %p358
      %p365 = scmp.eq.s32.totalorder %s29, 1
      %p366 = por %p364, %p365
      %p367 = scmp.ne.s32.totalorder %s359, %s362
      %p368 = scmp.eq.s32.totalorder %s29, 0
      %p369 = por %p367, %p368
      %p370 = scmp.ne.s32.totalorder %s359, %s362
      %p371 = scmp.eq.s32.totalorder %s34, 1
      %p372 = por %p370, %p371
      %p373 = scmp.ne.s32.totalorder %s362, %s363
      %p374 = scmp.eq.s32.totalorder %s34, 0
      %p375 = por %p373, %p374
      %p376 = scmp.ne.s32.totalorder %s362, %s363
      %p377 = scmp.eq.s32.totalorder %s35, 1
      %p378 = por %p376, %p377
      %p380 = scmp.ne.s32.totalorder %s363, %s379
      %p381 = scmp.eq.s32.totalorder %s35, 0
      %p382 = por %p380, %p381
      %s383 = ssub.s32 %s37, %s44
      %p384 = scmp.eq.s32.totalorder %s383, 0
      %s386 = sadd.s32 %s385, 1
      %s387 = scalar_select %p384, %s385, %s386
      %p390 = pneg %p384
      %p391 = scmp.eq.s32.totalorder %s29, 1
      %p392 = por %p390, %p391
      %p393 = scmp.ne.s32.totalorder %s385, %s388
      %p394 = scmp.eq.s32.totalorder %s29, 0
      %p395 = por %p393, %p394
      %p396 = scmp.ne.s32.totalorder %s385, %s388
      %p397 = scmp.eq.s32.totalorder %s34, 1
      %p398 = por %p396, %p397
      %p399 = scmp.ne.s32.totalorder %s388, %s389
      %p400 = scmp.eq.s32.totalorder %s34, 0
      %p401 = por %p399, %p400
      %p402 = scmp.ne.s32.totalorder %s388, %s389
      %p403 = scmp.eq.s32.totalorder %s35, 1
      %p404 = por %p402, %p403
      %p406 = scmp.ne.s32.totalorder %s389, %s405
      %p407 = scmp.eq.s32.totalorder %s35, 0
      %p408 = por %p406, %p407
      %s409 = ssub.s32 %s37, %s44
      %p410 = scmp.eq.s32.totalorder %s409, 0
      %s412 = sadd.s32 %s411, 1
      %s413 = scalar_select %p410, %s411, %s412
      %p416 = pneg %p410
      %p417 = scmp.eq.s32.totalorder %s29, 1
      %p418 = por %p416, %p417
      %p419 = scmp.ne.s32.totalorder %s411, %s414
      %p420 = scmp.eq.s32.totalorder %s29, 0
      %p421 = por %p419, %p420
      %p422 = scmp.ne.s32.totalorder %s411, %s414
      %p423 = scmp.eq.s32.totalorder %s34, 1
      %p424 = por %p422, %p423
      %p425 = scmp.ne.s32.totalorder %s414, %s415
      %p426 = scmp.eq.s32.totalorder %s34, 0
      %p427 = por %p425, %p426
      %p428 = scmp.ne.s32.totalorder %s414, %s415
      %p429 = scmp.eq.s32.totalorder %s35, 1
      %p430 = por %p428, %p429
      %p432 = scmp.ne.s32.totalorder %s415, %s431
      %p433 = scmp.eq.s32.totalorder %s35, 0
      %p434 = por %p432, %p433
      %s435 = ssub.s32 %s37, %s44
      %p436 = scmp.eq.s32.totalorder %s435, 0
      %s438 = sadd.s32 %s437, 1
      %s439 = scalar_select %p436, %s437, %s438
      %p442 = pneg %p436
      %p443 = scmp.eq.s32.totalorder %s29, 1
      %p444 = por %p442, %p443
      %p445 = scmp.ne.s32.totalorder %s437, %s440
      %p446 = scmp.eq.s32.totalorder %s29, 0
      %p447 = por %p445, %p446
      %p448 = scmp.ne.s32.totalorder %s437, %s440
      %p449 = scmp.eq.s32.totalorder %s34, 1
      %p450 = por %p448, %p449
      %p451 = scmp.ne.s32.totalorder %s440, %s441
      %p452 = scmp.eq.s32.totalorder %s34, 0
      %p453 = por %p451, %p452
      %p454 = scmp.ne.s32.totalorder %s440, %s441
      %p455 = scmp.eq.s32.totalorder %s35, 1
      %p456 = por %p454, %p455
      %p458 = scmp.ne.s32.totalorder %s441, %s457
      %p459 = scmp.eq.s32.totalorder %s35, 0
      %p460 = por %p458, %p459
      %s461 = ssub.s32 %s37, %s44
      %p462 = scmp.eq.s32.totalorder %s461, 0
      %s464 = sadd.s32 %s463, 1
      %s465 = scalar_select %p462, %s463, %s464
      %p468 = pneg %p462
      %p469 = scmp.eq.s32.totalorder %s29, 1
      %p470 = por %p468, %p469
      %p471 = scmp.ne.s32.totalorder %s463, %s466
      %p472 = scmp.eq.s32.totalorder %s29, 0
      %p473 = por %p471, %p472
      %p474 = scmp.ne.s32.totalorder %s463, %s466
      %p475 = scmp.eq.s32.totalorder %s34, 1
      %p476 = por %p474, %p475
      %p477 = scmp.ne.s32.totalorder %s466, %s467
      %p478 = scmp.eq.s32.totalorder %s34, 0
      %p479 = por %p477, %p478
      %p480 = scmp.ne.s32.totalorder %s466, %s467
      %p481 = scmp.eq.s32.totalorder %s35, 1
      %p482 = por %p480, %p481
      %p484 = scmp.ne.s32.totalorder %s467, %s483
      %p485 = scmp.eq.s32.totalorder %s35, 0
      %p486 = por %p484, %p485
      %s487 = ssub.s32 %s37, %s44
      %p488 = scmp.eq.s32.totalorder %s487, 0
      %s490 = sadd.s32 %s489, 1
      %s491 = scalar_select %p488, %s489, %s490
      %p494 = pneg %p488
      %p495 = scmp.eq.s32.totalorder %s29, 1
      %p496 = por %p494, %p495
      %p497 = scmp.ne.s32.totalorder %s489, %s492
      %p498 = scmp.eq.s32.totalorder %s29, 0
      %p499 = por %p497, %p498
      %p500 = scmp.ne.s32.totalorder %s489, %s492
      %p501 = scmp.eq.s32.totalorder %s34, 1
      %p502 = por %p500, %p501
      %p503 = scmp.ne.s32.totalorder %s492, %s493
      %p504 = scmp.eq.s32.totalorder %s34, 0
      %p505 = por %p503, %p504
      %p506 = scmp.ne.s32.totalorder %s492, %s493
      %p507 = scmp.eq.s32.totalorder %s35, 1
      %p508 = por %p506, %p507
      %p510 = scmp.ne.s32.totalorder %s493, %s509
      %p511 = scmp.eq.s32.totalorder %s35, 0
      %p512 = por %p510, %p511
      %s513 = ssub.s32 %s37, %s44
      %p514 = scmp.eq.s32.totalorder %s513, 0
      %s516 = sadd.s32 %s515, 1
      %s517 = scalar_select %p514, %s515, %s516
      %p520 = pneg %p514
      %p521 = scmp.eq.s32.totalorder %s29, 1
      %p522 = por %p520, %p521
      %p523 = scmp.ne.s32.totalorder %s515, %s518
      %p524 = scmp.eq.s32.totalorder %s29, 0
      %p525 = por %p523, %p524
      %p526 = scmp.ne.s32.totalorder %s515, %s518
      %p527 = scmp.eq.s32.totalorder %s34, 1
      %p528 = por %p526, %p527
      %p529 = scmp.ne.s32.totalorder %s518, %s519
      %p530 = scmp.eq.s32.totalorder %s34, 0
      %p531 = por %p529, %p530
      %p532 = scmp.ne.s32.totalorder %s518, %s519
      %p533 = scmp.eq.s32.totalorder %s35, 1
      %p534 = por %p532, %p533
      %p536 = scmp.ne.s32.totalorder %s519, %s535
      %p537 = scmp.eq.s32.totalorder %s35, 0
      %p538 = por %p536, %p537
      %s540 = sadd.s32 %s539, 1
      %p543 = scmp.eq.s32.totalorder %s29, 1
      %p544 = scmp.ne.s32.totalorder %s539, %s541
      %p545 = scmp.eq.s32.totalorder %s29, 0
      %p546 = por %p544, %p545
      %p547 = scmp.ne.s32.totalorder %s539, %s541
      %p548 = scmp.eq.s32.totalorder %s34, 1
      %p549 = por %p547, %p548
      %p550 = scmp.ne.s32.totalorder %s541, %s542
      %p551 = scmp.eq.s32.totalorder %s34, 0
      %p552 = por %p550, %p551
      %p553 = scmp.ne.s32.totalorder %s541, %s542
      %p554 = scmp.eq.s32.totalorder %s35, 1
      %p555 = por %p553, %p554
      %p557 = scmp.ne.s32.totalorder %s542, %s556
      %p558 = scmp.eq.s32.totalorder %s35, 0
      %p559 = por %p557, %p558
      %s561 = sadd.s32 %s560, 1
      %p564 = scmp.eq.s32.totalorder %s29, 1
      %p565 = scmp.ne.s32.totalorder %s560, %s562
      %p566 = scmp.eq.s32.totalorder %s29, 0
      %p567 = por %p565, %p566
      %p568 = scmp.ne.s32.totalorder %s560, %s562
      %p569 = scmp.eq.s32.totalorder %s34, 1
      %p570 = por %p568, %p569
      %p571 = scmp.ne.s32.totalorder %s562, %s563
      %p572 = scmp.eq.s32.totalorder %s34, 0
      %p573 = por %p571, %p572
      %p574 = scmp.ne.s32.totalorder %s562, %s563
      %p575 = scmp.eq.s32.totalorder %s35, 1
      %p576 = por %p574, %p575
      %p578 = scmp.ne.s32.totalorder %s563, %s577
      %p579 = scmp.eq.s32.totalorder %s35, 0
      %p580 = por %p578, %p579
      %s581 = ssub.s32 %s36, %s48
      %p582 = scmp.eq.s32.totalorder %s581, 0
      %s584 = sadd.s32 %s583, 1
      %s585 = scalar_select %p582, %s583, %s584
      %p588 = pneg %p582
      %p589 = scmp.eq.s32.totalorder %s29, 1
      %p590 = por %p588, %p589
      %p591 = scmp.ne.s32.totalorder %s583, %s586
      %p592 = scmp.eq.s32.totalorder %s29, 0
      %p593 = por %p591, %p592
      %p594 = scmp.ne.s32.totalorder %s583, %s586
      %p595 = scmp.eq.s32.totalorder %s34, 1
      %p596 = por %p594, %p595
      %p597 = scmp.ne.s32.totalorder %s586, %s587
      %p598 = scmp.eq.s32.totalorder %s34, 0
      %p599 = por %p597, %p598
      %p600 = scmp.ne.s32.totalorder %s586, %s587
      %p601 = scmp.eq.s32.totalorder %s35, 1
      %p602 = por %p600, %p601
      %p604 = scmp.ne.s32.totalorder %s587, %s603
      %p605 = scmp.eq.s32.totalorder %s35, 0
      %p606 = por %p604, %p605
      %p607 = scmp.le.s32.totalorder 1, %s29
      %p608 = scmp.lt.s32.totalorder %s29, 3
      %p609 = pnand %p607, %p608
      %p610 = pneg %p609
      // Predicated region
      $region9: #{tpu_custom_call.1} parent=5 // pred_check
        _
      $region10: #{tpu_custom_call.1} parent=5 // pred_check_branch
        %612 = sbr.rel (%p609) target = $region12
      $region11: #{tpu_custom_call.1} parent=5 // pred_region
        %s613 = ssub.s32 %s29, 1
        // Predicated region
        $region13: #{tpu_custom_call.1} parent=11 // pred_check
          %p614 = pneg %p67
        $region14: #{tpu_custom_call.1} parent=11 // pred_check_branch
          %616 = sbr.rel (%p614) target = $region16
        $region15: #{tpu_custom_call.1} parent=11 // pred_region
          %s617 = smul.u32 2, %s38
          %p618 = scmp.lt.s32.totalorder %s617, 1
          %s619 = scalar_select %p618, %s617, 1
          %s620 = smul.addr %s619, 8
          %s621 = scalar_lea.vmem %s0, %s620
          %s622 = smul.u32 2, %s38
        $region16: #{tpu_custom_call.1} parent=11 // pred_fallthru
          _
        // Predicated region
        $region17: #{tpu_custom_call.1} parent=11 // pred_check
          %p623 = pneg %p93
        $region18: #{tpu_custom_call.1} parent=11 // pred_check_branch
          %625 = sbr.rel (%p623) target = $region20
        $region19: #{tpu_custom_call.1} parent=11 // pred_region
          %s626 = smul.u32 2, %s38
          %p627 = scmp.lt.s32.totalorder %s626, 1
          %s628 = scalar_select %p627, %s626, 1
          %s629 = smul.addr %s628, 4
          %s630 = smul.addr %s629, 8
          %s631 = scalar_lea.vmem %s1, %s630
          %s632 = smul.u32 2, %s38
        $region20: #{tpu_custom_call.1} parent=11 // pred_fallthru
          _
        // Predicated region
        $region21: #{tpu_custom_call.1} parent=11 // pred_check
          %p633 = pneg %p114
        $region22: #{tpu_custom_call.1} parent=11 // pred_check_branch
          %635 = sbr.rel (%p633) target = $region24
        $region23: #{tpu_custom_call.1} parent=11 // pred_region
          _
        $region24: #{tpu_custom_call.1} parent=11 // pred_fallthru
          _
        // Predicated region
        $region25: #{tpu_custom_call.1} parent=11 // pred_check
          %p636 = pneg %p135
        $region26: #{tpu_custom_call.1} parent=11 // pred_check_branch
          %638 = sbr.rel (%p636) target = $region28
        $region27: #{tpu_custom_call.1} parent=11 // pred_region
          _
        $region28: #{tpu_custom_call.1} parent=11 // pred_fallthru
          _
        // Predicated region
        $region29: #{tpu_custom_call.1} parent=11 // pred_check
          %p639 = pneg %p156
        $region30: #{tpu_custom_call.1} parent=11 // pred_check_branch
          %641 = sbr.rel (%p639) target = $region32
        $region31: #{tpu_custom_call.1} parent=11 // pred_region
          _
        $region32: #{tpu_custom_call.1} parent=11 // pred_fallthru
          _
        // Predicated region
        $region33: #{tpu_custom_call.1} parent=11 // pred_check
          %p642 = pneg %p177
        $region34: #{tpu_custom_call.1} parent=11 // pred_check_branch
          %644 = sbr.rel (%p642) target = $region36
        $region35: #{tpu_custom_call.1} parent=11 // pred_region
          _
        $region36: #{tpu_custom_call.1} parent=11 // pred_fallthru
          _
        // Predicated region
        $region37: #{tpu_custom_call.1} parent=11 // pred_check
          %p645 = pneg %p198
        $region38: #{tpu_custom_call.1} parent=11 // pred_check_branch
          %647 = sbr.rel (%p645) target = $region40
        $region39: #{tpu_custom_call.1} parent=11 // pred_region
          _
        $region40: #{tpu_custom_call.1} parent=11 // pred_fallthru
          _
        // Predicated region
        $region41: #{tpu_custom_call.1} parent=11 // pred_check
          %p648 = pneg %p219
        $region42: #{tpu_custom_call.1} parent=11 // pred_check_branch
          %650 = sbr.rel (%p648) target = $region44
        $region43: #{tpu_custom_call.1} parent=11 // pred_region
          _
        $region44: #{tpu_custom_call.1} parent=11 // pred_fallthru
          _
        // Predicated region
        $region45: #{tpu_custom_call.1} parent=11 // pred_check
          %p651 = pneg %p552
        $region46: #{tpu_custom_call.1} parent=11 // pred_check_branch
          %653 = sbr.rel (%p651) target = $region48
        $region47: #{tpu_custom_call.1} parent=11 // pred_region
          _
        $region48: #{tpu_custom_call.1} parent=11 // pred_fallthru
          _
        // Predicated region
        $region49: #{tpu_custom_call.1} parent=11 // pred_check
          %p654 = pneg %p573
        $region50: #{tpu_custom_call.1} parent=11 // pred_check_branch
          %656 = sbr.rel (%p654) target = $region52
        $region51: #{tpu_custom_call.1} parent=11 // pred_region
          _
        $region52: #{tpu_custom_call.1} parent=11 // pred_fallthru
          _
      $region12: #{tpu_custom_call.1} parent=5 // pred_fallthru
        _
      %p657 = scmp.lt.s32.totalorder %s29, 2
      // Predicated region
      $region53: #{tpu_custom_call.1} parent=5 // pred_check
        %p658 = pneg %p657
      $region54: #{tpu_custom_call.1} parent=5 // pred_check_branch
        %660 = sbr.rel (%p658) target = $region56
      $region55: #{tpu_custom_call.1} parent=5 // pred_region
        // Predicated region
        $region57: #{tpu_custom_call.1} parent=55 // pred_check
          %p661 = pneg %p239
        $region58: #{tpu_custom_call.1} parent=55 // pred_check_branch
          %663 = sbr.rel (%p661) target = $region60
        $region59: #{tpu_custom_call.1} parent=55 // pred_region
          %p664 = scmp.lt.s32.totalorder %s37, 1
          %s665 = scalar_select %p664, %s37, 1
          %s666 = smul.addr %s665, 48
          %s667 = smul.addr %s666, 4
          %s668 = scalar_lea.vmem %s8, %s667
        $region60: #{tpu_custom_call.1} parent=55 // pred_fallthru
          _
        // Predicated region
        $region61: #{tpu_custom_call.1} parent=55 // pred_check
          %p669 = pneg %p265
        $region62: #{tpu_custom_call.1} parent=55 // pred_check_branch
          %671 = sbr.rel (%p669) target = $region64
        $region63: #{tpu_custom_call.1} parent=55 // pred_region
          %p672 = scmp.lt.s32.totalorder %s37, 1
          %s673 = scalar_select %p672, %s37, 1
          %s674 = smul.addr %s673, 48
          %s675 = smul.addr %s674, 4
          %s676 = scalar_lea.vmem %s9, %s675
        $region64: #{tpu_custom_call.1} parent=55 // pred_fallthru
          _
        // Predicated region
        $region65: #{tpu_custom_call.1} parent=55 // pred_check
          %p677 = pneg %p291
        $region66: #{tpu_custom_call.1} parent=55 // pred_check_branch
          %679 = sbr.rel (%p677) target = $region68
        $region67: #{tpu_custom_call.1} parent=55 // pred_region
          %p680 = scmp.lt.s32.totalorder %s37, 1
          %s681 = scalar_select %p680, %s37, 1
          %s682 = smul.addr %s681, 48
          %s683 = smul.addr %s682, 4
          %s684 = scalar_lea.vmem %s10, %s683
        $region68: #{tpu_custom_call.1} parent=55 // pred_fallthru
          _
        // Predicated region
        $region69: #{tpu_custom_call.1} parent=55 // pred_check
          %p685 = pneg %p317
        $region70: #{tpu_custom_call.1} parent=55 // pred_check_branch
          %687 = sbr.rel (%p685) target = $region72
        $region71: #{tpu_custom_call.1} parent=55 // pred_region
          %p688 = scmp.lt.s32.totalorder %s37, 1
          %s689 = scalar_select %p688, %s37, 1
          %s690 = smul.addr %s689, 8
          %s691 = scalar_lea.vmem %s11, %s690
        $region72: #{tpu_custom_call.1} parent=55 // pred_fallthru
          _
        // Predicated region
        $region73: #{tpu_custom_call.1} parent=55 // pred_check
          %p692 = pneg %p343
        $region74: #{tpu_custom_call.1} parent=55 // pred_check_branch
          %694 = sbr.rel (%p692) target = $region76
        $region75: #{tpu_custom_call.1} parent=55 // pred_region
          %p695 = scmp.lt.s32.totalorder %s37, 1
          %s696 = scalar_select %p695, %s37, 1
          %s697 = smul.addr %s696, 8
          %s698 = scalar_lea.vmem %s12, %s697
        $region76: #{tpu_custom_call.1} parent=55 // pred_fallthru
          _
        // Predicated region
        $region77: #{tpu_custom_call.1} parent=55 // pred_check
          %p699 = pneg %p369
        $region78: #{tpu_custom_call.1} parent=55 // pred_check_branch
          %701 = sbr.rel (%p699) target = $region80
        $region79: #{tpu_custom_call.1} parent=55 // pred_region
          %p702 = scmp.lt.s32.totalorder %s37, 1
          %s703 = scalar_select %p702, %s37, 1
          %s704 = smul.addr %s703, 8
          %s705 = scalar_lea.vmem %s13, %s704
        $region80: #{tpu_custom_call.1} parent=55 // pred_fallthru
          _
        // Predicated region
        $region81: #{tpu_custom_call.1} parent=55 // pred_check
          %p706 = pneg %p395
        $region82: #{tpu_custom_call.1} parent=55 // pred_check_branch
          %708 = sbr.rel (%p706) target = $region84
        $region83: #{tpu_custom_call.1} parent=55 // pred_region
          %p709 = scmp.lt.s32.totalorder %s37, 1
          %s710 = scalar_select %p709, %s37, 1
          %s711 = smul.addr %s710, 8
          %s712 = smul.addr %s711, 4
          %s713 = scalar_lea.vmem %s14, %s712
        $region84: #{tpu_custom_call.1} parent=55 // pred_fallthru
          _
        // Predicated region
        $region85: #{tpu_custom_call.1} parent=55 // pred_check
          %p714 = pneg %p421
        $region86: #{tpu_custom_call.1} parent=55 // pred_check_branch
          %716 = sbr.rel (%p714) target = $region88
        $region87: #{tpu_custom_call.1} parent=55 // pred_region
          %p717 = scmp.lt.s32.totalorder %s37, 1
          %s718 = scalar_select %p717, %s37, 1
          %s719 = scalar_lea.vmem %s15, %s718
        $region88: #{tpu_custom_call.1} parent=55 // pred_fallthru
          _
        // Predicated region
        $region89: #{tpu_custom_call.1} parent=55 // pred_check
          %p720 = pneg %p447
        $region90: #{tpu_custom_call.1} parent=55 // pred_check_branch
          %722 = sbr.rel (%p720) target = $region92
        $region91: #{tpu_custom_call.1} parent=55 // pred_region
          %p723 = scmp.lt.s32.totalorder %s37, 1
          %s724 = scalar_select %p723, %s37, 1
          %s725 = smul.addr %s724, 6
          %s726 = smul.addr %s725, 4
          %s727 = scalar_lea.vmem %s16, %s726
        $region92: #{tpu_custom_call.1} parent=55 // pred_fallthru
          _
        // Predicated region
        $region93: #{tpu_custom_call.1} parent=55 // pred_check
          %p728 = pneg %p473
        $region94: #{tpu_custom_call.1} parent=55 // pred_check_branch
          %730 = sbr.rel (%p728) target = $region96
        $region95: #{tpu_custom_call.1} parent=55 // pred_region
          %p731 = scmp.lt.s32.totalorder %s37, 1
          %s732 = scalar_select %p731, %s37, 1
          %s733 = scalar_lea.vmem %s17, %s732
        $region96: #{tpu_custom_call.1} parent=55 // pred_fallthru
          _
        // Predicated region
        $region97: #{tpu_custom_call.1} parent=55 // pred_check
          %p734 = pneg %p499
        $region98: #{tpu_custom_call.1} parent=55 // pred_check_branch
          %736 = sbr.rel (%p734) target = $region100
        $region99: #{tpu_custom_call.1} parent=55 // pred_region
          %p737 = scmp.lt.s32.totalorder %s37, 1
          %s738 = scalar_select %p737, %s37, 1
          %s739 = smul.addr %s738, 8
          %s740 = smul.addr %s739, 4
          %s741 = scalar_lea.vmem %s18, %s740
        $region100: #{tpu_custom_call.1} parent=55 // pred_fallthru
          _
        // Predicated region
        $region101: #{tpu_custom_call.1} parent=55 // pred_check
          %p742 = pneg %p525
        $region102: #{tpu_custom_call.1} parent=55 // pred_check_branch
          %744 = sbr.rel (%p742) target = $region104
        $region103: #{tpu_custom_call.1} parent=55 // pred_region
          %p745 = scmp.lt.s32.totalorder %s37, 1
          %s746 = scalar_select %p745, %s37, 1
          %s747 = scalar_lea.vmem %s19, %s746
        $region104: #{tpu_custom_call.1} parent=55 // pred_fallthru
          _
      $region56: #{tpu_custom_call.1} parent=5 // pred_fallthru
        _
      %p748 = scmp.le.s32.totalorder 1, %s29
      %p749 = scmp.lt.s32.totalorder %s29, 3
      %p750 = pnand %p748, %p749
      %p751 = pneg %p750
      // Predicated region
      $region105: #{tpu_custom_call.1} parent=5 // pred_check
        _
      $region106: #{tpu_custom_call.1} parent=5 // pred_check_branch
        %753 = sbr.rel (%p750) target = $region108
      $region107: #{tpu_custom_call.1} parent=5 // pred_region
        %s754 = ssub.s32 %s29, 1
        %s755 = smul.u32 2, %s38
        %p756 = scmp.lt.s32.totalorder %s755, 1
        %s757 = scalar_select %p756, %s755, 1
        %s758 = smul.addr %s757, 8
        %s759 = scalar_lea.vmem %s0, %s758
        %p760 = pneg %p67
        %p761 = pneg %p64
        %s762 = smul.u32 2, %s38
        %p763 = scmp.lt.s32.totalorder %s762, 1
        %s764 = scalar_select %p763, %s762, 1
        %s765 = smul.addr %s764, 4
        %s766 = smul.addr %s765, 8
        %s767 = scalar_lea.vmem %s1, %s766
        %p768 = pneg %p93
        %p769 = pneg %p90
        %p770 = pneg %p114
        %p771 = pneg %p111
        %p772 = pneg %p135
        %p773 = pneg %p132
        %p774 = pneg %p156
        %p775 = pneg %p153
        %p776 = pneg %p177
        %p777 = pneg %p174
        %p778 = pneg %p198
        %p779 = pneg %p195
        %p780 = pneg %p219
        %p781 = pneg %p216
        %p782 = scmp.lt.s32.totalorder %s39, 1
        %s783 = scalar_select %p782, %s39, 1
        %s784 = smul.addr %s783, 48
        %s785 = smul.addr %s784, 4
        %s786 = scalar_lea.vmem %s8, %s785
        %p787 = pneg %p245
        %p788 = pneg %p242
        %p789 = scmp.lt.s32.totalorder %s39, 1
        %s790 = scalar_select %p789, %s39, 1
        %s791 = smul.addr %s790, 48
        %s792 = smul.addr %s791, 4
        %s793 = scalar_lea.vmem %s9, %s792
        %p794 = pneg %p271
        %p795 = pneg %p268
        %p796 = scmp.lt.s32.totalorder %s39, 1
        %s797 = scalar_select %p796, %s39, 1
        %s798 = smul.addr %s797, 48
        %s799 = smul.addr %s798, 4
        %s800 = scalar_lea.vmem %s10, %s799
        %p801 = pneg %p297
        %p802 = pneg %p294
        %p803 = scmp.lt.s32.totalorder %s39, 1
        %s804 = scalar_select %p803, %s39, 1
        %s805 = smul.addr %s804, 8
        %s806 = scalar_lea.vmem %s11, %s805
        %p807 = pneg %p323
        %p808 = pneg %p320
        %p809 = scmp.lt.s32.totalorder %s39, 1
        %s810 = scalar_select %p809, %s39, 1
        %s811 = smul.addr %s810, 8
        %s812 = scalar_lea.vmem %s12, %s811
        %p813 = pneg %p349
        %p814 = pneg %p346
        %p815 = scmp.lt.s32.totalorder %s39, 1
        %s816 = scalar_select %p815, %s39, 1
        %s817 = smul.addr %s816, 8
        %s818 = scalar_lea.vmem %s13, %s817
        %p819 = pneg %p375
        %p820 = pneg %p372
        %p821 = scmp.lt.s32.totalorder %s39, 1
        %s822 = scalar_select %p821, %s39, 1
        %s823 = smul.addr %s822, 8
        %s824 = smul.addr %s823, 4
        %s825 = scalar_lea.vmem %s14, %s824
        %p826 = pneg %p401
        %p827 = pneg %p398
        %p828 = scmp.lt.s32.totalorder %s39, 1
        %s829 = scalar_select %p828, %s39, 1
        %s830 = scalar_lea.vmem %s15, %s829
        %p831 = pneg %p427
        %p832 = pneg %p424
        %p833 = scmp.lt.s32.totalorder %s39, 1
        %s834 = scalar_select %p833, %s39, 1
        %s835 = smul.addr %s834, 6
        %s836 = smul.addr %s835, 4
        %s837 = scalar_lea.vmem %s16, %s836
        %p838 = pneg %p453
        %p839 = pneg %p450
        %p840 = scmp.lt.s32.totalorder %s39, 1
        %s841 = scalar_select %p840, %s39, 1
        %s842 = scalar_lea.vmem %s17, %s841
        %p843 = pneg %p479
        %p844 = pneg %p476
        %p845 = scmp.lt.s32.totalorder %s39, 1
        %s846 = scalar_select %p845, %s39, 1
        %s847 = smul.addr %s846, 8
        %s848 = smul.addr %s847, 4
        %s849 = scalar_lea.vmem %s18, %s848
        %p850 = pneg %p505
        %p851 = pneg %p502
        %p852 = scmp.lt.s32.totalorder %s39, 1
        %s853 = scalar_select %p852, %s39, 1
        %s854 = scalar_lea.vmem %s19, %s853
        %p855 = pneg %p531
        %p856 = pneg %p528
        %p857 = pneg %p552
        %p858 = pneg %p549
        %p859 = pneg %p573
        %p860 = pneg %p570
        %p861 = pneg %p599
        %p862 = pneg %p596
        %s863 = smul.u32 2, %s38
        %p864 = scmp.lt.s32.totalorder %s863, 1
        %s865 = scalar_select %p864, %s863, 1
        %s866 = smul.addr %s865, 8
        %s867 = scalar_lea.vmem %s0, %s866
        %s868 = smul.u32 2, %s38
        %s869 = smul.u32 2, %s38
        %p870 = scmp.lt.s32.totalorder %s869, 1
        %s871 = scalar_select %p870, %s869, 1
        %s872 = smul.addr %s871, 4
        %s873 = smul.addr %s872, 8
        %s874 = scalar_lea.vmem %s1, %s873
        %s875 = smul.u32 2, %s38
        %p876 = scmp.lt.s32.totalorder %s39, 1
        %s877 = scalar_select %p876, %s39, 1
        %s878 = smul.addr %s877, 48
        %s879 = smul.addr %s878, 4
        %s880 = scalar_lea.vmem %s8, %s879
        %p881 = scmp.lt.s32.totalorder %s39, 1
        %s882 = scalar_select %p881, %s39, 1
        %s883 = smul.addr %s882, 48
        %s884 = smul.addr %s883, 4
        %s885 = scalar_lea.vmem %s9, %s884
        %p886 = scmp.lt.s32.totalorder %s39, 1
        %s887 = scalar_select %p886, %s39, 1
        %s888 = smul.addr %s887, 48
        %s889 = smul.addr %s888, 4
        %s890 = scalar_lea.vmem %s10, %s889
        %p891 = scmp.lt.s32.totalorder %s39, 1
        %s892 = scalar_select %p891, %s39, 1
        %s893 = smul.addr %s892, 8
        %s894 = scalar_lea.vmem %s11, %s893
        %p895 = scmp.lt.s32.totalorder %s39, 1
        %s896 = scalar_select %p895, %s39, 1
        %s897 = smul.addr %s896, 8
        %s898 = scalar_lea.vmem %s12, %s897
        %p899 = scmp.lt.s32.totalorder %s39, 1
        %s900 = scalar_select %p899, %s39, 1
        %s901 = smul.addr %s900, 8
        %s902 = scalar_lea.vmem %s13, %s901
        %p903 = scmp.lt.s32.totalorder %s39, 1
        %s904 = scalar_select %p903, %s39, 1
        %s905 = smul.addr %s904, 8
        %s906 = smul.addr %s905, 4
        %s907 = scalar_lea.vmem %s14, %s906
        %p908 = scmp.lt.s32.totalorder %s39, 1
        %s909 = scalar_select %p908, %s39, 1
        %s910 = scalar_lea.vmem %s15, %s909
        %p911 = scmp.lt.s32.totalorder %s39, 1
        %s912 = scalar_select %p911, %s39, 1
        %s913 = smul.addr %s912, 6
        %s914 = smul.addr %s913, 4
        %s915 = scalar_lea.vmem %s16, %s914
        %p916 = scmp.lt.s32.totalorder %s39, 1
        %s917 = scalar_select %p916, %s39, 1
        %s918 = scalar_lea.vmem %s17, %s917
        %p919 = scmp.lt.s32.totalorder %s39, 1
        %s920 = scalar_select %p919, %s39, 1
        %s921 = smul.addr %s920, 8
        %s922 = smul.addr %s921, 4
        %s923 = scalar_lea.vmem %s18, %s922
        %p924 = scmp.lt.s32.totalorder %s39, 1
        %s925 = scalar_select %p924, %s39, 1
        %s926 = scalar_lea.vmem %s19, %s925
        %s927 = smul.u32 2, %s38
        %p929 = scmp.eq.s32.totalorder %s39, 0
        // Predicated region
        $region109: #{tpu_custom_call.1} parent=107 // pred_check
          %p930 = pneg %p929
        $region110: #{tpu_custom_call.1} parent=107 // pred_check_branch
          %932 = sbr.rel (%p930) target = $region112
        $region111: #{tpu_custom_call.1} parent=107 // pred_region
          %v933 = vld [vmem:[%s867] sm:$0xff]
          %v934 = vld [vmem:[%s867 + $0x8] sm:$0xff]
          %v935 = vld [vmem:[%s874] sm:$0xff]
          %v936 = vld [vmem:[%s874 + $0x8] sm:$0xff]
          %v937 = vld [vmem:[%s874 + $0x10] sm:$0xff]
          %v938 = vld [vmem:[%s874 + $0x18] sm:$0xff]
          %v939 = vld [vmem:[%s874 + $0x20] sm:$0xff]
          %v940 = vld [vmem:[%s874 + $0x28] sm:$0xff]
          %v941 = vld [vmem:[%s874 + $0x30] sm:$0xff]
          %v942 = vld [vmem:[%s874 + $0x38] sm:$0xff]
          %v943 = vld [vmem:[%s2] sm:$0x1]
          %v945 = vlaneseq
          %v946 = vshrl.u32 %v945, 7
          %v947 = vsub.s32 0, %v946
          %v948 = vrot.slane %v943, %v947
          %v950 = vmul.f32 %v935, %v948
          %v951 = vmul.f32 %v939, %v948
          %v952 = vadd.f32 %v950, 0.0
          %v953 = vadd.f32 %v951, 0.0
          %s954 = scalar_lea.vmem %s2, 1
          %v955 = vld [vmem:[%s954] sm:$0x1]
          %v957 = vlaneseq
          %v958 = vshrl.u32 %v957, 7
          %v959 = vsub.s32 0, %v958
          %v960 = vrot.slane %v955, %v959
          %v962 = vmul.f32 %v935, %v960
          %v963 = vmul.f32 %v936, %v960
          %v964 = vmul.f32 %v939, %v960
          %v965 = vmul.f32 %v940, %v960
          %vm970 = vcmask 1046528
          %v971 = vrot.slane %v962, 1
          %v972 = vrot.slane %v963, 1
          %v973 = vsel %vm970, %v971, %v972
          %v974 = vrot.slane %v964, 1
          %v975 = vrot.slane %v965, 1
          %v976 = vsel %vm970, %v974, %v975
          %v979 = vadd.f32 %v952, %v973
          %v980 = vadd.f32 %v953, %v976
          %s981 = scalar_lea.vmem %s2, 2
          %v982 = vld [vmem:[%s981] sm:$0x1]
          %v984 = vlaneseq
          %v985 = vshrl.u32 %v984, 7
          %v986 = vsub.s32 0, %v985
          %v987 = vrot.slane %v982, %v986
          %v989 = vmul.f32 %v935, %v987
          %v990 = vmul.f32 %v936, %v987
          %v991 = vmul.f32 %v939, %v987
          %v992 = vmul.f32 %v940, %v987
          %vm997 = vcmask 1045504
          %v998 = vrot.slane %v989, 2
          %v999 = vrot.slane %v990, 2
          %v1000 = vsel %vm997, %v998, %v999
          %v1001 = vrot.slane %v991, 2
          %v1002 = vrot.slane %v992, 2
          %v1003 = vsel %vm997, %v1001, %v1002
          %v1006 = vadd.f32 %v979, %v1000
          %v1007 = vadd.f32 %v980, %v1003
          %s1008 = scalar_lea.vmem %s2, 3
          %v1009 = vld [vmem:[%s1008] sm:$0x1]
          %v1011 = vlaneseq
          %v1012 = vshrl.u32 %v1011, 7
          %v1013 = vsub.s32 0, %v1012
          %v1014 = vrot.slane %v1009, %v1013
          %v1016 = vmul.f32 %v935, %v1014
          %v1017 = vmul.f32 %v936, %v1014
          %v1018 = vmul.f32 %v939, %v1014
          %v1019 = vmul.f32 %v940, %v1014
          %vm1024 = vcmask 1044480
          %v1025 = vrot.slane %v1016, 3
          %v1026 = vrot.slane %v1017, 3
          %v1027 = vsel %vm1024, %v1025, %v1026
          %v1028 = vrot.slane %v1018, 3
          %v1029 = vrot.slane %v1019, 3
          %v1030 = vsel %vm1024, %v1028, %v1029
          %v1033 = vadd.f32 %v1006, %v1027
          %v1034 = vadd.f32 %v1007, %v1030
          %s1035 = scalar_lea.vmem %s2, 4
          %v1036 = vld [vmem:[%s1035] sm:$0x1]
          %v1038 = vlaneseq
          %v1039 = vshrl.u32 %v1038, 7
          %v1040 = vsub.s32 0, %v1039
          %v1041 = vrot.slane %v1036, %v1040
          %v1043 = vmul.f32 %v935, %v1041
          %v1044 = vmul.f32 %v936, %v1041
          %v1045 = vmul.f32 %v939, %v1041
          %v1046 = vmul.f32 %v940, %v1041
          %vm1051 = vcmask 1043456
          %v1052 = vrot.slane %v1043, 4
          %v1053 = vrot.slane %v1044, 4
          %v1054 = vsel %vm1051, %v1052, %v1053
          %v1055 = vrot.slane %v1045, 4
          %v1056 = vrot.slane %v1046, 4
          %v1057 = vsel %vm1051, %v1055, %v1056
          %v1060 = vadd.f32 %v1033, %v1054
          %v1061 = vadd.f32 %v1034, %v1057
          %s1062 = scalar_lea.vmem %s2, 5
          %v1063 = vld [vmem:[%s1062] sm:$0x1]
          %v1065 = vlaneseq
          %v1066 = vshrl.u32 %v1065, 7
          %v1067 = vsub.s32 0, %v1066
          %v1068 = vrot.slane %v1063, %v1067
          %v1070 = vmul.f32 %v935, %v1068
          %v1071 = vmul.f32 %v936, %v1068
          %v1072 = vmul.f32 %v939, %v1068
          %v1073 = vmul.f32 %v940, %v1068
          %vm1078 = vcmask 1042432
          %v1079 = vrot.slane %v1070, 5
          %v1080 = vrot.slane %v1071, 5
          %v1081 = vsel %vm1078, %v1079, %v1080
          %v1082 = vrot.slane %v1072, 5
          %v1083 = vrot.slane %v1073, 5
          %v1084 = vsel %vm1078, %v1082, %v1083
          %v1087 = vadd.f32 %v1060, %v1081
          %v1088 = vadd.f32 %v1061, %v1084
          %s1089 = scalar_lea.vmem %s2, 6
          %v1090 = vld [vmem:[%s1089] sm:$0x1]
          %v1092 = vlaneseq
          %v1093 = vshrl.u32 %v1092, 7
          %v1094 = vsub.s32 0, %v1093
          %v1095 = vrot.slane %v1090, %v1094
          %v1097 = vmul.f32 %v935, %v1095
          %v1098 = vmul.f32 %v936, %v1095
          %v1099 = vmul.f32 %v939, %v1095
          %v1100 = vmul.f32 %v940, %v1095
          %vm1105 = vcmask 1041408
          %v1106 = vrot.slane %v1097, 6
          %v1107 = vrot.slane %v1098, 6
          %v1108 = vsel %vm1105, %v1106, %v1107
          %v1109 = vrot.slane %v1099, 6
          %v1110 = vrot.slane %v1100, 6
          %v1111 = vsel %vm1105, %v1109, %v1110
          %v1114 = vadd.f32 %v1087, %v1108
          %v1115 = vadd.f32 %v1088, %v1111
          %s1116 = scalar_lea.vmem %s2, 7
          %v1117 = vld [vmem:[%s1116] sm:$0x1]
          %v1119 = vlaneseq
          %v1120 = vshrl.u32 %v1119, 7
          %v1121 = vsub.s32 0, %v1120
          %v1122 = vrot.slane %v1117, %v1121
          %v1124 = vmul.f32 %v935, %v1122
          %v1125 = vmul.f32 %v936, %v1122
          %v1126 = vmul.f32 %v939, %v1122
          %v1127 = vmul.f32 %v940, %v1122
          %vm1132 = vcmask 1040384
          %v1133 = vrot.slane %v1124, 7
          %v1134 = vrot.slane %v1125, 7
          %v1135 = vsel %vm1132, %v1133, %v1134
          %v1136 = vrot.slane %v1126, 7
          %v1137 = vrot.slane %v1127, 7
          %v1138 = vsel %vm1132, %v1136, %v1137
          %v1141 = vadd.f32 %v1114, %v1135
          %v1142 = vadd.f32 %v1115, %v1138
          %s1143 = scalar_lea.vmem %s2, 8
          %v1144 = vld [vmem:[%s1143] sm:$0x1]
          %v1146 = vlaneseq
          %v1147 = vshrl.u32 %v1146, 7
          %v1148 = vsub.s32 0, %v1147
          %v1149 = vrot.slane %v1144, %v1148
          %v1151 = vmul.f32 %v936, %v1149
          %v1152 = vmul.f32 %v940, %v1149
          %v1153 = vadd.f32 %v1141, %v1151
          %v1154 = vadd.f32 %v1142, %v1152
          %s1155 = scalar_lea.vmem %s2, 9
          %v1156 = vld [vmem:[%s1155] sm:$0x1]
          %v1158 = vlaneseq
          %v1159 = vshrl.u32 %v1158, 7
          %v1160 = vsub.s32 0, %v1159
          %v1161 = vrot.slane %v1156, %v1160
          %v1163 = vmul.f32 %v936, %v1161
          %v1164 = vmul.f32 %v937, %v1161
          %v1165 = vmul.f32 %v940, %v1161
          %v1166 = vmul.f32 %v941, %v1161
          %v1171 = vrot.slane %v1163, 1
          %v1172 = vrot.slane %v1164, 1
          %v1173 = vsel %vm970, %v1171, %v1172
          %v1174 = vrot.slane %v1165, 1
          %v1175 = vrot.slane %v1166, 1
          %v1176 = vsel %vm970, %v1174, %v1175
          %v1179 = vadd.f32 %v1153, %v1173
          %v1180 = vadd.f32 %v1154, %v1176
          %s1181 = scalar_lea.vmem %s2, 10
          %v1182 = vld [vmem:[%s1181] sm:$0x1]
          %v1184 = vlaneseq
          %v1185 = vshrl.u32 %v1184, 7
          %v1186 = vsub.s32 0, %v1185
          %v1187 = vrot.slane %v1182, %v1186
          %v1189 = vmul.f32 %v936, %v1187
          %v1190 = vmul.f32 %v937, %v1187
          %v1191 = vmul.f32 %v940, %v1187
          %v1192 = vmul.f32 %v941, %v1187
          %v1197 = vrot.slane %v1189, 2
          %v1198 = vrot.slane %v1190, 2
          %v1199 = vsel %vm997, %v1197, %v1198
          %v1200 = vrot.slane %v1191, 2
          %v1201 = vrot.slane %v1192, 2
          %v1202 = vsel %vm997, %v1200, %v1201
          %v1205 = vadd.f32 %v1179, %v1199
          %v1206 = vadd.f32 %v1180, %v1202
          %s1207 = scalar_lea.vmem %s2, 11
          %v1208 = vld [vmem:[%s1207] sm:$0x1]
          %v1210 = vlaneseq
          %v1211 = vshrl.u32 %v1210, 7
          %v1212 = vsub.s32 0, %v1211
          %v1213 = vrot.slane %v1208, %v1212
          %v1215 = vmul.f32 %v936, %v1213
          %v1216 = vmul.f32 %v937, %v1213
          %v1217 = vmul.f32 %v940, %v1213
          %v1218 = vmul.f32 %v941, %v1213
          %v1223 = vrot.slane %v1215, 3
          %v1224 = vrot.slane %v1216, 3
          %v1225 = vsel %vm1024, %v1223, %v1224
          %v1226 = vrot.slane %v1217, 3
          %v1227 = vrot.slane %v1218, 3
          %v1228 = vsel %vm1024, %v1226, %v1227
          %v1231 = vadd.f32 %v1205, %v1225
          %v1232 = vadd.f32 %v1206, %v1228
          %s1233 = scalar_lea.vmem %s2, 12
          %v1234 = vld [vmem:[%s1233] sm:$0x1]
          %v1236 = vlaneseq
          %v1237 = vshrl.u32 %v1236, 7
          %v1238 = vsub.s32 0, %v1237
          %v1239 = vrot.slane %v1234, %v1238
          %v1241 = vmul.f32 %v936, %v1239
          %v1242 = vmul.f32 %v937, %v1239
          %v1243 = vmul.f32 %v940, %v1239
          %v1244 = vmul.f32 %v941, %v1239
          %v1249 = vrot.slane %v1241, 4
          %v1250 = vrot.slane %v1242, 4
          %v1251 = vsel %vm1051, %v1249, %v1250
          %v1252 = vrot.slane %v1243, 4
          %v1253 = vrot.slane %v1244, 4
          %v1254 = vsel %vm1051, %v1252, %v1253
          %v1257 = vadd.f32 %v1231, %v1251
          %v1258 = vadd.f32 %v1232, %v1254
          %s1259 = scalar_lea.vmem %s2, 13
          %v1260 = vld [vmem:[%s1259] sm:$0x1]
          %v1262 = vlaneseq
          %v1263 = vshrl.u32 %v1262, 7
          %v1264 = vsub.s32 0, %v1263
          %v1265 = vrot.slane %v1260, %v1264
          %v1267 = vmul.f32 %v936, %v1265
          %v1268 = vmul.f32 %v937, %v1265
          %v1269 = vmul.f32 %v940, %v1265
          %v1270 = vmul.f32 %v941, %v1265
          %v1275 = vrot.slane %v1267, 5
          %v1276 = vrot.slane %v1268, 5
          %v1277 = vsel %vm1078, %v1275, %v1276
          %v1278 = vrot.slane %v1269, 5
          %v1279 = vrot.slane %v1270, 5
          %v1280 = vsel %vm1078, %v1278, %v1279
          %v1283 = vadd.f32 %v1257, %v1277
          %v1284 = vadd.f32 %v1258, %v1280
          %s1285 = scalar_lea.vmem %s2, 14
          %v1286 = vld [vmem:[%s1285] sm:$0x1]
          %v1288 = vlaneseq
          %v1289 = vshrl.u32 %v1288, 7
          %v1290 = vsub.s32 0, %v1289
          %v1291 = vrot.slane %v1286, %v1290
          %v1293 = vmul.f32 %v936, %v1291
          %v1294 = vmul.f32 %v937, %v1291
          %v1295 = vmul.f32 %v940, %v1291
          %v1296 = vmul.f32 %v941, %v1291
          %v1301 = vrot.slane %v1293, 6
          %v1302 = vrot.slane %v1294, 6
          %v1303 = vsel %vm1105, %v1301, %v1302
          %v1304 = vrot.slane %v1295, 6
          %v1305 = vrot.slane %v1296, 6
          %v1306 = vsel %vm1105, %v1304, %v1305
          %v1309 = vadd.f32 %v1283, %v1303
          %v1310 = vadd.f32 %v1284, %v1306
          %s1311 = scalar_lea.vmem %s2, 15
          %v1312 = vld [vmem:[%s1311] sm:$0x1]
          %v1314 = vlaneseq
          %v1315 = vshrl.u32 %v1314, 7
          %v1316 = vsub.s32 0, %v1315
          %v1317 = vrot.slane %v1312, %v1316
          %v1319 = vmul.f32 %v936, %v1317
          %v1320 = vmul.f32 %v937, %v1317
          %v1321 = vmul.f32 %v940, %v1317
          %v1322 = vmul.f32 %v941, %v1317
          %v1327 = vrot.slane %v1319, 7
          %v1328 = vrot.slane %v1320, 7
          %v1329 = vsel %vm1132, %v1327, %v1328
          %v1330 = vrot.slane %v1321, 7
          %v1331 = vrot.slane %v1322, 7
          %v1332 = vsel %vm1132, %v1330, %v1331
          %v1335 = vadd.f32 %v1309, %v1329
          %v1336 = vadd.f32 %v1310, %v1332
          %s1337 = scalar_lea.vmem %s2, 16
          %v1338 = vld [vmem:[%s1337] sm:$0x1]
          %v1340 = vlaneseq
          %v1341 = vshrl.u32 %v1340, 7
          %v1342 = vsub.s32 0, %v1341
          %v1343 = vrot.slane %v1338, %v1342
          %v1345 = vmul.f32 %v937, %v1343
          %v1346 = vmul.f32 %v941, %v1343
          %v1347 = vadd.f32 %v1335, %v1345
          %v1348 = vadd.f32 %v1336, %v1346
          %s1349 = scalar_lea.vmem %s2, 17
          %v1350 = vld [vmem:[%s1349] sm:$0x1]
          %v1352 = vlaneseq
          %v1353 = vshrl.u32 %v1352, 7
          %v1354 = vsub.s32 0, %v1353
          %v1355 = vrot.slane %v1350, %v1354
          %v1357 = vmul.f32 %v937, %v1355
          %v1358 = vmul.f32 %v938, %v1355
          %v1359 = vmul.f32 %v941, %v1355
          %v1360 = vmul.f32 %v942, %v1355
          %v1365 = vrot.slane %v1357, 1
          %v1366 = vrot.slane %v1358, 1
          %v1367 = vsel %vm970, %v1365, %v1366
          %v1368 = vrot.slane %v1359, 1
          %v1369 = vrot.slane %v1360, 1
          %v1370 = vsel %vm970, %v1368, %v1369
          %v1373 = vadd.f32 %v1347, %v1367
          %v1374 = vadd.f32 %v1348, %v1370
          %s1375 = scalar_lea.vmem %s2, 18
          %v1376 = vld [vmem:[%s1375] sm:$0x1]
          %v1378 = vlaneseq
          %v1379 = vshrl.u32 %v1378, 7
          %v1380 = vsub.s32 0, %v1379
          %v1381 = vrot.slane %v1376, %v1380
          %v1383 = vmul.f32 %v937, %v1381
          %v1384 = vmul.f32 %v938, %v1381
          %v1385 = vmul.f32 %v941, %v1381
          %v1386 = vmul.f32 %v942, %v1381
          %v1391 = vrot.slane %v1383, 2
          %v1392 = vrot.slane %v1384, 2
          %v1393 = vsel %vm997, %v1391, %v1392
          %v1394 = vrot.slane %v1385, 2
          %v1395 = vrot.slane %v1386, 2
          %v1396 = vsel %vm997, %v1394, %v1395
          %v1399 = vadd.f32 %v1373, %v1393
          %v1400 = vadd.f32 %v1374, %v1396
          %s1401 = scalar_lea.vmem %s2, 19
          %v1402 = vld [vmem:[%s1401] sm:$0x1]
          %v1404 = vlaneseq
          %v1405 = vshrl.u32 %v1404, 7
          %v1406 = vsub.s32 0, %v1405
          %v1407 = vrot.slane %v1402, %v1406
          %v1409 = vmul.f32 %v937, %v1407
          %v1410 = vmul.f32 %v938, %v1407
          %v1411 = vmul.f32 %v941, %v1407
          %v1412 = vmul.f32 %v942, %v1407
          %v1417 = vrot.slane %v1409, 3
          %v1418 = vrot.slane %v1410, 3
          %v1419 = vsel %vm1024, %v1417, %v1418
          %v1420 = vrot.slane %v1411, 3
          %v1421 = vrot.slane %v1412, 3
          %v1422 = vsel %vm1024, %v1420, %v1421
          %v1425 = vadd.f32 %v1399, %v1419
          %v1426 = vadd.f32 %v1400, %v1422
          %s1427 = scalar_lea.vmem %s2, 20
          %v1428 = vld [vmem:[%s1427] sm:$0x1]
          %v1430 = vlaneseq
          %v1431 = vshrl.u32 %v1430, 7
          %v1432 = vsub.s32 0, %v1431
          %v1433 = vrot.slane %v1428, %v1432
          %v1435 = vmul.f32 %v937, %v1433
          %v1436 = vmul.f32 %v938, %v1433
          %v1437 = vmul.f32 %v941, %v1433
          %v1438 = vmul.f32 %v942, %v1433
          %v1443 = vrot.slane %v1435, 4
          %v1444 = vrot.slane %v1436, 4
          %v1445 = vsel %vm1051, %v1443, %v1444
          %v1446 = vrot.slane %v1437, 4
          %v1447 = vrot.slane %v1438, 4
          %v1448 = vsel %vm1051, %v1446, %v1447
          %v1451 = vadd.f32 %v1425, %v1445
          %v1452 = vadd.f32 %v1426, %v1448
          %s1453 = scalar_lea.vmem %s2, 21
          %v1454 = vld [vmem:[%s1453] sm:$0x1]
          %v1456 = vlaneseq
          %v1457 = vshrl.u32 %v1456, 7
          %v1458 = vsub.s32 0, %v1457
          %v1459 = vrot.slane %v1454, %v1458
          %v1461 = vmul.f32 %v937, %v1459
          %v1462 = vmul.f32 %v938, %v1459
          %v1463 = vmul.f32 %v941, %v1459
          %v1464 = vmul.f32 %v942, %v1459
          %v1469 = vrot.slane %v1461, 5
          %v1470 = vrot.slane %v1462, 5
          %v1471 = vsel %vm1078, %v1469, %v1470
          %v1472 = vrot.slane %v1463, 5
          %v1473 = vrot.slane %v1464, 5
          %v1474 = vsel %vm1078, %v1472, %v1473
          %v1477 = vadd.f32 %v1451, %v1471
          %v1478 = vadd.f32 %v1452, %v1474
          %s1479 = scalar_lea.vmem %s2, 22
          %v1480 = vld [vmem:[%s1479] sm:$0x1]
          %v1482 = vlaneseq
          %v1483 = vshrl.u32 %v1482, 7
          %v1484 = vsub.s32 0, %v1483
          %v1485 = vrot.slane %v1480, %v1484
          %v1487 = vmul.f32 %v937, %v1485
          %v1488 = vmul.f32 %v938, %v1485
          %v1489 = vmul.f32 %v941, %v1485
          %v1490 = vmul.f32 %v942, %v1485
          %v1495 = vrot.slane %v1487, 6
          %v1496 = vrot.slane %v1488, 6
          %v1497 = vsel %vm1105, %v1495, %v1496
          %v1498 = vrot.slane %v1489, 6
          %v1499 = vrot.slane %v1490, 6
          %v1500 = vsel %vm1105, %v1498, %v1499
          %v1503 = vadd.f32 %v1477, %v1497
          %v1504 = vadd.f32 %v1478, %v1500
          %s1505 = scalar_lea.vmem %s2, 23
          %v1506 = vld [vmem:[%s1505] sm:$0x1]
          %v1508 = vlaneseq
          %v1509 = vshrl.u32 %v1508, 7
          %v1510 = vsub.s32 0, %v1509
          %v1511 = vrot.slane %v1506, %v1510
          %v1513 = vmul.f32 %v937, %v1511
          %v1514 = vmul.f32 %v938, %v1511
          %v1515 = vmul.f32 %v941, %v1511
          %v1516 = vmul.f32 %v942, %v1511
          %v1521 = vrot.slane %v1513, 7
          %v1522 = vrot.slane %v1514, 7
          %v1523 = vsel %vm1132, %v1521, %v1522
          %v1524 = vrot.slane %v1515, 7
          %v1525 = vrot.slane %v1516, 7
          %v1526 = vsel %vm1132, %v1524, %v1525
          %v1529 = vadd.f32 %v1503, %v1523
          %v1530 = vadd.f32 %v1504, %v1526
          %s1531 = scalar_lea.vmem %s2, 24
          %v1532 = vld [vmem:[%s1531] sm:$0x1]
          %v1534 = vlaneseq
          %v1535 = vshrl.u32 %v1534, 7
          %v1536 = vsub.s32 0, %v1535
          %v1537 = vrot.slane %v1532, %v1536
          %v1539 = vmul.f32 %v938, %v1537
          %v1540 = vmul.f32 %v942, %v1537
          %v1541 = vadd.f32 %v1529, %v1539
          %v1542 = vadd.f32 %v1530, %v1540
          %v1543 = vld [vmem:[%s3] sm:$0x1]
          %v1545 = vlaneseq
          %v1546 = vshrl.u32 %v1545, 7
          %v1547 = vsub.s32 0, %v1546
          %v1548 = vrot.slane %v1543, %v1547
          %v1550 = vadd.f32 %v1541, %v1548
          %v1551 = vadd.f32 %v1542, %v1548
          %v1552 = vmul.f32 %v1550, 0.5
          %v1553 = vmul.f32 %v1551, 0.5
          %v1554 = vmul.f32 %v1550, 0.044715
          %v1555 = vmul.f32 %v1551, 0.044715
          %v1556 = vmul.f32 %v1554, %v1550
          %v1557 = vmul.f32 %v1555, %v1551
          %v1558 = vmul.f32 %v1556, %v1550
          %v1559 = vmul.f32 %v1557, %v1551
          %v1560 = vadd.f32 %v1550, %v1558
          %v1561 = vadd.f32 %v1551, %v1559
          %v1562 = vmul.f32 %v1560, 0.7978846
          %v1563 = vmul.f32 %v1561, 0.7978846
          %v1564 = vtanh.pop %v1562
          %v1565 = vtanh.pop %v1563
          %v1566 = vadd.f32 %v1564, 1.0
          %v1567 = vadd.f32 %v1565, 1.0
          %v1568 = vmul.f32 %v1552, %v1566
          %v1569 = vmul.f32 %v1553, %v1567
          %v1570 = vadd.f32 %v933, %v1568
          %v1571 = vadd.f32 %v934, %v1569
          %vm1572 = vcmask 130048
          %v1573 = vsel %vm1572, %v1570, 0.0
          %1574 = vadd.xlane.f32.xlu0 %v1573
          %v1575 = vpop.xlane.xlu0 %1574
          %v1576 = vsel %vm1572, %v1571, 0.0
          %1577 = vadd.xlane.f32.xlu0 %v1576
          %v1578 = vpop.xlane.xlu0 %1577
          %v1579 = vrcp.pop 16.0
          %v1580 = vmul.f32 %v1575, %v1579
          %v1581 = vmul.f32 %v1578, %v1579
          %v1582 = vsub.f32 %v1570, %v1580
          %v1583 = vsub.f32 %v1571, %v1581
          %v1584 = vmul.f32 %v1582, %v1582
          %v1585 = vmul.f32 %v1583, %v1583
          %v1586 = vsel %vm1572, %v1584, 0.0
          %1587 = vadd.xlane.f32.xlu0 %v1586
          %v1588 = vpop.xlane.xlu0 %1587
          %v1589 = vsel %vm1572, %v1585, 0.0
          %1590 = vadd.xlane.f32.xlu0 %v1589
          %v1591 = vpop.xlane.xlu0 %1590
          %v1592 = vmul.f32 %v1588, %v1579
          %v1593 = vmul.f32 %v1591, %v1579
          %v1594 = vadd.f32 %v1592, 1e-05
          %v1595 = vadd.f32 %v1593, 1e-05
          %v1596 = vrsqrt.pop %v1594
          %v1597 = vrsqrt.pop %v1595
          %v1598 = vmul.f32 %v1582, %v1596
          %v1599 = vmul.f32 %v1583, %v1597
          %v1600 = vld [vmem:[%s4] sm:$0x1]
          %v1602 = vlaneseq
          %v1603 = vshrl.u32 %v1602, 7
          %v1604 = vsub.s32 0, %v1603
          %v1605 = vrot.slane %v1600, %v1604
          %v1607 = vmul.f32 %v1598, %v1605
          %v1608 = vmul.f32 %v1599, %v1605
          %v1609 = vld [vmem:[%s5] sm:$0x1]
          %v1611 = vlaneseq
          %v1612 = vshrl.u32 %v1611, 7
          %v1613 = vsub.s32 0, %v1612
          %v1614 = vrot.slane %v1609, %v1613
          %v1616 = vadd.f32 %v1607, %v1614
          %v1617 = vadd.f32 %v1608, %v1614
          %v1618 = vpack.c.bf16 %v1617, %v1616
          %v1619 = vld [vmem:[%s6] sm:$0xf]
          %v1620 = vld [vmem:[%s6 + $0x4] sm:$0xf]
          %v1621 = vld [vmem:[%s7] sm:$0x1]
          %v1623 = vlaneseq
          %v1624 = vshrl.u32 %v1623, 7
          %v1625 = vsub.s32 0, %v1624
          %v1626 = vrot.slane %v1621, %v1625
          %v1630 = vunpack.c.l.b16 %v1619
          %v1631 = vunpack.c.l.b16 %v1620
          %v1632 = vpack.c.b16 %v1631, %v1630
          %v1635 = vsel %vm1572, %v1618, 0
          %1637 = vmatprep.subr.bf16.mxu0 0
          %1638 = vmatpush1.bf16.msra.mxu0 0
          %1639 = vmatprep.subr.bf16.mxu0 0
          %1640 = vmatpush1.bf16.msra.mxu0 0
          %1641 = vmatprep.subr.bf16.mxu0 0
          %1642 = vmatpush1.bf16.msra.mxu0 0
          %1643 = vmatprep.subr.bf16.mxu0 0
          %1644 = vmatpush1.bf16.msra.mxu0 0
          %1645 = vmatprep.subr.bf16.mxu0 0
          %1646 = vmatpush1.bf16.msra.mxu0 0
          %1647 = vmatprep.subr.bf16.mxu0 0
          %1648 = vmatpush1.bf16.msra.mxu0 0
          %1649 = vmatprep.subr.bf16.mxu0 0
          %1650 = vmatpush1.bf16.msra.mxu0 0
          %1651 = vmatprep.subr.bf16.mxu0 0
          %1652 = vmatpush1.bf16.msra.mxu0 %v1632
          %1653 = vmatprep.subr.bf16.mxu0 0
          %1654 = vmatpush2.bf16.msra.mxu0 0
          %1655 = vmatprep.subr.bf16.mxu0 0
          %1656 = vmatpush2.bf16.msra.mxu0 0
          %1657 = vmatprep.subr.bf16.mxu0 0
          %1658 = vmatpush2.bf16.msra.mxu0 0
          %1659 = vmatprep.subr.bf16.mxu0 0
          %1660 = vmatpush2.bf16.msra.mxu0 0
          %1661 = vmatprep.subr.bf16.mxu0 0
          %1662 = vmatpush2.bf16.msra.mxu0 0
          %1663 = vmatprep.subr.bf16.mxu0 0
          %1664 = vmatpush2.bf16.msra.mxu0 0
          %1665 = vmatprep.subr.bf16.mxu0 0
          %1666 = vmatpush2.bf16.msra.mxu0 0
          %1667 = vmatprep.subr.bf16.mxu0 0
          %1668 = vmatpush2.bf16.msra.mxu0 0
          %1669 = vmatprep.mubr.bf16.mxu0 0
          %1670 = vmatmul.mubr.bf16.gmra.mxu0 %v1635
          %v1671 = vpop.f32.mrf.mxu0
          %v1672 = vadd.f32 %v1626, %v1671
          %v1673 = vpop.f32.mrf.mxu0
          %v1674 = vpop.f32.mrf.mxu0
          %v1675 = vadd.f32 %v1626, %v1674
          %v1676 = vpop.f32.mrf.mxu0
          %1677 = vdwg.mxu0
          %v1680 = vrot.slane %v1672, 7
          %v1681 = vrot.slane %v1675, 7
          %v1684 = vsel %vm1132, -5.0, %v1680
          %v1685 = vsel %vm1132, -5.0, %v1681
          %v1686 = vsel %vm1132, %v1680, 0.0
          %v1687 = vsel %vm1132, %v1681, 0.0
          %vm1688 = vcmask 392192
          %1689 = vst.msk [vmem:[#allocation2] sm:$0xff] %vm1688, %v1684
          %1690 = vst.msk [vmem:[#allocation2 + $0x8] sm:$0xff] %vm1688, %v1686
          %1691 = vst.msk [vmem:[#allocation2 + $0x10] sm:$0xff] %vm1688, %v1685
          %1692 = vst.msk [vmem:[#allocation2 + $0x18] sm:$0xff] %vm1688, %v1687
        $region112: #{tpu_custom_call.1} parent=107 // pred_fallthru
          _
        %v1693 = vld [vmem:[#allocation2] sm:$0xff]
        %v1694 = vld [vmem:[#allocation2 + $0x8] sm:$0xff]
        %v1695 = vld [vmem:[#allocation2 + $0x10] sm:$0xff]
        %v1696 = vld [vmem:[#allocation2 + $0x18] sm:$0xff]
        %v1697 = vpack.c.bf16 %v1694, %v1693
        %v1698 = vpack.c.bf16 %v1696, %v1695
        %v1699 = vlaneseq
        %v1700 = vand.u32 %v1699, 127
        %vm1701 = vcmp.lt.s32.totalorder %v1700, 9
        %v1702 = vld [vmem:[%s880] sm:$0xf]
        %v1703 = vld [vmem:[%s880 + $0x4] sm:$0xf]
        %v1704 = vld [vmem:[%s880 + $0x8] sm:$0xf]
        %v1705 = vld [vmem:[%s880 + $0xc] sm:$0xf]
        %v1706 = vld [vmem:[%s880 + $0x10] sm:$0xf]
        %v1707 = vld [vmem:[%s880 + $0x14] sm:$0xf]
        %v1708 = vld [vmem:[%s894] sm:$0x1]
        %v1710 = vlaneseq
        %v1711 = vshrl.u32 %v1710, 7
        %v1712 = vsub.s32 0, %v1711
        %v1713 = vrot.slane %v1708, %v1712
        %v1721 = vunpack.c.l.b16 %v1702
        %v1722 = vunpack.c.l.b16 %v1703
        %v1723 = vunpack.c.l.b16 %v1704
        %v1724 = vunpack.c.l.b16 %v1705
        %v1725 = vunpack.c.l.b16 %v1706
        %v1726 = vunpack.c.l.b16 %v1707
        %v1727 = vpack.c.b16 %v1722, %v1721
        %v1728 = vpack.c.b16 %v1724, %v1723
        %v1729 = vpack.c.b16 %v1726, %v1725
        %vm1733 = vcmask 392192
        %v1735 = vsel %vm1733, %v1697, 0
        %v1738 = vsel %vm1733, %v1698, 0
        %1740 = vmatprep.subr.bf16.mxu0 0
        %1741 = vmatpush1.bf16.msra.mxu0 0
        %1742 = vmatprep.subr.bf16.mxu0 0
        %1743 = vmatpush1.bf16.msra.mxu0 0
        %1744 = vmatprep.subr.bf16.mxu0 0
        %1745 = vmatpush1.bf16.msra.mxu0 0
        %1746 = vmatprep.subr.bf16.mxu0 0
        %1747 = vmatpush1.bf16.msra.mxu0 0
        %1748 = vmatprep.subr.bf16.mxu0 0
        %1749 = vmatpush1.bf16.msra.mxu0 0
        %1750 = vmatprep.subr.bf16.mxu0 0
        %1751 = vmatpush1.bf16.msra.mxu0 %v1729
        %1752 = vmatprep.subr.bf16.mxu0 0
        %1753 = vmatpush1.bf16.msra.mxu0 %v1728
        %1754 = vmatprep.subr.bf16.mxu0 0
        %1755 = vmatpush1.bf16.msra.mxu0 %v1727
        %1756 = vmatprep.subr.bf16.mxu0 0
        %1757 = vmatpush2.bf16.msra.mxu0 0
        %1758 = vmatprep.subr.bf16.mxu0 0
        %1759 = vmatpush2.bf16.msra.mxu0 0
        %1760 = vmatprep.subr.bf16.mxu0 0
        %1761 = vmatpush2.bf16.msra.mxu0 0
        %1762 = vmatprep.subr.bf16.mxu0 0
        %1763 = vmatpush2.bf16.msra.mxu0 0
        %1764 = vmatprep.subr.bf16.mxu0 0
        %1765 = vmatpush2.bf16.msra.mxu0 0
        %1766 = vmatprep.subr.bf16.mxu0 0
        %1767 = vmatpush2.bf16.msra.mxu0 0
        %1768 = vmatprep.subr.bf16.mxu0 0
        %1769 = vmatpush2.bf16.msra.mxu0 0
        %1770 = vmatprep.subr.bf16.mxu0 0
        %1771 = vmatpush2.bf16.msra.mxu0 0
        %1772 = vmatprep.mubr.bf16.mxu0 0
        %1773 = vmatmul.mubr.bf16.gmra.mxu0 %v1735
        %v1774 = vpop.f32.mrf.mxu0
        %v1775 = vadd.f32 %v1713, %v1774
        %v1776 = vpop.f32.mrf.mxu0
        %v1777 = vpop.f32.mrf.mxu0
        %v1778 = vadd.f32 %v1713, %v1777
        %v1779 = vpop.f32.mrf.mxu0
        %1780 = vmatprep.mubr.bf16.mxu0 0
        %1781 = vmatmul.mubr.bf16.gmra.mxu0 %v1738
        %v1782 = vpop.f32.mrf.mxu0
        %v1783 = vadd.f32 %v1713, %v1782
        %v1784 = vpop.f32.mrf.mxu0
        %v1785 = vpop.f32.mrf.mxu0
        %v1786 = vadd.f32 %v1713, %v1785
        %v1787 = vpop.f32.mrf.mxu0
        %1788 = vdwg.mxu0
        %v1789 = vld [vmem:[%s885] sm:$0xf]
        %v1790 = vld [vmem:[%s885 + $0x4] sm:$0xf]
        %v1791 = vld [vmem:[%s885 + $0x8] sm:$0xf]
        %v1792 = vld [vmem:[%s885 + $0xc] sm:$0xf]
        %v1793 = vld [vmem:[%s885 + $0x10] sm:$0xf]
        %v1794 = vld [vmem:[%s885 + $0x14] sm:$0xf]
        %v1795 = vld [vmem:[%s898] sm:$0x1]
        %v1797 = vlaneseq
        %v1798 = vshrl.u32 %v1797, 7
        %v1799 = vsub.s32 0, %v1798
        %v1800 = vrot.slane %v1795, %v1799
        %v1808 = vunpack.c.l.b16 %v1789
        %v1809 = vunpack.c.l.b16 %v1790
        %v1810 = vunpack.c.l.b16 %v1791
        %v1811 = vunpack.c.l.b16 %v1792
        %v1812 = vunpack.c.l.b16 %v1793
        %v1813 = vunpack.c.l.b16 %v1794
        %v1814 = vpack.c.b16 %v1809, %v1808
        %v1815 = vpack.c.b16 %v1811, %v1810
        %v1816 = vpack.c.b16 %v1813, %v1812
        %1820 = vmatprep.subr.bf16.mxu0 0
        %1821 = vmatpush1.bf16.msra.mxu0 0
        %1822 = vmatprep.subr.bf16.mxu0 0
        %1823 = vmatpush1.bf16.msra.mxu0 0
        %1824 = vmatprep.subr.bf16.mxu0 0
        %1825 = vmatpush1.bf16.msra.mxu0 0
        %1826 = vmatprep.subr.bf16.mxu0 0
        %1827 = vmatpush1.bf16.msra.mxu0 0
        %1828 = vmatprep.subr.bf16.mxu0 0
        %1829 = vmatpush1.bf16.msra.mxu0 0
        %1830 = vmatprep.subr.bf16.mxu0 0
        %1831 = vmatpush1.bf16.msra.mxu0 %v1816
        %1832 = vmatprep.subr.bf16.mxu0 0
        %1833 = vmatpush1.bf16.msra.mxu0 %v1815
        %1834 = vmatprep.subr.bf16.mxu0 0
        %1835 = vmatpush1.bf16.msra.mxu0 %v1814
        %1836 = vmatprep.subr.bf16.mxu0 0
        %1837 = vmatpush2.bf16.msra.mxu0 0
        %1838 = vmatprep.subr.bf16.mxu0 0
        %1839 = vmatpush2.bf16.msra.mxu0 0
        %1840 = vmatprep.subr.bf16.mxu0 0
        %1841 = vmatpush2.bf16.msra.mxu0 0
        %1842 = vmatprep.subr.bf16.mxu0 0
        %1843 = vmatpush2.bf16.msra.mxu0 0
        %1844 = vmatprep.subr.bf16.mxu0 0
        %1845 = vmatpush2.bf16.msra.mxu0 0
        %1846 = vmatprep.subr.bf16.mxu0 0
        %1847 = vmatpush2.bf16.msra.mxu0 0
        %1848 = vmatprep.subr.bf16.mxu0 0
        %1849 = vmatpush2.bf16.msra.mxu0 0
        %1850 = vmatprep.subr.bf16.mxu0 0
        %1851 = vmatpush2.bf16.msra.mxu0 0
        %1852 = vmatprep.mubr.bf16.mxu0 0
        %1853 = vmatmul.mubr.bf16.gmra.mxu0 %v1735
        %v1854 = vpop.f32.mrf.mxu0
        %v1855 = vadd.f32 %v1800, %v1854
        %v1856 = vpop.f32.mrf.mxu0
        %v1857 = vpop.f32.mrf.mxu0
        %v1858 = vadd.f32 %v1800, %v1857
        %v1859 = vpop.f32.mrf.mxu0
        %1860 = vmatprep.mubr.bf16.mxu0 0
        %1861 = vmatmul.mubr.bf16.gmra.mxu0 %v1738
        %v1862 = vpop.f32.mrf.mxu0
        %v1863 = vadd.f32 %v1800, %v1862
        %v1864 = vpop.f32.mrf.mxu0
        %v1865 = vpop.f32.mrf.mxu0
        %v1866 = vadd.f32 %v1800, %v1865
        %v1867 = vpop.f32.mrf.mxu0
        %1868 = vdwg.mxu0
        %v1869 = vld [vmem:[%s890] sm:$0xf]
        %v1870 = vld [vmem:[%s890 + $0x4] sm:$0xf]
        %v1871 = vld [vmem:[%s890 + $0x8] sm:$0xf]
        %v1872 = vld [vmem:[%s890 + $0xc] sm:$0xf]
        %v1873 = vld [vmem:[%s890 + $0x10] sm:$0xf]
        %v1874 = vld [vmem:[%s890 + $0x14] sm:$0xf]
        %v1875 = vld [vmem:[%s902] sm:$0x1]
        %v1877 = vlaneseq
        %v1878 = vshrl.u32 %v1877, 7
        %v1879 = vsub.s32 0, %v1878
        %v1880 = vrot.slane %v1875, %v1879
        %v1888 = vunpack.c.l.b16 %v1869
        %v1889 = vunpack.c.l.b16 %v1870
        %v1890 = vunpack.c.l.b16 %v1871
        %v1891 = vunpack.c.l.b16 %v1872
        %v1892 = vunpack.c.l.b16 %v1873
        %v1893 = vunpack.c.l.b16 %v1874
        %v1894 = vpack.c.b16 %v1889, %v1888
        %v1895 = vpack.c.b16 %v1891, %v1890
        %v1896 = vpack.c.b16 %v1893, %v1892
        %1900 = vmatprep.subr.bf16.mxu0 0
        %1901 = vmatpush1.bf16.msra.mxu0 0
        %1902 = vmatprep.subr.bf16.mxu0 0
        %1903 = vmatpush1.bf16.msra.mxu0 0
        %1904 = vmatprep.subr.bf16.mxu0 0
        %1905 = vmatpush1.bf16.msra.mxu0 0
        %1906 = vmatprep.subr.bf16.mxu0 0
        %1907 = vmatpush1.bf16.msra.mxu0 0
        %1908 = vmatprep.subr.bf16.mxu0 0
        %1909 = vmatpush1.bf16.msra.mxu0 0
        %1910 = vmatprep.subr.bf16.mxu0 0
        %1911 = vmatpush1.bf16.msra.mxu0 %v1896
        %1912 = vmatprep.subr.bf16.mxu0 0
        %1913 = vmatpush1.bf16.msra.mxu0 %v1895
        %1914 = vmatprep.subr.bf16.mxu0 0
        %1915 = vmatpush1.bf16.msra.mxu0 %v1894
        %1916 = vmatprep.subr.bf16.mxu0 0
        %1917 = vmatpush2.bf16.msra.mxu0 0
        %1918 = vmatprep.subr.bf16.mxu0 0
        %1919 = vmatpush2.bf16.msra.mxu0 0
        %1920 = vmatprep.subr.bf16.mxu0 0
        %1921 = vmatpush2.bf16.msra.mxu0 0
        %1922 = vmatprep.subr.bf16.mxu0 0
        %1923 = vmatpush2.bf16.msra.mxu0 0
        %1924 = vmatprep.subr.bf16.mxu0 0
        %1925 = vmatpush2.bf16.msra.mxu0 0
        %1926 = vmatprep.subr.bf16.mxu0 0
        %1927 = vmatpush2.bf16.msra.mxu0 0
        %1928 = vmatprep.subr.bf16.mxu0 0
        %1929 = vmatpush2.bf16.msra.mxu0 0
        %1930 = vmatprep.subr.bf16.mxu0 0
        %1931 = vmatpush2.bf16.msra.mxu0 0
        %1932 = vmatprep.mubr.bf16.mxu0 0
        %1933 = vmatmul.mubr.bf16.gmra.mxu0 %v1735
        %v1934 = vpop.f32.mrf.mxu0
        %v1935 = vadd.f32 %v1880, %v1934
        %v1936 = vpop.f32.mrf.mxu0
        %v1937 = vpop.f32.mrf.mxu0
        %v1938 = vadd.f32 %v1880, %v1937
        %v1939 = vpop.f32.mrf.mxu0
        %1940 = vmatprep.mubr.bf16.mxu0 0
        %1941 = vmatmul.mubr.bf16.gmra.mxu0 %v1738
        %v1942 = vpop.f32.mrf.mxu0
        %v1943 = vadd.f32 %v1880, %v1942
        %v1944 = vpop.f32.mrf.mxu0
        %v1945 = vpop.f32.mrf.mxu0
        %v1946 = vadd.f32 %v1880, %v1945
        %v1947 = vpop.f32.mrf.mxu0
        %1948 = vdwg.mxu0
        %v1949 = vpack.c.bf16 %v1778, %v1775
        %v1950 = vpack.c.bf16 %v1786, %v1783
        %v1951 = vpack.c.bf16 %v1858, %v1855
        %v1952 = vpack.c.bf16 %v1866, %v1863
        %vm1953 = vcmask 48128
        %v1955 = vsel %vm1953, %v1949, 0
        %v1958 = vsel %vm1953, %v1951, 0
        %1960 = vmatprep.subr.bf16.mxu0 0
        %1961 = vmatpush1.bf16.xpose.msra.mxu0 0
        %1962 = vmatprep.subr.bf16.mxu0 0
        %1963 = vmatpush1.bf16.xpose.msra.mxu0 0
        %1964 = vmatprep.subr.bf16.mxu0 0
        %1965 = vmatpush1.bf16.xpose.msra.mxu0 0
        %1966 = vmatprep.subr.bf16.mxu0 0
        %1967 = vmatpush1.bf16.xpose.msra.mxu0 0
        %1968 = vmatprep.subr.bf16.mxu0 0
        %1969 = vmatpush1.bf16.xpose.msra.mxu0 0
        %1970 = vmatprep.subr.bf16.mxu0 0
        %1971 = vmatpush1.bf16.xpose.msra.mxu0 0
        %1972 = vmatprep.subr.bf16.mxu0 0
        %1973 = vmatpush1.bf16.xpose.msra.mxu0 0
        %1974 = vmatprep.subr.bf16.mxu0 0
        %1975 = vmatpush1.bf16.xpose.msra.mxu0 %v1958
        %1976 = vmatprep.subr.bf16.mxu0 0
        %1977 = vmatpush2.bf16.xpose.msra.mxu0 0
        %1978 = vmatprep.subr.bf16.mxu0 0
        %1979 = vmatpush2.bf16.xpose.msra.mxu0 0
        %1980 = vmatprep.subr.bf16.mxu0 0
        %1981 = vmatpush2.bf16.xpose.msra.mxu0 0
        %1982 = vmatprep.subr.bf16.mxu0 0
        %1983 = vmatpush2.bf16.xpose.msra.mxu0 0
        %1984 = vmatprep.subr.bf16.mxu0 0
        %1985 = vmatpush2.bf16.xpose.msra.mxu0 0
        %1986 = vmatprep.subr.bf16.mxu0 0
        %1987 = vmatpush2.bf16.xpose.msra.mxu0 0
        %1988 = vmatprep.subr.bf16.mxu0 0
        %1989 = vmatpush2.bf16.xpose.msra.mxu0 0
        %1990 = vmatprep.subr.bf16.mxu0 0
        %1991 = vmatpush2.bf16.xpose.msra.mxu0 0
        %1992 = vmatprep.mubr.bf16.mxu0 0
        %1993 = vmatmul.mubr.bf16.gmra.mxu0 %v1955
        %v1994 = vpop.f32.mrf.mxu0
        %v1995 = vadd.f32 0.0, %v1994
        %v1996 = vpop.f32.mrf.mxu0
        %v1997 = vpop.f32.mrf.mxu0
        %v1998 = vadd.f32 0.0, %v1997
        %v1999 = vpop.f32.mrf.mxu0
        %2000 = vdwg.mxu0
        %v2002 = vsel %vm1953, %v1950, 0
        %v2005 = vsel %vm1953, %v1952, 0
        %2007 = vmatprep.subr.bf16.mxu0 0
        %2008 = vmatpush1.bf16.xpose.msra.mxu0 0
        %2009 = vmatprep.subr.bf16.mxu0 0
        %2010 = vmatpush1.bf16.xpose.msra.mxu0 0
        %2011 = vmatprep.subr.bf16.mxu0 0
        %2012 = vmatpush1.bf16.xpose.msra.mxu0 0
        %2013 = vmatprep.subr.bf16.mxu0 0
        %2014 = vmatpush1.bf16.xpose.msra.mxu0 0
        %2015 = vmatprep.subr.bf16.mxu0 0
        %2016 = vmatpush1.bf16.xpose.msra.mxu0 0
        %2017 = vmatprep.subr.bf16.mxu0 0
        %2018 = vmatpush1.bf16.xpose.msra.mxu0 0
        %2019 = vmatprep.subr.bf16.mxu0 0
        %2020 = vmatpush1.bf16.xpose.msra.mxu0 0
        %2021 = vmatprep.subr.bf16.mxu0 0
        %2022 = vmatpush1.bf16.xpose.msra.mxu0 %v2005
        %2023 = vmatprep.subr.bf16.mxu0 0
        %2024 = vmatpush2.bf16.xpose.msra.mxu0 0
        %2025 = vmatprep.subr.bf16.mxu0 0
        %2026 = vmatpush2.bf16.xpose.msra.mxu0 0
        %2027 = vmatprep.subr.bf16.mxu0 0
        %2028 = vmatpush2.bf16.xpose.msra.mxu0 0
        %2029 = vmatprep.subr.bf16.mxu0 0
        %2030 = vmatpush2.bf16.xpose.msra.mxu0 0
        %2031 = vmatprep.subr.bf16.mxu0 0
        %2032 = vmatpush2.bf16.xpose.msra.mxu0 0
        %2033 = vmatprep.subr.bf16.mxu0 0
        %2034 = vmatpush2.bf16.xpose.msra.mxu0 0
        %2035 = vmatprep.subr.bf16.mxu0 0
        %2036 = vmatpush2.bf16.xpose.msra.mxu0 0
        %2037 = vmatprep.subr.bf16.mxu0 0
        %2038 = vmatpush2.bf16.xpose.msra.mxu0 0
        %2039 = vmatprep.mubr.bf16.mxu0 0
        %2040 = vmatmul.mubr.bf16.gmra.mxu0 %v2002
        %v2041 = vpop.f32.mrf.mxu0
        %v2042 = vadd.f32 0.0, %v2041
        %v2043 = vpop.f32.mrf.mxu0
        %v2044 = vpop.f32.mrf.mxu0
        %v2045 = vadd.f32 0.0, %v2044
        %v2046 = vpop.f32.mrf.mxu0
        %2047 = vdwg.mxu0
        %v2048 = vsel %vm1701, 1, 0
        %vm2049 = vcmp.eq.s32.totalorder %v2048, 1
        %v2050 = vsel %vm2049, %v1995, -1e+30
        %v2051 = vsel %vm2049, %v1998, -1e+30
        %v2052 = vsel %vm2049, %v2042, -1e+30
        %v2053 = vsel %vm2049, %v2045, -1e+30
        %vm2054 = vcmask 130048
        %v2055 = vsel %vm2054, %v2050, -inf
        %2056 = vmax.xlane.f32.xlu0 %v2055
        %v2057 = vpop.xlane.xlu0 %2056
        %v2058 = vsel %vm2054, %v2051, -inf
        %2059 = vmax.xlane.f32.xlu0 %v2058
        %v2060 = vpop.xlane.xlu0 %2059
        %v2061 = vsel %vm2054, %v2052, -inf
        %2062 = vmax.xlane.f32.xlu0 %v2061
        %v2063 = vpop.xlane.xlu0 %2062
        %v2064 = vsel %vm2054, %v2053, -inf
        %2065 = vmax.xlane.f32.xlu0 %v2064
        %v2066 = vpop.xlane.xlu0 %2065
        %v2067 = vsub.f32 %v2050, %v2057
        %v2068 = vsub.f32 %v2051, %v2060
        %v2069 = vsub.f32 %v2052, %v2063
        %v2070 = vsub.f32 %v2053, %v2066
        %v2071 = vmul.f32 %v2067, 1.442695
        %v2072 = vpow.pop %v2071
        %v2073 = vmul.f32 %v2068, 1.442695
        %v2074 = vpow.pop %v2073
        %v2075 = vmul.f32 %v2069, 1.442695
        %v2076 = vpow.pop %v2075
        %v2077 = vmul.f32 %v2070, 1.442695
        %v2078 = vpow.pop %v2077
        %v2079 = vsel %vm2054, %v2072, 0.0
        %2080 = vadd.xlane.f32.xlu0 %v2079
        %v2081 = vpop.xlane.xlu0 %2080
        %v2082 = vsel %vm2054, %v2074, 0.0
        %2083 = vadd.xlane.f32.xlu0 %v2082
        %v2084 = vpop.xlane.xlu0 %2083
        %v2085 = vsel %vm2054, %v2076, 0.0
        %2086 = vadd.xlane.f32.xlu0 %v2085
        %v2087 = vpop.xlane.xlu0 %2086
        %v2088 = vsel %vm2054, %v2078, 0.0
        %2089 = vadd.xlane.f32.xlu0 %v2088
        %v2090 = vpop.xlane.xlu0 %2089
        %v2091 = vrcp.pop %v2081
        %v2092 = vrcp.pop %v2084
        %v2093 = vrcp.pop %v2087
        %v2094 = vrcp.pop %v2090
        %v2095 = vmul.f32 %v2072, %v2091
        %v2096 = vmul.f32 %v2074, %v2092
        %v2097 = vmul.f32 %v2076, %v2093
        %v2098 = vmul.f32 %v2078, %v2094
        %v2099 = vpack.c.bf16 %v2096, %v2095
        %v2100 = vpack.c.bf16 %v2098, %v2097
        %v2101 = vpack.c.bf16 %v1938, %v1935
        %v2102 = vpack.c.bf16 %v1946, %v1943
        %v2104 = vsel %vm2054, %v2099, 0
        %2106 = vmatprep.subr.bf16.mxu0 0
        %2107 = vmatpush1.bf16.msra.mxu0 0
        %2108 = vmatprep.subr.bf16.mxu0 0
        %2109 = vmatpush1.bf16.msra.mxu0 0
        %2110 = vmatprep.subr.bf16.mxu0 0
        %2111 = vmatpush1.bf16.msra.mxu0 0
        %2112 = vmatprep.subr.bf16.mxu0 0
        %2113 = vmatpush1.bf16.msra.mxu0 0
        %2114 = vmatprep.subr.bf16.mxu0 0
        %2115 = vmatpush1.bf16.msra.mxu0 0
        %2116 = vmatprep.subr.bf16.mxu0 0
        %2117 = vmatpush1.bf16.msra.mxu0 0
        %2118 = vmatprep.subr.bf16.mxu0 0
        %2119 = vmatpush1.bf16.msra.mxu0 0
        %2120 = vmatprep.subr.bf16.mxu0 0
        %2121 = vmatpush1.bf16.msra.mxu0 %v2101
        %2122 = vmatprep.subr.bf16.mxu0 0
        %2123 = vmatpush2.bf16.msra.mxu0 0
        %2124 = vmatprep.subr.bf16.mxu0 0
        %2125 = vmatpush2.bf16.msra.mxu0 0
        %2126 = vmatprep.subr.bf16.mxu0 0
        %2127 = vmatpush2.bf16.msra.mxu0 0
        %2128 = vmatprep.subr.bf16.mxu0 0
        %2129 = vmatpush2.bf16.msra.mxu0 0
        %2130 = vmatprep.subr.bf16.mxu0 0
        %2131 = vmatpush2.bf16.msra.mxu0 0
        %2132 = vmatprep.subr.bf16.mxu0 0
        %2133 = vmatpush2.bf16.msra.mxu0 0
        %2134 = vmatprep.subr.bf16.mxu0 0
        %2135 = vmatpush2.bf16.msra.mxu0 0
        %2136 = vmatprep.subr.bf16.mxu0 0
        %2137 = vmatpush2.bf16.msra.mxu0 0
        %2138 = vmatprep.mubr.bf16.mxu0 0
        %2139 = vmatmul.mubr.bf16.gmra.mxu0 %v2104
        %v2140 = vpop.f32.mrf.mxu0
        %v2141 = vadd.f32 0.0, %v2140
        %v2142 = vpop.f32.mrf.mxu0
        %v2143 = vpop.f32.mrf.mxu0
        %v2144 = vadd.f32 0.0, %v2143
        %v2145 = vpop.f32.mrf.mxu0
        %2146 = vdwg.mxu0
        %v2148 = vsel %vm2054, %v2100, 0
        %2150 = vmatprep.subr.bf16.mxu0 0
        %2151 = vmatpush1.bf16.msra.mxu0 0
        %2152 = vmatprep.subr.bf16.mxu0 0
        %2153 = vmatpush1.bf16.msra.mxu0 0
        %2154 = vmatprep.subr.bf16.mxu0 0
        %2155 = vmatpush1.bf16.msra.mxu0 0
        %2156 = vmatprep.subr.bf16.mxu0 0
        %2157 = vmatpush1.bf16.msra.mxu0 0
        %2158 = vmatprep.subr.bf16.mxu0 0
        %2159 = vmatpush1.bf16.msra.mxu0 0
        %2160 = vmatprep.subr.bf16.mxu0 0
        %2161 = vmatpush1.bf16.msra.mxu0 0
        %2162 = vmatprep.subr.bf16.mxu0 0
        %2163 = vmatpush1.bf16.msra.mxu0 0
        %2164 = vmatprep.subr.bf16.mxu0 0
        %2165 = vmatpush1.bf16.msra.mxu0 %v2102
        %2166 = vmatprep.subr.bf16.mxu0 0
        %2167 = vmatpush2.bf16.msra.mxu0 0
        %2168 = vmatprep.subr.bf16.mxu0 0
        %2169 = vmatpush2.bf16.msra.mxu0 0
        %2170 = vmatprep.subr.bf16.mxu0 0
        %2171 = vmatpush2.bf16.msra.mxu0 0
        %2172 = vmatprep.subr.bf16.mxu0 0
        %2173 = vmatpush2.bf16.msra.mxu0 0
        %2174 = vmatprep.subr.bf16.mxu0 0
        %2175 = vmatpush2.bf16.msra.mxu0 0
        %2176 = vmatprep.subr.bf16.mxu0 0
        %2177 = vmatpush2.bf16.msra.mxu0 0
        %2178 = vmatprep.subr.bf16.mxu0 0
        %2179 = vmatpush2.bf16.msra.mxu0 0
        %2180 = vmatprep.subr.bf16.mxu0 0
        %2181 = vmatpush2.bf16.msra.mxu0 0
        %2182 = vmatprep.mubr.bf16.mxu0 0
        %2183 = vmatmul.mubr.bf16.gmra.mxu0 %v2148
        %v2184 = vpop.f32.mrf.mxu0
        %v2185 = vadd.f32 0.0, %v2184
        %v2186 = vpop.f32.mrf.mxu0
        %v2187 = vpop.f32.mrf.mxu0
        %v2188 = vadd.f32 0.0, %v2187
        %v2189 = vpop.f32.mrf.mxu0
        %2190 = vdwg.mxu0
        %v2191 = vpack.c.bf16 %v2144, %v2141
        %v2192 = vpack.c.bf16 %v2188, %v2185
        %v2193 = vld [vmem:[%s907] sm:$0x7]
        %s2194 = scalar_lea.vmem %s880, 24
        %v2195 = vld [vmem:[%s2194] sm:$0xf]
        %v2196 = vld [vmem:[%s2194 + $0x4] sm:$0xf]
        %v2197 = vld [vmem:[%s2194 + $0x8] sm:$0xf]
        %v2198 = vld [vmem:[%s2194 + $0xc] sm:$0xf]
        %v2199 = vld [vmem:[%s2194 + $0x10] sm:$0xf]
        %v2200 = vld [vmem:[%s2194 + $0x14] sm:$0xf]
        %s2201 = scalar_lea.vmem %s894, 1
        %v2202 = vld [vmem:[%s2201] sm:$0x1]
        %v2204 = vlaneseq
        %v2205 = vshrl.u32 %v2204, 7
        %v2206 = vsub.s32 0, %v2205
        %v2207 = vrot.slane %v2202, %v2206
        %v2215 = vunpack.c.l.b16 %v2195
        %v2216 = vunpack.c.l.b16 %v2196
        %v2217 = vunpack.c.l.b16 %v2197
        %v2218 = vunpack.c.l.b16 %v2198
        %v2219 = vunpack.c.l.b16 %v2199
        %v2220 = vunpack.c.l.b16 %v2200
        %v2221 = vpack.c.b16 %v2216, %v2215
        %v2222 = vpack.c.b16 %v2218, %v2217
        %v2223 = vpack.c.b16 %v2220, %v2219
        %2227 = vmatprep.subr.bf16.mxu0 0
        %2228 = vmatpush1.bf16.msra.mxu0 0
        %2229 = vmatprep.subr.bf16.mxu0 0
        %2230 = vmatpush1.bf16.msra.mxu0 0
        %2231 = vmatprep.subr.bf16.mxu0 0
        %2232 = vmatpush1.bf16.msra.mxu0 0
        %2233 = vmatprep.subr.bf16.mxu0 0
        %2234 = vmatpush1.bf16.msra.mxu0 0
        %2235 = vmatprep.subr.bf16.mxu0 0
        %2236 = vmatpush1.bf16.msra.mxu0 0
        %2237 = vmatprep.subr.bf16.mxu0 0
        %2238 = vmatpush1.bf16.msra.mxu0 %v2223
        %2239 = vmatprep.subr.bf16.mxu0 0
        %2240 = vmatpush1.bf16.msra.mxu0 %v2222
        %2241 = vmatprep.subr.bf16.mxu0 0
        %2242 = vmatpush1.bf16.msra.mxu0 %v2221
        %2243 = vmatprep.subr.bf16.mxu0 0
        %2244 = vmatpush2.bf16.msra.mxu0 0
        %2245 = vmatprep.subr.bf16.mxu0 0
        %2246 = vmatpush2.bf16.msra.mxu0 0
        %2247 = vmatprep.subr.bf16.mxu0 0
        %2248 = vmatpush2.bf16.msra.mxu0 0
        %2249 = vmatprep.subr.bf16.mxu0 0
        %2250 = vmatpush2.bf16.msra.mxu0 0
        %2251 = vmatprep.subr.bf16.mxu0 0
        %2252 = vmatpush2.bf16.msra.mxu0 0
        %2253 = vmatprep.subr.bf16.mxu0 0
        %2254 = vmatpush2.bf16.msra.mxu0 0
        %2255 = vmatprep.subr.bf16.mxu0 0
        %2256 = vmatpush2.bf16.msra.mxu0 0
        %2257 = vmatprep.subr.bf16.mxu0 0
        %2258 = vmatpush2.bf16.msra.mxu0 0
        %2259 = vmatprep.mubr.bf16.mxu0 0
        %2260 = vmatmul.mubr.bf16.gmra.mxu0 %v1735
        %v2261 = vpop.f32.mrf.mxu0
        %v2262 = vadd.f32 %v2207, %v2261
        %v2263 = vpop.f32.mrf.mxu0
        %v2264 = vpop.f32.mrf.mxu0
        %v2265 = vadd.f32 %v2207, %v2264
        %v2266 = vpop.f32.mrf.mxu0
        %2267 = vmatprep.mubr.bf16.mxu0 0
        %2268 = vmatmul.mubr.bf16.gmra.mxu0 %v1738
        %v2269 = vpop.f32.mrf.mxu0
        %v2270 = vadd.f32 %v2207, %v2269
        %v2271 = vpop.f32.mrf.mxu0
        %v2272 = vpop.f32.mrf.mxu0
        %v2273 = vadd.f32 %v2207, %v2272
        %v2274 = vpop.f32.mrf.mxu0
        %2275 = vdwg.mxu0
        %s2276 = scalar_lea.vmem %s885, 24
        %v2277 = vld [vmem:[%s2276] sm:$0xf]
        %v2278 = vld [vmem:[%s2276 + $0x4] sm:$0xf]
        %v2279 = vld [vmem:[%s2276 + $0x8] sm:$0xf]
        %v2280 = vld [vmem:[%s2276 + $0xc] sm:$0xf]
        %v2281 = vld [vmem:[%s2276 + $0x10] sm:$0xf]
        %v2282 = vld [vmem:[%s2276 + $0x14] sm:$0xf]
        %s2283 = scalar_lea.vmem %s898, 1
        %v2284 = vld [vmem:[%s2283] sm:$0x1]
        %v2286 = vlaneseq
        %v2287 = vshrl.u32 %v2286, 7
        %v2288 = vsub.s32 0, %v2287
        %v2289 = vrot.slane %v2284, %v2288
        %v2297 = vunpack.c.l.b16 %v2277
        %v2298 = vunpack.c.l.b16 %v2278
        %v2299 = vunpack.c.l.b16 %v2279
        %v2300 = vunpack.c.l.b16 %v2280
        %v2301 = vunpack.c.l.b16 %v2281
        %v2302 = vunpack.c.l.b16 %v2282
        %v2303 = vpack.c.b16 %v2298, %v2297
        %v2304 = vpack.c.b16 %v2300, %v2299
        %v2305 = vpack.c.b16 %v2302, %v2301
        %2309 = vmatprep.subr.bf16.mxu0 0
        %2310 = vmatpush1.bf16.msra.mxu0 0
        %2311 = vmatprep.subr.bf16.mxu0 0
        %2312 = vmatpush1.bf16.msra.mxu0 0
        %2313 = vmatprep.subr.bf16.mxu0 0
        %2314 = vmatpush1.bf16.msra.mxu0 0
        %2315 = vmatprep.subr.bf16.mxu0 0
        %2316 = vmatpush1.bf16.msra.mxu0 0
        %2317 = vmatprep.subr.bf16.mxu0 0
        %2318 = vmatpush1.bf16.msra.mxu0 0
        %2319 = vmatprep.subr.bf16.mxu0 0
        %2320 = vmatpush1.bf16.msra.mxu0 %v2305
        %2321 = vmatprep.subr.bf16.mxu0 0
        %2322 = vmatpush1.bf16.msra.mxu0 %v2304
        %2323 = vmatprep.subr.bf16.mxu0 0
        %2324 = vmatpush1.bf16.msra.mxu0 %v2303
        %2325 = vmatprep.subr.bf16.mxu0 0
        %2326 = vmatpush2.bf16.msra.mxu0 0
        %2327 = vmatprep.subr.bf16.mxu0 0
        %2328 = vmatpush2.bf16.msra.mxu0 0
        %2329 = vmatprep.subr.bf16.mxu0 0
        %2330 = vmatpush2.bf16.msra.mxu0 0
        %2331 = vmatprep.subr.bf16.mxu0 0
        %2332 = vmatpush2.bf16.msra.mxu0 0
        %2333 = vmatprep.subr.bf16.mxu0 0
        %2334 = vmatpush2.bf16.msra.mxu0 0
        %2335 = vmatprep.subr.bf16.mxu0 0
        %2336 = vmatpush2.bf16.msra.mxu0 0
        %2337 = vmatprep.subr.bf16.mxu0 0
        %2338 = vmatpush2.bf16.msra.mxu0 0
        %2339 = vmatprep.subr.bf16.mxu0 0
        %2340 = vmatpush2.bf16.msra.mxu0 0
        %2341 = vmatprep.mubr.bf16.mxu0 0
        %2342 = vmatmul.mubr.bf16.gmra.mxu0 %v1735
        %v2343 = vpop.f32.mrf.mxu0
        %v2344 = vadd.f32 %v2289, %v2343
        %v2345 = vpop.f32.mrf.mxu0
        %v2346 = vpop.f32.mrf.mxu0
        %v2347 = vadd.f32 %v2289, %v2346
        %v2348 = vpop.f32.mrf.mxu0
        %2349 = vmatprep.mubr.bf16.mxu0 0
        %2350 = vmatmul.mubr.bf16.gmra.mxu0 %v1738
        %v2351 = vpop.f32.mrf.mxu0
        %v2352 = vadd.f32 %v2289, %v2351
        %v2353 = vpop.f32.mrf.mxu0
        %v2354 = vpop.f32.mrf.mxu0
        %v2355 = vadd.f32 %v2289, %v2354
        %v2356 = vpop.f32.mrf.mxu0
        %2357 = vdwg.mxu0
        %s2358 = scalar_lea.vmem %s890, 24
        %v2359 = vld [vmem:[%s2358] sm:$0xf]
        %v2360 = vld [vmem:[%s2358 + $0x4] sm:$0xf]
        %v2361 = vld [vmem:[%s2358 + $0x8] sm:$0xf]
        %v2362 = vld [vmem:[%s2358 + $0xc] sm:$0xf]
        %v2363 = vld [vmem:[%s2358 + $0x10] sm:$0xf]
        %v2364 = vld [vmem:[%s2358 + $0x14] sm:$0xf]
        %s2365 = scalar_lea.vmem %s902, 1
        %v2366 = vld [vmem:[%s2365] sm:$0x1]
        %v2368 = vlaneseq
        %v2369 = vshrl.u32 %v2368, 7
        %v2370 = vsub.s32 0, %v2369
        %v2371 = vrot.slane %v2366, %v2370
        %v2379 = vunpack.c.l.b16 %v2359
        %v2380 = vunpack.c.l.b16 %v2360
        %v2381 = vunpack.c.l.b16 %v2361
        %v2382 = vunpack.c.l.b16 %v2362
        %v2383 = vunpack.c.l.b16 %v2363
        %v2384 = vunpack.c.l.b16 %v2364
        %v2385 = vpack.c.b16 %v2380, %v2379
        %v2386 = vpack.c.b16 %v2382, %v2381
        %v2387 = vpack.c.b16 %v2384, %v2383
        %2391 = vmatprep.subr.bf16.mxu0 0
        %2392 = vmatpush1.bf16.msra.mxu0 0
        %2393 = vmatprep.subr.bf16.mxu0 0
        %2394 = vmatpush1.bf16.msra.mxu0 0
        %2395 = vmatprep.subr.bf16.mxu0 0
        %2396 = vmatpush1.bf16.msra.mxu0 0
        %2397 = vmatprep.subr.bf16.mxu0 0
        %2398 = vmatpush1.bf16.msra.mxu0 0
        %2399 = vmatprep.subr.bf16.mxu0 0
        %2400 = vmatpush1.bf16.msra.mxu0 0
        %2401 = vmatprep.subr.bf16.mxu0 0
        %2402 = vmatpush1.bf16.msra.mxu0 %v2387
        %2403 = vmatprep.subr.bf16.mxu0 0
        %2404 = vmatpush1.bf16.msra.mxu0 %v2386
        %2405 = vmatprep.subr.bf16.mxu0 0
        %2406 = vmatpush1.bf16.msra.mxu0 %v2385
        %2407 = vmatprep.subr.bf16.mxu0 0
        %2408 = vmatpush2.bf16.msra.mxu0 0
        %2409 = vmatprep.subr.bf16.mxu0 0
        %2410 = vmatpush2.bf16.msra.mxu0 0
        %2411 = vmatprep.subr.bf16.mxu0 0
        %2412 = vmatpush2.bf16.msra.mxu0 0
        %2413 = vmatprep.subr.bf16.mxu0 0
        %2414 = vmatpush2.bf16.msra.mxu0 0
        %2415 = vmatprep.subr.bf16.mxu0 0
        %2416 = vmatpush2.bf16.msra.mxu0 0
        %2417 = vmatprep.subr.bf16.mxu0 0
        %2418 = vmatpush2.bf16.msra.mxu0 0
        %2419 = vmatprep.subr.bf16.mxu0 0
        %2420 = vmatpush2.bf16.msra.mxu0 0
        %2421 = vmatprep.subr.bf16.mxu0 0
        %2422 = vmatpush2.bf16.msra.mxu0 0
        %2423 = vmatprep.mubr.bf16.mxu0 0
        %2424 = vmatmul.mubr.bf16.gmra.mxu0 %v1735
        %v2425 = vpop.f32.mrf.mxu0
        %v2426 = vadd.f32 %v2371, %v2425
        %v2427 = vpop.f32.mrf.mxu0
        %v2428 = vpop.f32.mrf.mxu0
        %v2429 = vadd.f32 %v2371, %v2428
        %v2430 = vpop.f32.mrf.mxu0
        %2431 = vmatprep.mubr.bf16.mxu0 0
        %2432 = vmatmul.mubr.bf16.gmra.mxu0 %v1738
        %v2433 = vpop.f32.mrf.mxu0
        %v2434 = vadd.f32 %v2371, %v2433
        %v2435 = vpop.f32.mrf.mxu0
        %v2436 = vpop.f32.mrf.mxu0
        %v2437 = vadd.f32 %v2371, %v2436
        %v2438 = vpop.f32.mrf.mxu0
        %2439 = vdwg.mxu0
        %v2440 = vpack.c.bf16 %v2265, %v2262
        %v2441 = vpack.c.bf16 %v2273, %v2270
        %v2442 = vpack.c.bf16 %v2347, %v2344
        %v2443 = vpack.c.bf16 %v2355, %v2352
        %v2445 = vsel %vm1953, %v2440, 0
        %v2448 = vsel %vm1953, %v2442, 0
        %2450 = vmatprep.subr.bf16.mxu0 0
        %2451 = vmatpush1.bf16.xpose.msra.mxu0 0
        %2452 = vmatprep.subr.bf16.mxu0 0
        %2453 = vmatpush1.bf16.xpose.msra.mxu0 0
        %2454 = vmatprep.subr.bf16.mxu0 0
        %2455 = vmatpush1.bf16.xpose.msra.mxu0 0
        %2456 = vmatprep.subr.bf16.mxu0 0
        %2457 = vmatpush1.bf16.xpose.msra.mxu0 0
        %2458 = vmatprep.subr.bf16.mxu0 0
        %2459 = vmatpush1.bf16.xpose.msra.mxu0 0
        %2460 = vmatprep.subr.bf16.mxu0 0
        %2461 = vmatpush1.bf16.xpose.msra.mxu0 0
        %2462 = vmatprep.subr.bf16.mxu0 0
        %2463 = vmatpush1.bf16.xpose.msra.mxu0 0
        %2464 = vmatprep.subr.bf16.mxu0 0
        %2465 = vmatpush1.bf16.xpose.msra.mxu0 %v2448
        %2466 = vmatprep.subr.bf16.mxu0 0
        %2467 = vmatpush2.bf16.xpose.msra.mxu0 0
        %2468 = vmatprep.subr.bf16.mxu0 0
        %2469 = vmatpush2.bf16.xpose.msra.mxu0 0
        %2470 = vmatprep.subr.bf16.mxu0 0
        %2471 = vmatpush2.bf16.xpose.msra.mxu0 0
        %2472 = vmatprep.subr.bf16.mxu0 0
        %2473 = vmatpush2.bf16.xpose.msra.mxu0 0
        %2474 = vmatprep.subr.bf16.mxu0 0
        %2475 = vmatpush2.bf16.xpose.msra.mxu0 0
        %2476 = vmatprep.subr.bf16.mxu0 0
        %2477 = vmatpush2.bf16.xpose.msra.mxu0 0
        %2478 = vmatprep.subr.bf16.mxu0 0
        %2479 = vmatpush2.bf16.xpose.msra.mxu0 0
        %2480 = vmatprep.subr.bf16.mxu0 0
        %2481 = vmatpush2.bf16.xpose.msra.mxu0 0
        %2482 = vmatprep.mubr.bf16.mxu0 0
        %2483 = vmatmul.mubr.bf16.gmra.mxu0 %v2445
        %v2484 = vpop.f32.mrf.mxu0
        %v2485 = vadd.f32 0.0, %v2484
        %v2486 = vpop.f32.mrf.mxu0
        %v2487 = vpop.f32.mrf.mxu0
        %v2488 = vadd.f32 0.0, %v2487
        %v2489 = vpop.f32.mrf.mxu0
        %2490 = vdwg.mxu0
        %v2492 = vsel %vm1953, %v2441, 0
        %v2495 = vsel %vm1953, %v2443, 0
        %2497 = vmatprep.subr.bf16.mxu0 0
        %2498 = vmatpush1.bf16.xpose.msra.mxu0 0
        %2499 = vmatprep.subr.bf16.mxu0 0
        %2500 = vmatpush1.bf16.xpose.msra.mxu0 0
        %2501 = vmatprep.subr.bf16.mxu0 0
        %2502 = vmatpush1.bf16.xpose.msra.mxu0 0
        %2503 = vmatprep.subr.bf16.mxu0 0
        %2504 = vmatpush1.bf16.xpose.msra.mxu0 0
        %2505 = vmatprep.subr.bf16.mxu0 0
        %2506 = vmatpush1.bf16.xpose.msra.mxu0 0
        %2507 = vmatprep.subr.bf16.mxu0 0
        %2508 = vmatpush1.bf16.xpose.msra.mxu0 0
        %2509 = vmatprep.subr.bf16.mxu0 0
        %2510 = vmatpush1.bf16.xpose.msra.mxu0 0
        %2511 = vmatprep.subr.bf16.mxu0 0
        %2512 = vmatpush1.bf16.xpose.msra.mxu0 %v2495
        %2513 = vmatprep.subr.bf16.mxu0 0
        %2514 = vmatpush2.bf16.xpose.msra.mxu0 0
        %2515 = vmatprep.subr.bf16.mxu0 0
        %2516 = vmatpush2.bf16.xpose.msra.mxu0 0
        %2517 = vmatprep.subr.bf16.mxu0 0
        %2518 = vmatpush2.bf16.xpose.msra.mxu0 0
        %2519 = vmatprep.subr.bf16.mxu0 0
        %2520 = vmatpush2.bf16.xpose.msra.mxu0 0
        %2521 = vmatprep.subr.bf16.mxu0 0
        %2522 = vmatpush2.bf16.xpose.msra.mxu0 0
        %2523 = vmatprep.subr.bf16.mxu0 0
        %2524 = vmatpush2.bf16.xpose.msra.mxu0 0
        %2525 = vmatprep.subr.bf16.mxu0 0
        %2526 = vmatpush2.bf16.xpose.msra.mxu0 0
        %2527 = vmatprep.subr.bf16.mxu0 0
        %2528 = vmatpush2.bf16.xpose.msra.mxu0 0
        %2529 = vmatprep.mubr.bf16.mxu0 0
        %2530 = vmatmul.mubr.bf16.gmra.mxu0 %v2492
        %v2531 = vpop.f32.mrf.mxu0
        %v2532 = vadd.f32 0.0, %v2531
        %v2533 = vpop.f32.mrf.mxu0
        %v2534 = vpop.f32.mrf.mxu0
        %v2535 = vadd.f32 0.0, %v2534
        %v2536 = vpop.f32.mrf.mxu0
        %2537 = vdwg.mxu0
        %v2538 = vsel %vm2049, %v2485, -1e+30
        %v2539 = vsel %vm2049, %v2488, -1e+30
        %v2540 = vsel %vm2049, %v2532, -1e+30
        %v2541 = vsel %vm2049, %v2535, -1e+30
        %v2542 = vsel %vm2054, %v2538, -inf
        %2543 = vmax.xlane.f32.xlu0 %v2542
        %v2544 = vpop.xlane.xlu0 %2543
        %v2545 = vsel %vm2054, %v2539, -inf
        %2546 = vmax.xlane.f32.xlu0 %v2545
        %v2547 = vpop.xlane.xlu0 %2546
        %v2548 = vsel %vm2054, %v2540, -inf
        %2549 = vmax.xlane.f32.xlu0 %v2548
        %v2550 = vpop.xlane.xlu0 %2549
        %v2551 = vsel %vm2054, %v2541, -inf
        %2552 = vmax.xlane.f32.xlu0 %v2551
        %v2553 = vpop.xlane.xlu0 %2552
        %v2554 = vsub.f32 %v2538, %v2544
        %v2555 = vsub.f32 %v2539, %v2547
        %v2556 = vsub.f32 %v2540, %v2550
        %v2557 = vsub.f32 %v2541, %v2553
        %v2558 = vmul.f32 %v2554, 1.442695
        %v2559 = vpow.pop %v2558
        %v2560 = vmul.f32 %v2555, 1.442695
        %v2561 = vpow.pop %v2560
        %v2562 = vmul.f32 %v2556, 1.442695
        %v2563 = vpow.pop %v2562
        %v2564 = vmul.f32 %v2557, 1.442695
        %v2565 = vpow.pop %v2564
        %v2566 = vsel %vm2054, %v2559, 0.0
        %2567 = vadd.xlane.f32.xlu0 %v2566
        %v2568 = vpop.xlane.xlu0 %2567
        %v2569 = vsel %vm2054, %v2561, 0.0
        %2570 = vadd.xlane.f32.xlu0 %v2569
        %v2571 = vpop.xlane.xlu0 %2570
        %v2572 = vsel %vm2054, %v2563, 0.0
        %2573 = vadd.xlane.f32.xlu0 %v2572
        %v2574 = vpop.xlane.xlu0 %2573
        %v2575 = vsel %vm2054, %v2565, 0.0
        %2576 = vadd.xlane.f32.xlu0 %v2575
        %v2577 = vpop.xlane.xlu0 %2576
        %v2578 = vrcp.pop %v2568
        %v2579 = vrcp.pop %v2571
        %v2580 = vrcp.pop %v2574
        %v2581 = vrcp.pop %v2577
        %v2582 = vmul.f32 %v2559, %v2578
        %v2583 = vmul.f32 %v2561, %v2579
        %v2584 = vmul.f32 %v2563, %v2580
        %v2585 = vmul.f32 %v2565, %v2581
        %v2586 = vpack.c.bf16 %v2583, %v2582
        %v2587 = vpack.c.bf16 %v2585, %v2584
        %v2588 = vpack.c.bf16 %v2429, %v2426
        %v2589 = vpack.c.bf16 %v2437, %v2434
        %v2591 = vsel %vm2054, %v2586, 0
        %2593 = vmatprep.subr.bf16.mxu0 0
        %2594 = vmatpush1.bf16.msra.mxu0 0
        %2595 = vmatprep.subr.bf16.mxu0 0
        %2596 = vmatpush1.bf16.msra.mxu0 0
        %2597 = vmatprep.subr.bf16.mxu0 0
        %2598 = vmatpush1.bf16.msra.mxu0 0
        %2599 = vmatprep.subr.bf16.mxu0 0
        %2600 = vmatpush1.bf16.msra.mxu0 0
        %2601 = vmatprep.subr.bf16.mxu0 0
        %2602 = vmatpush1.bf16.msra.mxu0 0
        %2603 = vmatprep.subr.bf16.mxu0 0
        %2604 = vmatpush1.bf16.msra.mxu0 0
        %2605 = vmatprep.subr.bf16.mxu0 0
        %2606 = vmatpush1.bf16.msra.mxu0 0
        %2607 = vmatprep.subr.bf16.mxu0 0
        %2608 = vmatpush1.bf16.msra.mxu0 %v2588
        %2609 = vmatprep.subr.bf16.mxu0 0
        %2610 = vmatpush2.bf16.msra.mxu0 0
        %2611 = vmatprep.subr.bf16.mxu0 0
        %2612 = vmatpush2.bf16.msra.mxu0 0
        %2613 = vmatprep.subr.bf16.mxu0 0
        %2614 = vmatpush2.bf16.msra.mxu0 0
        %2615 = vmatprep.subr.bf16.mxu0 0
        %2616 = vmatpush2.bf16.msra.mxu0 0
        %2617 = vmatprep.subr.bf16.mxu0 0
        %2618 = vmatpush2.bf16.msra.mxu0 0
        %2619 = vmatprep.subr.bf16.mxu0 0
        %2620 = vmatpush2.bf16.msra.mxu0 0
        %2621 = vmatprep.subr.bf16.mxu0 0
        %2622 = vmatpush2.bf16.msra.mxu0 0
        %2623 = vmatprep.subr.bf16.mxu0 0
        %2624 = vmatpush2.bf16.msra.mxu0 0
        %2625 = vmatprep.mubr.bf16.mxu0 0
        %2626 = vmatmul.mubr.bf16.gmra.mxu0 %v2591
        %v2627 = vpop.f32.mrf.mxu0
        %v2628 = vadd.f32 0.0, %v2627
        %v2629 = vpop.f32.mrf.mxu0
        %v2630 = vpop.f32.mrf.mxu0
        %v2631 = vadd.f32 0.0, %v2630
        %v2632 = vpop.f32.mrf.mxu0
        %2633 = vdwg.mxu0
        %v2635 = vsel %vm2054, %v2587, 0
        %2637 = vmatprep.subr.bf16.mxu0 0
        %2638 = vmatpush1.bf16.msra.mxu0 0
        %2639 = vmatprep.subr.bf16.mxu0 0
        %2640 = vmatpush1.bf16.msra.mxu0 0
        %2641 = vmatprep.subr.bf16.mxu0 0
        %2642 = vmatpush1.bf16.msra.mxu0 0
        %2643 = vmatprep.subr.bf16.mxu0 0
        %2644 = vmatpush1.bf16.msra.mxu0 0
        %2645 = vmatprep.subr.bf16.mxu0 0
        %2646 = vmatpush1.bf16.msra.mxu0 0
        %2647 = vmatprep.subr.bf16.mxu0 0
        %2648 = vmatpush1.bf16.msra.mxu0 0
        %2649 = vmatprep.subr.bf16.mxu0 0
        %2650 = vmatpush1.bf16.msra.mxu0 0
        %2651 = vmatprep.subr.bf16.mxu0 0
        %2652 = vmatpush1.bf16.msra.mxu0 %v2589
        %2653 = vmatprep.subr.bf16.mxu0 0
        %2654 = vmatpush2.bf16.msra.mxu0 0
        %2655 = vmatprep.subr.bf16.mxu0 0
        %2656 = vmatpush2.bf16.msra.mxu0 0
        %2657 = vmatprep.subr.bf16.mxu0 0
        %2658 = vmatpush2.bf16.msra.mxu0 0
        %2659 = vmatprep.subr.bf16.mxu0 0
        %2660 = vmatpush2.bf16.msra.mxu0 0
        %2661 = vmatprep.subr.bf16.mxu0 0
        %2662 = vmatpush2.bf16.msra.mxu0 0
        %2663 = vmatprep.subr.bf16.mxu0 0
        %2664 = vmatpush2.bf16.msra.mxu0 0
        %2665 = vmatprep.subr.bf16.mxu0 0
        %2666 = vmatpush2.bf16.msra.mxu0 0
        %2667 = vmatprep.subr.bf16.mxu0 0
        %2668 = vmatpush2.bf16.msra.mxu0 0
        %2669 = vmatprep.mubr.bf16.mxu0 0
        %2670 = vmatmul.mubr.bf16.gmra.mxu0 %v2635
        %v2671 = vpop.f32.mrf.mxu0
        %v2672 = vadd.f32 0.0, %v2671
        %v2673 = vpop.f32.mrf.mxu0
        %v2674 = vpop.f32.mrf.mxu0
        %v2675 = vadd.f32 0.0, %v2674
        %v2676 = vpop.f32.mrf.mxu0
        %2677 = vdwg.mxu0
        %v2678 = vpack.c.bf16 %v2631, %v2628
        %v2679 = vpack.c.bf16 %v2675, %v2672
        %s2680 = scalar_lea.vmem %s907, 4
        %v2681 = vld [vmem:[%s2680] sm:$0x7]
        %v2683 = vsel %vm1953, %v2678, 0
        %v2686 = vsel %vm1953, %v2679, 0
        %vm2688 = vcmask 1042432
        %v2690 = vsel %vm2688, %v2681, 0
        %2692 = vmatprep.subr.bf16.mxu0 0
        %2693 = vmatpush1.bf16.msra.mxu0 0
        %2694 = vmatprep.subr.bf16.mxu0 0
        %2695 = vmatpush1.bf16.msra.mxu0 0
        %2696 = vmatprep.subr.bf16.mxu0 0
        %2697 = vmatpush1.bf16.msra.mxu0 0
        %2698 = vmatprep.subr.bf16.mxu0 0
        %2699 = vmatpush1.bf16.msra.mxu0 0
        %2700 = vmatprep.subr.bf16.mxu0 0
        %2701 = vmatpush1.bf16.msra.mxu0 0
        %2702 = vmatprep.subr.bf16.mxu0 0
        %2703 = vmatpush1.bf16.msra.mxu0 0
        %2704 = vmatprep.subr.bf16.mxu0 0
        %2705 = vmatpush1.bf16.msra.mxu0 0
        %2706 = vmatprep.subr.bf16.mxu0 0
        %2707 = vmatpush1.bf16.msra.mxu0 %v2690
        %2708 = vmatprep.subr.bf16.mxu0 0
        %2709 = vmatpush2.bf16.msra.mxu0 0
        %2710 = vmatprep.subr.bf16.mxu0 0
        %2711 = vmatpush2.bf16.msra.mxu0 0
        %2712 = vmatprep.subr.bf16.mxu0 0
        %2713 = vmatpush2.bf16.msra.mxu0 0
        %2714 = vmatprep.subr.bf16.mxu0 0
        %2715 = vmatpush2.bf16.msra.mxu0 0
        %2716 = vmatprep.subr.bf16.mxu0 0
        %2717 = vmatpush2.bf16.msra.mxu0 0
        %2718 = vmatprep.subr.bf16.mxu0 0
        %2719 = vmatpush2.bf16.msra.mxu0 0
        %2720 = vmatprep.subr.bf16.mxu0 0
        %2721 = vmatpush2.bf16.msra.mxu0 0
        %2722 = vmatprep.subr.bf16.mxu0 0
        %2723 = vmatpush2.bf16.msra.mxu0 0
        %2724 = vmatprep.mubr.bf16.mxu0 0
        %2725 = vmatmul.mubr.bf16.gmra.mxu0 %v2683
        %v2726 = vpop.f32.mrf.mxu0
        %v2727 = vadd.f32 0.0, %v2726
        %v2728 = vpop.f32.mrf.mxu0
        %v2729 = vpop.f32.mrf.mxu0
        %v2730 = vadd.f32 0.0, %v2729
        %v2731 = vpop.f32.mrf.mxu0
        %2732 = vmatprep.mubr.bf16.mxu0 0
        %2733 = vmatmul.mubr.bf16.gmra.mxu0 %v2686
        %v2734 = vpop.f32.mrf.mxu0
        %v2735 = vadd.f32 0.0, %v2734
        %v2736 = vpop.f32.mrf.mxu0
        %v2737 = vpop.f32.mrf.mxu0
        %v2738 = vadd.f32 0.0, %v2737
        %v2739 = vpop.f32.mrf.mxu0
        %2740 = vdwg.mxu0
        %v2742 = vsel %vm1953, %v2191, 0
        %v2745 = vsel %vm1953, %v2192, 0
        %v2748 = vsel %vm2688, %v2193, 0
        %2750 = vmatprep.subr.bf16.mxu0 0
        %2751 = vmatpush1.bf16.msra.mxu0 0
        %2752 = vmatprep.subr.bf16.mxu0 0
        %2753 = vmatpush1.bf16.msra.mxu0 0
        %2754 = vmatprep.subr.bf16.mxu0 0
        %2755 = vmatpush1.bf16.msra.mxu0 0
        %2756 = vmatprep.subr.bf16.mxu0 0
        %2757 = vmatpush1.bf16.msra.mxu0 0
        %2758 = vmatprep.subr.bf16.mxu0 0
        %2759 = vmatpush1.bf16.msra.mxu0 0
        %2760 = vmatprep.subr.bf16.mxu0 0
        %2761 = vmatpush1.bf16.msra.mxu0 0
        %2762 = vmatprep.subr.bf16.mxu0 0
        %2763 = vmatpush1.bf16.msra.mxu0 0
        %2764 = vmatprep.subr.bf16.mxu0 0
        %2765 = vmatpush1.bf16.msra.mxu0 %v2748
        %2766 = vmatprep.subr.bf16.mxu0 0
        %2767 = vmatpush2.bf16.msra.mxu0 0
        %2768 = vmatprep.subr.bf16.mxu0 0
        %2769 = vmatpush2.bf16.msra.mxu0 0
        %2770 = vmatprep.subr.bf16.mxu0 0
        %2771 = vmatpush2.bf16.msra.mxu0 0
        %2772 = vmatprep.subr.bf16.mxu0 0
        %2773 = vmatpush2.bf16.msra.mxu0 0
        %2774 = vmatprep.subr.bf16.mxu0 0
        %2775 = vmatpush2.bf16.msra.mxu0 0
        %2776 = vmatprep.subr.bf16.mxu0 0
        %2777 = vmatpush2.bf16.msra.mxu0 0
        %2778 = vmatprep.subr.bf16.mxu0 0
        %2779 = vmatpush2.bf16.msra.mxu0 0
        %2780 = vmatprep.subr.bf16.mxu0 0
        %2781 = vmatpush2.bf16.msra.mxu0 0
        %2782 = vmatprep.mubr.bf16.mxu0 0
        %2783 = vmatmul.mubr.bf16.gmra.mxu0 %v2742
        %v2784 = vpop.f32.mrf.mxu0
        %v2785 = vadd.f32 %v2727, %v2784
        %v2786 = vpop.f32.mrf.mxu0
        %v2787 = vpop.f32.mrf.mxu0
        %v2788 = vadd.f32 %v2730, %v2787
        %v2789 = vpop.f32.mrf.mxu0
        %2790 = vmatprep.mubr.bf16.mxu0 0
        %2791 = vmatmul.mubr.bf16.gmra.mxu0 %v2745
        %v2792 = vpop.f32.mrf.mxu0
        %v2793 = vadd.f32 %v2735, %v2792
        %v2794 = vpop.f32.mrf.mxu0
        %v2795 = vpop.f32.mrf.mxu0
        %v2796 = vadd.f32 %v2738, %v2795
        %v2797 = vpop.f32.mrf.mxu0
        %2798 = vdwg.mxu0
        %s2799 = scalar_lea.vmem %s880, 48
        %v2800 = vld [vmem:[%s2799] sm:$0xf]
        %v2801 = vld [vmem:[%s2799 + $0x4] sm:$0xf]
        %v2802 = vld [vmem:[%s2799 + $0x8] sm:$0xf]
        %v2803 = vld [vmem:[%s2799 + $0xc] sm:$0xf]
        %v2804 = vld [vmem:[%s2799 + $0x10] sm:$0xf]
        %v2805 = vld [vmem:[%s2799 + $0x14] sm:$0xf]
        %s2806 = scalar_lea.vmem %s894, 2
        %v2807 = vld [vmem:[%s2806] sm:$0x1]
        %v2809 = vlaneseq
        %v2810 = vshrl.u32 %v2809, 7
        %v2811 = vsub.s32 0, %v2810
        %v2812 = vrot.slane %v2807, %v2811
        %v2820 = vunpack.c.l.b16 %v2800
        %v2821 = vunpack.c.l.b16 %v2801
        %v2822 = vunpack.c.l.b16 %v2802
        %v2823 = vunpack.c.l.b16 %v2803
        %v2824 = vunpack.c.l.b16 %v2804
        %v2825 = vunpack.c.l.b16 %v2805
        %v2826 = vpack.c.b16 %v2821, %v2820
        %v2827 = vpack.c.b16 %v2823, %v2822
        %v2828 = vpack.c.b16 %v2825, %v2824
        %2832 = vmatprep.subr.bf16.mxu0 0
        %2833 = vmatpush1.bf16.msra.mxu0 0
        %2834 = vmatprep.subr.bf16.mxu0 0
        %2835 = vmatpush1.bf16.msra.mxu0 0
        %2836 = vmatprep.subr.bf16.mxu0 0
        %2837 = vmatpush1.bf16.msra.mxu0 0
        %2838 = vmatprep.subr.bf16.mxu0 0
        %2839 = vmatpush1.bf16.msra.mxu0 0
        %2840 = vmatprep.subr.bf16.mxu0 0
        %2841 = vmatpush1.bf16.msra.mxu0 0
        %2842 = vmatprep.subr.bf16.mxu0 0
        %2843 = vmatpush1.bf16.msra.mxu0 %v2828
        %2844 = vmatprep.subr.bf16.mxu0 0
        %2845 = vmatpush1.bf16.msra.mxu0 %v2827
        %2846 = vmatprep.subr.bf16.mxu0 0
        %2847 = vmatpush1.bf16.msra.mxu0 %v2826
        %2848 = vmatprep.subr.bf16.mxu0 0
        %2849 = vmatpush2.bf16.msra.mxu0 0
        %2850 = vmatprep.subr.bf16.mxu0 0
        %2851 = vmatpush2.bf16.msra.mxu0 0
        %2852 = vmatprep.subr.bf16.mxu0 0
        %2853 = vmatpush2.bf16.msra.mxu0 0
        %2854 = vmatprep.subr.bf16.mxu0 0
        %2855 = vmatpush2.bf16.msra.mxu0 0
        %2856 = vmatprep.subr.bf16.mxu0 0
        %2857 = vmatpush2.bf16.msra.mxu0 0
        %2858 = vmatprep.subr.bf16.mxu0 0
        %2859 = vmatpush2.bf16.msra.mxu0 0
        %2860 = vmatprep.subr.bf16.mxu0 0
        %2861 = vmatpush2.bf16.msra.mxu0 0
        %2862 = vmatprep.subr.bf16.mxu0 0
        %2863 = vmatpush2.bf16.msra.mxu0 0
        %2864 = vmatprep.mubr.bf16.mxu0 0
        %2865 = vmatmul.mubr.bf16.gmra.mxu0 %v1735
        %v2866 = vpop.f32.mrf.mxu0
        %v2867 = vadd.f32 %v2812, %v2866
        %v2868 = vpop.f32.mrf.mxu0
        %v2869 = vpop.f32.mrf.mxu0
        %v2870 = vadd.f32 %v2812, %v2869
        %v2871 = vpop.f32.mrf.mxu0
        %2872 = vmatprep.mubr.bf16.mxu0 0
        %2873 = vmatmul.mubr.bf16.gmra.mxu0 %v1738
        %v2874 = vpop.f32.mrf.mxu0
        %v2875 = vadd.f32 %v2812, %v2874
        %v2876 = vpop.f32.mrf.mxu0
        %v2877 = vpop.f32.mrf.mxu0
        %v2878 = vadd.f32 %v2812, %v2877
        %v2879 = vpop.f32.mrf.mxu0
        %2880 = vdwg.mxu0
        %s2881 = scalar_lea.vmem %s885, 48
        %v2882 = vld [vmem:[%s2881] sm:$0xf]
        %v2883 = vld [vmem:[%s2881 + $0x4] sm:$0xf]
        %v2884 = vld [vmem:[%s2881 + $0x8] sm:$0xf]
        %v2885 = vld [vmem:[%s2881 + $0xc] sm:$0xf]
        %v2886 = vld [vmem:[%s2881 + $0x10] sm:$0xf]
        %v2887 = vld [vmem:[%s2881 + $0x14] sm:$0xf]
        %s2888 = scalar_lea.vmem %s898, 2
        %v2889 = vld [vmem:[%s2888] sm:$0x1]
        %v2891 = vlaneseq
        %v2892 = vshrl.u32 %v2891, 7
        %v2893 = vsub.s32 0, %v2892
        %v2894 = vrot.slane %v2889, %v2893
        %v2902 = vunpack.c.l.b16 %v2882
        %v2903 = vunpack.c.l.b16 %v2883
        %v2904 = vunpack.c.l.b16 %v2884
        %v2905 = vunpack.c.l.b16 %v2885
        %v2906 = vunpack.c.l.b16 %v2886
        %v2907 = vunpack.c.l.b16 %v2887
        %v2908 = vpack.c.b16 %v2903, %v2902
        %v2909 = vpack.c.b16 %v2905, %v2904
        %v2910 = vpack.c.b16 %v2907, %v2906
        %2914 = vmatprep.subr.bf16.mxu0 0
        %2915 = vmatpush1.bf16.msra.mxu0 0
        %2916 = vmatprep.subr.bf16.mxu0 0
        %2917 = vmatpush1.bf16.msra.mxu0 0
        %2918 = vmatprep.subr.bf16.mxu0 0
        %2919 = vmatpush1.bf16.msra.mxu0 0
        %2920 = vmatprep.subr.bf16.mxu0 0
        %2921 = vmatpush1.bf16.msra.mxu0 0
        %2922 = vmatprep.subr.bf16.mxu0 0
        %2923 = vmatpush1.bf16.msra.mxu0 0
        %2924 = vmatprep.subr.bf16.mxu0 0
        %2925 = vmatpush1.bf16.msra.mxu0 %v2910
        %2926 = vmatprep.subr.bf16.mxu0 0
        %2927 = vmatpush1.bf16.msra.mxu0 %v2909
        %2928 = vmatprep.subr.bf16.mxu0 0
        %2929 = vmatpush1.bf16.msra.mxu0 %v2908
        %2930 = vmatprep.subr.bf16.mxu0 0
        %2931 = vmatpush2.bf16.msra.mxu0 0
        %2932 = vmatprep.subr.bf16.mxu0 0
        %2933 = vmatpush2.bf16.msra.mxu0 0
        %2934 = vmatprep.subr.bf16.mxu0 0
        %2935 = vmatpush2.bf16.msra.mxu0 0
        %2936 = vmatprep.subr.bf16.mxu0 0
        %2937 = vmatpush2.bf16.msra.mxu0 0
        %2938 = vmatprep.subr.bf16.mxu0 0
        %2939 = vmatpush2.bf16.msra.mxu0 0
        %2940 = vmatprep.subr.bf16.mxu0 0
        %2941 = vmatpush2.bf16.msra.mxu0 0
        %2942 = vmatprep.subr.bf16.mxu0 0
        %2943 = vmatpush2.bf16.msra.mxu0 0
        %2944 = vmatprep.subr.bf16.mxu0 0
        %2945 = vmatpush2.bf16.msra.mxu0 0
        %2946 = vmatprep.mubr.bf16.mxu0 0
        %2947 = vmatmul.mubr.bf16.gmra.mxu0 %v1735
        %v2948 = vpop.f32.mrf.mxu0
        %v2949 = vadd.f32 %v2894, %v2948
        %v2950 = vpop.f32.mrf.mxu0
        %v2951 = vpop.f32.mrf.mxu0
        %v2952 = vadd.f32 %v2894, %v2951
        %v2953 = vpop.f32.mrf.mxu0
        %2954 = vmatprep.mubr.bf16.mxu0 0
        %2955 = vmatmul.mubr.bf16.gmra.mxu0 %v1738
        %v2956 = vpop.f32.mrf.mxu0
        %v2957 = vadd.f32 %v2894, %v2956
        %v2958 = vpop.f32.mrf.mxu0
        %v2959 = vpop.f32.mrf.mxu0
        %v2960 = vadd.f32 %v2894, %v2959
        %v2961 = vpop.f32.mrf.mxu0
        %2962 = vdwg.mxu0
        %s2963 = scalar_lea.vmem %s890, 48
        %v2964 = vld [vmem:[%s2963] sm:$0xf]
        %v2965 = vld [vmem:[%s2963 + $0x4] sm:$0xf]
        %v2966 = vld [vmem:[%s2963 + $0x8] sm:$0xf]
        %v2967 = vld [vmem:[%s2963 + $0xc] sm:$0xf]
        %v2968 = vld [vmem:[%s2963 + $0x10] sm:$0xf]
        %v2969 = vld [vmem:[%s2963 + $0x14] sm:$0xf]
        %s2970 = scalar_lea.vmem %s902, 2
        %v2971 = vld [vmem:[%s2970] sm:$0x1]
        %v2973 = vlaneseq
        %v2974 = vshrl.u32 %v2973, 7
        %v2975 = vsub.s32 0, %v2974
        %v2976 = vrot.slane %v2971, %v2975
        %v2984 = vunpack.c.l.b16 %v2964
        %v2985 = vunpack.c.l.b16 %v2965
        %v2986 = vunpack.c.l.b16 %v2966
        %v2987 = vunpack.c.l.b16 %v2967
        %v2988 = vunpack.c.l.b16 %v2968
        %v2989 = vunpack.c.l.b16 %v2969
        %v2990 = vpack.c.b16 %v2985, %v2984
        %v2991 = vpack.c.b16 %v2987, %v2986
        %v2992 = vpack.c.b16 %v2989, %v2988
        %2996 = vmatprep.subr.bf16.mxu0 0
        %2997 = vmatpush1.bf16.msra.mxu0 0
        %2998 = vmatprep.subr.bf16.mxu0 0
        %2999 = vmatpush1.bf16.msra.mxu0 0
        %3000 = vmatprep.subr.bf16.mxu0 0
        %3001 = vmatpush1.bf16.msra.mxu0 0
        %3002 = vmatprep.subr.bf16.mxu0 0
        %3003 = vmatpush1.bf16.msra.mxu0 0
        %3004 = vmatprep.subr.bf16.mxu0 0
        %3005 = vmatpush1.bf16.msra.mxu0 0
        %3006 = vmatprep.subr.bf16.mxu0 0
        %3007 = vmatpush1.bf16.msra.mxu0 %v2992
        %3008 = vmatprep.subr.bf16.mxu0 0
        %3009 = vmatpush1.bf16.msra.mxu0 %v2991
        %3010 = vmatprep.subr.bf16.mxu0 0
        %3011 = vmatpush1.bf16.msra.mxu0 %v2990
        %3012 = vmatprep.subr.bf16.mxu0 0
        %3013 = vmatpush2.bf16.msra.mxu0 0
        %3014 = vmatprep.subr.bf16.mxu0 0
        %3015 = vmatpush2.bf16.msra.mxu0 0
        %3016 = vmatprep.subr.bf16.mxu0 0
        %3017 = vmatpush2.bf16.msra.mxu0 0
        %3018 = vmatprep.subr.bf16.mxu0 0
        %3019 = vmatpush2.bf16.msra.mxu0 0
        %3020 = vmatprep.subr.bf16.mxu0 0
        %3021 = vmatpush2.bf16.msra.mxu0 0
        %3022 = vmatprep.subr.bf16.mxu0 0
        %3023 = vmatpush2.bf16.msra.mxu0 0
        %3024 = vmatprep.subr.bf16.mxu0 0
        %3025 = vmatpush2.bf16.msra.mxu0 0
        %3026 = vmatprep.subr.bf16.mxu0 0
        %3027 = vmatpush2.bf16.msra.mxu0 0
        %3028 = vmatprep.mubr.bf16.mxu0 0
        %3029 = vmatmul.mubr.bf16.gmra.mxu0 %v1735
        %v3030 = vpop.f32.mrf.mxu0
        %v3031 = vadd.f32 %v2976, %v3030
        %v3032 = vpop.f32.mrf.mxu0
        %v3033 = vpop.f32.mrf.mxu0
        %v3034 = vadd.f32 %v2976, %v3033
        %v3035 = vpop.f32.mrf.mxu0
        %3036 = vmatprep.mubr.bf16.mxu0 0
        %3037 = vmatmul.mubr.bf16.gmra.mxu0 %v1738
        %v3038 = vpop.f32.mrf.mxu0
        %v3039 = vadd.f32 %v2976, %v3038
        %v3040 = vpop.f32.mrf.mxu0
        %v3041 = vpop.f32.mrf.mxu0
        %v3042 = vadd.f32 %v2976, %v3041
        %v3043 = vpop.f32.mrf.mxu0
        %3044 = vdwg.mxu0
        %v3045 = vpack.c.bf16 %v2870, %v2867
        %v3046 = vpack.c.bf16 %v2878, %v2875
        %v3047 = vpack.c.bf16 %v2952, %v2949
        %v3048 = vpack.c.bf16 %v2960, %v2957
        %v3050 = vsel %vm1953, %v3045, 0
        %v3053 = vsel %vm1953, %v3047, 0
        %3055 = vmatprep.subr.bf16.mxu0 0
        %3056 = vmatpush1.bf16.xpose.msra.mxu0 0
        %3057 = vmatprep.subr.bf16.mxu0 0
        %3058 = vmatpush1.bf16.xpose.msra.mxu0 0
        %3059 = vmatprep.subr.bf16.mxu0 0
        %3060 = vmatpush1.bf16.xpose.msra.mxu0 0
        %3061 = vmatprep.subr.bf16.mxu0 0
        %3062 = vmatpush1.bf16.xpose.msra.mxu0 0
        %3063 = vmatprep.subr.bf16.mxu0 0
        %3064 = vmatpush1.bf16.xpose.msra.mxu0 0
        %3065 = vmatprep.subr.bf16.mxu0 0
        %3066 = vmatpush1.bf16.xpose.msra.mxu0 0
        %3067 = vmatprep.subr.bf16.mxu0 0
        %3068 = vmatpush1.bf16.xpose.msra.mxu0 0
        %3069 = vmatprep.subr.bf16.mxu0 0
        %3070 = vmatpush1.bf16.xpose.msra.mxu0 %v3053
        %3071 = vmatprep.subr.bf16.mxu0 0
        %3072 = vmatpush2.bf16.xpose.msra.mxu0 0
        %3073 = vmatprep.subr.bf16.mxu0 0
        %3074 = vmatpush2.bf16.xpose.msra.mxu0 0
        %3075 = vmatprep.subr.bf16.mxu0 0
        %3076 = vmatpush2.bf16.xpose.msra.mxu0 0
        %3077 = vmatprep.subr.bf16.mxu0 0
        %3078 = vmatpush2.bf16.xpose.msra.mxu0 0
        %3079 = vmatprep.subr.bf16.mxu0 0
        %3080 = vmatpush2.bf16.xpose.msra.mxu0 0
        %3081 = vmatprep.subr.bf16.mxu0 0
        %3082 = vmatpush2.bf16.xpose.msra.mxu0 0
        %3083 = vmatprep.subr.bf16.mxu0 0
        %3084 = vmatpush2.bf16.xpose.msra.mxu0 0
        %3085 = vmatprep.subr.bf16.mxu0 0
        %3086 = vmatpush2.bf16.xpose.msra.mxu0 0
        %3087 = vmatprep.mubr.bf16.mxu0 0
        %3088 = vmatmul.mubr.bf16.gmra.mxu0 %v3050
        %v3089 = vpop.f32.mrf.mxu0
        %v3090 = vadd.f32 0.0, %v3089
        %v3091 = vpop.f32.mrf.mxu0
        %v3092 = vpop.f32.mrf.mxu0
        %v3093 = vadd.f32 0.0, %v3092
        %v3094 = vpop.f32.mrf.mxu0
        %3095 = vdwg.mxu0
        %v3097 = vsel %vm1953, %v3046, 0
        %v3100 = vsel %vm1953, %v3048, 0
        %3102 = vmatprep.subr.bf16.mxu0 0
        %3103 = vmatpush1.bf16.xpose.msra.mxu0 0
        %3104 = vmatprep.subr.bf16.mxu0 0
        %3105 = vmatpush1.bf16.xpose.msra.mxu0 0
        %3106 = vmatprep.subr.bf16.mxu0 0
        %3107 = vmatpush1.bf16.xpose.msra.mxu0 0
        %3108 = vmatprep.subr.bf16.mxu0 0
        %3109 = vmatpush1.bf16.xpose.msra.mxu0 0
        %3110 = vmatprep.subr.bf16.mxu0 0
        %3111 = vmatpush1.bf16.xpose.msra.mxu0 0
        %3112 = vmatprep.subr.bf16.mxu0 0
        %3113 = vmatpush1.bf16.xpose.msra.mxu0 0
        %3114 = vmatprep.subr.bf16.mxu0 0
        %3115 = vmatpush1.bf16.xpose.msra.mxu0 0
        %3116 = vmatprep.subr.bf16.mxu0 0
        %3117 = vmatpush1.bf16.xpose.msra.mxu0 %v3100
        %3118 = vmatprep.subr.bf16.mxu0 0
        %3119 = vmatpush2.bf16.xpose.msra.mxu0 0
        %3120 = vmatprep.subr.bf16.mxu0 0
        %3121 = vmatpush2.bf16.xpose.msra.mxu0 0
        %3122 = vmatprep.subr.bf16.mxu0 0
        %3123 = vmatpush2.bf16.xpose.msra.mxu0 0
        %3124 = vmatprep.subr.bf16.mxu0 0
        %3125 = vmatpush2.bf16.xpose.msra.mxu0 0
        %3126 = vmatprep.subr.bf16.mxu0 0
        %3127 = vmatpush2.bf16.xpose.msra.mxu0 0
        %3128 = vmatprep.subr.bf16.mxu0 0
        %3129 = vmatpush2.bf16.xpose.msra.mxu0 0
        %3130 = vmatprep.subr.bf16.mxu0 0
        %3131 = vmatpush2.bf16.xpose.msra.mxu0 0
        %3132 = vmatprep.subr.bf16.mxu0 0
        %3133 = vmatpush2.bf16.xpose.msra.mxu0 0
        %3134 = vmatprep.mubr.bf16.mxu0 0
        %3135 = vmatmul.mubr.bf16.gmra.mxu0 %v3097
        %v3136 = vpop.f32.mrf.mxu0
        %v3137 = vadd.f32 0.0, %v3136
        %v3138 = vpop.f32.mrf.mxu0
        %v3139 = vpop.f32.mrf.mxu0
        %v3140 = vadd.f32 0.0, %v3139
        %v3141 = vpop.f32.mrf.mxu0
        %3142 = vdwg.mxu0
        %v3143 = vsel %vm2049, %v3090, -1e+30
        %v3144 = vsel %vm2049, %v3093, -1e+30
        %v3145 = vsel %vm2049, %v3137, -1e+30
        %v3146 = vsel %vm2049, %v3140, -1e+30
        %v3147 = vsel %vm2054, %v3143, -inf
        %3148 = vmax.xlane.f32.xlu0 %v3147
        %v3149 = vpop.xlane.xlu0 %3148
        %v3150 = vsel %vm2054, %v3144, -inf
        %3151 = vmax.xlane.f32.xlu0 %v3150
        %v3152 = vpop.xlane.xlu0 %3151
        %v3153 = vsel %vm2054, %v3145, -inf
        %3154 = vmax.xlane.f32.xlu0 %v3153
        %v3155 = vpop.xlane.xlu0 %3154
        %v3156 = vsel %vm2054, %v3146, -inf
        %3157 = vmax.xlane.f32.xlu0 %v3156
        %v3158 = vpop.xlane.xlu0 %3157
        %v3159 = vsub.f32 %v3143, %v3149
        %v3160 = vsub.f32 %v3144, %v3152
        %v3161 = vsub.f32 %v3145, %v3155
        %v3162 = vsub.f32 %v3146, %v3158
        %v3163 = vmul.f32 %v3159, 1.442695
        %v3164 = vpow.pop %v3163
        %v3165 = vmul.f32 %v3160, 1.442695
        %v3166 = vpow.pop %v3165
        %v3167 = vmul.f32 %v3161, 1.442695
        %v3168 = vpow.pop %v3167
        %v3169 = vmul.f32 %v3162, 1.442695
        %v3170 = vpow.pop %v3169
        %v3171 = vsel %vm2054, %v3164, 0.0
        %3172 = vadd.xlane.f32.xlu0 %v3171
        %v3173 = vpop.xlane.xlu0 %3172
        %v3174 = vsel %vm2054, %v3166, 0.0
        %3175 = vadd.xlane.f32.xlu0 %v3174
        %v3176 = vpop.xlane.xlu0 %3175
        %v3177 = vsel %vm2054, %v3168, 0.0
        %3178 = vadd.xlane.f32.xlu0 %v3177
        %v3179 = vpop.xlane.xlu0 %3178
        %v3180 = vsel %vm2054, %v3170, 0.0
        %3181 = vadd.xlane.f32.xlu0 %v3180
        %v3182 = vpop.xlane.xlu0 %3181
        %v3183 = vrcp.pop %v3173
        %v3184 = vrcp.pop %v3176
        %v3185 = vrcp.pop %v3179
        %v3186 = vrcp.pop %v3182
        %v3187 = vmul.f32 %v3164, %v3183
        %v3188 = vmul.f32 %v3166, %v3184
        %v3189 = vmul.f32 %v3168, %v3185
        %v3190 = vmul.f32 %v3170, %v3186
        %v3191 = vpack.c.bf16 %v3188, %v3187
        %v3192 = vpack.c.bf16 %v3190, %v3189
        %v3193 = vpack.c.bf16 %v3034, %v3031
        %v3194 = vpack.c.bf16 %v3042, %v3039
        %v3196 = vsel %vm2054, %v3191, 0
        %3198 = vmatprep.subr.bf16.mxu0 0
        %3199 = vmatpush1.bf16.msra.mxu0 0
        %3200 = vmatprep.subr.bf16.mxu0 0
        %3201 = vmatpush1.bf16.msra.mxu0 0
        %3202 = vmatprep.subr.bf16.mxu0 0
        %3203 = vmatpush1.bf16.msra.mxu0 0
        %3204 = vmatprep.subr.bf16.mxu0 0
        %3205 = vmatpush1.bf16.msra.mxu0 0
        %3206 = vmatprep.subr.bf16.mxu0 0
        %3207 = vmatpush1.bf16.msra.mxu0 0
        %3208 = vmatprep.subr.bf16.mxu0 0
        %3209 = vmatpush1.bf16.msra.mxu0 0
        %3210 = vmatprep.subr.bf16.mxu0 0
        %3211 = vmatpush1.bf16.msra.mxu0 0
        %3212 = vmatprep.subr.bf16.mxu0 0
        %3213 = vmatpush1.bf16.msra.mxu0 %v3193
        %3214 = vmatprep.subr.bf16.mxu0 0
        %3215 = vmatpush2.bf16.msra.mxu0 0
        %3216 = vmatprep.subr.bf16.mxu0 0
        %3217 = vmatpush2.bf16.msra.mxu0 0
        %3218 = vmatprep.subr.bf16.mxu0 0
        %3219 = vmatpush2.bf16.msra.mxu0 0
        %3220 = vmatprep.subr.bf16.mxu0 0
        %3221 = vmatpush2.bf16.msra.mxu0 0
        %3222 = vmatprep.subr.bf16.mxu0 0
        %3223 = vmatpush2.bf16.msra.mxu0 0
        %3224 = vmatprep.subr.bf16.mxu0 0
        %3225 = vmatpush2.bf16.msra.mxu0 0
        %3226 = vmatprep.subr.bf16.mxu0 0
        %3227 = vmatpush2.bf16.msra.mxu0 0
        %3228 = vmatprep.subr.bf16.mxu0 0
        %3229 = vmatpush2.bf16.msra.mxu0 0
        %3230 = vmatprep.mubr.bf16.mxu0 0
        %3231 = vmatmul.mubr.bf16.gmra.mxu0 %v3196
        %v3232 = vpop.f32.mrf.mxu0
        %v3233 = vadd.f32 0.0, %v3232
        %v3234 = vpop.f32.mrf.mxu0
        %v3235 = vpop.f32.mrf.mxu0
        %v3236 = vadd.f32 0.0, %v3235
        %v3237 = vpop.f32.mrf.mxu0
        %3238 = vdwg.mxu0
        %v3240 = vsel %vm2054, %v3192, 0
        %3242 = vmatprep.subr.bf16.mxu0 0
        %3243 = vmatpush1.bf16.msra.mxu0 0
        %3244 = vmatprep.subr.bf16.mxu0 0
        %3245 = vmatpush1.bf16.msra.mxu0 0
        %3246 = vmatprep.subr.bf16.mxu0 0
        %3247 = vmatpush1.bf16.msra.mxu0 0
        %3248 = vmatprep.subr.bf16.mxu0 0
        %3249 = vmatpush1.bf16.msra.mxu0 0
        %3250 = vmatprep.subr.bf16.mxu0 0
        %3251 = vmatpush1.bf16.msra.mxu0 0
        %3252 = vmatprep.subr.bf16.mxu0 0
        %3253 = vmatpush1.bf16.msra.mxu0 0
        %3254 = vmatprep.subr.bf16.mxu0 0
        %3255 = vmatpush1.bf16.msra.mxu0 0
        %3256 = vmatprep.subr.bf16.mxu0 0
        %3257 = vmatpush1.bf16.msra.mxu0 %v3194
        %3258 = vmatprep.subr.bf16.mxu0 0
        %3259 = vmatpush2.bf16.msra.mxu0 0
        %3260 = vmatprep.subr.bf16.mxu0 0
        %3261 = vmatpush2.bf16.msra.mxu0 0
        %3262 = vmatprep.subr.bf16.mxu0 0
        %3263 = vmatpush2.bf16.msra.mxu0 0
        %3264 = vmatprep.subr.bf16.mxu0 0
        %3265 = vmatpush2.bf16.msra.mxu0 0
        %3266 = vmatprep.subr.bf16.mxu0 0
        %3267 = vmatpush2.bf16.msra.mxu0 0
        %3268 = vmatprep.subr.bf16.mxu0 0
        %3269 = vmatpush2.bf16.msra.mxu0 0
        %3270 = vmatprep.subr.bf16.mxu0 0
        %3271 = vmatpush2.bf16.msra.mxu0 0
        %3272 = vmatprep.subr.bf16.mxu0 0
        %3273 = vmatpush2.bf16.msra.mxu0 0
        %3274 = vmatprep.mubr.bf16.mxu0 0
        %3275 = vmatmul.mubr.bf16.gmra.mxu0 %v3240
        %v3276 = vpop.f32.mrf.mxu0
        %v3277 = vadd.f32 0.0, %v3276
        %v3278 = vpop.f32.mrf.mxu0
        %v3279 = vpop.f32.mrf.mxu0
        %v3280 = vadd.f32 0.0, %v3279
        %v3281 = vpop.f32.mrf.mxu0
        %3282 = vdwg.mxu0
        %v3283 = vpack.c.bf16 %v3236, %v3233
        %v3284 = vpack.c.bf16 %v3280, %v3277
        %s3285 = scalar_lea.vmem %s907, 8
        %v3286 = vld [vmem:[%s3285] sm:$0x7]
        %v3288 = vsel %vm1953, %v3283, 0
        %v3291 = vsel %vm1953, %v3284, 0
        %v3294 = vsel %vm2688, %v3286, 0
        %3296 = vmatprep.subr.bf16.mxu0 0
        %3297 = vmatpush1.bf16.msra.mxu0 0
        %3298 = vmatprep.subr.bf16.mxu0 0
        %3299 = vmatpush1.bf16.msra.mxu0 0
        %3300 = vmatprep.subr.bf16.mxu0 0
        %3301 = vmatpush1.bf16.msra.mxu0 0
        %3302 = vmatprep.subr.bf16.mxu0 0
        %3303 = vmatpush1.bf16.msra.mxu0 0
        %3304 = vmatprep.subr.bf16.mxu0 0
        %3305 = vmatpush1.bf16.msra.mxu0 0
        %3306 = vmatprep.subr.bf16.mxu0 0
        %3307 = vmatpush1.bf16.msra.mxu0 0
        %3308 = vmatprep.subr.bf16.mxu0 0
        %3309 = vmatpush1.bf16.msra.mxu0 0
        %3310 = vmatprep.subr.bf16.mxu0 0
        %3311 = vmatpush1.bf16.msra.mxu0 %v3294
        %3312 = vmatprep.subr.bf16.mxu0 0
        %3313 = vmatpush2.bf16.msra.mxu0 0
        %3314 = vmatprep.subr.bf16.mxu0 0
        %3315 = vmatpush2.bf16.msra.mxu0 0
        %3316 = vmatprep.subr.bf16.mxu0 0
        %3317 = vmatpush2.bf16.msra.mxu0 0
        %3318 = vmatprep.subr.bf16.mxu0 0
        %3319 = vmatpush2.bf16.msra.mxu0 0
        %3320 = vmatprep.subr.bf16.mxu0 0
        %3321 = vmatpush2.bf16.msra.mxu0 0
        %3322 = vmatprep.subr.bf16.mxu0 0
        %3323 = vmatpush2.bf16.msra.mxu0 0
        %3324 = vmatprep.subr.bf16.mxu0 0
        %3325 = vmatpush2.bf16.msra.mxu0 0
        %3326 = vmatprep.subr.bf16.mxu0 0
        %3327 = vmatpush2.bf16.msra.mxu0 0
        %3328 = vmatprep.mubr.bf16.mxu0 0
        %3329 = vmatmul.mubr.bf16.gmra.mxu0 %v3288
        %v3330 = vpop.f32.mrf.mxu0
        %v3331 = vadd.f32 0.0, %v3330
        %v3332 = vpop.f32.mrf.mxu0
        %v3333 = vpop.f32.mrf.mxu0
        %v3334 = vadd.f32 0.0, %v3333
        %v3335 = vpop.f32.mrf.mxu0
        %3336 = vmatprep.mubr.bf16.mxu0 0
        %3337 = vmatmul.mubr.bf16.gmra.mxu0 %v3291
        %v3338 = vpop.f32.mrf.mxu0
        %v3339 = vadd.f32 0.0, %v3338
        %v3340 = vpop.f32.mrf.mxu0
        %v3341 = vpop.f32.mrf.mxu0
        %v3342 = vadd.f32 0.0, %v3341
        %v3343 = vpop.f32.mrf.mxu0
        %3344 = vdwg.mxu0
        %v3345 = vadd.f32 %v2785, %v3331
        %v3346 = vadd.f32 %v2788, %v3334
        %v3347 = vadd.f32 %v2793, %v3339
        %v3348 = vadd.f32 %v2796, %v3342
        %s3349 = scalar_lea.vmem %s880, 72
        %v3350 = vld [vmem:[%s3349] sm:$0xf]
        %v3351 = vld [vmem:[%s3349 + $0x4] sm:$0xf]
        %v3352 = vld [vmem:[%s3349 + $0x8] sm:$0xf]
        %v3353 = vld [vmem:[%s3349 + $0xc] sm:$0xf]
        %v3354 = vld [vmem:[%s3349 + $0x10] sm:$0xf]
        %v3355 = vld [vmem:[%s3349 + $0x14] sm:$0xf]
        %s3356 = scalar_lea.vmem %s894, 3
        %v3357 = vld [vmem:[%s3356] sm:$0x1]
        %v3359 = vlaneseq
        %v3360 = vshrl.u32 %v3359, 7
        %v3361 = vsub.s32 0, %v3360
        %v3362 = vrot.slane %v3357, %v3361
        %v3370 = vunpack.c.l.b16 %v3350
        %v3371 = vunpack.c.l.b16 %v3351
        %v3372 = vunpack.c.l.b16 %v3352
        %v3373 = vunpack.c.l.b16 %v3353
        %v3374 = vunpack.c.l.b16 %v3354
        %v3375 = vunpack.c.l.b16 %v3355
        %v3376 = vpack.c.b16 %v3371, %v3370
        %v3377 = vpack.c.b16 %v3373, %v3372
        %v3378 = vpack.c.b16 %v3375, %v3374
        %3382 = vmatprep.subr.bf16.mxu0 0
        %3383 = vmatpush1.bf16.msra.mxu0 0
        %3384 = vmatprep.subr.bf16.mxu0 0
        %3385 = vmatpush1.bf16.msra.mxu0 0
        %3386 = vmatprep.subr.bf16.mxu0 0
        %3387 = vmatpush1.bf16.msra.mxu0 0
        %3388 = vmatprep.subr.bf16.mxu0 0
        %3389 = vmatpush1.bf16.msra.mxu0 0
        %3390 = vmatprep.subr.bf16.mxu0 0
        %3391 = vmatpush1.bf16.msra.mxu0 0
        %3392 = vmatprep.subr.bf16.mxu0 0
        %3393 = vmatpush1.bf16.msra.mxu0 %v3378
        %3394 = vmatprep.subr.bf16.mxu0 0
        %3395 = vmatpush1.bf16.msra.mxu0 %v3377
        %3396 = vmatprep.subr.bf16.mxu0 0
        %3397 = vmatpush1.bf16.msra.mxu0 %v3376
        %3398 = vmatprep.subr.bf16.mxu0 0
        %3399 = vmatpush2.bf16.msra.mxu0 0
        %3400 = vmatprep.subr.bf16.mxu0 0
        %3401 = vmatpush2.bf16.msra.mxu0 0
        %3402 = vmatprep.subr.bf16.mxu0 0
        %3403 = vmatpush2.bf16.msra.mxu0 0
        %3404 = vmatprep.subr.bf16.mxu0 0
        %3405 = vmatpush2.bf16.msra.mxu0 0
        %3406 = vmatprep.subr.bf16.mxu0 0
        %3407 = vmatpush2.bf16.msra.mxu0 0
        %3408 = vmatprep.subr.bf16.mxu0 0
        %3409 = vmatpush2.bf16.msra.mxu0 0
        %3410 = vmatprep.subr.bf16.mxu0 0
        %3411 = vmatpush2.bf16.msra.mxu0 0
        %3412 = vmatprep.subr.bf16.mxu0 0
        %3413 = vmatpush2.bf16.msra.mxu0 0
        %3414 = vmatprep.mubr.bf16.mxu0 0
        %3415 = vmatmul.mubr.bf16.gmra.mxu0 %v1735
        %v3416 = vpop.f32.mrf.mxu0
        %v3417 = vadd.f32 %v3362, %v3416
        %v3418 = vpop.f32.mrf.mxu0
        %v3419 = vpop.f32.mrf.mxu0
        %v3420 = vadd.f32 %v3362, %v3419
        %v3421 = vpop.f32.mrf.mxu0
        %3422 = vmatprep.mubr.bf16.mxu0 0
        %3423 = vmatmul.mubr.bf16.gmra.mxu0 %v1738
        %v3424 = vpop.f32.mrf.mxu0
        %v3425 = vadd.f32 %v3362, %v3424
        %v3426 = vpop.f32.mrf.mxu0
        %v3427 = vpop.f32.mrf.mxu0
        %v3428 = vadd.f32 %v3362, %v3427
        %v3429 = vpop.f32.mrf.mxu0
        %3430 = vdwg.mxu0
        %s3431 = scalar_lea.vmem %s885, 72
        %v3432 = vld [vmem:[%s3431] sm:$0xf]
        %v3433 = vld [vmem:[%s3431 + $0x4] sm:$0xf]
        %v3434 = vld [vmem:[%s3431 + $0x8] sm:$0xf]
        %v3435 = vld [vmem:[%s3431 + $0xc] sm:$0xf]
        %v3436 = vld [vmem:[%s3431 + $0x10] sm:$0xf]
        %v3437 = vld [vmem:[%s3431 + $0x14] sm:$0xf]
        %s3438 = scalar_lea.vmem %s898, 3
        %v3439 = vld [vmem:[%s3438] sm:$0x1]
        %v3441 = vlaneseq
        %v3442 = vshrl.u32 %v3441, 7
        %v3443 = vsub.s32 0, %v3442
        %v3444 = vrot.slane %v3439, %v3443
        %v3452 = vunpack.c.l.b16 %v3432
        %v3453 = vunpack.c.l.b16 %v3433
        %v3454 = vunpack.c.l.b16 %v3434
        %v3455 = vunpack.c.l.b16 %v3435
        %v3456 = vunpack.c.l.b16 %v3436
        %v3457 = vunpack.c.l.b16 %v3437
        %v3458 = vpack.c.b16 %v3453, %v3452
        %v3459 = vpack.c.b16 %v3455, %v3454
        %v3460 = vpack.c.b16 %v3457, %v3456
        %3464 = vmatprep.subr.bf16.mxu0 0
        %3465 = vmatpush1.bf16.msra.mxu0 0
        %3466 = vmatprep.subr.bf16.mxu0 0
        %3467 = vmatpush1.bf16.msra.mxu0 0
        %3468 = vmatprep.subr.bf16.mxu0 0
        %3469 = vmatpush1.bf16.msra.mxu0 0
        %3470 = vmatprep.subr.bf16.mxu0 0
        %3471 = vmatpush1.bf16.msra.mxu0 0
        %3472 = vmatprep.subr.bf16.mxu0 0
        %3473 = vmatpush1.bf16.msra.mxu0 0
        %3474 = vmatprep.subr.bf16.mxu0 0
        %3475 = vmatpush1.bf16.msra.mxu0 %v3460
        %3476 = vmatprep.subr.bf16.mxu0 0
        %3477 = vmatpush1.bf16.msra.mxu0 %v3459
        %3478 = vmatprep.subr.bf16.mxu0 0
        %3479 = vmatpush1.bf16.msra.mxu0 %v3458
        %3480 = vmatprep.subr.bf16.mxu0 0
        %3481 = vmatpush2.bf16.msra.mxu0 0
        %3482 = vmatprep.subr.bf16.mxu0 0
        %3483 = vmatpush2.bf16.msra.mxu0 0
        %3484 = vmatprep.subr.bf16.mxu0 0
        %3485 = vmatpush2.bf16.msra.mxu0 0
        %3486 = vmatprep.subr.bf16.mxu0 0
        %3487 = vmatpush2.bf16.msra.mxu0 0
        %3488 = vmatprep.subr.bf16.mxu0 0
        %3489 = vmatpush2.bf16.msra.mxu0 0
        %3490 = vmatprep.subr.bf16.mxu0 0
        %3491 = vmatpush2.bf16.msra.mxu0 0
        %3492 = vmatprep.subr.bf16.mxu0 0
        %3493 = vmatpush2.bf16.msra.mxu0 0
        %3494 = vmatprep.subr.bf16.mxu0 0
        %3495 = vmatpush2.bf16.msra.mxu0 0
        %3496 = vmatprep.mubr.bf16.mxu0 0
        %3497 = vmatmul.mubr.bf16.gmra.mxu0 %v1735
        %v3498 = vpop.f32.mrf.mxu0
        %v3499 = vadd.f32 %v3444, %v3498
        %v3500 = vpop.f32.mrf.mxu0
        %v3501 = vpop.f32.mrf.mxu0
        %v3502 = vadd.f32 %v3444, %v3501
        %v3503 = vpop.f32.mrf.mxu0
        %3504 = vmatprep.mubr.bf16.mxu0 0
        %3505 = vmatmul.mubr.bf16.gmra.mxu0 %v1738
        %v3506 = vpop.f32.mrf.mxu0
        %v3507 = vadd.f32 %v3444, %v3506
        %v3508 = vpop.f32.mrf.mxu0
        %v3509 = vpop.f32.mrf.mxu0
        %v3510 = vadd.f32 %v3444, %v3509
        %v3511 = vpop.f32.mrf.mxu0
        %3512 = vdwg.mxu0
        %s3513 = scalar_lea.vmem %s890, 72
        %v3514 = vld [vmem:[%s3513] sm:$0xf]
        %v3515 = vld [vmem:[%s3513 + $0x4] sm:$0xf]
        %v3516 = vld [vmem:[%s3513 + $0x8] sm:$0xf]
        %v3517 = vld [vmem:[%s3513 + $0xc] sm:$0xf]
        %v3518 = vld [vmem:[%s3513 + $0x10] sm:$0xf]
        %v3519 = vld [vmem:[%s3513 + $0x14] sm:$0xf]
        %s3520 = scalar_lea.vmem %s902, 3
        %v3521 = vld [vmem:[%s3520] sm:$0x1]
        %v3523 = vlaneseq
        %v3524 = vshrl.u32 %v3523, 7
        %v3525 = vsub.s32 0, %v3524
        %v3526 = vrot.slane %v3521, %v3525
        %v3534 = vunpack.c.l.b16 %v3514
        %v3535 = vunpack.c.l.b16 %v3515
        %v3536 = vunpack.c.l.b16 %v3516
        %v3537 = vunpack.c.l.b16 %v3517
        %v3538 = vunpack.c.l.b16 %v3518
        %v3539 = vunpack.c.l.b16 %v3519
        %v3540 = vpack.c.b16 %v3535, %v3534
        %v3541 = vpack.c.b16 %v3537, %v3536
        %v3542 = vpack.c.b16 %v3539, %v3538
        %3546 = vmatprep.subr.bf16.mxu0 0
        %3547 = vmatpush1.bf16.msra.mxu0 0
        %3548 = vmatprep.subr.bf16.mxu0 0
        %3549 = vmatpush1.bf16.msra.mxu0 0
        %3550 = vmatprep.subr.bf16.mxu0 0
        %3551 = vmatpush1.bf16.msra.mxu0 0
        %3552 = vmatprep.subr.bf16.mxu0 0
        %3553 = vmatpush1.bf16.msra.mxu0 0
        %3554 = vmatprep.subr.bf16.mxu0 0
        %3555 = vmatpush1.bf16.msra.mxu0 0
        %3556 = vmatprep.subr.bf16.mxu0 0
        %3557 = vmatpush1.bf16.msra.mxu0 %v3542
        %3558 = vmatprep.subr.bf16.mxu0 0
        %3559 = vmatpush1.bf16.msra.mxu0 %v3541
        %3560 = vmatprep.subr.bf16.mxu0 0
        %3561 = vmatpush1.bf16.msra.mxu0 %v3540
        %3562 = vmatprep.subr.bf16.mxu0 0
        %3563 = vmatpush2.bf16.msra.mxu0 0
        %3564 = vmatprep.subr.bf16.mxu0 0
        %3565 = vmatpush2.bf16.msra.mxu0 0
        %3566 = vmatprep.subr.bf16.mxu0 0
        %3567 = vmatpush2.bf16.msra.mxu0 0
        %3568 = vmatprep.subr.bf16.mxu0 0
        %3569 = vmatpush2.bf16.msra.mxu0 0
        %3570 = vmatprep.subr.bf16.mxu0 0
        %3571 = vmatpush2.bf16.msra.mxu0 0
        %3572 = vmatprep.subr.bf16.mxu0 0
        %3573 = vmatpush2.bf16.msra.mxu0 0
        %3574 = vmatprep.subr.bf16.mxu0 0
        %3575 = vmatpush2.bf16.msra.mxu0 0
        %3576 = vmatprep.subr.bf16.mxu0 0
        %3577 = vmatpush2.bf16.msra.mxu0 0
        %3578 = vmatprep.mubr.bf16.mxu0 0
        %3579 = vmatmul.mubr.bf16.gmra.mxu0 %v1735
        %v3580 = vpop.f32.mrf.mxu0
        %v3581 = vadd.f32 %v3526, %v3580
        %v3582 = vpop.f32.mrf.mxu0
        %v3583 = vpop.f32.mrf.mxu0
        %v3584 = vadd.f32 %v3526, %v3583
        %v3585 = vpop.f32.mrf.mxu0
        %3586 = vmatprep.mubr.bf16.mxu0 0
        %3587 = vmatmul.mubr.bf16.gmra.mxu0 %v1738
        %v3588 = vpop.f32.mrf.mxu0
        %v3589 = vadd.f32 %v3526, %v3588
        %v3590 = vpop.f32.mrf.mxu0
        %v3591 = vpop.f32.mrf.mxu0
        %v3592 = vadd.f32 %v3526, %v3591
        %v3593 = vpop.f32.mrf.mxu0
        %3594 = vdwg.mxu0
        %v3595 = vpack.c.bf16 %v3420, %v3417
        %v3596 = vpack.c.bf16 %v3428, %v3425
        %v3597 = vpack.c.bf16 %v3502, %v3499
        %v3598 = vpack.c.bf16 %v3510, %v3507
        %v3600 = vsel %vm1953, %v3595, 0
        %v3603 = vsel %vm1953, %v3597, 0
        %3605 = vmatprep.subr.bf16.mxu0 0
        %3606 = vmatpush1.bf16.xpose.msra.mxu0 0
        %3607 = vmatprep.subr.bf16.mxu0 0
        %3608 = vmatpush1.bf16.xpose.msra.mxu0 0
        %3609 = vmatprep.subr.bf16.mxu0 0
        %3610 = vmatpush1.bf16.xpose.msra.mxu0 0
        %3611 = vmatprep.subr.bf16.mxu0 0
        %3612 = vmatpush1.bf16.xpose.msra.mxu0 0
        %3613 = vmatprep.subr.bf16.mxu0 0
        %3614 = vmatpush1.bf16.xpose.msra.mxu0 0
        %3615 = vmatprep.subr.bf16.mxu0 0
        %3616 = vmatpush1.bf16.xpose.msra.mxu0 0
        %3617 = vmatprep.subr.bf16.mxu0 0
        %3618 = vmatpush1.bf16.xpose.msra.mxu0 0
        %3619 = vmatprep.subr.bf16.mxu0 0
        %3620 = vmatpush1.bf16.xpose.msra.mxu0 %v3603
        %3621 = vmatprep.subr.bf16.mxu0 0
        %3622 = vmatpush2.bf16.xpose.msra.mxu0 0
        %3623 = vmatprep.subr.bf16.mxu0 0
        %3624 = vmatpush2.bf16.xpose.msra.mxu0 0
        %3625 = vmatprep.subr.bf16.mxu0 0
        %3626 = vmatpush2.bf16.xpose.msra.mxu0 0
        %3627 = vmatprep.subr.bf16.mxu0 0
        %3628 = vmatpush2.bf16.xpose.msra.mxu0 0
        %3629 = vmatprep.subr.bf16.mxu0 0
        %3630 = vmatpush2.bf16.xpose.msra.mxu0 0
        %3631 = vmatprep.subr.bf16.mxu0 0
        %3632 = vmatpush2.bf16.xpose.msra.mxu0 0
        %3633 = vmatprep.subr.bf16.mxu0 0
        %3634 = vmatpush2.bf16.xpose.msra.mxu0 0
        %3635 = vmatprep.subr.bf16.mxu0 0
        %3636 = vmatpush2.bf16.xpose.msra.mxu0 0
        %3637 = vmatprep.mubr.bf16.mxu0 0
        %3638 = vmatmul.mubr.bf16.gmra.mxu0 %v3600
        %v3639 = vpop.f32.mrf.mxu0
        %v3640 = vadd.f32 0.0, %v3639
        %v3641 = vpop.f32.mrf.mxu0
        %v3642 = vpop.f32.mrf.mxu0
        %v3643 = vadd.f32 0.0, %v3642
        %v3644 = vpop.f32.mrf.mxu0
        %3645 = vdwg.mxu0
        %v3647 = vsel %vm1953, %v3596, 0
        %v3650 = vsel %vm1953, %v3598, 0
        %3652 = vmatprep.subr.bf16.mxu0 0
        %3653 = vmatpush1.bf16.xpose.msra.mxu0 0
        %3654 = vmatprep.subr.bf16.mxu0 0
        %3655 = vmatpush1.bf16.xpose.msra.mxu0 0
        %3656 = vmatprep.subr.bf16.mxu0 0
        %3657 = vmatpush1.bf16.xpose.msra.mxu0 0
        %3658 = vmatprep.subr.bf16.mxu0 0
        %3659 = vmatpush1.bf16.xpose.msra.mxu0 0
        %3660 = vmatprep.subr.bf16.mxu0 0
        %3661 = vmatpush1.bf16.xpose.msra.mxu0 0
        %3662 = vmatprep.subr.bf16.mxu0 0
        %3663 = vmatpush1.bf16.xpose.msra.mxu0 0
        %3664 = vmatprep.subr.bf16.mxu0 0
        %3665 = vmatpush1.bf16.xpose.msra.mxu0 0
        %3666 = vmatprep.subr.bf16.mxu0 0
        %3667 = vmatpush1.bf16.xpose.msra.mxu0 %v3650
        %3668 = vmatprep.subr.bf16.mxu0 0
        %3669 = vmatpush2.bf16.xpose.msra.mxu0 0
        %3670 = vmatprep.subr.bf16.mxu0 0
        %3671 = vmatpush2.bf16.xpose.msra.mxu0 0
        %3672 = vmatprep.subr.bf16.mxu0 0
        %3673 = vmatpush2.bf16.xpose.msra.mxu0 0
        %3674 = vmatprep.subr.bf16.mxu0 0
        %3675 = vmatpush2.bf16.xpose.msra.mxu0 0
        %3676 = vmatprep.subr.bf16.mxu0 0
        %3677 = vmatpush2.bf16.xpose.msra.mxu0 0
        %3678 = vmatprep.subr.bf16.mxu0 0
        %3679 = vmatpush2.bf16.xpose.msra.mxu0 0
        %3680 = vmatprep.subr.bf16.mxu0 0
        %3681 = vmatpush2.bf16.xpose.msra.mxu0 0
        %3682 = vmatprep.subr.bf16.mxu0 0
        %3683 = vmatpush2.bf16.xpose.msra.mxu0 0
        %3684 = vmatprep.mubr.bf16.mxu0 0
        %3685 = vmatmul.mubr.bf16.gmra.mxu0 %v3647
        %v3686 = vpop.f32.mrf.mxu0
        %v3687 = vadd.f32 0.0, %v3686
        %v3688 = vpop.f32.mrf.mxu0
        %v3689 = vpop.f32.mrf.mxu0
        %v3690 = vadd.f32 0.0, %v3689
        %v3691 = vpop.f32.mrf.mxu0
        %3692 = vdwg.mxu0
        %v3693 = vsel %vm2049, %v3640, -1e+30
        %v3694 = vsel %vm2049, %v3643, -1e+30
        %v3695 = vsel %vm2049, %v3687, -1e+30
        %v3696 = vsel %vm2049, %v3690, -1e+30
        %v3697 = vsel %vm2054, %v3693, -inf
        %3698 = vmax.xlane.f32.xlu0 %v3697
        %v3699 = vpop.xlane.xlu0 %3698
        %v3700 = vsel %vm2054, %v3694, -inf
        %3701 = vmax.xlane.f32.xlu0 %v3700
        %v3702 = vpop.xlane.xlu0 %3701
        %v3703 = vsel %vm2054, %v3695, -inf
        %3704 = vmax.xlane.f32.xlu0 %v3703
        %v3705 = vpop.xlane.xlu0 %3704
        %v3706 = vsel %vm2054, %v3696, -inf
        %3707 = vmax.xlane.f32.xlu0 %v3706
        %v3708 = vpop.xlane.xlu0 %3707
        %v3709 = vsub.f32 %v3693, %v3699
        %v3710 = vsub.f32 %v3694, %v3702
        %v3711 = vsub.f32 %v3695, %v3705
        %v3712 = vsub.f32 %v3696, %v3708
        %v3713 = vmul.f32 %v3709, 1.442695
        %v3714 = vpow.pop %v3713
        %v3715 = vmul.f32 %v3710, 1.442695
        %v3716 = vpow.pop %v3715
        %v3717 = vmul.f32 %v3711, 1.442695
        %v3718 = vpow.pop %v3717
        %v3719 = vmul.f32 %v3712, 1.442695
        %v3720 = vpow.pop %v3719
        %v3721 = vsel %vm2054, %v3714, 0.0
        %3722 = vadd.xlane.f32.xlu0 %v3721
        %v3723 = vpop.xlane.xlu0 %3722
        %v3724 = vsel %vm2054, %v3716, 0.0
        %3725 = vadd.xlane.f32.xlu0 %v3724
        %v3726 = vpop.xlane.xlu0 %3725
        %v3727 = vsel %vm2054, %v3718, 0.0
        %3728 = vadd.xlane.f32.xlu0 %v3727
        %v3729 = vpop.xlane.xlu0 %3728
        %v3730 = vsel %vm2054, %v3720, 0.0
        %3731 = vadd.xlane.f32.xlu0 %v3730
        %v3732 = vpop.xlane.xlu0 %3731
        %v3733 = vrcp.pop %v3723
        %v3734 = vrcp.pop %v3726
        %v3735 = vrcp.pop %v3729
        %v3736 = vrcp.pop %v3732
        %v3737 = vmul.f32 %v3714, %v3733
        %v3738 = vmul.f32 %v3716, %v3734
        %v3739 = vmul.f32 %v3718, %v3735
        %v3740 = vmul.f32 %v3720, %v3736
        %v3741 = vpack.c.bf16 %v3738, %v3737
        %v3742 = vpack.c.bf16 %v3740, %v3739
        %v3743 = vpack.c.bf16 %v3584, %v3581
        %v3744 = vpack.c.bf16 %v3592, %v3589
        %v3746 = vsel %vm2054, %v3741, 0
        %3748 = vmatprep.subr.bf16.mxu0 0
        %3749 = vmatpush1.bf16.msra.mxu0 0
        %3750 = vmatprep.subr.bf16.mxu0 0
        %3751 = vmatpush1.bf16.msra.mxu0 0
        %3752 = vmatprep.subr.bf16.mxu0 0
        %3753 = vmatpush1.bf16.msra.mxu0 0
        %3754 = vmatprep.subr.bf16.mxu0 0
        %3755 = vmatpush1.bf16.msra.mxu0 0
        %3756 = vmatprep.subr.bf16.mxu0 0
        %3757 = vmatpush1.bf16.msra.mxu0 0
        %3758 = vmatprep.subr.bf16.mxu0 0
        %3759 = vmatpush1.bf16.msra.mxu0 0
        %3760 = vmatprep.subr.bf16.mxu0 0
        %3761 = vmatpush1.bf16.msra.mxu0 0
        %3762 = vmatprep.subr.bf16.mxu0 0
        %3763 = vmatpush1.bf16.msra.mxu0 %v3743
        %3764 = vmatprep.subr.bf16.mxu0 0
        %3765 = vmatpush2.bf16.msra.mxu0 0
        %3766 = vmatprep.subr.bf16.mxu0 0
        %3767 = vmatpush2.bf16.msra.mxu0 0
        %3768 = vmatprep.subr.bf16.mxu0 0
        %3769 = vmatpush2.bf16.msra.mxu0 0
        %3770 = vmatprep.subr.bf16.mxu0 0
        %3771 = vmatpush2.bf16.msra.mxu0 0
        %3772 = vmatprep.subr.bf16.mxu0 0
        %3773 = vmatpush2.bf16.msra.mxu0 0
        %3774 = vmatprep.subr.bf16.mxu0 0
        %3775 = vmatpush2.bf16.msra.mxu0 0
        %3776 = vmatprep.subr.bf16.mxu0 0
        %3777 = vmatpush2.bf16.msra.mxu0 0
        %3778 = vmatprep.subr.bf16.mxu0 0
        %3779 = vmatpush2.bf16.msra.mxu0 0
        %3780 = vmatprep.mubr.bf16.mxu0 0
        %3781 = vmatmul.mubr.bf16.gmra.mxu0 %v3746
        %v3782 = vpop.f32.mrf.mxu0
        %v3783 = vadd.f32 0.0, %v3782
        %v3784 = vpop.f32.mrf.mxu0
        %v3785 = vpop.f32.mrf.mxu0
        %v3786 = vadd.f32 0.0, %v3785
        %v3787 = vpop.f32.mrf.mxu0
        %3788 = vdwg.mxu0
        %v3790 = vsel %vm2054, %v3742, 0
        %3792 = vmatprep.subr.bf16.mxu0 0
        %3793 = vmatpush1.bf16.msra.mxu0 0
        %3794 = vmatprep.subr.bf16.mxu0 0
        %3795 = vmatpush1.bf16.msra.mxu0 0
        %3796 = vmatprep.subr.bf16.mxu0 0
        %3797 = vmatpush1.bf16.msra.mxu0 0
        %3798 = vmatprep.subr.bf16.mxu0 0
        %3799 = vmatpush1.bf16.msra.mxu0 0
        %3800 = vmatprep.subr.bf16.mxu0 0
        %3801 = vmatpush1.bf16.msra.mxu0 0
        %3802 = vmatprep.subr.bf16.mxu0 0
        %3803 = vmatpush1.bf16.msra.mxu0 0
        %3804 = vmatprep.subr.bf16.mxu0 0
        %3805 = vmatpush1.bf16.msra.mxu0 0
        %3806 = vmatprep.subr.bf16.mxu0 0
        %3807 = vmatpush1.bf16.msra.mxu0 %v3744
        %3808 = vmatprep.subr.bf16.mxu0 0
        %3809 = vmatpush2.bf16.msra.mxu0 0
        %3810 = vmatprep.subr.bf16.mxu0 0
        %3811 = vmatpush2.bf16.msra.mxu0 0
        %3812 = vmatprep.subr.bf16.mxu0 0
        %3813 = vmatpush2.bf16.msra.mxu0 0
        %3814 = vmatprep.subr.bf16.mxu0 0
        %3815 = vmatpush2.bf16.msra.mxu0 0
        %3816 = vmatprep.subr.bf16.mxu0 0
        %3817 = vmatpush2.bf16.msra.mxu0 0
        %3818 = vmatprep.subr.bf16.mxu0 0
        %3819 = vmatpush2.bf16.msra.mxu0 0
        %3820 = vmatprep.subr.bf16.mxu0 0
        %3821 = vmatpush2.bf16.msra.mxu0 0
        %3822 = vmatprep.subr.bf16.mxu0 0
        %3823 = vmatpush2.bf16.msra.mxu0 0
        %3824 = vmatprep.mubr.bf16.mxu0 0
        %3825 = vmatmul.mubr.bf16.gmra.mxu0 %v3790
        %v3826 = vpop.f32.mrf.mxu0
        %v3827 = vadd.f32 0.0, %v3826
        %v3828 = vpop.f32.mrf.mxu0
        %v3829 = vpop.f32.mrf.mxu0
        %v3830 = vadd.f32 0.0, %v3829
        %v3831 = vpop.f32.mrf.mxu0
        %3832 = vdwg.mxu0
        %v3833 = vpack.c.bf16 %v3786, %v3783
        %v3834 = vpack.c.bf16 %v3830, %v3827
        %s3835 = scalar_lea.vmem %s907, 12
        %v3836 = vld [vmem:[%s3835] sm:$0x7]
        %v3838 = vsel %vm1953, %v3833, 0
        %v3841 = vsel %vm1953, %v3834, 0
        %v3844 = vsel %vm2688, %v3836, 0
        %3846 = vmatprep.subr.bf16.mxu0 0
        %3847 = vmatpush1.bf16.msra.mxu0 0
        %3848 = vmatprep.subr.bf16.mxu0 0
        %3849 = vmatpush1.bf16.msra.mxu0 0
        %3850 = vmatprep.subr.bf16.mxu0 0
        %3851 = vmatpush1.bf16.msra.mxu0 0
        %3852 = vmatprep.subr.bf16.mxu0 0
        %3853 = vmatpush1.bf16.msra.mxu0 0
        %3854 = vmatprep.subr.bf16.mxu0 0
        %3855 = vmatpush1.bf16.msra.mxu0 0
        %3856 = vmatprep.subr.bf16.mxu0 0
        %3857 = vmatpush1.bf16.msra.mxu0 0
        %3858 = vmatprep.subr.bf16.mxu0 0
        %3859 = vmatpush1.bf16.msra.mxu0 0
        %3860 = vmatprep.subr.bf16.mxu0 0
        %3861 = vmatpush1.bf16.msra.mxu0 %v3844
        %3862 = vmatprep.subr.bf16.mxu0 0
        %3863 = vmatpush2.bf16.msra.mxu0 0
        %3864 = vmatprep.subr.bf16.mxu0 0
        %3865 = vmatpush2.bf16.msra.mxu0 0
        %3866 = vmatprep.subr.bf16.mxu0 0
        %3867 = vmatpush2.bf16.msra.mxu0 0
        %3868 = vmatprep.subr.bf16.mxu0 0
        %3869 = vmatpush2.bf16.msra.mxu0 0
        %3870 = vmatprep.subr.bf16.mxu0 0
        %3871 = vmatpush2.bf16.msra.mxu0 0
        %3872 = vmatprep.subr.bf16.mxu0 0
        %3873 = vmatpush2.bf16.msra.mxu0 0
        %3874 = vmatprep.subr.bf16.mxu0 0
        %3875 = vmatpush2.bf16.msra.mxu0 0
        %3876 = vmatprep.subr.bf16.mxu0 0
        %3877 = vmatpush2.bf16.msra.mxu0 0
        %3878 = vmatprep.mubr.bf16.mxu0 0
        %3879 = vmatmul.mubr.bf16.gmra.mxu0 %v3838
        %v3880 = vpop.f32.mrf.mxu0
        %v3881 = vadd.f32 0.0, %v3880
        %v3882 = vpop.f32.mrf.mxu0
        %v3883 = vpop.f32.mrf.mxu0
        %v3884 = vadd.f32 0.0, %v3883
        %v3885 = vpop.f32.mrf.mxu0
        %3886 = vmatprep.mubr.bf16.mxu0 0
        %3887 = vmatmul.mubr.bf16.gmra.mxu0 %v3841
        %v3888 = vpop.f32.mrf.mxu0
        %v3889 = vadd.f32 0.0, %v3888
        %v3890 = vpop.f32.mrf.mxu0
        %v3891 = vpop.f32.mrf.mxu0
        %v3892 = vadd.f32 0.0, %v3891
        %v3893 = vpop.f32.mrf.mxu0
        %3894 = vdwg.mxu0
        %v3895 = vadd.f32 %v3345, %v3881
        %v3896 = vadd.f32 %v3346, %v3884
        %v3897 = vadd.f32 %v3347, %v3889
        %v3898 = vadd.f32 %v3348, %v3892
        %s3899 = scalar_lea.vmem %s880, 96
        %v3900 = vld [vmem:[%s3899] sm:$0xf]
        %v3901 = vld [vmem:[%s3899 + $0x4] sm:$0xf]
        %v3902 = vld [vmem:[%s3899 + $0x8] sm:$0xf]
        %v3903 = vld [vmem:[%s3899 + $0xc] sm:$0xf]
        %v3904 = vld [vmem:[%s3899 + $0x10] sm:$0xf]
        %v3905 = vld [vmem:[%s3899 + $0x14] sm:$0xf]
        %s3906 = scalar_lea.vmem %s894, 4
        %v3907 = vld [vmem:[%s3906] sm:$0x1]
        %v3909 = vlaneseq
        %v3910 = vshrl.u32 %v3909, 7
        %v3911 = vsub.s32 0, %v3910
        %v3912 = vrot.slane %v3907, %v3911
        %v3920 = vunpack.c.l.b16 %v3900
        %v3921 = vunpack.c.l.b16 %v3901
        %v3922 = vunpack.c.l.b16 %v3902
        %v3923 = vunpack.c.l.b16 %v3903
        %v3924 = vunpack.c.l.b16 %v3904
        %v3925 = vunpack.c.l.b16 %v3905
        %v3926 = vpack.c.b16 %v3921, %v3920
        %v3927 = vpack.c.b16 %v3923, %v3922
        %v3928 = vpack.c.b16 %v3925, %v3924
        %3932 = vmatprep.subr.bf16.mxu0 0
        %3933 = vmatpush1.bf16.msra.mxu0 0
        %3934 = vmatprep.subr.bf16.mxu0 0
        %3935 = vmatpush1.bf16.msra.mxu0 0
        %3936 = vmatprep.subr.bf16.mxu0 0
        %3937 = vmatpush1.bf16.msra.mxu0 0
        %3938 = vmatprep.subr.bf16.mxu0 0
        %3939 = vmatpush1.bf16.msra.mxu0 0
        %3940 = vmatprep.subr.bf16.mxu0 0
        %3941 = vmatpush1.bf16.msra.mxu0 0
        %3942 = vmatprep.subr.bf16.mxu0 0
        %3943 = vmatpush1.bf16.msra.mxu0 %v3928
        %3944 = vmatprep.subr.bf16.mxu0 0
        %3945 = vmatpush1.bf16.msra.mxu0 %v3927
        %3946 = vmatprep.subr.bf16.mxu0 0
        %3947 = vmatpush1.bf16.msra.mxu0 %v3926
        %3948 = vmatprep.subr.bf16.mxu0 0
        %3949 = vmatpush2.bf16.msra.mxu0 0
        %3950 = vmatprep.subr.bf16.mxu0 0
        %3951 = vmatpush2.bf16.msra.mxu0 0
        %3952 = vmatprep.subr.bf16.mxu0 0
        %3953 = vmatpush2.bf16.msra.mxu0 0
        %3954 = vmatprep.subr.bf16.mxu0 0
        %3955 = vmatpush2.bf16.msra.mxu0 0
        %3956 = vmatprep.subr.bf16.mxu0 0
        %3957 = vmatpush2.bf16.msra.mxu0 0
        %3958 = vmatprep.subr.bf16.mxu0 0
        %3959 = vmatpush2.bf16.msra.mxu0 0
        %3960 = vmatprep.subr.bf16.mxu0 0
        %3961 = vmatpush2.bf16.msra.mxu0 0
        %3962 = vmatprep.subr.bf16.mxu0 0
        %3963 = vmatpush2.bf16.msra.mxu0 0
        %3964 = vmatprep.mubr.bf16.mxu0 0
        %3965 = vmatmul.mubr.bf16.gmra.mxu0 %v1735
        %v3966 = vpop.f32.mrf.mxu0
        %v3967 = vadd.f32 %v3912, %v3966
        %v3968 = vpop.f32.mrf.mxu0
        %v3969 = vpop.f32.mrf.mxu0
        %v3970 = vadd.f32 %v3912, %v3969
        %v3971 = vpop.f32.mrf.mxu0
        %3972 = vmatprep.mubr.bf16.mxu0 0
        %3973 = vmatmul.mubr.bf16.gmra.mxu0 %v1738
        %v3974 = vpop.f32.mrf.mxu0
        %v3975 = vadd.f32 %v3912, %v3974
        %v3976 = vpop.f32.mrf.mxu0
        %v3977 = vpop.f32.mrf.mxu0
        %v3978 = vadd.f32 %v3912, %v3977
        %v3979 = vpop.f32.mrf.mxu0
        %3980 = vdwg.mxu0
        %s3981 = scalar_lea.vmem %s885, 96
        %v3982 = vld [vmem:[%s3981] sm:$0xf]
        %v3983 = vld [vmem:[%s3981 + $0x4] sm:$0xf]
        %v3984 = vld [vmem:[%s3981 + $0x8] sm:$0xf]
        %v3985 = vld [vmem:[%s3981 + $0xc] sm:$0xf]
        %v3986 = vld [vmem:[%s3981 + $0x10] sm:$0xf]
        %v3987 = vld [vmem:[%s3981 + $0x14] sm:$0xf]
        %s3988 = scalar_lea.vmem %s898, 4
        %v3989 = vld [vmem:[%s3988] sm:$0x1]
        %v3991 = vlaneseq
        %v3992 = vshrl.u32 %v3991, 7
        %v3993 = vsub.s32 0, %v3992
        %v3994 = vrot.slane %v3989, %v3993
        %v4002 = vunpack.c.l.b16 %v3982
        %v4003 = vunpack.c.l.b16 %v3983
        %v4004 = vunpack.c.l.b16 %v3984
        %v4005 = vunpack.c.l.b16 %v3985
        %v4006 = vunpack.c.l.b16 %v3986
        %v4007 = vunpack.c.l.b16 %v3987
        %v4008 = vpack.c.b16 %v4003, %v4002
        %v4009 = vpack.c.b16 %v4005, %v4004
        %v4010 = vpack.c.b16 %v4007, %v4006
        %4014 = vmatprep.subr.bf16.mxu0 0
        %4015 = vmatpush1.bf16.msra.mxu0 0
        %4016 = vmatprep.subr.bf16.mxu0 0
        %4017 = vmatpush1.bf16.msra.mxu0 0
        %4018 = vmatprep.subr.bf16.mxu0 0
        %4019 = vmatpush1.bf16.msra.mxu0 0
        %4020 = vmatprep.subr.bf16.mxu0 0
        %4021 = vmatpush1.bf16.msra.mxu0 0
        %4022 = vmatprep.subr.bf16.mxu0 0
        %4023 = vmatpush1.bf16.msra.mxu0 0
        %4024 = vmatprep.subr.bf16.mxu0 0
        %4025 = vmatpush1.bf16.msra.mxu0 %v4010
        %4026 = vmatprep.subr.bf16.mxu0 0
        %4027 = vmatpush1.bf16.msra.mxu0 %v4009
        %4028 = vmatprep.subr.bf16.mxu0 0
        %4029 = vmatpush1.bf16.msra.mxu0 %v4008
        %4030 = vmatprep.subr.bf16.mxu0 0
        %4031 = vmatpush2.bf16.msra.mxu0 0
        %4032 = vmatprep.subr.bf16.mxu0 0
        %4033 = vmatpush2.bf16.msra.mxu0 0
        %4034 = vmatprep.subr.bf16.mxu0 0
        %4035 = vmatpush2.bf16.msra.mxu0 0
        %4036 = vmatprep.subr.bf16.mxu0 0
        %4037 = vmatpush2.bf16.msra.mxu0 0
        %4038 = vmatprep.subr.bf16.mxu0 0
        %4039 = vmatpush2.bf16.msra.mxu0 0
        %4040 = vmatprep.subr.bf16.mxu0 0
        %4041 = vmatpush2.bf16.msra.mxu0 0
        %4042 = vmatprep.subr.bf16.mxu0 0
        %4043 = vmatpush2.bf16.msra.mxu0 0
        %4044 = vmatprep.subr.bf16.mxu0 0
        %4045 = vmatpush2.bf16.msra.mxu0 0
        %4046 = vmatprep.mubr.bf16.mxu0 0
        %4047 = vmatmul.mubr.bf16.gmra.mxu0 %v1735
        %v4048 = vpop.f32.mrf.mxu0
        %v4049 = vadd.f32 %v3994, %v4048
        %v4050 = vpop.f32.mrf.mxu0
        %v4051 = vpop.f32.mrf.mxu0
        %v4052 = vadd.f32 %v3994, %v4051
        %v4053 = vpop.f32.mrf.mxu0
        %4054 = vmatprep.mubr.bf16.mxu0 0
        %4055 = vmatmul.mubr.bf16.gmra.mxu0 %v1738
        %v4056 = vpop.f32.mrf.mxu0
        %v4057 = vadd.f32 %v3994, %v4056
        %v4058 = vpop.f32.mrf.mxu0
        %v4059 = vpop.f32.mrf.mxu0
        %v4060 = vadd.f32 %v3994, %v4059
        %v4061 = vpop.f32.mrf.mxu0
        %4062 = vdwg.mxu0
        %s4063 = scalar_lea.vmem %s890, 96
        %v4064 = vld [vmem:[%s4063] sm:$0xf]
        %v4065 = vld [vmem:[%s4063 + $0x4] sm:$0xf]
        %v4066 = vld [vmem:[%s4063 + $0x8] sm:$0xf]
        %v4067 = vld [vmem:[%s4063 + $0xc] sm:$0xf]
        %v4068 = vld [vmem:[%s4063 + $0x10] sm:$0xf]
        %v4069 = vld [vmem:[%s4063 + $0x14] sm:$0xf]
        %s4070 = scalar_lea.vmem %s902, 4
        %v4071 = vld [vmem:[%s4070] sm:$0x1]
        %v4073 = vlaneseq
        %v4074 = vshrl.u32 %v4073, 7
        %v4075 = vsub.s32 0, %v4074
        %v4076 = vrot.slane %v4071, %v4075
        %v4084 = vunpack.c.l.b16 %v4064
        %v4085 = vunpack.c.l.b16 %v4065
        %v4086 = vunpack.c.l.b16 %v4066
        %v4087 = vunpack.c.l.b16 %v4067
        %v4088 = vunpack.c.l.b16 %v4068
        %v4089 = vunpack.c.l.b16 %v4069
        %v4090 = vpack.c.b16 %v4085, %v4084
        %v4091 = vpack.c.b16 %v4087, %v4086
        %v4092 = vpack.c.b16 %v4089, %v4088
        %4096 = vmatprep.subr.bf16.mxu0 0
        %4097 = vmatpush1.bf16.msra.mxu0 0
        %4098 = vmatprep.subr.bf16.mxu0 0
        %4099 = vmatpush1.bf16.msra.mxu0 0
        %4100 = vmatprep.subr.bf16.mxu0 0
        %4101 = vmatpush1.bf16.msra.mxu0 0
        %4102 = vmatprep.subr.bf16.mxu0 0
        %4103 = vmatpush1.bf16.msra.mxu0 0
        %4104 = vmatprep.subr.bf16.mxu0 0
        %4105 = vmatpush1.bf16.msra.mxu0 0
        %4106 = vmatprep.subr.bf16.mxu0 0
        %4107 = vmatpush1.bf16.msra.mxu0 %v4092
        %4108 = vmatprep.subr.bf16.mxu0 0
        %4109 = vmatpush1.bf16.msra.mxu0 %v4091
        %4110 = vmatprep.subr.bf16.mxu0 0
        %4111 = vmatpush1.bf16.msra.mxu0 %v4090
        %4112 = vmatprep.subr.bf16.mxu0 0
        %4113 = vmatpush2.bf16.msra.mxu0 0
        %4114 = vmatprep.subr.bf16.mxu0 0
        %4115 = vmatpush2.bf16.msra.mxu0 0
        %4116 = vmatprep.subr.bf16.mxu0 0
        %4117 = vmatpush2.bf16.msra.mxu0 0
        %4118 = vmatprep.subr.bf16.mxu0 0
        %4119 = vmatpush2.bf16.msra.mxu0 0
        %4120 = vmatprep.subr.bf16.mxu0 0
        %4121 = vmatpush2.bf16.msra.mxu0 0
        %4122 = vmatprep.subr.bf16.mxu0 0
        %4123 = vmatpush2.bf16.msra.mxu0 0
        %4124 = vmatprep.subr.bf16.mxu0 0
        %4125 = vmatpush2.bf16.msra.mxu0 0
        %4126 = vmatprep.subr.bf16.mxu0 0
        %4127 = vmatpush2.bf16.msra.mxu0 0
        %4128 = vmatprep.mubr.bf16.mxu0 0
        %4129 = vmatmul.mubr.bf16.gmra.mxu0 %v1735
        %v4130 = vpop.f32.mrf.mxu0
        %v4131 = vadd.f32 %v4076, %v4130
        %v4132 = vpop.f32.mrf.mxu0
        %v4133 = vpop.f32.mrf.mxu0
        %v4134 = vadd.f32 %v4076, %v4133
        %v4135 = vpop.f32.mrf.mxu0
        %4136 = vmatprep.mubr.bf16.mxu0 0
        %4137 = vmatmul.mubr.bf16.gmra.mxu0 %v1738
        %v4138 = vpop.f32.mrf.mxu0
        %v4139 = vadd.f32 %v4076, %v4138
        %v4140 = vpop.f32.mrf.mxu0
        %v4141 = vpop.f32.mrf.mxu0
        %v4142 = vadd.f32 %v4076, %v4141
        %v4143 = vpop.f32.mrf.mxu0
        %4144 = vdwg.mxu0
        %v4145 = vpack.c.bf16 %v3970, %v3967
        %v4146 = vpack.c.bf16 %v3978, %v3975
        %v4147 = vpack.c.bf16 %v4052, %v4049
        %v4148 = vpack.c.bf16 %v4060, %v4057
        %v4150 = vsel %vm1953, %v4145, 0
        %v4153 = vsel %vm1953, %v4147, 0
        %4155 = vmatprep.subr.bf16.mxu0 0
        %4156 = vmatpush1.bf16.xpose.msra.mxu0 0
        %4157 = vmatprep.subr.bf16.mxu0 0
        %4158 = vmatpush1.bf16.xpose.msra.mxu0 0
        %4159 = vmatprep.subr.bf16.mxu0 0
        %4160 = vmatpush1.bf16.xpose.msra.mxu0 0
        %4161 = vmatprep.subr.bf16.mxu0 0
        %4162 = vmatpush1.bf16.xpose.msra.mxu0 0
        %4163 = vmatprep.subr.bf16.mxu0 0
        %4164 = vmatpush1.bf16.xpose.msra.mxu0 0
        %4165 = vmatprep.subr.bf16.mxu0 0
        %4166 = vmatpush1.bf16.xpose.msra.mxu0 0
        %4167 = vmatprep.subr.bf16.mxu0 0
        %4168 = vmatpush1.bf16.xpose.msra.mxu0 0
        %4169 = vmatprep.subr.bf16.mxu0 0
        %4170 = vmatpush1.bf16.xpose.msra.mxu0 %v4153
        %4171 = vmatprep.subr.bf16.mxu0 0
        %4172 = vmatpush2.bf16.xpose.msra.mxu0 0
        %4173 = vmatprep.subr.bf16.mxu0 0
        %4174 = vmatpush2.bf16.xpose.msra.mxu0 0
        %4175 = vmatprep.subr.bf16.mxu0 0
        %4176 = vmatpush2.bf16.xpose.msra.mxu0 0
        %4177 = vmatprep.subr.bf16.mxu0 0
        %4178 = vmatpush2.bf16.xpose.msra.mxu0 0
        %4179 = vmatprep.subr.bf16.mxu0 0
        %4180 = vmatpush2.bf16.xpose.msra.mxu0 0
        %4181 = vmatprep.subr.bf16.mxu0 0
        %4182 = vmatpush2.bf16.xpose.msra.mxu0 0
        %4183 = vmatprep.subr.bf16.mxu0 0
        %4184 = vmatpush2.bf16.xpose.msra.mxu0 0
        %4185 = vmatprep.subr.bf16.mxu0 0
        %4186 = vmatpush2.bf16.xpose.msra.mxu0 0
        %4187 = vmatprep.mubr.bf16.mxu0 0
        %4188 = vmatmul.mubr.bf16.gmra.mxu0 %v4150
        %v4189 = vpop.f32.mrf.mxu0
        %v4190 = vadd.f32 0.0, %v4189
        %v4191 = vpop.f32.mrf.mxu0
        %v4192 = vpop.f32.mrf.mxu0
        %v4193 = vadd.f32 0.0, %v4192
        %v4194 = vpop.f32.mrf.mxu0
        %4195 = vdwg.mxu0
        %v4197 = vsel %vm1953, %v4146, 0
        %v4200 = vsel %vm1953, %v4148, 0
        %4202 = vmatprep.subr.bf16.mxu0 0
        %4203 = vmatpush1.bf16.xpose.msra.mxu0 0
        %4204 = vmatprep.subr.bf16.mxu0 0
        %4205 = vmatpush1.bf16.xpose.msra.mxu0 0
        %4206 = vmatprep.subr.bf16.mxu0 0
        %4207 = vmatpush1.bf16.xpose.msra.mxu0 0
        %4208 = vmatprep.subr.bf16.mxu0 0
        %4209 = vmatpush1.bf16.xpose.msra.mxu0 0
        %4210 = vmatprep.subr.bf16.mxu0 0
        %4211 = vmatpush1.bf16.xpose.msra.mxu0 0
        %4212 = vmatprep.subr.bf16.mxu0 0
        %4213 = vmatpush1.bf16.xpose.msra.mxu0 0
        %4214 = vmatprep.subr.bf16.mxu0 0
        %4215 = vmatpush1.bf16.xpose.msra.mxu0 0
        %4216 = vmatprep.subr.bf16.mxu0 0
        %4217 = vmatpush1.bf16.xpose.msra.mxu0 %v4200
        %4218 = vmatprep.subr.bf16.mxu0 0
        %4219 = vmatpush2.bf16.xpose.msra.mxu0 0
        %4220 = vmatprep.subr.bf16.mxu0 0
        %4221 = vmatpush2.bf16.xpose.msra.mxu0 0
        %4222 = vmatprep.subr.bf16.mxu0 0
        %4223 = vmatpush2.bf16.xpose.msra.mxu0 0
        %4224 = vmatprep.subr.bf16.mxu0 0
        %4225 = vmatpush2.bf16.xpose.msra.mxu0 0
        %4226 = vmatprep.subr.bf16.mxu0 0
        %4227 = vmatpush2.bf16.xpose.msra.mxu0 0
        %4228 = vmatprep.subr.bf16.mxu0 0
        %4229 = vmatpush2.bf16.xpose.msra.mxu0 0
        %4230 = vmatprep.subr.bf16.mxu0 0
        %4231 = vmatpush2.bf16.xpose.msra.mxu0 0
        %4232 = vmatprep.subr.bf16.mxu0 0
        %4233 = vmatpush2.bf16.xpose.msra.mxu0 0
        %4234 = vmatprep.mubr.bf16.mxu0 0
        %4235 = vmatmul.mubr.bf16.gmra.mxu0 %v4197
        %v4236 = vpop.f32.mrf.mxu0
        %v4237 = vadd.f32 0.0, %v4236
        %v4238 = vpop.f32.mrf.mxu0
        %v4239 = vpop.f32.mrf.mxu0
        %v4240 = vadd.f32 0.0, %v4239
        %v4241 = vpop.f32.mrf.mxu0
        %4242 = vdwg.mxu0
        %v4243 = vsel %vm2049, %v4190, -1e+30
        %v4244 = vsel %vm2049, %v4193, -1e+30
        %v4245 = vsel %vm2049, %v4237, -1e+30
        %v4246 = vsel %vm2049, %v4240, -1e+30
        %v4247 = vsel %vm2054, %v4243, -inf
        %4248 = vmax.xlane.f32.xlu0 %v4247
        %v4249 = vpop.xlane.xlu0 %4248
        %v4250 = vsel %vm2054, %v4244, -inf
        %4251 = vmax.xlane.f32.xlu0 %v4250
        %v4252 = vpop.xlane.xlu0 %4251
        %v4253 = vsel %vm2054, %v4245, -inf
        %4254 = vmax.xlane.f32.xlu0 %v4253
        %v4255 = vpop.xlane.xlu0 %4254
        %v4256 = vsel %vm2054, %v4246, -inf
        %4257 = vmax.xlane.f32.xlu0 %v4256
        %v4258 = vpop.xlane.xlu0 %4257
        %v4259 = vsub.f32 %v4243, %v4249
        %v4260 = vsub.f32 %v4244, %v4252
        %v4261 = vsub.f32 %v4245, %v4255
        %v4262 = vsub.f32 %v4246, %v4258
        %v4263 = vmul.f32 %v4259, 1.442695
        %v4264 = vpow.pop %v4263
        %v4265 = vmul.f32 %v4260, 1.442695
        %v4266 = vpow.pop %v4265
        %v4267 = vmul.f32 %v4261, 1.442695
        %v4268 = vpow.pop %v4267
        %v4269 = vmul.f32 %v4262, 1.442695
        %v4270 = vpow.pop %v4269
        %v4271 = vsel %vm2054, %v4264, 0.0
        %4272 = vadd.xlane.f32.xlu0 %v4271
        %v4273 = vpop.xlane.xlu0 %4272
        %v4274 = vsel %vm2054, %v4266, 0.0
        %4275 = vadd.xlane.f32.xlu0 %v4274
        %v4276 = vpop.xlane.xlu0 %4275
        %v4277 = vsel %vm2054, %v4268, 0.0
        %4278 = vadd.xlane.f32.xlu0 %v4277
        %v4279 = vpop.xlane.xlu0 %4278
        %v4280 = vsel %vm2054, %v4270, 0.0
        %4281 = vadd.xlane.f32.xlu0 %v4280
        %v4282 = vpop.xlane.xlu0 %4281
        %v4283 = vrcp.pop %v4273
        %v4284 = vrcp.pop %v4276
        %v4285 = vrcp.pop %v4279
        %v4286 = vrcp.pop %v4282
        %v4287 = vmul.f32 %v4264, %v4283
        %v4288 = vmul.f32 %v4266, %v4284
        %v4289 = vmul.f32 %v4268, %v4285
        %v4290 = vmul.f32 %v4270, %v4286
        %v4291 = vpack.c.bf16 %v4288, %v4287
        %v4292 = vpack.c.bf16 %v4290, %v4289
        %v4293 = vpack.c.bf16 %v4134, %v4131
        %v4294 = vpack.c.bf16 %v4142, %v4139
        %v4296 = vsel %vm2054, %v4291, 0
        %4298 = vmatprep.subr.bf16.mxu0 0
        %4299 = vmatpush1.bf16.msra.mxu0 0
        %4300 = vmatprep.subr.bf16.mxu0 0
        %4301 = vmatpush1.bf16.msra.mxu0 0
        %4302 = vmatprep.subr.bf16.mxu0 0
        %4303 = vmatpush1.bf16.msra.mxu0 0
        %4304 = vmatprep.subr.bf16.mxu0 0
        %4305 = vmatpush1.bf16.msra.mxu0 0
        %4306 = vmatprep.subr.bf16.mxu0 0
        %4307 = vmatpush1.bf16.msra.mxu0 0
        %4308 = vmatprep.subr.bf16.mxu0 0
        %4309 = vmatpush1.bf16.msra.mxu0 0
        %4310 = vmatprep.subr.bf16.mxu0 0
        %4311 = vmatpush1.bf16.msra.mxu0 0
        %4312 = vmatprep.subr.bf16.mxu0 0
        %4313 = vmatpush1.bf16.msra.mxu0 %v4293
        %4314 = vmatprep.subr.bf16.mxu0 0
        %4315 = vmatpush2.bf16.msra.mxu0 0
        %4316 = vmatprep.subr.bf16.mxu0 0
        %4317 = vmatpush2.bf16.msra.mxu0 0
        %4318 = vmatprep.subr.bf16.mxu0 0
        %4319 = vmatpush2.bf16.msra.mxu0 0
        %4320 = vmatprep.subr.bf16.mxu0 0
        %4321 = vmatpush2.bf16.msra.mxu0 0
        %4322 = vmatprep.subr.bf16.mxu0 0
        %4323 = vmatpush2.bf16.msra.mxu0 0
        %4324 = vmatprep.subr.bf16.mxu0 0
        %4325 = vmatpush2.bf16.msra.mxu0 0
        %4326 = vmatprep.subr.bf16.mxu0 0
        %4327 = vmatpush2.bf16.msra.mxu0 0
        %4328 = vmatprep.subr.bf16.mxu0 0
        %4329 = vmatpush2.bf16.msra.mxu0 0
        %4330 = vmatprep.mubr.bf16.mxu0 0
        %4331 = vmatmul.mubr.bf16.gmra.mxu0 %v4296
        %v4332 = vpop.f32.mrf.mxu0
        %v4333 = vadd.f32 0.0, %v4332
        %v4334 = vpop.f32.mrf.mxu0
        %v4335 = vpop.f32.mrf.mxu0
        %v4336 = vadd.f32 0.0, %v4335
        %v4337 = vpop.f32.mrf.mxu0
        %4338 = vdwg.mxu0
        %v4340 = vsel %vm2054, %v4292, 0
        %4342 = vmatprep.subr.bf16.mxu0 0
        %4343 = vmatpush1.bf16.msra.mxu0 0
        %4344 = vmatprep.subr.bf16.mxu0 0
        %4345 = vmatpush1.bf16.msra.mxu0 0
        %4346 = vmatprep.subr.bf16.mxu0 0
        %4347 = vmatpush1.bf16.msra.mxu0 0
        %4348 = vmatprep.subr.bf16.mxu0 0
        %4349 = vmatpush1.bf16.msra.mxu0 0
        %4350 = vmatprep.subr.bf16.mxu0 0
        %4351 = vmatpush1.bf16.msra.mxu0 0
        %4352 = vmatprep.subr.bf16.mxu0 0
        %4353 = vmatpush1.bf16.msra.mxu0 0
        %4354 = vmatprep.subr.bf16.mxu0 0
        %4355 = vmatpush1.bf16.msra.mxu0 0
        %4356 = vmatprep.subr.bf16.mxu0 0
        %4357 = vmatpush1.bf16.msra.mxu0 %v4294
        %4358 = vmatprep.subr.bf16.mxu0 0
        %4359 = vmatpush2.bf16.msra.mxu0 0
        %4360 = vmatprep.subr.bf16.mxu0 0
        %4361 = vmatpush2.bf16.msra.mxu0 0
        %4362 = vmatprep.subr.bf16.mxu0 0
        %4363 = vmatpush2.bf16.msra.mxu0 0
        %4364 = vmatprep.subr.bf16.mxu0 0
        %4365 = vmatpush2.bf16.msra.mxu0 0
        %4366 = vmatprep.subr.bf16.mxu0 0
        %4367 = vmatpush2.bf16.msra.mxu0 0
        %4368 = vmatprep.subr.bf16.mxu0 0
        %4369 = vmatpush2.bf16.msra.mxu0 0
        %4370 = vmatprep.subr.bf16.mxu0 0
        %4371 = vmatpush2.bf16.msra.mxu0 0
        %4372 = vmatprep.subr.bf16.mxu0 0
        %4373 = vmatpush2.bf16.msra.mxu0 0
        %4374 = vmatprep.mubr.bf16.mxu0 0
        %4375 = vmatmul.mubr.bf16.gmra.mxu0 %v4340
        %v4376 = vpop.f32.mrf.mxu0
        %v4377 = vadd.f32 0.0, %v4376
        %v4378 = vpop.f32.mrf.mxu0
        %v4379 = vpop.f32.mrf.mxu0
        %v4380 = vadd.f32 0.0, %v4379
        %v4381 = vpop.f32.mrf.mxu0
        %4382 = vdwg.mxu0
        %v4383 = vpack.c.bf16 %v4336, %v4333
        %v4384 = vpack.c.bf16 %v4380, %v4377
        %s4385 = scalar_lea.vmem %s907, 16
        %v4386 = vld [vmem:[%s4385] sm:$0x7]
        %v4388 = vsel %vm1953, %v4383, 0
        %v4391 = vsel %vm1953, %v4384, 0
        %v4394 = vsel %vm2688, %v4386, 0
        %4396 = vmatprep.subr.bf16.mxu0 0
        %4397 = vmatpush1.bf16.msra.mxu0 0
        %4398 = vmatprep.subr.bf16.mxu0 0
        %4399 = vmatpush1.bf16.msra.mxu0 0
        %4400 = vmatprep.subr.bf16.mxu0 0
        %4401 = vmatpush1.bf16.msra.mxu0 0
        %4402 = vmatprep.subr.bf16.mxu0 0
        %4403 = vmatpush1.bf16.msra.mxu0 0
        %4404 = vmatprep.subr.bf16.mxu0 0
        %4405 = vmatpush1.bf16.msra.mxu0 0
        %4406 = vmatprep.subr.bf16.mxu0 0
        %4407 = vmatpush1.bf16.msra.mxu0 0
        %4408 = vmatprep.subr.bf16.mxu0 0
        %4409 = vmatpush1.bf16.msra.mxu0 0
        %4410 = vmatprep.subr.bf16.mxu0 0
        %4411 = vmatpush1.bf16.msra.mxu0 %v4394
        %4412 = vmatprep.subr.bf16.mxu0 0
        %4413 = vmatpush2.bf16.msra.mxu0 0
        %4414 = vmatprep.subr.bf16.mxu0 0
        %4415 = vmatpush2.bf16.msra.mxu0 0
        %4416 = vmatprep.subr.bf16.mxu0 0
        %4417 = vmatpush2.bf16.msra.mxu0 0
        %4418 = vmatprep.subr.bf16.mxu0 0
        %4419 = vmatpush2.bf16.msra.mxu0 0
        %4420 = vmatprep.subr.bf16.mxu0 0
        %4421 = vmatpush2.bf16.msra.mxu0 0
        %4422 = vmatprep.subr.bf16.mxu0 0
        %4423 = vmatpush2.bf16.msra.mxu0 0
        %4424 = vmatprep.subr.bf16.mxu0 0
        %4425 = vmatpush2.bf16.msra.mxu0 0
        %4426 = vmatprep.subr.bf16.mxu0 0
        %4427 = vmatpush2.bf16.msra.mxu0 0
        %4428 = vmatprep.mubr.bf16.mxu0 0
        %4429 = vmatmul.mubr.bf16.gmra.mxu0 %v4388
        %v4430 = vpop.f32.mrf.mxu0
        %v4431 = vadd.f32 0.0, %v4430
        %v4432 = vpop.f32.mrf.mxu0
        %v4433 = vpop.f32.mrf.mxu0
        %v4434 = vadd.f32 0.0, %v4433
        %v4435 = vpop.f32.mrf.mxu0
        %4436 = vmatprep.mubr.bf16.mxu0 0
        %4437 = vmatmul.mubr.bf16.gmra.mxu0 %v4391
        %v4438 = vpop.f32.mrf.mxu0
        %v4439 = vadd.f32 0.0, %v4438
        %v4440 = vpop.f32.mrf.mxu0
        %v4441 = vpop.f32.mrf.mxu0
        %v4442 = vadd.f32 0.0, %v4441
        %v4443 = vpop.f32.mrf.mxu0
        %4444 = vdwg.mxu0
        %v4445 = vadd.f32 %v3895, %v4431
        %v4446 = vadd.f32 %v3896, %v4434
        %v4447 = vadd.f32 %v3897, %v4439
        %v4448 = vadd.f32 %v3898, %v4442
        %s4449 = scalar_lea.vmem %s880, 120
        %v4450 = vld [vmem:[%s4449] sm:$0xf]
        %v4451 = vld [vmem:[%s4449 + $0x4] sm:$0xf]
        %v4452 = vld [vmem:[%s4449 + $0x8] sm:$0xf]
        %v4453 = vld [vmem:[%s4449 + $0xc] sm:$0xf]
        %v4454 = vld [vmem:[%s4449 + $0x10] sm:$0xf]
        %v4455 = vld [vmem:[%s4449 + $0x14] sm:$0xf]
        %s4456 = scalar_lea.vmem %s894, 5
        %v4457 = vld [vmem:[%s4456] sm:$0x1]
        %v4459 = vlaneseq
        %v4460 = vshrl.u32 %v4459, 7
        %v4461 = vsub.s32 0, %v4460
        %v4462 = vrot.slane %v4457, %v4461
        %v4470 = vunpack.c.l.b16 %v4450
        %v4471 = vunpack.c.l.b16 %v4451
        %v4472 = vunpack.c.l.b16 %v4452
        %v4473 = vunpack.c.l.b16 %v4453
        %v4474 = vunpack.c.l.b16 %v4454
        %v4475 = vunpack.c.l.b16 %v4455
        %v4476 = vpack.c.b16 %v4471, %v4470
        %v4477 = vpack.c.b16 %v4473, %v4472
        %v4478 = vpack.c.b16 %v4475, %v4474
        %4482 = vmatprep.subr.bf16.mxu0 0
        %4483 = vmatpush1.bf16.msra.mxu0 0
        %4484 = vmatprep.subr.bf16.mxu0 0
        %4485 = vmatpush1.bf16.msra.mxu0 0
        %4486 = vmatprep.subr.bf16.mxu0 0
        %4487 = vmatpush1.bf16.msra.mxu0 0
        %4488 = vmatprep.subr.bf16.mxu0 0
        %4489 = vmatpush1.bf16.msra.mxu0 0
        %4490 = vmatprep.subr.bf16.mxu0 0
        %4491 = vmatpush1.bf16.msra.mxu0 0
        %4492 = vmatprep.subr.bf16.mxu0 0
        %4493 = vmatpush1.bf16.msra.mxu0 %v4478
        %4494 = vmatprep.subr.bf16.mxu0 0
        %4495 = vmatpush1.bf16.msra.mxu0 %v4477
        %4496 = vmatprep.subr.bf16.mxu0 0
        %4497 = vmatpush1.bf16.msra.mxu0 %v4476
        %4498 = vmatprep.subr.bf16.mxu0 0
        %4499 = vmatpush2.bf16.msra.mxu0 0
        %4500 = vmatprep.subr.bf16.mxu0 0
        %4501 = vmatpush2.bf16.msra.mxu0 0
        %4502 = vmatprep.subr.bf16.mxu0 0
        %4503 = vmatpush2.bf16.msra.mxu0 0
        %4504 = vmatprep.subr.bf16.mxu0 0
        %4505 = vmatpush2.bf16.msra.mxu0 0
        %4506 = vmatprep.subr.bf16.mxu0 0
        %4507 = vmatpush2.bf16.msra.mxu0 0
        %4508 = vmatprep.subr.bf16.mxu0 0
        %4509 = vmatpush2.bf16.msra.mxu0 0
        %4510 = vmatprep.subr.bf16.mxu0 0
        %4511 = vmatpush2.bf16.msra.mxu0 0
        %4512 = vmatprep.subr.bf16.mxu0 0
        %4513 = vmatpush2.bf16.msra.mxu0 0
        %4514 = vmatprep.mubr.bf16.mxu0 0
        %4515 = vmatmul.mubr.bf16.gmra.mxu0 %v1735
        %v4516 = vpop.f32.mrf.mxu0
        %v4517 = vadd.f32 %v4462, %v4516
        %v4518 = vpop.f32.mrf.mxu0
        %v4519 = vpop.f32.mrf.mxu0
        %v4520 = vadd.f32 %v4462, %v4519
        %v4521 = vpop.f32.mrf.mxu0
        %4522 = vmatprep.mubr.bf16.mxu0 0
        %4523 = vmatmul.mubr.bf16.gmra.mxu0 %v1738
        %v4524 = vpop.f32.mrf.mxu0
        %v4525 = vadd.f32 %v4462, %v4524
        %v4526 = vpop.f32.mrf.mxu0
        %v4527 = vpop.f32.mrf.mxu0
        %v4528 = vadd.f32 %v4462, %v4527
        %v4529 = vpop.f32.mrf.mxu0
        %4530 = vdwg.mxu0
        %s4531 = scalar_lea.vmem %s885, 120
        %v4532 = vld [vmem:[%s4531] sm:$0xf]
        %v4533 = vld [vmem:[%s4531 + $0x4] sm:$0xf]
        %v4534 = vld [vmem:[%s4531 + $0x8] sm:$0xf]
        %v4535 = vld [vmem:[%s4531 + $0xc] sm:$0xf]
        %v4536 = vld [vmem:[%s4531 + $0x10] sm:$0xf]
        %v4537 = vld [vmem:[%s4531 + $0x14] sm:$0xf]
        %s4538 = scalar_lea.vmem %s898, 5
        %v4539 = vld [vmem:[%s4538] sm:$0x1]
        %v4541 = vlaneseq
        %v4542 = vshrl.u32 %v4541, 7
        %v4543 = vsub.s32 0, %v4542
        %v4544 = vrot.slane %v4539, %v4543
        %v4552 = vunpack.c.l.b16 %v4532
        %v4553 = vunpack.c.l.b16 %v4533
        %v4554 = vunpack.c.l.b16 %v4534
        %v4555 = vunpack.c.l.b16 %v4535
        %v4556 = vunpack.c.l.b16 %v4536
        %v4557 = vunpack.c.l.b16 %v4537
        %v4558 = vpack.c.b16 %v4553, %v4552
        %v4559 = vpack.c.b16 %v4555, %v4554
        %v4560 = vpack.c.b16 %v4557, %v4556
        %4564 = vmatprep.subr.bf16.mxu0 0
        %4565 = vmatpush1.bf16.msra.mxu0 0
        %4566 = vmatprep.subr.bf16.mxu0 0
        %4567 = vmatpush1.bf16.msra.mxu0 0
        %4568 = vmatprep.subr.bf16.mxu0 0
        %4569 = vmatpush1.bf16.msra.mxu0 0
        %4570 = vmatprep.subr.bf16.mxu0 0
        %4571 = vmatpush1.bf16.msra.mxu0 0
        %4572 = vmatprep.subr.bf16.mxu0 0
        %4573 = vmatpush1.bf16.msra.mxu0 0
        %4574 = vmatprep.subr.bf16.mxu0 0
        %4575 = vmatpush1.bf16.msra.mxu0 %v4560
        %4576 = vmatprep.subr.bf16.mxu0 0
        %4577 = vmatpush1.bf16.msra.mxu0 %v4559
        %4578 = vmatprep.subr.bf16.mxu0 0
        %4579 = vmatpush1.bf16.msra.mxu0 %v4558
        %4580 = vmatprep.subr.bf16.mxu0 0
        %4581 = vmatpush2.bf16.msra.mxu0 0
        %4582 = vmatprep.subr.bf16.mxu0 0
        %4583 = vmatpush2.bf16.msra.mxu0 0
        %4584 = vmatprep.subr.bf16.mxu0 0
        %4585 = vmatpush2.bf16.msra.mxu0 0
        %4586 = vmatprep.subr.bf16.mxu0 0
        %4587 = vmatpush2.bf16.msra.mxu0 0
        %4588 = vmatprep.subr.bf16.mxu0 0
        %4589 = vmatpush2.bf16.msra.mxu0 0
        %4590 = vmatprep.subr.bf16.mxu0 0
        %4591 = vmatpush2.bf16.msra.mxu0 0
        %4592 = vmatprep.subr.bf16.mxu0 0
        %4593 = vmatpush2.bf16.msra.mxu0 0
        %4594 = vmatprep.subr.bf16.mxu0 0
        %4595 = vmatpush2.bf16.msra.mxu0 0
        %4596 = vmatprep.mubr.bf16.mxu0 0
        %4597 = vmatmul.mubr.bf16.gmra.mxu0 %v1735
        %v4598 = vpop.f32.mrf.mxu0
        %v4599 = vadd.f32 %v4544, %v4598
        %v4600 = vpop.f32.mrf.mxu0
        %v4601 = vpop.f32.mrf.mxu0
        %v4602 = vadd.f32 %v4544, %v4601
        %v4603 = vpop.f32.mrf.mxu0
        %4604 = vmatprep.mubr.bf16.mxu0 0
        %4605 = vmatmul.mubr.bf16.gmra.mxu0 %v1738
        %v4606 = vpop.f32.mrf.mxu0
        %v4607 = vadd.f32 %v4544, %v4606
        %v4608 = vpop.f32.mrf.mxu0
        %v4609 = vpop.f32.mrf.mxu0
        %v4610 = vadd.f32 %v4544, %v4609
        %v4611 = vpop.f32.mrf.mxu0
        %4612 = vdwg.mxu0
        %s4613 = scalar_lea.vmem %s890, 120
        %v4614 = vld [vmem:[%s4613] sm:$0xf]
        %v4615 = vld [vmem:[%s4613 + $0x4] sm:$0xf]
        %v4616 = vld [vmem:[%s4613 + $0x8] sm:$0xf]
        %v4617 = vld [vmem:[%s4613 + $0xc] sm:$0xf]
        %v4618 = vld [vmem:[%s4613 + $0x10] sm:$0xf]
        %v4619 = vld [vmem:[%s4613 + $0x14] sm:$0xf]
        %s4620 = scalar_lea.vmem %s902, 5
        %v4621 = vld [vmem:[%s4620] sm:$0x1]
        %v4623 = vlaneseq
        %v4624 = vshrl.u32 %v4623, 7
        %v4625 = vsub.s32 0, %v4624
        %v4626 = vrot.slane %v4621, %v4625
        %v4634 = vunpack.c.l.b16 %v4614
        %v4635 = vunpack.c.l.b16 %v4615
        %v4636 = vunpack.c.l.b16 %v4616
        %v4637 = vunpack.c.l.b16 %v4617
        %v4638 = vunpack.c.l.b16 %v4618
        %v4639 = vunpack.c.l.b16 %v4619
        %v4640 = vpack.c.b16 %v4635, %v4634
        %v4641 = vpack.c.b16 %v4637, %v4636
        %v4642 = vpack.c.b16 %v4639, %v4638
        %4646 = vmatprep.subr.bf16.mxu0 0
        %4647 = vmatpush1.bf16.msra.mxu0 0
        %4648 = vmatprep.subr.bf16.mxu0 0
        %4649 = vmatpush1.bf16.msra.mxu0 0
        %4650 = vmatprep.subr.bf16.mxu0 0
        %4651 = vmatpush1.bf16.msra.mxu0 0
        %4652 = vmatprep.subr.bf16.mxu0 0
        %4653 = vmatpush1.bf16.msra.mxu0 0
        %4654 = vmatprep.subr.bf16.mxu0 0
        %4655 = vmatpush1.bf16.msra.mxu0 0
        %4656 = vmatprep.subr.bf16.mxu0 0
        %4657 = vmatpush1.bf16.msra.mxu0 %v4642
        %4658 = vmatprep.subr.bf16.mxu0 0
        %4659 = vmatpush1.bf16.msra.mxu0 %v4641
        %4660 = vmatprep.subr.bf16.mxu0 0
        %4661 = vmatpush1.bf16.msra.mxu0 %v4640
        %4662 = vmatprep.subr.bf16.mxu0 0
        %4663 = vmatpush2.bf16.msra.mxu0 0
        %4664 = vmatprep.subr.bf16.mxu0 0
        %4665 = vmatpush2.bf16.msra.mxu0 0
        %4666 = vmatprep.subr.bf16.mxu0 0
        %4667 = vmatpush2.bf16.msra.mxu0 0
        %4668 = vmatprep.subr.bf16.mxu0 0
        %4669 = vmatpush2.bf16.msra.mxu0 0
        %4670 = vmatprep.subr.bf16.mxu0 0
        %4671 = vmatpush2.bf16.msra.mxu0 0
        %4672 = vmatprep.subr.bf16.mxu0 0
        %4673 = vmatpush2.bf16.msra.mxu0 0
        %4674 = vmatprep.subr.bf16.mxu0 0
        %4675 = vmatpush2.bf16.msra.mxu0 0
        %4676 = vmatprep.subr.bf16.mxu0 0
        %4677 = vmatpush2.bf16.msra.mxu0 0
        %4678 = vmatprep.mubr.bf16.mxu0 0
        %4679 = vmatmul.mubr.bf16.gmra.mxu0 %v1735
        %v4680 = vpop.f32.mrf.mxu0
        %v4681 = vadd.f32 %v4626, %v4680
        %v4682 = vpop.f32.mrf.mxu0
        %v4683 = vpop.f32.mrf.mxu0
        %v4684 = vadd.f32 %v4626, %v4683
        %v4685 = vpop.f32.mrf.mxu0
        %4686 = vmatprep.mubr.bf16.mxu0 0
        %4687 = vmatmul.mubr.bf16.gmra.mxu0 %v1738
        %v4688 = vpop.f32.mrf.mxu0
        %v4689 = vadd.f32 %v4626, %v4688
        %v4690 = vpop.f32.mrf.mxu0
        %v4691 = vpop.f32.mrf.mxu0
        %v4692 = vadd.f32 %v4626, %v4691
        %v4693 = vpop.f32.mrf.mxu0
        %4694 = vdwg.mxu0
        %v4695 = vpack.c.bf16 %v4520, %v4517
        %v4696 = vpack.c.bf16 %v4528, %v4525
        %v4697 = vpack.c.bf16 %v4602, %v4599
        %v4698 = vpack.c.bf16 %v4610, %v4607
        %v4700 = vsel %vm1953, %v4695, 0
        %v4703 = vsel %vm1953, %v4697, 0
        %4705 = vmatprep.subr.bf16.mxu0 0
        %4706 = vmatpush1.bf16.xpose.msra.mxu0 0
        %4707 = vmatprep.subr.bf16.mxu0 0
        %4708 = vmatpush1.bf16.xpose.msra.mxu0 0
        %4709 = vmatprep.subr.bf16.mxu0 0
        %4710 = vmatpush1.bf16.xpose.msra.mxu0 0
        %4711 = vmatprep.subr.bf16.mxu0 0
        %4712 = vmatpush1.bf16.xpose.msra.mxu0 0
        %4713 = vmatprep.subr.bf16.mxu0 0
        %4714 = vmatpush1.bf16.xpose.msra.mxu0 0
        %4715 = vmatprep.subr.bf16.mxu0 0
        %4716 = vmatpush1.bf16.xpose.msra.mxu0 0
        %4717 = vmatprep.subr.bf16.mxu0 0
        %4718 = vmatpush1.bf16.xpose.msra.mxu0 0
        %4719 = vmatprep.subr.bf16.mxu0 0
        %4720 = vmatpush1.bf16.xpose.msra.mxu0 %v4703
        %4721 = vmatprep.subr.bf16.mxu0 0
        %4722 = vmatpush2.bf16.xpose.msra.mxu0 0
        %4723 = vmatprep.subr.bf16.mxu0 0
        %4724 = vmatpush2.bf16.xpose.msra.mxu0 0
        %4725 = vmatprep.subr.bf16.mxu0 0
        %4726 = vmatpush2.bf16.xpose.msra.mxu0 0
        %4727 = vmatprep.subr.bf16.mxu0 0
        %4728 = vmatpush2.bf16.xpose.msra.mxu0 0
        %4729 = vmatprep.subr.bf16.mxu0 0
        %4730 = vmatpush2.bf16.xpose.msra.mxu0 0
        %4731 = vmatprep.subr.bf16.mxu0 0
        %4732 = vmatpush2.bf16.xpose.msra.mxu0 0
        %4733 = vmatprep.subr.bf16.mxu0 0
        %4734 = vmatpush2.bf16.xpose.msra.mxu0 0
        %4735 = vmatprep.subr.bf16.mxu0 0
        %4736 = vmatpush2.bf16.xpose.msra.mxu0 0
        %4737 = vmatprep.mubr.bf16.mxu0 0
        %4738 = vmatmul.mubr.bf16.gmra.mxu0 %v4700
        %v4739 = vpop.f32.mrf.mxu0
        %v4740 = vadd.f32 0.0, %v4739
        %v4741 = vpop.f32.mrf.mxu0
        %v4742 = vpop.f32.mrf.mxu0
        %v4743 = vadd.f32 0.0, %v4742
        %v4744 = vpop.f32.mrf.mxu0
        %4745 = vdwg.mxu0
        %v4747 = vsel %vm1953, %v4696, 0
        %v4750 = vsel %vm1953, %v4698, 0
        %4752 = vmatprep.subr.bf16.mxu0 0
        %4753 = vmatpush1.bf16.xpose.msra.mxu0 0
        %4754 = vmatprep.subr.bf16.mxu0 0
        %4755 = vmatpush1.bf16.xpose.msra.mxu0 0
        %4756 = vmatprep.subr.bf16.mxu0 0
        %4757 = vmatpush1.bf16.xpose.msra.mxu0 0
        %4758 = vmatprep.subr.bf16.mxu0 0
        %4759 = vmatpush1.bf16.xpose.msra.mxu0 0
        %4760 = vmatprep.subr.bf16.mxu0 0
        %4761 = vmatpush1.bf16.xpose.msra.mxu0 0
        %4762 = vmatprep.subr.bf16.mxu0 0
        %4763 = vmatpush1.bf16.xpose.msra.mxu0 0
        %4764 = vmatprep.subr.bf16.mxu0 0
        %4765 = vmatpush1.bf16.xpose.msra.mxu0 0
        %4766 = vmatprep.subr.bf16.mxu0 0
        %4767 = vmatpush1.bf16.xpose.msra.mxu0 %v4750
        %4768 = vmatprep.subr.bf16.mxu0 0
        %4769 = vmatpush2.bf16.xpose.msra.mxu0 0
        %4770 = vmatprep.subr.bf16.mxu0 0
        %4771 = vmatpush2.bf16.xpose.msra.mxu0 0
        %4772 = vmatprep.subr.bf16.mxu0 0
        %4773 = vmatpush2.bf16.xpose.msra.mxu0 0
        %4774 = vmatprep.subr.bf16.mxu0 0
        %4775 = vmatpush2.bf16.xpose.msra.mxu0 0
        %4776 = vmatprep.subr.bf16.mxu0 0
        %4777 = vmatpush2.bf16.xpose.msra.mxu0 0
        %4778 = vmatprep.subr.bf16.mxu0 0
        %4779 = vmatpush2.bf16.xpose.msra.mxu0 0
        %4780 = vmatprep.subr.bf16.mxu0 0
        %4781 = vmatpush2.bf16.xpose.msra.mxu0 0
        %4782 = vmatprep.subr.bf16.mxu0 0
        %4783 = vmatpush2.bf16.xpose.msra.mxu0 0
        %4784 = vmatprep.mubr.bf16.mxu0 0
        %4785 = vmatmul.mubr.bf16.gmra.mxu0 %v4747
        %v4786 = vpop.f32.mrf.mxu0
        %v4787 = vadd.f32 0.0, %v4786
        %v4788 = vpop.f32.mrf.mxu0
        %v4789 = vpop.f32.mrf.mxu0
        %v4790 = vadd.f32 0.0, %v4789
        %v4791 = vpop.f32.mrf.mxu0
        %4792 = vdwg.mxu0
        %v4793 = vsel %vm2049, %v4740, -1e+30
        %v4794 = vsel %vm2049, %v4743, -1e+30
        %v4795 = vsel %vm2049, %v4787, -1e+30
        %v4796 = vsel %vm2049, %v4790, -1e+30
        %v4797 = vsel %vm2054, %v4793, -inf
        %4798 = vmax.xlane.f32.xlu0 %v4797
        %v4799 = vpop.xlane.xlu0 %4798
        %v4800 = vsel %vm2054, %v4794, -inf
        %4801 = vmax.xlane.f32.xlu0 %v4800
        %v4802 = vpop.xlane.xlu0 %4801
        %v4803 = vsel %vm2054, %v4795, -inf
        %4804 = vmax.xlane.f32.xlu0 %v4803
        %v4805 = vpop.xlane.xlu0 %4804
        %v4806 = vsel %vm2054, %v4796, -inf
        %4807 = vmax.xlane.f32.xlu0 %v4806
        %v4808 = vpop.xlane.xlu0 %4807
        %v4809 = vsub.f32 %v4793, %v4799
        %v4810 = vsub.f32 %v4794, %v4802
        %v4811 = vsub.f32 %v4795, %v4805
        %v4812 = vsub.f32 %v4796, %v4808
        %v4813 = vmul.f32 %v4809, 1.442695
        %v4814 = vpow.pop %v4813
        %v4815 = vmul.f32 %v4810, 1.442695
        %v4816 = vpow.pop %v4815
        %v4817 = vmul.f32 %v4811, 1.442695
        %v4818 = vpow.pop %v4817
        %v4819 = vmul.f32 %v4812, 1.442695
        %v4820 = vpow.pop %v4819
        %v4821 = vsel %vm2054, %v4814, 0.0
        %4822 = vadd.xlane.f32.xlu0 %v4821
        %v4823 = vpop.xlane.xlu0 %4822
        %v4824 = vsel %vm2054, %v4816, 0.0
        %4825 = vadd.xlane.f32.xlu0 %v4824
        %v4826 = vpop.xlane.xlu0 %4825
        %v4827 = vsel %vm2054, %v4818, 0.0
        %4828 = vadd.xlane.f32.xlu0 %v4827
        %v4829 = vpop.xlane.xlu0 %4828
        %v4830 = vsel %vm2054, %v4820, 0.0
        %4831 = vadd.xlane.f32.xlu0 %v4830
        %v4832 = vpop.xlane.xlu0 %4831
        %v4833 = vrcp.pop %v4823
        %v4834 = vrcp.pop %v4826
        %v4835 = vrcp.pop %v4829
        %v4836 = vrcp.pop %v4832
        %v4837 = vmul.f32 %v4814, %v4833
        %v4838 = vmul.f32 %v4816, %v4834
        %v4839 = vmul.f32 %v4818, %v4835
        %v4840 = vmul.f32 %v4820, %v4836
        %v4841 = vpack.c.bf16 %v4838, %v4837
        %v4842 = vpack.c.bf16 %v4840, %v4839
        %v4843 = vpack.c.bf16 %v4684, %v4681
        %v4844 = vpack.c.bf16 %v4692, %v4689
        %v4846 = vsel %vm2054, %v4841, 0
        %4848 = vmatprep.subr.bf16.mxu0 0
        %4849 = vmatpush1.bf16.msra.mxu0 0
        %4850 = vmatprep.subr.bf16.mxu0 0
        %4851 = vmatpush1.bf16.msra.mxu0 0
        %4852 = vmatprep.subr.bf16.mxu0 0
        %4853 = vmatpush1.bf16.msra.mxu0 0
        %4854 = vmatprep.subr.bf16.mxu0 0
        %4855 = vmatpush1.bf16.msra.mxu0 0
        %4856 = vmatprep.subr.bf16.mxu0 0
        %4857 = vmatpush1.bf16.msra.mxu0 0
        %4858 = vmatprep.subr.bf16.mxu0 0
        %4859 = vmatpush1.bf16.msra.mxu0 0
        %4860 = vmatprep.subr.bf16.mxu0 0
        %4861 = vmatpush1.bf16.msra.mxu0 0
        %4862 = vmatprep.subr.bf16.mxu0 0
        %4863 = vmatpush1.bf16.msra.mxu0 %v4843
        %4864 = vmatprep.subr.bf16.mxu0 0
        %4865 = vmatpush2.bf16.msra.mxu0 0
        %4866 = vmatprep.subr.bf16.mxu0 0
        %4867 = vmatpush2.bf16.msra.mxu0 0
        %4868 = vmatprep.subr.bf16.mxu0 0
        %4869 = vmatpush2.bf16.msra.mxu0 0
        %4870 = vmatprep.subr.bf16.mxu0 0
        %4871 = vmatpush2.bf16.msra.mxu0 0
        %4872 = vmatprep.subr.bf16.mxu0 0
        %4873 = vmatpush2.bf16.msra.mxu0 0
        %4874 = vmatprep.subr.bf16.mxu0 0
        %4875 = vmatpush2.bf16.msra.mxu0 0
        %4876 = vmatprep.subr.bf16.mxu0 0
        %4877 = vmatpush2.bf16.msra.mxu0 0
        %4878 = vmatprep.subr.bf16.mxu0 0
        %4879 = vmatpush2.bf16.msra.mxu0 0
        %4880 = vmatprep.mubr.bf16.mxu0 0
        %4881 = vmatmul.mubr.bf16.gmra.mxu0 %v4846
        %v4882 = vpop.f32.mrf.mxu0
        %v4883 = vadd.f32 0.0, %v4882
        %v4884 = vpop.f32.mrf.mxu0
        %v4885 = vpop.f32.mrf.mxu0
        %v4886 = vadd.f32 0.0, %v4885
        %v4887 = vpop.f32.mrf.mxu0
        %4888 = vdwg.mxu0
        %v4890 = vsel %vm2054, %v4842, 0
        %4892 = vmatprep.subr.bf16.mxu0 0
        %4893 = vmatpush1.bf16.msra.mxu0 0
        %4894 = vmatprep.subr.bf16.mxu0 0
        %4895 = vmatpush1.bf16.msra.mxu0 0
        %4896 = vmatprep.subr.bf16.mxu0 0
        %4897 = vmatpush1.bf16.msra.mxu0 0
        %4898 = vmatprep.subr.bf16.mxu0 0
        %4899 = vmatpush1.bf16.msra.mxu0 0
        %4900 = vmatprep.subr.bf16.mxu0 0
        %4901 = vmatpush1.bf16.msra.mxu0 0
        %4902 = vmatprep.subr.bf16.mxu0 0
        %4903 = vmatpush1.bf16.msra.mxu0 0
        %4904 = vmatprep.subr.bf16.mxu0 0
        %4905 = vmatpush1.bf16.msra.mxu0 0
        %4906 = vmatprep.subr.bf16.mxu0 0
        %4907 = vmatpush1.bf16.msra.mxu0 %v4844
        %4908 = vmatprep.subr.bf16.mxu0 0
        %4909 = vmatpush2.bf16.msra.mxu0 0
        %4910 = vmatprep.subr.bf16.mxu0 0
        %4911 = vmatpush2.bf16.msra.mxu0 0
        %4912 = vmatprep.subr.bf16.mxu0 0
        %4913 = vmatpush2.bf16.msra.mxu0 0
        %4914 = vmatprep.subr.bf16.mxu0 0
        %4915 = vmatpush2.bf16.msra.mxu0 0
        %4916 = vmatprep.subr.bf16.mxu0 0
        %4917 = vmatpush2.bf16.msra.mxu0 0
        %4918 = vmatprep.subr.bf16.mxu0 0
        %4919 = vmatpush2.bf16.msra.mxu0 0
        %4920 = vmatprep.subr.bf16.mxu0 0
        %4921 = vmatpush2.bf16.msra.mxu0 0
        %4922 = vmatprep.subr.bf16.mxu0 0
        %4923 = vmatpush2.bf16.msra.mxu0 0
        %4924 = vmatprep.mubr.bf16.mxu0 0
        %4925 = vmatmul.mubr.bf16.gmra.mxu0 %v4890
        %v4926 = vpop.f32.mrf.mxu0
        %v4927 = vadd.f32 0.0, %v4926
        %v4928 = vpop.f32.mrf.mxu0
        %v4929 = vpop.f32.mrf.mxu0
        %v4930 = vadd.f32 0.0, %v4929
        %v4931 = vpop.f32.mrf.mxu0
        %4932 = vdwg.mxu0
        %v4933 = vpack.c.bf16 %v4886, %v4883
        %v4934 = vpack.c.bf16 %v4930, %v4927
        %s4935 = scalar_lea.vmem %s907, 20
        %v4936 = vld [vmem:[%s4935] sm:$0x7]
        %v4938 = vsel %vm1953, %v4933, 0
        %v4941 = vsel %vm1953, %v4934, 0
        %v4944 = vsel %vm2688, %v4936, 0
        %4946 = vmatprep.subr.bf16.mxu0 0
        %4947 = vmatpush1.bf16.msra.mxu0 0
        %4948 = vmatprep.subr.bf16.mxu0 0
        %4949 = vmatpush1.bf16.msra.mxu0 0
        %4950 = vmatprep.subr.bf16.mxu0 0
        %4951 = vmatpush1.bf16.msra.mxu0 0
        %4952 = vmatprep.subr.bf16.mxu0 0
        %4953 = vmatpush1.bf16.msra.mxu0 0
        %4954 = vmatprep.subr.bf16.mxu0 0
        %4955 = vmatpush1.bf16.msra.mxu0 0
        %4956 = vmatprep.subr.bf16.mxu0 0
        %4957 = vmatpush1.bf16.msra.mxu0 0
        %4958 = vmatprep.subr.bf16.mxu0 0
        %4959 = vmatpush1.bf16.msra.mxu0 0
        %4960 = vmatprep.subr.bf16.mxu0 0
        %4961 = vmatpush1.bf16.msra.mxu0 %v4944
        %4962 = vmatprep.subr.bf16.mxu0 0
        %4963 = vmatpush2.bf16.msra.mxu0 0
        %4964 = vmatprep.subr.bf16.mxu0 0
        %4965 = vmatpush2.bf16.msra.mxu0 0
        %4966 = vmatprep.subr.bf16.mxu0 0
        %4967 = vmatpush2.bf16.msra.mxu0 0
        %4968 = vmatprep.subr.bf16.mxu0 0
        %4969 = vmatpush2.bf16.msra.mxu0 0
        %4970 = vmatprep.subr.bf16.mxu0 0
        %4971 = vmatpush2.bf16.msra.mxu0 0
        %4972 = vmatprep.subr.bf16.mxu0 0
        %4973 = vmatpush2.bf16.msra.mxu0 0
        %4974 = vmatprep.subr.bf16.mxu0 0
        %4975 = vmatpush2.bf16.msra.mxu0 0
        %4976 = vmatprep.subr.bf16.mxu0 0
        %4977 = vmatpush2.bf16.msra.mxu0 0
        %4978 = vmatprep.mubr.bf16.mxu0 0
        %4979 = vmatmul.mubr.bf16.gmra.mxu0 %v4938
        %v4980 = vpop.f32.mrf.mxu0
        %v4981 = vadd.f32 0.0, %v4980
        %v4982 = vpop.f32.mrf.mxu0
        %v4983 = vpop.f32.mrf.mxu0
        %v4984 = vadd.f32 0.0, %v4983
        %v4985 = vpop.f32.mrf.mxu0
        %4986 = vmatprep.mubr.bf16.mxu0 0
        %4987 = vmatmul.mubr.bf16.gmra.mxu0 %v4941
        %v4988 = vpop.f32.mrf.mxu0
        %v4989 = vadd.f32 0.0, %v4988
        %v4990 = vpop.f32.mrf.mxu0
        %v4991 = vpop.f32.mrf.mxu0
        %v4992 = vadd.f32 0.0, %v4991
        %v4993 = vpop.f32.mrf.mxu0
        %4994 = vdwg.mxu0
        %v4995 = vadd.f32 %v4445, %v4981
        %v4996 = vadd.f32 %v4446, %v4984
        %v4997 = vadd.f32 %v4447, %v4989
        %v4998 = vadd.f32 %v4448, %v4992
        %s4999 = scalar_lea.vmem %s880, 144
        %v5000 = vld [vmem:[%s4999] sm:$0xf]
        %v5001 = vld [vmem:[%s4999 + $0x4] sm:$0xf]
        %v5002 = vld [vmem:[%s4999 + $0x8] sm:$0xf]
        %v5003 = vld [vmem:[%s4999 + $0xc] sm:$0xf]
        %v5004 = vld [vmem:[%s4999 + $0x10] sm:$0xf]
        %v5005 = vld [vmem:[%s4999 + $0x14] sm:$0xf]
        %s5006 = scalar_lea.vmem %s894, 6
        %v5007 = vld [vmem:[%s5006] sm:$0x1]
        %v5009 = vlaneseq
        %v5010 = vshrl.u32 %v5009, 7
        %v5011 = vsub.s32 0, %v5010
        %v5012 = vrot.slane %v5007, %v5011
        %v5020 = vunpack.c.l.b16 %v5000
        %v5021 = vunpack.c.l.b16 %v5001
        %v5022 = vunpack.c.l.b16 %v5002
        %v5023 = vunpack.c.l.b16 %v5003
        %v5024 = vunpack.c.l.b16 %v5004
        %v5025 = vunpack.c.l.b16 %v5005
        %v5026 = vpack.c.b16 %v5021, %v5020
        %v5027 = vpack.c.b16 %v5023, %v5022
        %v5028 = vpack.c.b16 %v5025, %v5024
        %5032 = vmatprep.subr.bf16.mxu0 0
        %5033 = vmatpush1.bf16.msra.mxu0 0
        %5034 = vmatprep.subr.bf16.mxu0 0
        %5035 = vmatpush1.bf16.msra.mxu0 0
        %5036 = vmatprep.subr.bf16.mxu0 0
        %5037 = vmatpush1.bf16.msra.mxu0 0
        %5038 = vmatprep.subr.bf16.mxu0 0
        %5039 = vmatpush1.bf16.msra.mxu0 0
        %5040 = vmatprep.subr.bf16.mxu0 0
        %5041 = vmatpush1.bf16.msra.mxu0 0
        %5042 = vmatprep.subr.bf16.mxu0 0
        %5043 = vmatpush1.bf16.msra.mxu0 %v5028
        %5044 = vmatprep.subr.bf16.mxu0 0
        %5045 = vmatpush1.bf16.msra.mxu0 %v5027
        %5046 = vmatprep.subr.bf16.mxu0 0
        %5047 = vmatpush1.bf16.msra.mxu0 %v5026
        %5048 = vmatprep.subr.bf16.mxu0 0
        %5049 = vmatpush2.bf16.msra.mxu0 0
        %5050 = vmatprep.subr.bf16.mxu0 0
        %5051 = vmatpush2.bf16.msra.mxu0 0
        %5052 = vmatprep.subr.bf16.mxu0 0
        %5053 = vmatpush2.bf16.msra.mxu0 0
        %5054 = vmatprep.subr.bf16.mxu0 0
        %5055 = vmatpush2.bf16.msra.mxu0 0
        %5056 = vmatprep.subr.bf16.mxu0 0
        %5057 = vmatpush2.bf16.msra.mxu0 0
        %5058 = vmatprep.subr.bf16.mxu0 0
        %5059 = vmatpush2.bf16.msra.mxu0 0
        %5060 = vmatprep.subr.bf16.mxu0 0
        %5061 = vmatpush2.bf16.msra.mxu0 0
        %5062 = vmatprep.subr.bf16.mxu0 0
        %5063 = vmatpush2.bf16.msra.mxu0 0
        %5064 = vmatprep.mubr.bf16.mxu0 0
        %5065 = vmatmul.mubr.bf16.gmra.mxu0 %v1735
        %v5066 = vpop.f32.mrf.mxu0
        %v5067 = vadd.f32 %v5012, %v5066
        %v5068 = vpop.f32.mrf.mxu0
        %v5069 = vpop.f32.mrf.mxu0
        %v5070 = vadd.f32 %v5012, %v5069
        %v5071 = vpop.f32.mrf.mxu0
        %5072 = vmatprep.mubr.bf16.mxu0 0
        %5073 = vmatmul.mubr.bf16.gmra.mxu0 %v1738
        %v5074 = vpop.f32.mrf.mxu0
        %v5075 = vadd.f32 %v5012, %v5074
        %v5076 = vpop.f32.mrf.mxu0
        %v5077 = vpop.f32.mrf.mxu0
        %v5078 = vadd.f32 %v5012, %v5077
        %v5079 = vpop.f32.mrf.mxu0
        %5080 = vdwg.mxu0
        %s5081 = scalar_lea.vmem %s885, 144
        %v5082 = vld [vmem:[%s5081] sm:$0xf]
        %v5083 = vld [vmem:[%s5081 + $0x4] sm:$0xf]
        %v5084 = vld [vmem:[%s5081 + $0x8] sm:$0xf]
        %v5085 = vld [vmem:[%s5081 + $0xc] sm:$0xf]
        %v5086 = vld [vmem:[%s5081 + $0x10] sm:$0xf]
        %v5087 = vld [vmem:[%s5081 + $0x14] sm:$0xf]
        %s5088 = scalar_lea.vmem %s898, 6
        %v5089 = vld [vmem:[%s5088] sm:$0x1]
        %v5091 = vlaneseq
        %v5092 = vshrl.u32 %v5091, 7
        %v5093 = vsub.s32 0, %v5092
        %v5094 = vrot.slane %v5089, %v5093
        %v5102 = vunpack.c.l.b16 %v5082
        %v5103 = vunpack.c.l.b16 %v5083
        %v5104 = vunpack.c.l.b16 %v5084
        %v5105 = vunpack.c.l.b16 %v5085
        %v5106 = vunpack.c.l.b16 %v5086
        %v5107 = vunpack.c.l.b16 %v5087
        %v5108 = vpack.c.b16 %v5103, %v5102
        %v5109 = vpack.c.b16 %v5105, %v5104
        %v5110 = vpack.c.b16 %v5107, %v5106
        %5114 = vmatprep.subr.bf16.mxu0 0
        %5115 = vmatpush1.bf16.msra.mxu0 0
        %5116 = vmatprep.subr.bf16.mxu0 0
        %5117 = vmatpush1.bf16.msra.mxu0 0
        %5118 = vmatprep.subr.bf16.mxu0 0
        %5119 = vmatpush1.bf16.msra.mxu0 0
        %5120 = vmatprep.subr.bf16.mxu0 0
        %5121 = vmatpush1.bf16.msra.mxu0 0
        %5122 = vmatprep.subr.bf16.mxu0 0
        %5123 = vmatpush1.bf16.msra.mxu0 0
        %5124 = vmatprep.subr.bf16.mxu0 0
        %5125 = vmatpush1.bf16.msra.mxu0 %v5110
        %5126 = vmatprep.subr.bf16.mxu0 0
        %5127 = vmatpush1.bf16.msra.mxu0 %v5109
        %5128 = vmatprep.subr.bf16.mxu0 0
        %5129 = vmatpush1.bf16.msra.mxu0 %v5108
        %5130 = vmatprep.subr.bf16.mxu0 0
        %5131 = vmatpush2.bf16.msra.mxu0 0
        %5132 = vmatprep.subr.bf16.mxu0 0
        %5133 = vmatpush2.bf16.msra.mxu0 0
        %5134 = vmatprep.subr.bf16.mxu0 0
        %5135 = vmatpush2.bf16.msra.mxu0 0
        %5136 = vmatprep.subr.bf16.mxu0 0
        %5137 = vmatpush2.bf16.msra.mxu0 0
        %5138 = vmatprep.subr.bf16.mxu0 0
        %5139 = vmatpush2.bf16.msra.mxu0 0
        %5140 = vmatprep.subr.bf16.mxu0 0
        %5141 = vmatpush2.bf16.msra.mxu0 0
        %5142 = vmatprep.subr.bf16.mxu0 0
        %5143 = vmatpush2.bf16.msra.mxu0 0
        %5144 = vmatprep.subr.bf16.mxu0 0
        %5145 = vmatpush2.bf16.msra.mxu0 0
        %5146 = vmatprep.mubr.bf16.mxu0 0
        %5147 = vmatmul.mubr.bf16.gmra.mxu0 %v1735
        %v5148 = vpop.f32.mrf.mxu0
        %v5149 = vadd.f32 %v5094, %v5148
        %v5150 = vpop.f32.mrf.mxu0
        %v5151 = vpop.f32.mrf.mxu0
        %v5152 = vadd.f32 %v5094, %v5151
        %v5153 = vpop.f32.mrf.mxu0
        %5154 = vmatprep.mubr.bf16.mxu0 0
        %5155 = vmatmul.mubr.bf16.gmra.mxu0 %v1738
        %v5156 = vpop.f32.mrf.mxu0
        %v5157 = vadd.f32 %v5094, %v5156
        %v5158 = vpop.f32.mrf.mxu0
        %v5159 = vpop.f32.mrf.mxu0
        %v5160 = vadd.f32 %v5094, %v5159
        %v5161 = vpop.f32.mrf.mxu0
        %5162 = vdwg.mxu0
        %s5163 = scalar_lea.vmem %s890, 144
        %v5164 = vld [vmem:[%s5163] sm:$0xf]
        %v5165 = vld [vmem:[%s5163 + $0x4] sm:$0xf]
        %v5166 = vld [vmem:[%s5163 + $0x8] sm:$0xf]
        %v5167 = vld [vmem:[%s5163 + $0xc] sm:$0xf]
        %v5168 = vld [vmem:[%s5163 + $0x10] sm:$0xf]
        %v5169 = vld [vmem:[%s5163 + $0x14] sm:$0xf]
        %s5170 = scalar_lea.vmem %s902, 6
        %v5171 = vld [vmem:[%s5170] sm:$0x1]
        %v5173 = vlaneseq
        %v5174 = vshrl.u32 %v5173, 7
        %v5175 = vsub.s32 0, %v5174
        %v5176 = vrot.slane %v5171, %v5175
        %v5184 = vunpack.c.l.b16 %v5164
        %v5185 = vunpack.c.l.b16 %v5165
        %v5186 = vunpack.c.l.b16 %v5166
        %v5187 = vunpack.c.l.b16 %v5167
        %v5188 = vunpack.c.l.b16 %v5168
        %v5189 = vunpack.c.l.b16 %v5169
        %v5190 = vpack.c.b16 %v5185, %v5184
        %v5191 = vpack.c.b16 %v5187, %v5186
        %v5192 = vpack.c.b16 %v5189, %v5188
        %5196 = vmatprep.subr.bf16.mxu0 0
        %5197 = vmatpush1.bf16.msra.mxu0 0
        %5198 = vmatprep.subr.bf16.mxu0 0
        %5199 = vmatpush1.bf16.msra.mxu0 0
        %5200 = vmatprep.subr.bf16.mxu0 0
        %5201 = vmatpush1.bf16.msra.mxu0 0
        %5202 = vmatprep.subr.bf16.mxu0 0
        %5203 = vmatpush1.bf16.msra.mxu0 0
        %5204 = vmatprep.subr.bf16.mxu0 0
        %5205 = vmatpush1.bf16.msra.mxu0 0
        %5206 = vmatprep.subr.bf16.mxu0 0
        %5207 = vmatpush1.bf16.msra.mxu0 %v5192
        %5208 = vmatprep.subr.bf16.mxu0 0
        %5209 = vmatpush1.bf16.msra.mxu0 %v5191
        %5210 = vmatprep.subr.bf16.mxu0 0
        %5211 = vmatpush1.bf16.msra.mxu0 %v5190
        %5212 = vmatprep.subr.bf16.mxu0 0
        %5213 = vmatpush2.bf16.msra.mxu0 0
        %5214 = vmatprep.subr.bf16.mxu0 0
        %5215 = vmatpush2.bf16.msra.mxu0 0
        %5216 = vmatprep.subr.bf16.mxu0 0
        %5217 = vmatpush2.bf16.msra.mxu0 0
        %5218 = vmatprep.subr.bf16.mxu0 0
        %5219 = vmatpush2.bf16.msra.mxu0 0
        %5220 = vmatprep.subr.bf16.mxu0 0
        %5221 = vmatpush2.bf16.msra.mxu0 0
        %5222 = vmatprep.subr.bf16.mxu0 0
        %5223 = vmatpush2.bf16.msra.mxu0 0
        %5224 = vmatprep.subr.bf16.mxu0 0
        %5225 = vmatpush2.bf16.msra.mxu0 0
        %5226 = vmatprep.subr.bf16.mxu0 0
        %5227 = vmatpush2.bf16.msra.mxu0 0
        %5228 = vmatprep.mubr.bf16.mxu0 0
        %5229 = vmatmul.mubr.bf16.gmra.mxu0 %v1735
        %v5230 = vpop.f32.mrf.mxu0
        %v5231 = vadd.f32 %v5176, %v5230
        %v5232 = vpop.f32.mrf.mxu0
        %v5233 = vpop.f32.mrf.mxu0
        %v5234 = vadd.f32 %v5176, %v5233
        %v5235 = vpop.f32.mrf.mxu0
        %5236 = vmatprep.mubr.bf16.mxu0 0
        %5237 = vmatmul.mubr.bf16.gmra.mxu0 %v1738
        %v5238 = vpop.f32.mrf.mxu0
        %v5239 = vadd.f32 %v5176, %v5238
        %v5240 = vpop.f32.mrf.mxu0
        %v5241 = vpop.f32.mrf.mxu0
        %v5242 = vadd.f32 %v5176, %v5241
        %v5243 = vpop.f32.mrf.mxu0
        %5244 = vdwg.mxu0
        %v5245 = vpack.c.bf16 %v5070, %v5067
        %v5246 = vpack.c.bf16 %v5078, %v5075
        %v5247 = vpack.c.bf16 %v5152, %v5149
        %v5248 = vpack.c.bf16 %v5160, %v5157
        %v5250 = vsel %vm1953, %v5245, 0
        %v5253 = vsel %vm1953, %v5247, 0
        %5255 = vmatprep.subr.bf16.mxu0 0
        %5256 = vmatpush1.bf16.xpose.msra.mxu0 0
        %5257 = vmatprep.subr.bf16.mxu0 0
        %5258 = vmatpush1.bf16.xpose.msra.mxu0 0
        %5259 = vmatprep.subr.bf16.mxu0 0
        %5260 = vmatpush1.bf16.xpose.msra.mxu0 0
        %5261 = vmatprep.subr.bf16.mxu0 0
        %5262 = vmatpush1.bf16.xpose.msra.mxu0 0
        %5263 = vmatprep.subr.bf16.mxu0 0
        %5264 = vmatpush1.bf16.xpose.msra.mxu0 0
        %5265 = vmatprep.subr.bf16.mxu0 0
        %5266 = vmatpush1.bf16.xpose.msra.mxu0 0
        %5267 = vmatprep.subr.bf16.mxu0 0
        %5268 = vmatpush1.bf16.xpose.msra.mxu0 0
        %5269 = vmatprep.subr.bf16.mxu0 0
        %5270 = vmatpush1.bf16.xpose.msra.mxu0 %v5253
        %5271 = vmatprep.subr.bf16.mxu0 0
        %5272 = vmatpush2.bf16.xpose.msra.mxu0 0
        %5273 = vmatprep.subr.bf16.mxu0 0
        %5274 = vmatpush2.bf16.xpose.msra.mxu0 0
        %5275 = vmatprep.subr.bf16.mxu0 0
        %5276 = vmatpush2.bf16.xpose.msra.mxu0 0
        %5277 = vmatprep.subr.bf16.mxu0 0
        %5278 = vmatpush2.bf16.xpose.msra.mxu0 0
        %5279 = vmatprep.subr.bf16.mxu0 0
        %5280 = vmatpush2.bf16.xpose.msra.mxu0 0
        %5281 = vmatprep.subr.bf16.mxu0 0
        %5282 = vmatpush2.bf16.xpose.msra.mxu0 0
        %5283 = vmatprep.subr.bf16.mxu0 0
        %5284 = vmatpush2.bf16.xpose.msra.mxu0 0
        %5285 = vmatprep.subr.bf16.mxu0 0
        %5286 = vmatpush2.bf16.xpose.msra.mxu0 0
        %5287 = vmatprep.mubr.bf16.mxu0 0
        %5288 = vmatmul.mubr.bf16.gmra.mxu0 %v5250
        %v5289 = vpop.f32.mrf.mxu0
        %v5290 = vadd.f32 0.0, %v5289
        %v5291 = vpop.f32.mrf.mxu0
        %v5292 = vpop.f32.mrf.mxu0
        %v5293 = vadd.f32 0.0, %v5292
        %v5294 = vpop.f32.mrf.mxu0
        %5295 = vdwg.mxu0
        %v5297 = vsel %vm1953, %v5246, 0
        %v5300 = vsel %vm1953, %v5248, 0
        %5302 = vmatprep.subr.bf16.mxu0 0
        %5303 = vmatpush1.bf16.xpose.msra.mxu0 0
        %5304 = vmatprep.subr.bf16.mxu0 0
        %5305 = vmatpush1.bf16.xpose.msra.mxu0 0
        %5306 = vmatprep.subr.bf16.mxu0 0
        %5307 = vmatpush1.bf16.xpose.msra.mxu0 0
        %5308 = vmatprep.subr.bf16.mxu0 0
        %5309 = vmatpush1.bf16.xpose.msra.mxu0 0
        %5310 = vmatprep.subr.bf16.mxu0 0
        %5311 = vmatpush1.bf16.xpose.msra.mxu0 0
        %5312 = vmatprep.subr.bf16.mxu0 0
        %5313 = vmatpush1.bf16.xpose.msra.mxu0 0
        %5314 = vmatprep.subr.bf16.mxu0 0
        %5315 = vmatpush1.bf16.xpose.msra.mxu0 0
        %5316 = vmatprep.subr.bf16.mxu0 0
        %5317 = vmatpush1.bf16.xpose.msra.mxu0 %v5300
        %5318 = vmatprep.subr.bf16.mxu0 0
        %5319 = vmatpush2.bf16.xpose.msra.mxu0 0
        %5320 = vmatprep.subr.bf16.mxu0 0
        %5321 = vmatpush2.bf16.xpose.msra.mxu0 0
        %5322 = vmatprep.subr.bf16.mxu0 0
        %5323 = vmatpush2.bf16.xpose.msra.mxu0 0
        %5324 = vmatprep.subr.bf16.mxu0 0
        %5325 = vmatpush2.bf16.xpose.msra.mxu0 0
        %5326 = vmatprep.subr.bf16.mxu0 0
        %5327 = vmatpush2.bf16.xpose.msra.mxu0 0
        %5328 = vmatprep.subr.bf16.mxu0 0
        %5329 = vmatpush2.bf16.xpose.msra.mxu0 0
        %5330 = vmatprep.subr.bf16.mxu0 0
        %5331 = vmatpush2.bf16.xpose.msra.mxu0 0
        %5332 = vmatprep.subr.bf16.mxu0 0
        %5333 = vmatpush2.bf16.xpose.msra.mxu0 0
        %5334 = vmatprep.mubr.bf16.mxu0 0
        %5335 = vmatmul.mubr.bf16.gmra.mxu0 %v5297
        %v5336 = vpop.f32.mrf.mxu0
        %v5337 = vadd.f32 0.0, %v5336
        %v5338 = vpop.f32.mrf.mxu0
        %v5339 = vpop.f32.mrf.mxu0
        %v5340 = vadd.f32 0.0, %v5339
        %v5341 = vpop.f32.mrf.mxu0
        %5342 = vdwg.mxu0
        %v5343 = vsel %vm2049, %v5290, -1e+30
        %v5344 = vsel %vm2049, %v5293, -1e+30
        %v5345 = vsel %vm2049, %v5337, -1e+30
        %v5346 = vsel %vm2049, %v5340, -1e+30
        %v5347 = vsel %vm2054, %v5343, -inf
        %5348 = vmax.xlane.f32.xlu0 %v5347
        %v5349 = vpop.xlane.xlu0 %5348
        %v5350 = vsel %vm2054, %v5344, -inf
        %5351 = vmax.xlane.f32.xlu0 %v5350
        %v5352 = vpop.xlane.xlu0 %5351
        %v5353 = vsel %vm2054, %v5345, -inf
        %5354 = vmax.xlane.f32.xlu0 %v5353
        %v5355 = vpop.xlane.xlu0 %5354
        %v5356 = vsel %vm2054, %v5346, -inf
        %5357 = vmax.xlane.f32.xlu0 %v5356
        %v5358 = vpop.xlane.xlu0 %5357
        %v5359 = vsub.f32 %v5343, %v5349
        %v5360 = vsub.f32 %v5344, %v5352
        %v5361 = vsub.f32 %v5345, %v5355
        %v5362 = vsub.f32 %v5346, %v5358
        %v5363 = vmul.f32 %v5359, 1.442695
        %v5364 = vpow.pop %v5363
        %v5365 = vmul.f32 %v5360, 1.442695
        %v5366 = vpow.pop %v5365
        %v5367 = vmul.f32 %v5361, 1.442695
        %v5368 = vpow.pop %v5367
        %v5369 = vmul.f32 %v5362, 1.442695
        %v5370 = vpow.pop %v5369
        %v5371 = vsel %vm2054, %v5364, 0.0
        %5372 = vadd.xlane.f32.xlu0 %v5371
        %v5373 = vpop.xlane.xlu0 %5372
        %v5374 = vsel %vm2054, %v5366, 0.0
        %5375 = vadd.xlane.f32.xlu0 %v5374
        %v5376 = vpop.xlane.xlu0 %5375
        %v5377 = vsel %vm2054, %v5368, 0.0
        %5378 = vadd.xlane.f32.xlu0 %v5377
        %v5379 = vpop.xlane.xlu0 %5378
        %v5380 = vsel %vm2054, %v5370, 0.0
        %5381 = vadd.xlane.f32.xlu0 %v5380
        %v5382 = vpop.xlane.xlu0 %5381
        %v5383 = vrcp.pop %v5373
        %v5384 = vrcp.pop %v5376
        %v5385 = vrcp.pop %v5379
        %v5386 = vrcp.pop %v5382
        %v5387 = vmul.f32 %v5364, %v5383
        %v5388 = vmul.f32 %v5366, %v5384
        %v5389 = vmul.f32 %v5368, %v5385
        %v5390 = vmul.f32 %v5370, %v5386
        %v5391 = vpack.c.bf16 %v5388, %v5387
        %v5392 = vpack.c.bf16 %v5390, %v5389
        %v5393 = vpack.c.bf16 %v5234, %v5231
        %v5394 = vpack.c.bf16 %v5242, %v5239
        %v5396 = vsel %vm2054, %v5391, 0
        %5398 = vmatprep.subr.bf16.mxu0 0
        %5399 = vmatpush1.bf16.msra.mxu0 0
        %5400 = vmatprep.subr.bf16.mxu0 0
        %5401 = vmatpush1.bf16.msra.mxu0 0
        %5402 = vmatprep.subr.bf16.mxu0 0
        %5403 = vmatpush1.bf16.msra.mxu0 0
        %5404 = vmatprep.subr.bf16.mxu0 0
        %5405 = vmatpush1.bf16.msra.mxu0 0
        %5406 = vmatprep.subr.bf16.mxu0 0
        %5407 = vmatpush1.bf16.msra.mxu0 0
        %5408 = vmatprep.subr.bf16.mxu0 0
        %5409 = vmatpush1.bf16.msra.mxu0 0
        %5410 = vmatprep.subr.bf16.mxu0 0
        %5411 = vmatpush1.bf16.msra.mxu0 0
        %5412 = vmatprep.subr.bf16.mxu0 0
        %5413 = vmatpush1.bf16.msra.mxu0 %v5393
        %5414 = vmatprep.subr.bf16.mxu0 0
        %5415 = vmatpush2.bf16.msra.mxu0 0
        %5416 = vmatprep.subr.bf16.mxu0 0
        %5417 = vmatpush2.bf16.msra.mxu0 0
        %5418 = vmatprep.subr.bf16.mxu0 0
        %5419 = vmatpush2.bf16.msra.mxu0 0
        %5420 = vmatprep.subr.bf16.mxu0 0
        %5421 = vmatpush2.bf16.msra.mxu0 0
        %5422 = vmatprep.subr.bf16.mxu0 0
        %5423 = vmatpush2.bf16.msra.mxu0 0
        %5424 = vmatprep.subr.bf16.mxu0 0
        %5425 = vmatpush2.bf16.msra.mxu0 0
        %5426 = vmatprep.subr.bf16.mxu0 0
        %5427 = vmatpush2.bf16.msra.mxu0 0
        %5428 = vmatprep.subr.bf16.mxu0 0
        %5429 = vmatpush2.bf16.msra.mxu0 0
        %5430 = vmatprep.mubr.bf16.mxu0 0
        %5431 = vmatmul.mubr.bf16.gmra.mxu0 %v5396
        %v5432 = vpop.f32.mrf.mxu0
        %v5433 = vadd.f32 0.0, %v5432
        %v5434 = vpop.f32.mrf.mxu0
        %v5435 = vpop.f32.mrf.mxu0
        %v5436 = vadd.f32 0.0, %v5435
        %v5437 = vpop.f32.mrf.mxu0
        %5438 = vdwg.mxu0
        %v5440 = vsel %vm2054, %v5392, 0
        %5442 = vmatprep.subr.bf16.mxu0 0
        %5443 = vmatpush1.bf16.msra.mxu0 0
        %5444 = vmatprep.subr.bf16.mxu0 0
        %5445 = vmatpush1.bf16.msra.mxu0 0
        %5446 = vmatprep.subr.bf16.mxu0 0
        %5447 = vmatpush1.bf16.msra.mxu0 0
        %5448 = vmatprep.subr.bf16.mxu0 0
        %5449 = vmatpush1.bf16.msra.mxu0 0
        %5450 = vmatprep.subr.bf16.mxu0 0
        %5451 = vmatpush1.bf16.msra.mxu0 0
        %5452 = vmatprep.subr.bf16.mxu0 0
        %5453 = vmatpush1.bf16.msra.mxu0 0
        %5454 = vmatprep.subr.bf16.mxu0 0
        %5455 = vmatpush1.bf16.msra.mxu0 0
        %5456 = vmatprep.subr.bf16.mxu0 0
        %5457 = vmatpush1.bf16.msra.mxu0 %v5394
        %5458 = vmatprep.subr.bf16.mxu0 0
        %5459 = vmatpush2.bf16.msra.mxu0 0
        %5460 = vmatprep.subr.bf16.mxu0 0
        %5461 = vmatpush2.bf16.msra.mxu0 0
        %5462 = vmatprep.subr.bf16.mxu0 0
        %5463 = vmatpush2.bf16.msra.mxu0 0
        %5464 = vmatprep.subr.bf16.mxu0 0
        %5465 = vmatpush2.bf16.msra.mxu0 0
        %5466 = vmatprep.subr.bf16.mxu0 0
        %5467 = vmatpush2.bf16.msra.mxu0 0
        %5468 = vmatprep.subr.bf16.mxu0 0
        %5469 = vmatpush2.bf16.msra.mxu0 0
        %5470 = vmatprep.subr.bf16.mxu0 0
        %5471 = vmatpush2.bf16.msra.mxu0 0
        %5472 = vmatprep.subr.bf16.mxu0 0
        %5473 = vmatpush2.bf16.msra.mxu0 0
        %5474 = vmatprep.mubr.bf16.mxu0 0
        %5475 = vmatmul.mubr.bf16.gmra.mxu0 %v5440
        %v5476 = vpop.f32.mrf.mxu0
        %v5477 = vadd.f32 0.0, %v5476
        %v5478 = vpop.f32.mrf.mxu0
        %v5479 = vpop.f32.mrf.mxu0
        %v5480 = vadd.f32 0.0, %v5479
        %v5481 = vpop.f32.mrf.mxu0
        %5482 = vdwg.mxu0
        %v5483 = vpack.c.bf16 %v5436, %v5433
        %v5484 = vpack.c.bf16 %v5480, %v5477
        %s5485 = scalar_lea.vmem %s907, 24
        %v5486 = vld [vmem:[%s5485] sm:$0x7]
        %v5488 = vsel %vm1953, %v5483, 0
        %v5491 = vsel %vm1953, %v5484, 0
        %v5494 = vsel %vm2688, %v5486, 0
        %5496 = vmatprep.subr.bf16.mxu0 0
        %5497 = vmatpush1.bf16.msra.mxu0 0
        %5498 = vmatprep.subr.bf16.mxu0 0
        %5499 = vmatpush1.bf16.msra.mxu0 0
        %5500 = vmatprep.subr.bf16.mxu0 0
        %5501 = vmatpush1.bf16.msra.mxu0 0
        %5502 = vmatprep.subr.bf16.mxu0 0
        %5503 = vmatpush1.bf16.msra.mxu0 0
        %5504 = vmatprep.subr.bf16.mxu0 0
        %5505 = vmatpush1.bf16.msra.mxu0 0
        %5506 = vmatprep.subr.bf16.mxu0 0
        %5507 = vmatpush1.bf16.msra.mxu0 0
        %5508 = vmatprep.subr.bf16.mxu0 0
        %5509 = vmatpush1.bf16.msra.mxu0 0
        %5510 = vmatprep.subr.bf16.mxu0 0
        %5511 = vmatpush1.bf16.msra.mxu0 %v5494
        %5512 = vmatprep.subr.bf16.mxu0 0
        %5513 = vmatpush2.bf16.msra.mxu0 0
        %5514 = vmatprep.subr.bf16.mxu0 0
        %5515 = vmatpush2.bf16.msra.mxu0 0
        %5516 = vmatprep.subr.bf16.mxu0 0
        %5517 = vmatpush2.bf16.msra.mxu0 0
        %5518 = vmatprep.subr.bf16.mxu0 0
        %5519 = vmatpush2.bf16.msra.mxu0 0
        %5520 = vmatprep.subr.bf16.mxu0 0
        %5521 = vmatpush2.bf16.msra.mxu0 0
        %5522 = vmatprep.subr.bf16.mxu0 0
        %5523 = vmatpush2.bf16.msra.mxu0 0
        %5524 = vmatprep.subr.bf16.mxu0 0
        %5525 = vmatpush2.bf16.msra.mxu0 0
        %5526 = vmatprep.subr.bf16.mxu0 0
        %5527 = vmatpush2.bf16.msra.mxu0 0
        %5528 = vmatprep.mubr.bf16.mxu0 0
        %5529 = vmatmul.mubr.bf16.gmra.mxu0 %v5488
        %v5530 = vpop.f32.mrf.mxu0
        %v5531 = vadd.f32 0.0, %v5530
        %v5532 = vpop.f32.mrf.mxu0
        %v5533 = vpop.f32.mrf.mxu0
        %v5534 = vadd.f32 0.0, %v5533
        %v5535 = vpop.f32.mrf.mxu0
        %5536 = vmatprep.mubr.bf16.mxu0 0
        %5537 = vmatmul.mubr.bf16.gmra.mxu0 %v5491
        %v5538 = vpop.f32.mrf.mxu0
        %v5539 = vadd.f32 0.0, %v5538
        %v5540 = vpop.f32.mrf.mxu0
        %v5541 = vpop.f32.mrf.mxu0
        %v5542 = vadd.f32 0.0, %v5541
        %v5543 = vpop.f32.mrf.mxu0
        %5544 = vdwg.mxu0
        %v5545 = vadd.f32 %v4995, %v5531
        %v5546 = vadd.f32 %v4996, %v5534
        %v5547 = vadd.f32 %v4997, %v5539
        %v5548 = vadd.f32 %v4998, %v5542
        %s5549 = scalar_lea.vmem %s880, 168
        %v5550 = vld [vmem:[%s5549] sm:$0xf]
        %v5551 = vld [vmem:[%s5549 + $0x4] sm:$0xf]
        %v5552 = vld [vmem:[%s5549 + $0x8] sm:$0xf]
        %v5553 = vld [vmem:[%s5549 + $0xc] sm:$0xf]
        %v5554 = vld [vmem:[%s5549 + $0x10] sm:$0xf]
        %v5555 = vld [vmem:[%s5549 + $0x14] sm:$0xf]
        %s5556 = scalar_lea.vmem %s894, 7
        %v5557 = vld [vmem:[%s5556] sm:$0x1]
        %v5559 = vlaneseq
        %v5560 = vshrl.u32 %v5559, 7
        %v5561 = vsub.s32 0, %v5560
        %v5562 = vrot.slane %v5557, %v5561
        %v5570 = vunpack.c.l.b16 %v5550
        %v5571 = vunpack.c.l.b16 %v5551
        %v5572 = vunpack.c.l.b16 %v5552
        %v5573 = vunpack.c.l.b16 %v5553
        %v5574 = vunpack.c.l.b16 %v5554
        %v5575 = vunpack.c.l.b16 %v5555
        %v5576 = vpack.c.b16 %v5571, %v5570
        %v5577 = vpack.c.b16 %v5573, %v5572
        %v5578 = vpack.c.b16 %v5575, %v5574
        %5582 = vmatprep.subr.bf16.mxu0 0
        %5583 = vmatpush1.bf16.msra.mxu0 0
        %5584 = vmatprep.subr.bf16.mxu0 0
        %5585 = vmatpush1.bf16.msra.mxu0 0
        %5586 = vmatprep.subr.bf16.mxu0 0
        %5587 = vmatpush1.bf16.msra.mxu0 0
        %5588 = vmatprep.subr.bf16.mxu0 0
        %5589 = vmatpush1.bf16.msra.mxu0 0
        %5590 = vmatprep.subr.bf16.mxu0 0
        %5591 = vmatpush1.bf16.msra.mxu0 0
        %5592 = vmatprep.subr.bf16.mxu0 0
        %5593 = vmatpush1.bf16.msra.mxu0 %v5578
        %5594 = vmatprep.subr.bf16.mxu0 0
        %5595 = vmatpush1.bf16.msra.mxu0 %v5577
        %5596 = vmatprep.subr.bf16.mxu0 0
        %5597 = vmatpush1.bf16.msra.mxu0 %v5576
        %5598 = vmatprep.subr.bf16.mxu0 0
        %5599 = vmatpush2.bf16.msra.mxu0 0
        %5600 = vmatprep.subr.bf16.mxu0 0
        %5601 = vmatpush2.bf16.msra.mxu0 0
        %5602 = vmatprep.subr.bf16.mxu0 0
        %5603 = vmatpush2.bf16.msra.mxu0 0
        %5604 = vmatprep.subr.bf16.mxu0 0
        %5605 = vmatpush2.bf16.msra.mxu0 0
        %5606 = vmatprep.subr.bf16.mxu0 0
        %5607 = vmatpush2.bf16.msra.mxu0 0
        %5608 = vmatprep.subr.bf16.mxu0 0
        %5609 = vmatpush2.bf16.msra.mxu0 0
        %5610 = vmatprep.subr.bf16.mxu0 0
        %5611 = vmatpush2.bf16.msra.mxu0 0
        %5612 = vmatprep.subr.bf16.mxu0 0
        %5613 = vmatpush2.bf16.msra.mxu0 0
        %5614 = vmatprep.mubr.bf16.mxu0 0
        %5615 = vmatmul.mubr.bf16.gmra.mxu0 %v1735
        %v5616 = vpop.f32.mrf.mxu0
        %v5617 = vadd.f32 %v5562, %v5616
        %v5618 = vpop.f32.mrf.mxu0
        %v5619 = vpop.f32.mrf.mxu0
        %v5620 = vadd.f32 %v5562, %v5619
        %v5621 = vpop.f32.mrf.mxu0
        %5622 = vmatprep.mubr.bf16.mxu0 0
        %5623 = vmatmul.mubr.bf16.gmra.mxu0 %v1738
        %v5624 = vpop.f32.mrf.mxu0
        %v5625 = vadd.f32 %v5562, %v5624
        %v5626 = vpop.f32.mrf.mxu0
        %v5627 = vpop.f32.mrf.mxu0
        %v5628 = vadd.f32 %v5562, %v5627
        %v5629 = vpop.f32.mrf.mxu0
        %5630 = vdwg.mxu0
        %s5631 = scalar_lea.vmem %s885, 168
        %v5632 = vld [vmem:[%s5631] sm:$0xf]
        %v5633 = vld [vmem:[%s5631 + $0x4] sm:$0xf]
        %v5634 = vld [vmem:[%s5631 + $0x8] sm:$0xf]
        %v5635 = vld [vmem:[%s5631 + $0xc] sm:$0xf]
        %v5636 = vld [vmem:[%s5631 + $0x10] sm:$0xf]
        %v5637 = vld [vmem:[%s5631 + $0x14] sm:$0xf]
        %s5638 = scalar_lea.vmem %s898, 7
        %v5639 = vld [vmem:[%s5638] sm:$0x1]
        %v5641 = vlaneseq
        %v5642 = vshrl.u32 %v5641, 7
        %v5643 = vsub.s32 0, %v5642
        %v5644 = vrot.slane %v5639, %v5643
        %v5652 = vunpack.c.l.b16 %v5632
        %v5653 = vunpack.c.l.b16 %v5633
        %v5654 = vunpack.c.l.b16 %v5634
        %v5655 = vunpack.c.l.b16 %v5635
        %v5656 = vunpack.c.l.b16 %v5636
        %v5657 = vunpack.c.l.b16 %v5637
        %v5658 = vpack.c.b16 %v5653, %v5652
        %v5659 = vpack.c.b16 %v5655, %v5654
        %v5660 = vpack.c.b16 %v5657, %v5656
        %5664 = vmatprep.subr.bf16.mxu0 0
        %5665 = vmatpush1.bf16.msra.mxu0 0
        %5666 = vmatprep.subr.bf16.mxu0 0
        %5667 = vmatpush1.bf16.msra.mxu0 0
        %5668 = vmatprep.subr.bf16.mxu0 0
        %5669 = vmatpush1.bf16.msra.mxu0 0
        %5670 = vmatprep.subr.bf16.mxu0 0
        %5671 = vmatpush1.bf16.msra.mxu0 0
        %5672 = vmatprep.subr.bf16.mxu0 0
        %5673 = vmatpush1.bf16.msra.mxu0 0
        %5674 = vmatprep.subr.bf16.mxu0 0
        %5675 = vmatpush1.bf16.msra.mxu0 %v5660
        %5676 = vmatprep.subr.bf16.mxu0 0
        %5677 = vmatpush1.bf16.msra.mxu0 %v5659
        %5678 = vmatprep.subr.bf16.mxu0 0
        %5679 = vmatpush1.bf16.msra.mxu0 %v5658
        %5680 = vmatprep.subr.bf16.mxu0 0
        %5681 = vmatpush2.bf16.msra.mxu0 0
        %5682 = vmatprep.subr.bf16.mxu0 0
        %5683 = vmatpush2.bf16.msra.mxu0 0
        %5684 = vmatprep.subr.bf16.mxu0 0
        %5685 = vmatpush2.bf16.msra.mxu0 0
        %5686 = vmatprep.subr.bf16.mxu0 0
        %5687 = vmatpush2.bf16.msra.mxu0 0
        %5688 = vmatprep.subr.bf16.mxu0 0
        %5689 = vmatpush2.bf16.msra.mxu0 0
        %5690 = vmatprep.subr.bf16.mxu0 0
        %5691 = vmatpush2.bf16.msra.mxu0 0
        %5692 = vmatprep.subr.bf16.mxu0 0
        %5693 = vmatpush2.bf16.msra.mxu0 0
        %5694 = vmatprep.subr.bf16.mxu0 0
        %5695 = vmatpush2.bf16.msra.mxu0 0
        %5696 = vmatprep.mubr.bf16.mxu0 0
        %5697 = vmatmul.mubr.bf16.gmra.mxu0 %v1735
        %v5698 = vpop.f32.mrf.mxu0
        %v5699 = vadd.f32 %v5644, %v5698
        %v5700 = vpop.f32.mrf.mxu0
        %v5701 = vpop.f32.mrf.mxu0
        %v5702 = vadd.f32 %v5644, %v5701
        %v5703 = vpop.f32.mrf.mxu0
        %5704 = vmatprep.mubr.bf16.mxu0 0
        %5705 = vmatmul.mubr.bf16.gmra.mxu0 %v1738
        %v5706 = vpop.f32.mrf.mxu0
        %v5707 = vadd.f32 %v5644, %v5706
        %v5708 = vpop.f32.mrf.mxu0
        %v5709 = vpop.f32.mrf.mxu0
        %v5710 = vadd.f32 %v5644, %v5709
        %v5711 = vpop.f32.mrf.mxu0
        %5712 = vdwg.mxu0
        %s5713 = scalar_lea.vmem %s890, 168
        %v5714 = vld [vmem:[%s5713] sm:$0xf]
        %v5715 = vld [vmem:[%s5713 + $0x4] sm:$0xf]
        %v5716 = vld [vmem:[%s5713 + $0x8] sm:$0xf]
        %v5717 = vld [vmem:[%s5713 + $0xc] sm:$0xf]
        %v5718 = vld [vmem:[%s5713 + $0x10] sm:$0xf]
        %v5719 = vld [vmem:[%s5713 + $0x14] sm:$0xf]
        %s5720 = scalar_lea.vmem %s902, 7
        %v5721 = vld [vmem:[%s5720] sm:$0x1]
        %v5723 = vlaneseq
        %v5724 = vshrl.u32 %v5723, 7
        %v5725 = vsub.s32 0, %v5724
        %v5726 = vrot.slane %v5721, %v5725
        %v5734 = vunpack.c.l.b16 %v5714
        %v5735 = vunpack.c.l.b16 %v5715
        %v5736 = vunpack.c.l.b16 %v5716
        %v5737 = vunpack.c.l.b16 %v5717
        %v5738 = vunpack.c.l.b16 %v5718
        %v5739 = vunpack.c.l.b16 %v5719
        %v5740 = vpack.c.b16 %v5735, %v5734
        %v5741 = vpack.c.b16 %v5737, %v5736
        %v5742 = vpack.c.b16 %v5739, %v5738
        %5746 = vmatprep.subr.bf16.mxu0 0
        %5747 = vmatpush1.bf16.msra.mxu0 0
        %5748 = vmatprep.subr.bf16.mxu0 0
        %5749 = vmatpush1.bf16.msra.mxu0 0
        %5750 = vmatprep.subr.bf16.mxu0 0
        %5751 = vmatpush1.bf16.msra.mxu0 0
        %5752 = vmatprep.subr.bf16.mxu0 0
        %5753 = vmatpush1.bf16.msra.mxu0 0
        %5754 = vmatprep.subr.bf16.mxu0 0
        %5755 = vmatpush1.bf16.msra.mxu0 0
        %5756 = vmatprep.subr.bf16.mxu0 0
        %5757 = vmatpush1.bf16.msra.mxu0 %v5742
        %5758 = vmatprep.subr.bf16.mxu0 0
        %5759 = vmatpush1.bf16.msra.mxu0 %v5741
        %5760 = vmatprep.subr.bf16.mxu0 0
        %5761 = vmatpush1.bf16.msra.mxu0 %v5740
        %5762 = vmatprep.subr.bf16.mxu0 0
        %5763 = vmatpush2.bf16.msra.mxu0 0
        %5764 = vmatprep.subr.bf16.mxu0 0
        %5765 = vmatpush2.bf16.msra.mxu0 0
        %5766 = vmatprep.subr.bf16.mxu0 0
        %5767 = vmatpush2.bf16.msra.mxu0 0
        %5768 = vmatprep.subr.bf16.mxu0 0
        %5769 = vmatpush2.bf16.msra.mxu0 0
        %5770 = vmatprep.subr.bf16.mxu0 0
        %5771 = vmatpush2.bf16.msra.mxu0 0
        %5772 = vmatprep.subr.bf16.mxu0 0
        %5773 = vmatpush2.bf16.msra.mxu0 0
        %5774 = vmatprep.subr.bf16.mxu0 0
        %5775 = vmatpush2.bf16.msra.mxu0 0
        %5776 = vmatprep.subr.bf16.mxu0 0
        %5777 = vmatpush2.bf16.msra.mxu0 0
        %5778 = vmatprep.mubr.bf16.mxu0 0
        %5779 = vmatmul.mubr.bf16.gmra.mxu0 %v1735
        %v5780 = vpop.f32.mrf.mxu0
        %v5781 = vadd.f32 %v5726, %v5780
        %v5782 = vpop.f32.mrf.mxu0
        %v5783 = vpop.f32.mrf.mxu0
        %v5784 = vadd.f32 %v5726, %v5783
        %v5785 = vpop.f32.mrf.mxu0
        %5786 = vmatprep.mubr.bf16.mxu0 0
        %5787 = vmatmul.mubr.bf16.gmra.mxu0 %v1738
        %v5788 = vpop.f32.mrf.mxu0
        %v5789 = vadd.f32 %v5726, %v5788
        %v5790 = vpop.f32.mrf.mxu0
        %v5791 = vpop.f32.mrf.mxu0
        %v5792 = vadd.f32 %v5726, %v5791
        %v5793 = vpop.f32.mrf.mxu0
        %5794 = vdwg.mxu0
        %v5795 = vpack.c.bf16 %v5620, %v5617
        %v5796 = vpack.c.bf16 %v5628, %v5625
        %v5797 = vpack.c.bf16 %v5702, %v5699
        %v5798 = vpack.c.bf16 %v5710, %v5707
        %v5800 = vsel %vm1953, %v5795, 0
        %v5803 = vsel %vm1953, %v5797, 0
        %5805 = vmatprep.subr.bf16.mxu0 0
        %5806 = vmatpush1.bf16.xpose.msra.mxu0 0
        %5807 = vmatprep.subr.bf16.mxu0 0
        %5808 = vmatpush1.bf16.xpose.msra.mxu0 0
        %5809 = vmatprep.subr.bf16.mxu0 0
        %5810 = vmatpush1.bf16.xpose.msra.mxu0 0
        %5811 = vmatprep.subr.bf16.mxu0 0
        %5812 = vmatpush1.bf16.xpose.msra.mxu0 0
        %5813 = vmatprep.subr.bf16.mxu0 0
        %5814 = vmatpush1.bf16.xpose.msra.mxu0 0
        %5815 = vmatprep.subr.bf16.mxu0 0
        %5816 = vmatpush1.bf16.xpose.msra.mxu0 0
        %5817 = vmatprep.subr.bf16.mxu0 0
        %5818 = vmatpush1.bf16.xpose.msra.mxu0 0
        %5819 = vmatprep.subr.bf16.mxu0 0
        %5820 = vmatpush1.bf16.xpose.msra.mxu0 %v5803
        %5821 = vmatprep.subr.bf16.mxu0 0
        %5822 = vmatpush2.bf16.xpose.msra.mxu0 0
        %5823 = vmatprep.subr.bf16.mxu0 0
        %5824 = vmatpush2.bf16.xpose.msra.mxu0 0
        %5825 = vmatprep.subr.bf16.mxu0 0
        %5826 = vmatpush2.bf16.xpose.msra.mxu0 0
        %5827 = vmatprep.subr.bf16.mxu0 0
        %5828 = vmatpush2.bf16.xpose.msra.mxu0 0
        %5829 = vmatprep.subr.bf16.mxu0 0
        %5830 = vmatpush2.bf16.xpose.msra.mxu0 0
        %5831 = vmatprep.subr.bf16.mxu0 0
        %5832 = vmatpush2.bf16.xpose.msra.mxu0 0
        %5833 = vmatprep.subr.bf16.mxu0 0
        %5834 = vmatpush2.bf16.xpose.msra.mxu0 0
        %5835 = vmatprep.subr.bf16.mxu0 0
        %5836 = vmatpush2.bf16.xpose.msra.mxu0 0
        %5837 = vmatprep.mubr.bf16.mxu0 0
        %5838 = vmatmul.mubr.bf16.gmra.mxu0 %v5800
        %v5839 = vpop.f32.mrf.mxu0
        %v5840 = vadd.f32 0.0, %v5839
        %v5841 = vpop.f32.mrf.mxu0
        %v5842 = vpop.f32.mrf.mxu0
        %v5843 = vadd.f32 0.0, %v5842
        %v5844 = vpop.f32.mrf.mxu0
        %5845 = vdwg.mxu0
        %v5847 = vsel %vm1953, %v5796, 0
        %v5850 = vsel %vm1953, %v5798, 0
        %5852 = vmatprep.subr.bf16.mxu0 0
        %5853 = vmatpush1.bf16.xpose.msra.mxu0 0
        %5854 = vmatprep.subr.bf16.mxu0 0
        %5855 = vmatpush1.bf16.xpose.msra.mxu0 0
        %5856 = vmatprep.subr.bf16.mxu0 0
        %5857 = vmatpush1.bf16.xpose.msra.mxu0 0
        %5858 = vmatprep.subr.bf16.mxu0 0
        %5859 = vmatpush1.bf16.xpose.msra.mxu0 0
        %5860 = vmatprep.subr.bf16.mxu0 0
        %5861 = vmatpush1.bf16.xpose.msra.mxu0 0
        %5862 = vmatprep.subr.bf16.mxu0 0
        %5863 = vmatpush1.bf16.xpose.msra.mxu0 0
        %5864 = vmatprep.subr.bf16.mxu0 0
        %5865 = vmatpush1.bf16.xpose.msra.mxu0 0
        %5866 = vmatprep.subr.bf16.mxu0 0
        %5867 = vmatpush1.bf16.xpose.msra.mxu0 %v5850
        %5868 = vmatprep.subr.bf16.mxu0 0
        %5869 = vmatpush2.bf16.xpose.msra.mxu0 0
        %5870 = vmatprep.subr.bf16.mxu0 0
        %5871 = vmatpush2.bf16.xpose.msra.mxu0 0
        %5872 = vmatprep.subr.bf16.mxu0 0
        %5873 = vmatpush2.bf16.xpose.msra.mxu0 0
        %5874 = vmatprep.subr.bf16.mxu0 0
        %5875 = vmatpush2.bf16.xpose.msra.mxu0 0
        %5876 = vmatprep.subr.bf16.mxu0 0
        %5877 = vmatpush2.bf16.xpose.msra.mxu0 0
        %5878 = vmatprep.subr.bf16.mxu0 0
        %5879 = vmatpush2.bf16.xpose.msra.mxu0 0
        %5880 = vmatprep.subr.bf16.mxu0 0
        %5881 = vmatpush2.bf16.xpose.msra.mxu0 0
        %5882 = vmatprep.subr.bf16.mxu0 0
        %5883 = vmatpush2.bf16.xpose.msra.mxu0 0
        %5884 = vmatprep.mubr.bf16.mxu0 0
        %5885 = vmatmul.mubr.bf16.gmra.mxu0 %v5847
        %v5886 = vpop.f32.mrf.mxu0
        %v5887 = vadd.f32 0.0, %v5886
        %v5888 = vpop.f32.mrf.mxu0
        %v5889 = vpop.f32.mrf.mxu0
        %v5890 = vadd.f32 0.0, %v5889
        %v5891 = vpop.f32.mrf.mxu0
        %5892 = vdwg.mxu0
        %v5893 = vsel %vm2049, %v5840, -1e+30
        %v5894 = vsel %vm2049, %v5843, -1e+30
        %v5895 = vsel %vm2049, %v5887, -1e+30
        %v5896 = vsel %vm2049, %v5890, -1e+30
        %v5897 = vsel %vm2054, %v5893, -inf
        %5898 = vmax.xlane.f32.xlu0 %v5897
        %v5899 = vpop.xlane.xlu0 %5898
        %v5900 = vsel %vm2054, %v5894, -inf
        %5901 = vmax.xlane.f32.xlu0 %v5900
        %v5902 = vpop.xlane.xlu0 %5901
        %v5903 = vsel %vm2054, %v5895, -inf
        %5904 = vmax.xlane.f32.xlu0 %v5903
        %v5905 = vpop.xlane.xlu0 %5904
        %v5906 = vsel %vm2054, %v5896, -inf
        %5907 = vmax.xlane.f32.xlu0 %v5906
        %v5908 = vpop.xlane.xlu0 %5907
        %v5909 = vsub.f32 %v5893, %v5899
        %v5910 = vsub.f32 %v5894, %v5902
        %v5911 = vsub.f32 %v5895, %v5905
        %v5912 = vsub.f32 %v5896, %v5908
        %v5913 = vmul.f32 %v5909, 1.442695
        %v5914 = vpow.pop %v5913
        %v5915 = vmul.f32 %v5910, 1.442695
        %v5916 = vpow.pop %v5915
        %v5917 = vmul.f32 %v5911, 1.442695
        %v5918 = vpow.pop %v5917
        %v5919 = vmul.f32 %v5912, 1.442695
        %v5920 = vpow.pop %v5919
        %v5921 = vsel %vm2054, %v5914, 0.0
        %5922 = vadd.xlane.f32.xlu0 %v5921
        %v5923 = vpop.xlane.xlu0 %5922
        %v5924 = vsel %vm2054, %v5916, 0.0
        %5925 = vadd.xlane.f32.xlu0 %v5924
        %v5926 = vpop.xlane.xlu0 %5925
        %v5927 = vsel %vm2054, %v5918, 0.0
        %5928 = vadd.xlane.f32.xlu0 %v5927
        %v5929 = vpop.xlane.xlu0 %5928
        %v5930 = vsel %vm2054, %v5920, 0.0
        %5931 = vadd.xlane.f32.xlu0 %v5930
        %v5932 = vpop.xlane.xlu0 %5931
        %v5933 = vrcp.pop %v5923
        %v5934 = vrcp.pop %v5926
        %v5935 = vrcp.pop %v5929
        %v5936 = vrcp.pop %v5932
        %v5937 = vmul.f32 %v5914, %v5933
        %v5938 = vmul.f32 %v5916, %v5934
        %v5939 = vmul.f32 %v5918, %v5935
        %v5940 = vmul.f32 %v5920, %v5936
        %v5941 = vpack.c.bf16 %v5938, %v5937
        %v5942 = vpack.c.bf16 %v5940, %v5939
        %v5943 = vpack.c.bf16 %v5784, %v5781
        %v5944 = vpack.c.bf16 %v5792, %v5789
        %v5946 = vsel %vm2054, %v5941, 0
        %5948 = vmatprep.subr.bf16.mxu0 0
        %5949 = vmatpush1.bf16.msra.mxu0 0
        %5950 = vmatprep.subr.bf16.mxu0 0
        %5951 = vmatpush1.bf16.msra.mxu0 0
        %5952 = vmatprep.subr.bf16.mxu0 0
        %5953 = vmatpush1.bf16.msra.mxu0 0
        %5954 = vmatprep.subr.bf16.mxu0 0
        %5955 = vmatpush1.bf16.msra.mxu0 0
        %5956 = vmatprep.subr.bf16.mxu0 0
        %5957 = vmatpush1.bf16.msra.mxu0 0
        %5958 = vmatprep.subr.bf16.mxu0 0
        %5959 = vmatpush1.bf16.msra.mxu0 0
        %5960 = vmatprep.subr.bf16.mxu0 0
        %5961 = vmatpush1.bf16.msra.mxu0 0
        %5962 = vmatprep.subr.bf16.mxu0 0
        %5963 = vmatpush1.bf16.msra.mxu0 %v5943
        %5964 = vmatprep.subr.bf16.mxu0 0
        %5965 = vmatpush2.bf16.msra.mxu0 0
        %5966 = vmatprep.subr.bf16.mxu0 0
        %5967 = vmatpush2.bf16.msra.mxu0 0
        %5968 = vmatprep.subr.bf16.mxu0 0
        %5969 = vmatpush2.bf16.msra.mxu0 0
        %5970 = vmatprep.subr.bf16.mxu0 0
        %5971 = vmatpush2.bf16.msra.mxu0 0
        %5972 = vmatprep.subr.bf16.mxu0 0
        %5973 = vmatpush2.bf16.msra.mxu0 0
        %5974 = vmatprep.subr.bf16.mxu0 0
        %5975 = vmatpush2.bf16.msra.mxu0 0
        %5976 = vmatprep.subr.bf16.mxu0 0
        %5977 = vmatpush2.bf16.msra.mxu0 0
        %5978 = vmatprep.subr.bf16.mxu0 0
        %5979 = vmatpush2.bf16.msra.mxu0 0
        %5980 = vmatprep.mubr.bf16.mxu0 0
        %5981 = vmatmul.mubr.bf16.gmra.mxu0 %v5946
        %v5982 = vpop.f32.mrf.mxu0
        %v5983 = vadd.f32 0.0, %v5982
        %v5984 = vpop.f32.mrf.mxu0
        %v5985 = vpop.f32.mrf.mxu0
        %v5986 = vadd.f32 0.0, %v5985
        %v5987 = vpop.f32.mrf.mxu0
        %5988 = vdwg.mxu0
        %v5990 = vsel %vm2054, %v5942, 0
        %5992 = vmatprep.subr.bf16.mxu0 0
        %5993 = vmatpush1.bf16.msra.mxu0 0
        %5994 = vmatprep.subr.bf16.mxu0 0
        %5995 = vmatpush1.bf16.msra.mxu0 0
        %5996 = vmatprep.subr.bf16.mxu0 0
        %5997 = vmatpush1.bf16.msra.mxu0 0
        %5998 = vmatprep.subr.bf16.mxu0 0
        %5999 = vmatpush1.bf16.msra.mxu0 0
        %6000 = vmatprep.subr.bf16.mxu0 0
        %6001 = vmatpush1.bf16.msra.mxu0 0
        %6002 = vmatprep.subr.bf16.mxu0 0
        %6003 = vmatpush1.bf16.msra.mxu0 0
        %6004 = vmatprep.subr.bf16.mxu0 0
        %6005 = vmatpush1.bf16.msra.mxu0 0
        %6006 = vmatprep.subr.bf16.mxu0 0
        %6007 = vmatpush1.bf16.msra.mxu0 %v5944
        %6008 = vmatprep.subr.bf16.mxu0 0
        %6009 = vmatpush2.bf16.msra.mxu0 0
        %6010 = vmatprep.subr.bf16.mxu0 0
        %6011 = vmatpush2.bf16.msra.mxu0 0
        %6012 = vmatprep.subr.bf16.mxu0 0
        %6013 = vmatpush2.bf16.msra.mxu0 0
        %6014 = vmatprep.subr.bf16.mxu0 0
        %6015 = vmatpush2.bf16.msra.mxu0 0
        %6016 = vmatprep.subr.bf16.mxu0 0
        %6017 = vmatpush2.bf16.msra.mxu0 0
        %6018 = vmatprep.subr.bf16.mxu0 0
        %6019 = vmatpush2.bf16.msra.mxu0 0
        %6020 = vmatprep.subr.bf16.mxu0 0
        %6021 = vmatpush2.bf16.msra.mxu0 0
        %6022 = vmatprep.subr.bf16.mxu0 0
        %6023 = vmatpush2.bf16.msra.mxu0 0
        %6024 = vmatprep.mubr.bf16.mxu0 0
        %6025 = vmatmul.mubr.bf16.gmra.mxu0 %v5990
        %v6026 = vpop.f32.mrf.mxu0
        %v6027 = vadd.f32 0.0, %v6026
        %v6028 = vpop.f32.mrf.mxu0
        %v6029 = vpop.f32.mrf.mxu0
        %v6030 = vadd.f32 0.0, %v6029
        %v6031 = vpop.f32.mrf.mxu0
        %6032 = vdwg.mxu0
        %v6033 = vpack.c.bf16 %v5986, %v5983
        %v6034 = vpack.c.bf16 %v6030, %v6027
        %s6035 = scalar_lea.vmem %s907, 28
        %v6036 = vld [vmem:[%s6035] sm:$0x7]
        %v6038 = vsel %vm1953, %v6033, 0
        %v6041 = vsel %vm1953, %v6034, 0
        %v6044 = vsel %vm2688, %v6036, 0
        %6046 = vmatprep.subr.bf16.mxu0 0
        %6047 = vmatpush1.bf16.msra.mxu0 0
        %6048 = vmatprep.subr.bf16.mxu0 0
        %6049 = vmatpush1.bf16.msra.mxu0 0
        %6050 = vmatprep.subr.bf16.mxu0 0
        %6051 = vmatpush1.bf16.msra.mxu0 0
        %6052 = vmatprep.subr.bf16.mxu0 0
        %6053 = vmatpush1.bf16.msra.mxu0 0
        %6054 = vmatprep.subr.bf16.mxu0 0
        %6055 = vmatpush1.bf16.msra.mxu0 0
        %6056 = vmatprep.subr.bf16.mxu0 0
        %6057 = vmatpush1.bf16.msra.mxu0 0
        %6058 = vmatprep.subr.bf16.mxu0 0
        %6059 = vmatpush1.bf16.msra.mxu0 0
        %6060 = vmatprep.subr.bf16.mxu0 0
        %6061 = vmatpush1.bf16.msra.mxu0 %v6044
        %6062 = vmatprep.subr.bf16.mxu0 0
        %6063 = vmatpush2.bf16.msra.mxu0 0
        %6064 = vmatprep.subr.bf16.mxu0 0
        %6065 = vmatpush2.bf16.msra.mxu0 0
        %6066 = vmatprep.subr.bf16.mxu0 0
        %6067 = vmatpush2.bf16.msra.mxu0 0
        %6068 = vmatprep.subr.bf16.mxu0 0
        %6069 = vmatpush2.bf16.msra.mxu0 0
        %6070 = vmatprep.subr.bf16.mxu0 0
        %6071 = vmatpush2.bf16.msra.mxu0 0
        %6072 = vmatprep.subr.bf16.mxu0 0
        %6073 = vmatpush2.bf16.msra.mxu0 0
        %6074 = vmatprep.subr.bf16.mxu0 0
        %6075 = vmatpush2.bf16.msra.mxu0 0
        %6076 = vmatprep.subr.bf16.mxu0 0
        %6077 = vmatpush2.bf16.msra.mxu0 0
        %6078 = vmatprep.mubr.bf16.mxu0 0
        %6079 = vmatmul.mubr.bf16.gmra.mxu0 %v6038
        %v6080 = vpop.f32.mrf.mxu0
        %v6081 = vadd.f32 0.0, %v6080
        %v6082 = vpop.f32.mrf.mxu0
        %v6083 = vpop.f32.mrf.mxu0
        %v6084 = vadd.f32 0.0, %v6083
        %v6085 = vpop.f32.mrf.mxu0
        %6086 = vmatprep.mubr.bf16.mxu0 0
        %6087 = vmatmul.mubr.bf16.gmra.mxu0 %v6041
        %v6088 = vpop.f32.mrf.mxu0
        %v6089 = vadd.f32 0.0, %v6088
        %v6090 = vpop.f32.mrf.mxu0
        %v6091 = vpop.f32.mrf.mxu0
        %v6092 = vadd.f32 0.0, %v6091
        %v6093 = vpop.f32.mrf.mxu0
        %6094 = vdwg.mxu0
        %v6095 = vadd.f32 %v5545, %v6081
        %v6096 = vadd.f32 %v5546, %v6084
        %v6097 = vadd.f32 %v5547, %v6089
        %v6098 = vadd.f32 %v5548, %v6092
        %v6099 = vld [vmem:[%s910] sm:$0x1]
        %v6101 = vlaneseq
        %v6102 = vshrl.u32 %v6101, 7
        %v6103 = vsub.s32 0, %v6102
        %v6104 = vrot.slane %v6099, %v6103
        %v6106 = vadd.f32 %v6095, %v6104
        %v6107 = vadd.f32 %v6096, %v6104
        %v6108 = vadd.f32 %v6097, %v6104
        %v6109 = vadd.f32 %v6098, %v6104
        %v6110 = vadd.f32 %v1693, %v6106
        %v6111 = vadd.f32 %v1694, %v6107
        %v6112 = vadd.f32 %v1695, %v6108
        %v6113 = vadd.f32 %v1696, %v6109
        %v6114 = vpack.c.bf16 %v6111, %v6110
        %v6115 = vpack.c.bf16 %v6113, %v6112
        %v6116 = vld [vmem:[%s915] sm:$0xf]
        %v6117 = vld [vmem:[%s915 + $0x4] sm:$0xf]
        %v6118 = vld [vmem:[%s915 + $0x8] sm:$0xf]
        %v6119 = vld [vmem:[%s915 + $0xc] sm:$0xf]
        %v6120 = vld [vmem:[%s915 + $0x10] sm:$0xf]
        %v6121 = vld [vmem:[%s915 + $0x14] sm:$0xf]
        %v6122 = vld [vmem:[%s918] sm:$0x1]
        %v6124 = vlaneseq
        %v6125 = vshrl.u32 %v6124, 7
        %v6126 = vsub.s32 0, %v6125
        %v6127 = vrot.slane %v6122, %v6126
        %v6135 = vunpack.c.l.b16 %v6116
        %v6136 = vunpack.c.l.b16 %v6117
        %v6137 = vunpack.c.l.b16 %v6118
        %v6138 = vunpack.c.l.b16 %v6119
        %v6139 = vunpack.c.l.b16 %v6120
        %v6140 = vunpack.c.l.b16 %v6121
        %v6141 = vpack.c.b16 %v6136, %v6135
        %v6142 = vpack.c.b16 %v6138, %v6137
        %v6143 = vpack.c.b16 %v6140, %v6139
        %v6148 = vsel %vm1733, %v6114, 0
        %v6151 = vsel %vm1733, %v6115, 0
        %6153 = vmatprep.subr.bf16.mxu0 0
        %6154 = vmatpush1.bf16.msra.mxu0 0
        %6155 = vmatprep.subr.bf16.mxu0 0
        %6156 = vmatpush1.bf16.msra.mxu0 0
        %6157 = vmatprep.subr.bf16.mxu0 0
        %6158 = vmatpush1.bf16.msra.mxu0 0
        %6159 = vmatprep.subr.bf16.mxu0 0
        %6160 = vmatpush1.bf16.msra.mxu0 0
        %6161 = vmatprep.subr.bf16.mxu0 0
        %6162 = vmatpush1.bf16.msra.mxu0 0
        %6163 = vmatprep.subr.bf16.mxu0 0
        %6164 = vmatpush1.bf16.msra.mxu0 %v6143
        %6165 = vmatprep.subr.bf16.mxu0 0
        %6166 = vmatpush1.bf16.msra.mxu0 %v6142
        %6167 = vmatprep.subr.bf16.mxu0 0
        %6168 = vmatpush1.bf16.msra.mxu0 %v6141
        %6169 = vmatprep.subr.bf16.mxu0 0
        %6170 = vmatpush2.bf16.msra.mxu0 0
        %6171 = vmatprep.subr.bf16.mxu0 0
        %6172 = vmatpush2.bf16.msra.mxu0 0
        %6173 = vmatprep.subr.bf16.mxu0 0
        %6174 = vmatpush2.bf16.msra.mxu0 0
        %6175 = vmatprep.subr.bf16.mxu0 0
        %6176 = vmatpush2.bf16.msra.mxu0 0
        %6177 = vmatprep.subr.bf16.mxu0 0
        %6178 = vmatpush2.bf16.msra.mxu0 0
        %6179 = vmatprep.subr.bf16.mxu0 0
        %6180 = vmatpush2.bf16.msra.mxu0 0
        %6181 = vmatprep.subr.bf16.mxu0 0
        %6182 = vmatpush2.bf16.msra.mxu0 0
        %6183 = vmatprep.subr.bf16.mxu0 0
        %6184 = vmatpush2.bf16.msra.mxu0 0
        %6185 = vmatprep.mubr.bf16.mxu0 0
        %6186 = vmatmul.mubr.bf16.gmra.mxu0 %v6148
        %v6187 = vpop.f32.mrf.mxu0
        %v6188 = vadd.f32 %v6127, %v6187
        %v6189 = vpop.f32.mrf.mxu0
        %v6190 = vpop.f32.mrf.mxu0
        %v6191 = vadd.f32 %v6127, %v6190
        %v6192 = vpop.f32.mrf.mxu0
        %6193 = vmatprep.mubr.bf16.mxu0 0
        %6194 = vmatmul.mubr.bf16.gmra.mxu0 %v6151
        %v6195 = vpop.f32.mrf.mxu0
        %v6196 = vadd.f32 %v6127, %v6195
        %v6197 = vpop.f32.mrf.mxu0
        %v6198 = vpop.f32.mrf.mxu0
        %v6199 = vadd.f32 %v6127, %v6198
        %v6200 = vpop.f32.mrf.mxu0
        %6201 = vdwg.mxu0
        %v6202 = vmul.f32 %v6188, 0.5
        %v6203 = vmul.f32 %v6191, 0.5
        %v6204 = vmul.f32 %v6196, 0.5
        %v6205 = vmul.f32 %v6199, 0.5
        %v6206 = vmul.f32 %v6188, 0.044715
        %v6207 = vmul.f32 %v6191, 0.044715
        %v6208 = vmul.f32 %v6196, 0.044715
        %v6209 = vmul.f32 %v6199, 0.044715
        %v6210 = vmul.f32 %v6206, %v6188
        %v6211 = vmul.f32 %v6207, %v6191
        %v6212 = vmul.f32 %v6208, %v6196
        %v6213 = vmul.f32 %v6209, %v6199
        %v6214 = vmul.f32 %v6210, %v6188
        %v6215 = vmul.f32 %v6211, %v6191
        %v6216 = vmul.f32 %v6212, %v6196
        %v6217 = vmul.f32 %v6213, %v6199
        %v6218 = vadd.f32 %v6188, %v6214
        %v6219 = vadd.f32 %v6191, %v6215
        %v6220 = vadd.f32 %v6196, %v6216
        %v6221 = vadd.f32 %v6199, %v6217
        %v6222 = vmul.f32 %v6218, 0.7978846
        %v6223 = vmul.f32 %v6219, 0.7978846
        %v6224 = vmul.f32 %v6220, 0.7978846
        %v6225 = vmul.f32 %v6221, 0.7978846
        %v6226 = vtanh.pop %v6222
        %v6227 = vtanh.pop %v6223
        %v6228 = vtanh.pop %v6224
        %v6229 = vtanh.pop %v6225
        %v6230 = vadd.f32 %v6226, 1.0
        %v6231 = vadd.f32 %v6227, 1.0
        %v6232 = vadd.f32 %v6228, 1.0
        %v6233 = vadd.f32 %v6229, 1.0
        %v6234 = vmul.f32 %v6202, %v6230
        %v6235 = vmul.f32 %v6203, %v6231
        %v6236 = vmul.f32 %v6204, %v6232
        %v6237 = vmul.f32 %v6205, %v6233
        %v6238 = vpack.c.bf16 %v6235, %v6234
        %v6239 = vpack.c.bf16 %v6237, %v6236
        %v6240 = vld [vmem:[%s923] sm:$0xf]
        %v6241 = vld [vmem:[%s923 + $0x4] sm:$0xf]
        %v6242 = vld [vmem:[%s923 + $0x8] sm:$0xf]
        %v6243 = vld [vmem:[%s923 + $0xc] sm:$0xf]
        %v6244 = vld [vmem:[%s923 + $0x10] sm:$0xf]
        %v6245 = vld [vmem:[%s923 + $0x14] sm:$0xf]
        %v6246 = vld [vmem:[%s923 + $0x18] sm:$0xf]
        %v6247 = vld [vmem:[%s923 + $0x1c] sm:$0xf]
        %v6248 = vld [vmem:[%s926] sm:$0x1]
        %v6250 = vlaneseq
        %v6251 = vshrl.u32 %v6250, 7
        %v6252 = vsub.s32 0, %v6251
        %v6253 = vrot.slane %v6248, %v6252
        %v6263 = vunpack.c.l.b16 %v6240
        %v6264 = vunpack.c.l.b16 %v6241
        %v6265 = vunpack.c.l.b16 %v6242
        %v6266 = vunpack.c.l.b16 %v6243
        %v6267 = vunpack.c.l.b16 %v6244
        %v6268 = vunpack.c.l.b16 %v6245
        %v6269 = vunpack.c.l.b16 %v6246
        %v6270 = vunpack.c.l.b16 %v6247
        %v6271 = vpack.c.b16 %v6264, %v6263
        %v6272 = vpack.c.b16 %v6266, %v6265
        %v6273 = vpack.c.b16 %v6268, %v6267
        %v6274 = vpack.c.b16 %v6270, %v6269
        %vm6279 = vcmask 523264
        %v6281 = vsel %vm6279, %v6238, 0
        %v6284 = vsel %vm6279, %v6239, 0
        %6286 = vmatprep.subr.bf16.mxu0 0
        %6287 = vmatpush1.bf16.msra.mxu0 0
        %6288 = vmatprep.subr.bf16.mxu0 0
        %6289 = vmatpush1.bf16.msra.mxu0 0
        %6290 = vmatprep.subr.bf16.mxu0 0
        %6291 = vmatpush1.bf16.msra.mxu0 0
        %6292 = vmatprep.subr.bf16.mxu0 0
        %6293 = vmatpush1.bf16.msra.mxu0 0
        %6294 = vmatprep.subr.bf16.mxu0 0
        %6295 = vmatpush1.bf16.msra.mxu0 %v6274
        %6296 = vmatprep.subr.bf16.mxu0 0
        %6297 = vmatpush1.bf16.msra.mxu0 %v6273
        %6298 = vmatprep.subr.bf16.mxu0 0
        %6299 = vmatpush1.bf16.msra.mxu0 %v6272
        %6300 = vmatprep.subr.bf16.mxu0 0
        %6301 = vmatpush1.bf16.msra.mxu0 %v6271
        %6302 = vmatprep.subr.bf16.mxu0 0
        %6303 = vmatpush2.bf16.msra.mxu0 0
        %6304 = vmatprep.subr.bf16.mxu0 0
        %6305 = vmatpush2.bf16.msra.mxu0 0
        %6306 = vmatprep.subr.bf16.mxu0 0
        %6307 = vmatpush2.bf16.msra.mxu0 0
        %6308 = vmatprep.subr.bf16.mxu0 0
        %6309 = vmatpush2.bf16.msra.mxu0 0
        %6310 = vmatprep.subr.bf16.mxu0 0
        %6311 = vmatpush2.bf16.msra.mxu0 0
        %6312 = vmatprep.subr.bf16.mxu0 0
        %6313 = vmatpush2.bf16.msra.mxu0 0
        %6314 = vmatprep.subr.bf16.mxu0 0
        %6315 = vmatpush2.bf16.msra.mxu0 0
        %6316 = vmatprep.subr.bf16.mxu0 0
        %6317 = vmatpush2.bf16.msra.mxu0 0
        %6318 = vmatprep.mubr.bf16.mxu0 0
        %6319 = vmatmul.mubr.bf16.gmra.mxu0 %v6281
        %v6320 = vpop.f32.mrf.mxu0
        %v6321 = vadd.f32 %v6253, %v6320
        %v6322 = vpop.f32.mrf.mxu0
        %v6323 = vpop.f32.mrf.mxu0
        %v6324 = vadd.f32 %v6253, %v6323
        %v6325 = vpop.f32.mrf.mxu0
        %6326 = vmatprep.mubr.bf16.mxu0 0
        %6327 = vmatmul.mubr.bf16.gmra.mxu0 %v6284
        %v6328 = vpop.f32.mrf.mxu0
        %v6329 = vadd.f32 %v6253, %v6328
        %v6330 = vpop.f32.mrf.mxu0
        %v6331 = vpop.f32.mrf.mxu0
        %v6332 = vadd.f32 %v6253, %v6331
        %v6333 = vpop.f32.mrf.mxu0
        %6334 = vdwg.mxu0
        %v6335 = vadd.f32 %v6110, %v6321
        %v6336 = vadd.f32 %v6111, %v6324
        %v6337 = vadd.f32 %v6112, %v6329
        %v6338 = vadd.f32 %v6113, %v6332
        %6339 = vst.msk [vmem:[#allocation2] sm:$0xff] %vm1733, %v6335
        %6340 = vst.msk [vmem:[#allocation2 + $0x8] sm:$0xff] %vm1733, %v6336
        %6341 = vst.msk [vmem:[#allocation2 + $0x10] sm:$0xff] %vm1733, %v6337
        %6342 = vst.msk [vmem:[#allocation2 + $0x18] sm:$0xff] %vm1733, %v6338
        %p6343 = scmp.eq.s32.totalorder %s39, 1
        // Predicated region
        $region113: #{tpu_custom_call.1} parent=107 // pred_check
          %p6344 = pneg %p6343
        $region114: #{tpu_custom_call.1} parent=107 // pred_check_branch
          %6346 = sbr.rel (%p6344) target = $region116
        $region115: #{tpu_custom_call.1} parent=107 // pred_region
          %v6347 = vpack.c.bf16 %v6336, %v6335
          %v6348 = vpack.c.bf16 %v6338, %v6337
          %v6349 = vld [vmem:[%s20] sm:$0xf]
          %v6350 = vld [vmem:[%s20 + $0x4] sm:$0xf]
          %v6351 = vld [vmem:[%s20 + $0x8] sm:$0xf]
          %v6352 = vld [vmem:[%s20 + $0xc] sm:$0xf]
          %v6353 = vld [vmem:[%s20 + $0x10] sm:$0xf]
          %v6354 = vld [vmem:[%s20 + $0x14] sm:$0xf]
          %v6355 = vld [vmem:[%s21] sm:$0x1]
          %v6357 = vlaneseq
          %v6358 = vshrl.u32 %v6357, 7
          %v6359 = vsub.s32 0, %v6358
          %v6360 = vrot.slane %v6355, %v6359
          %v6368 = vunpack.c.l.b16 %v6349
          %v6369 = vunpack.c.l.b16 %v6350
          %v6370 = vunpack.c.l.b16 %v6351
          %v6371 = vunpack.c.l.b16 %v6352
          %v6372 = vunpack.c.l.b16 %v6353
          %v6373 = vunpack.c.l.b16 %v6354
          %v6374 = vpack.c.b16 %v6369, %v6368
          %v6375 = vpack.c.b16 %v6371, %v6370
          %v6376 = vpack.c.b16 %v6373, %v6372
          %v6381 = vsel %vm1733, %v6347, 0
          %v6384 = vsel %vm1733, %v6348, 0
          %6386 = vmatprep.subr.bf16.mxu0 0
          %6387 = vmatpush1.bf16.msra.mxu0 0
          %6388 = vmatprep.subr.bf16.mxu0 0
          %6389 = vmatpush1.bf16.msra.mxu0 0
          %6390 = vmatprep.subr.bf16.mxu0 0
          %6391 = vmatpush1.bf16.msra.mxu0 0
          %6392 = vmatprep.subr.bf16.mxu0 0
          %6393 = vmatpush1.bf16.msra.mxu0 0
          %6394 = vmatprep.subr.bf16.mxu0 0
          %6395 = vmatpush1.bf16.msra.mxu0 0
          %6396 = vmatprep.subr.bf16.mxu0 0
          %6397 = vmatpush1.bf16.msra.mxu0 %v6376
          %6398 = vmatprep.subr.bf16.mxu0 0
          %6399 = vmatpush1.bf16.msra.mxu0 %v6375
          %6400 = vmatprep.subr.bf16.mxu0 0
          %6401 = vmatpush1.bf16.msra.mxu0 %v6374
          %6402 = vmatprep.subr.bf16.mxu0 0
          %6403 = vmatpush2.bf16.msra.mxu0 0
          %6404 = vmatprep.subr.bf16.mxu0 0
          %6405 = vmatpush2.bf16.msra.mxu0 0
          %6406 = vmatprep.subr.bf16.mxu0 0
          %6407 = vmatpush2.bf16.msra.mxu0 0
          %6408 = vmatprep.subr.bf16.mxu0 0
          %6409 = vmatpush2.bf16.msra.mxu0 0
          %6410 = vmatprep.subr.bf16.mxu0 0
          %6411 = vmatpush2.bf16.msra.mxu0 0
          %6412 = vmatprep.subr.bf16.mxu0 0
          %6413 = vmatpush2.bf16.msra.mxu0 0
          %6414 = vmatprep.subr.bf16.mxu0 0
          %6415 = vmatpush2.bf16.msra.mxu0 0
          %6416 = vmatprep.subr.bf16.mxu0 0
          %6417 = vmatpush2.bf16.msra.mxu0 0
          %6418 = vmatprep.mubr.bf16.mxu0 0
          %6419 = vmatmul.mubr.bf16.gmra.mxu0 %v6381
          %v6420 = vpop.f32.mrf.mxu0
          %v6421 = vadd.f32 %v6360, %v6420
          %v6422 = vpop.f32.mrf.mxu0
          %v6423 = vpop.f32.mrf.mxu0
          %v6424 = vadd.f32 %v6360, %v6423
          %v6425 = vpop.f32.mrf.mxu0
          %6426 = vmatprep.mubr.bf16.mxu0 0
          %6427 = vmatmul.mubr.bf16.gmra.mxu0 %v6384
          %v6428 = vpop.f32.mrf.mxu0
          %v6429 = vadd.f32 %v6360, %v6428
          %v6430 = vpop.f32.mrf.mxu0
          %v6431 = vpop.f32.mrf.mxu0
          %v6432 = vadd.f32 %v6360, %v6431
          %v6433 = vpop.f32.mrf.mxu0
          %6434 = vdwg.mxu0
          %6435 = vst.msk [vmem:[#allocation3] sm:$0xff] %vm2054, %v6421
          %6436 = vst.msk [vmem:[#allocation3 + $0x8] sm:$0xff] %vm2054, %v6424
          %6437 = vst.msk [vmem:[#allocation3 + $0x10] sm:$0xff] %vm2054, %v6429
          %6438 = vst.msk [vmem:[#allocation3 + $0x18] sm:$0xff] %vm2054, %v6432
        $region116: #{tpu_custom_call.1} parent=107 // pred_fallthru
          _
        // Predicated region
        $region117: #{tpu_custom_call.1} parent=107 // pred_check
          %p6439 = pneg %p596
        $region118: #{tpu_custom_call.1} parent=107 // pred_check_branch
          %6441 = sbr.rel (%p6439) target = $region120
        $region119: #{tpu_custom_call.1} parent=107 // pred_region
          %s6442 = smul.u32 2, %s38
          %s6444 = ssub.s32 512, 512
          %6445 = vsyncadd [#allocation4], %s6444
          %s6446 = smul.addr %s6442, 2
          %s6447 = smul.addr %s6446, 128
          %s6448 = scalar_lea.hbm %s22, %s6447
          %s6449 = sshll.u32 [#allocation3], 4
          %s6450 = int_to_ptr.vmem [resolvable:$true] %s6449
          %6455 = dma.vmem_to_hbm [thread:$0]  %s6450, 512, %s6448, [#allocation4], 128, 128, 8
        $region120: #{tpu_custom_call.1} parent=107 // pred_fallthru
          _
        // Predicated region
        $region121: #{tpu_custom_call.1} parent=107 // pred_check
          %p6456 = pneg %p596
        $region122: #{tpu_custom_call.1} parent=107 // pred_check_branch
          %6458 = sbr.rel (%p6456) target = $region124
        $region123: #{tpu_custom_call.1} parent=107 // pred_region
          %6459 = dma.done [#allocation4], 512
        $region124: #{tpu_custom_call.1} parent=107 // pred_fallthru
          _
      $region108: #{tpu_custom_call.1} parent=5 // pred_fallthru
        _
      %p6460 = scmp.le.s32.totalorder 2, %s29
      // Predicated region
      $region125: #{tpu_custom_call.1} parent=5 // pred_check
        %p6461 = pneg %p6460
      $region126: #{tpu_custom_call.1} parent=5 // pred_check_branch
        %6463 = sbr.rel (%p6461) target = $region128
      $region127: #{tpu_custom_call.1} parent=5 // pred_region
        %s6464 = ssub.s32 %s29, 2
      $region128: #{tpu_custom_call.1} parent=5 // pred_fallthru
        _
    $region6: #{tpu_custom_call.1} parent=1 // loop_footer
      %s33 = sadd.s32 1, %s29
    $region7: #{tpu_custom_call.1} parent=1 // loop_footer_branch
      %28 = sbr.rel target = $region3
    $region8: #{tpu_custom_call.1} parent=1 // loop_exit
      _
    %6465 = vsyncpa [#allocation4], 1
    %s6466 = scalar_lea.sflag [#allocation4], 1
    %6467 = vsyncpa %s6466, 1

</llo_original>
